<compile_context>
chip_gen: v7x
topology: tpu7x:2x2x1
jax: 0.10.0
libtpu: 0.0.40
codegen_flags: <defaults>
</compile_context>

<pallas_src>
import functools

import jax
import jax.numpy as jnp
from jax.experimental import pallas as pl
from jax.experimental.pallas import tpu as pltpu


# ----------------------------------------------------------------------------
# Kernel
# ----------------------------------------------------------------------------
def _double_conv_kernel(x_ref, w1_ref, b1_ref, w2_ref, b2_ref, o_ref,
                        xpad_ref, midpad_ref, patch1_ref, patch2_ref):
    # x_ref:      (1, H, W, Cin)          unpadded input (one batch element)
    # w1_ref:     (9*Cin_p,  Cmid_p)      conv1 weights, BN1 scale folded in
    # b1_ref:     (1, Cmid_p)             folded BN1 bias
    # w2_ref:     (9*Cmid_p, Cout_p)      conv2 weights, BN2 scale folded in
    # b2_ref:     (1, Cout_p)             folded BN2 bias
    # o_ref:      (1, H, W, Cout_p)       lane-dense (Cout padded to 128)
    # xpad_ref:   (H+2, W+2, Cin_p)       VMEM scratch, zero halo + zero-padded C
    # midpad_ref: (H+2, W+2, Cmid_p)      VMEM scratch for intermediate act
    # patch1_ref: (H*W, 9*Cin_p)          VMEM im2col scratch, stage 1
    # patch2_ref: (H*W, 9*Cmid_p)         VMEM im2col scratch, stage 2
    H = o_ref.shape[1]
    W = o_ref.shape[2]
    Cin = x_ref.shape[3]
    Cmid_p = midpad_ref.shape[2]
    Cout_p = o_ref.shape[3]

    def im2col_into(src_ref, patch_ref, c):
        # Build the (H*W, 9*c) patch matrix: one 128-lane-aligned column block
        # per 3x3 tap.
        for dy in range(3):
            for dx in range(3):
                t = dy * 3 + dx
                piece = src_ref[dy:dy + H, dx:dx + W, :].reshape(H * W, c)
                patch_ref[:, t * c:(t + 1) * c] = piece

    # ---- stage 1: conv1 (BN1 folded) + ReLU -------------------------------
    xpad_ref[...] = jnp.zeros_like(xpad_ref)          # zero halo + padded lanes
    xpad_ref[1:H + 1, 1:W + 1, :Cin] = x_ref[0]       # interior
    im2col_into(xpad_ref, patch1_ref, xpad_ref.shape[2])
    y1 = jnp.dot(patch1_ref[...], w1_ref[...],
                 preferred_element_type=jnp.float32)   # (H*W, Cmid_p), single MXU pass
    y1 = jnp.maximum(y1 + b1_ref[...], 0.0)            # bias + ReLU (padded lanes stay 0)

    # ---- stage 2: conv2 (BN2 folded) + ReLU -------------------------------
    midpad_ref[...] = jnp.zeros_like(midpad_ref)
    midpad_ref[1:H + 1, 1:W + 1, :] = y1.reshape(H, W, Cmid_p)
    im2col_into(midpad_ref, patch2_ref, Cmid_p)
    y2 = jnp.dot(patch2_ref[...], w2_ref[...],
                 preferred_element_type=jnp.float32)   # (H*W, Cout_p)
    y2 = jnp.maximum(y2 + b2_ref[...], 0.0)

    o_ref[0] = y2.reshape(H, W, Cout_p).astype(o_ref.dtype)


# ----------------------------------------------------------------------------
# pallas_call wrapper
# ----------------------------------------------------------------------------
def _double_conv_pallas(x_nhwc, w1_mat, b1, w2_mat, b2):
    N, H, W, Cin = x_nhwc.shape
    K1, Cmid_p = w1_mat.shape
    K2, Cout_p = w2_mat.shape
    Cin_p = K1 // 9
    assert K2 == 9 * Cmid_p

    return pl.pallas_call(
        _double_conv_kernel,
        out_shape=jax.ShapeDtypeStruct((N, H, W, Cout_p), jnp.float32),
        grid_spec=pltpu.PrefetchScalarGridSpec(
            num_scalar_prefetch=0,
            grid=(N,),
            in_specs=[
                pl.BlockSpec((1, H, W, Cin), lambda n: (n, 0, 0, 0)),
                pl.BlockSpec((K1, Cmid_p), lambda n: (0, 0)),
                pl.BlockSpec((1, Cmid_p), lambda n: (0, 0)),
                pl.BlockSpec((K2, Cout_p), lambda n: (0, 0)),
                pl.BlockSpec((1, Cout_p), lambda n: (0, 0)),
            ],
            out_specs=pl.BlockSpec((1, H, W, Cout_p), lambda n: (n, 0, 0, 0)),
            scratch_shapes=[
                pltpu.VMEM((H + 2, W + 2, Cin_p), jnp.float32),
                pltpu.VMEM((H + 2, W + 2, Cmid_p), jnp.float32),
                pltpu.VMEM((H * W, K1), jnp.float32),
                pltpu.VMEM((H * W, K2), jnp.float32),
            ]),
        compiler_params=pltpu.CompilerParams(
            dimension_semantics=("parallel",),
            vmem_limit_bytes=48 * 1024 * 1024),
    )(x_nhwc, w1_mat, b1, w2_mat, b2)


@functools.partial(jax.jit, static_argnames=("cout",))
def double_conv(x_nchw, w1_mat, b1, w2_mat, b2, *, cout):
    """PyTorch-style NCHW in / NCHW out DoubleConv forward (eval-mode BN)."""
    x = jnp.transpose(x_nchw, (0, 2, 3, 1))            # NCHW -> NHWC
    y = _double_conv_pallas(x, w1_mat, b1, w2_mat, b2)
    y = y[..., :cout]                                  # drop channel padding
    return jnp.transpose(y, (0, 3, 1, 2))              # back to NCHW


# ----------------------------------------------------------------------------
# Parameter construction / preparation (BN folding, channel padding)
# ----------------------------------------------------------------------------
def _round_up(n, m=128):
    return ((n + m - 1) // m) * m


def make_raw_params(key, in_channels, out_channels, mid_channels=None):
    """Random PyTorch-layout conv weights + BatchNorm running stats."""
    if not mid_channels:
        mid_channels = out_channels
    ks = jax.random.split(key, 10)
    w1 = 0.1 * jax.random.normal(ks[0], (mid_channels, in_channels, 3, 3), jnp.float32)
    w2 = 0.1 * jax.random.normal(ks[1], (out_channels, mid_channels, 3, 3), jnp.float32)
    bn1 = dict(
        gamma=1.0 + 0.1 * jax.random.normal(ks[2], (mid_channels,), jnp.float32),
        beta=0.1 * jax.random.normal(ks[3], (mid_channels,), jnp.float32),
        mean=0.1 * jax.random.normal(ks[4], (mid_channels,), jnp.float32),
        var=jnp.abs(1.0 + 0.1 * jax.random.normal(ks[5], (mid_channels,), jnp.float32)),
    )
    bn2 = dict(
        gamma=1.0 + 0.1 * jax.random.normal(ks[6], (out_channels,), jnp.float32),
        beta=0.1 * jax.random.normal(ks[7], (out_channels,), jnp.float32),
        mean=0.1 * jax.random.normal(ks[8], (out_channels,), jnp.float32),
        var=jnp.abs(1.0 + 0.1 * jax.random.normal(ks[9], (out_channels,), jnp.float32)),
    )
    return dict(w1_pt=w1, w2_pt=w2, bn1=bn1, bn2=bn2)


def prepare_double_conv_params(w1_pt, bn1, w2_pt, bn2, eps=1e-5):
    """Fold BN scale into weights, pad channels to 128, reshape for im2col."""
    cin = w1_pt.shape[1]
    cmid = w1_pt.shape[0]
    cout = w2_pt.shape[0]
    cin_p, cmid_p, cout_p = _round_up(cin), _round_up(cmid), _round_up(cout)

    def fold(w_pt, bn, cin_pad, cout_pad):
        scale = bn["gamma"] / jnp.sqrt(bn["var"] + eps)
        bias = bn["beta"] - bn["mean"] * scale
        w = jnp.transpose(w_pt, (2, 3, 1, 0))              # (3,3,Cin,Cout)
        w = w * scale[None, None, None, :]                  # fold BN scale
        w = jnp.pad(w, ((0, 0), (0, 0),
                        (0, cin_pad - w.shape[2]),
                        (0, cout_pad - w.shape[3])))
        w_mat = w.reshape(9 * cin_pad, cout_pad)            # im2col weight matrix
        bias = jnp.pad(bias, (0, cout_pad - bias.shape[0])).reshape(1, cout_pad)
        return w_mat, bias

    w1_mat, b1 = fold(w1_pt, bn1, cin_p, cmid_p)
    w2_mat, b2 = fold(w2_pt, bn2, cmid_p, cout_p)
    return dict(w1_mat=w1_mat, b1=b1, w2_mat=w2_mat, b2=b2, cout=cout)


# ----------------------------------------------------------------------------
# Pure-JAX reference (PyTorch eval-mode semantics, NCHW)
# ----------------------------------------------------------------------------
def _reference_double_conv(x_nchw, raw, eps=1e-5):
    def conv_bn_relu(x, w_pt, bn):
        y = jax.lax.conv_general_dilated(
            x, w_pt, window_strides=(1, 1), padding=((1, 1), (1, 1)),
            dimension_numbers=("NCHW", "OIHW", "NCHW"))
        g = bn["gamma"][None, :, None, None]
        b = bn["beta"][None, :, None, None]
        m = bn["mean"][None, :, None, None]
        v = bn["var"][None, :, None, None]
        y = g * (y - m) / jnp.sqrt(v + eps) + b
        return jnp.maximum(y, 0.0)

    y = conv_bn_relu(x_nchw, raw["w1_pt"], raw["bn1"])
    return conv_bn_relu(y, raw["w2_pt"], raw["bn2"])


# ----------------------------------------------------------------------------
if __name__ == "__main__":
    key = jax.random.PRNGKey(0)
    k_x, k_p = jax.random.split(key)

    N, Cin, Cout, H, W = 2, 4, 8, 16, 16
    x = jax.random.normal(k_x, (N, Cin, H, W), jnp.float32)   # NCHW like PyTorch

    raw = make_raw_params(k_p, Cin, Cout)
    p = prepare_double_conv_params(raw["w1_pt"], raw["bn1"],
                                   raw["w2_pt"], raw["bn2"])

    out = double_conv(x, p["w1_mat"], p["b1"], p["w2_mat"], p["b2"],
                      cout=p["cout"])
    out = jax.block_until_ready(out)

    ref = _reference_double_conv(x, raw)
    assert out.shape == (N, Cout, H, W)
    max_err = jnp.max(jnp.abs(out - ref))
    assert jnp.allclose(out, ref, atol=1e-3, rtol=1e-3), f"max abs err {max_err}"

    print("KERNEL_OK")
</pallas_src>

<mosaic_0001>
module attributes {stable_mosaic.version = 11 : i64} {
  func.func @_double_conv_kernel(%arg0: i32, %arg1: memref<1x16x16x4xf32, #tpu.memory_space<vmem>>, %arg2: memref<1152x128xf32, #tpu.memory_space<vmem>>, %arg3: memref<1x128xf32, #tpu.memory_space<vmem>>, %arg4: memref<1152x128xf32, #tpu.memory_space<vmem>>, %arg5: memref<1x128xf32, #tpu.memory_space<vmem>>, %arg6: memref<1x16x16x128xf32, #tpu.memory_space<vmem>>, %arg7: memref<18x18x128xf32, #tpu.memory_space<vmem>>, %arg8: memref<18x18x128xf32, #tpu.memory_space<vmem>>, %arg9: memref<256x1152xf32, #tpu.memory_space<vmem>>, %arg10: memref<256x1152xf32, #tpu.memory_space<vmem>>) attributes {dimension_semantics = [#tpu.dimension_semantics<parallel>], iteration_bounds = array<i64: 2>, scalar_prefetch = 0 : i64, scratch_operands = 4 : i64, tpu.core_type = #tpu.core_type<tc>, window_params = [{transform_indices = @transform_0, window_bounds = array<i64: 1, 16, 16, 4>}, {pipeline_mode = #tpu.pipeline_mode<synchronous>, transform_indices = @transform_1, window_bounds = array<i64: 1152, 128>}, {pipeline_mode = #tpu.pipeline_mode<synchronous>, transform_indices = @transform_2, window_bounds = array<i64: 1, 128>}, {pipeline_mode = #tpu.pipeline_mode<synchronous>, transform_indices = @transform_3, window_bounds = array<i64: 1152, 128>}, {pipeline_mode = #tpu.pipeline_mode<synchronous>, transform_indices = @transform_4, window_bounds = array<i64: 1, 128>}, {transform_indices = @transform_5, window_bounds = array<i64: 1, 16, 16, 128>}]} {
    %cst = arith.constant 0.000000e+00 : f32
    %0 = vector.broadcast %cst : f32 to vector<18x18x128xf32>
    %c0 = arith.constant 0 : index
    %c0_0 = arith.constant 0 : index
    %c0_1 = arith.constant 0 : index
    %1 = vector.load %arg7[%c0, %c0_0, %c0_1] : memref<18x18x128xf32, #tpu.memory_space<vmem>>, vector<18x18x128xf32>
    tpu.vector_store %arg7[%c0, %c0_0, %c0_1], %0 {strides = array<i32>} : memref<18x18x128xf32, #tpu.memory_space<vmem>>, vector<18x18x128xf32>,
    %c0_2 = arith.constant 0 : index
    %c0_3 = arith.constant 0 : index
    %c0_4 = arith.constant 0 : index
    %c0_5 = arith.constant 0 : index
    %2 = vector.load %arg1[%c0_2, %c0_3, %c0_4, %c0_5] : memref<1x16x16x4xf32, #tpu.memory_space<vmem>>, vector<1x16x16x4xf32>
    %3 = vector.shape_cast %2 : vector<1x16x16x4xf32> to vector<16x16x4xf32>
    %c1 = arith.constant 1 : index
    %c1_6 = arith.constant 1 : index
    %c0_7 = arith.constant 0 : index
    %4 = vector.load %arg7[%c1, %c1_6, %c0_7] : memref<18x18x128xf32, #tpu.memory_space<vmem>>, vector<16x16x4xf32>
    tpu.vector_store %arg7[%c1, %c1_6, %c0_7], %3 {strides = array<i32>} : memref<18x18x128xf32, #tpu.memory_space<vmem>>, vector<16x16x4xf32>,
    %c0_8 = arith.constant 0 : index
    %c0_9 = arith.constant 0 : index
    %c0_10 = arith.constant 0 : index
    %5 = vector.load %arg7[%c0_8, %c0_9, %c0_10] : memref<18x18x128xf32, #tpu.memory_space<vmem>>, vector<16x16x128xf32>
    %6 = vector.shape_cast %5 : vector<16x16x128xf32> to vector<256x128xf32>
    %c0_11 = arith.constant 0 : index
    %c0_12 = arith.constant 0 : index
    %7 = vector.load %arg9[%c0_11, %c0_12] : memref<256x1152xf32, #tpu.memory_space<vmem>>, vector<256x128xf32>
    tpu.vector_store %arg9[%c0_11, %c0_12], %6 {strides = array<i32>} : memref<256x1152xf32, #tpu.memory_space<vmem>>, vector<256x128xf32>,
    %c0_13 = arith.constant 0 : index
    %c1_14 = arith.constant 1 : index
    %c0_15 = arith.constant 0 : index
    %8 = vector.load %arg7[%c0_13, %c1_14, %c0_15] : memref<18x18x128xf32, #tpu.memory_space<vmem>>, vector<16x16x128xf32>
    %9 = vector.shape_cast %8 : vector<16x16x128xf32> to vector<256x128xf32>
    %c0_16 = arith.constant 0 : index
    %c128 = arith.constant 128 : index
    %10 = vector.load %arg9[%c0_16, %c128] : memref<256x1152xf32, #tpu.memory_space<vmem>>, vector<256x128xf32>
    tpu.vector_store %arg9[%c0_16, %c128], %9 {strides = array<i32>} : memref<256x1152xf32, #tpu.memory_space<vmem>>, vector<256x128xf32>,
    %c0_17 = arith.constant 0 : index
    %c2 = arith.constant 2 : index
    %c0_18 = arith.constant 0 : index
    %11 = vector.load %arg7[%c0_17, %c2, %c0_18] : memref<18x18x128xf32, #tpu.memory_space<vmem>>, vector<16x16x128xf32>
    %12 = vector.shape_cast %11 : vector<16x16x128xf32> to vector<256x128xf32>
    %c0_19 = arith.constant 0 : index
    %c256 = arith.constant 256 : index
    %13 = vector.load %arg9[%c0_19, %c256] : memref<256x1152xf32, #tpu.memory_space<vmem>>, vector<256x128xf32>
    tpu.vector_store %arg9[%c0_19, %c256], %12 {strides = array<i32>} : memref<256x1152xf32, #tpu.memory_space<vmem>>, vector<256x128xf32>,
    %c1_20 = arith.constant 1 : index
    %c0_21 = arith.constant 0 : index
    %c0_22 = arith.constant 0 : index
    %14 = vector.load %arg7[%c1_20, %c0_21, %c0_22] : memref<18x18x128xf32, #tpu.memory_space<vmem>>, vector<16x16x128xf32>
    %15 = vector.shape_cast %14 : vector<16x16x128xf32> to vector<256x128xf32>
    %c0_23 = arith.constant 0 : index
    %c384 = arith.constant 384 : index
    %16 = vector.load %arg9[%c0_23, %c384] : memref<256x1152xf32, #tpu.memory_space<vmem>>, vector<256x128xf32>
    tpu.vector_store %arg9[%c0_23, %c384], %15 {strides = array<i32>} : memref<256x1152xf32, #tpu.memory_space<vmem>>, vector<256x128xf32>,
    %c1_24 = arith.constant 1 : index
    %c1_25 = arith.constant 1 : index
    %c0_26 = arith.constant 0 : index
    %17 = vector.load %arg7[%c1_24, %c1_25, %c0_26] : memref<18x18x128xf32, #tpu.memory_space<vmem>>, vector<16x16x128xf32>
    %18 = vector.shape_cast %17 : vector<16x16x128xf32> to vector<256x128xf32>
    %c0_27 = arith.constant 0 : index
    %c512 = arith.constant 512 : index
    %19 = vector.load %arg9[%c0_27, %c512] : memref<256x1152xf32, #tpu.memory_space<vmem>>, vector<256x128xf32>
    tpu.vector_store %arg9[%c0_27, %c512], %18 {strides = array<i32>} : memref<256x1152xf32, #tpu.memory_space<vmem>>, vector<256x128xf32>,
    %c1_28 = arith.constant 1 : index
    %c2_29 = arith.constant 2 : index
    %c0_30 = arith.constant 0 : index
    %20 = vector.load %arg7[%c1_28, %c2_29, %c0_30] : memref<18x18x128xf32, #tpu.memory_space<vmem>>, vector<16x16x128xf32>
    %21 = vector.shape_cast %20 : vector<16x16x128xf32> to vector<256x128xf32>
    %c0_31 = arith.constant 0 : index
    %c640 = arith.constant 640 : index
    %22 = vector.load %arg9[%c0_31, %c640] : memref<256x1152xf32, #tpu.memory_space<vmem>>, vector<256x128xf32>
    tpu.vector_store %arg9[%c0_31, %c640], %21 {strides = array<i32>} : memref<256x1152xf32, #tpu.memory_space<vmem>>, vector<256x128xf32>,
    %c2_32 = arith.constant 2 : index
    %c0_33 = arith.constant 0 : index
    %c0_34 = arith.constant 0 : index
    %23 = vector.load %arg7[%c2_32, %c0_33, %c0_34] : memref<18x18x128xf32, #tpu.memory_space<vmem>>, vector<16x16x128xf32>
    %24 = vector.shape_cast %23 : vector<16x16x128xf32> to vector<256x128xf32>
    %c0_35 = arith.constant 0 : index
    %c768 = arith.constant 768 : index
    %25 = vector.load %arg9[%c0_35, %c768] : memref<256x1152xf32, #tpu.memory_space<vmem>>, vector<256x128xf32>
    tpu.vector_store %arg9[%c0_35, %c768], %24 {strides = array<i32>} : memref<256x1152xf32, #tpu.memory_space<vmem>>, vector<256x128xf32>,
    %c2_36 = arith.constant 2 : index
    %c1_37 = arith.constant 1 : index
    %c0_38 = arith.constant 0 : index
    %26 = vector.load %arg7[%c2_36, %c1_37, %c0_38] : memref<18x18x128xf32, #tpu.memory_space<vmem>>, vector<16x16x128xf32>
    %27 = vector.shape_cast %26 : vector<16x16x128xf32> to vector<256x128xf32>
    %c0_39 = arith.constant 0 : index
    %c896 = arith.constant 896 : index
    %28 = vector.load %arg9[%c0_39, %c896] : memref<256x1152xf32, #tpu.memory_space<vmem>>, vector<256x128xf32>
    tpu.vector_store %arg9[%c0_39, %c896], %27 {strides = array<i32>} : memref<256x1152xf32, #tpu.memory_space<vmem>>, vector<256x128xf32>,
    %c2_40 = arith.constant 2 : index
    %c2_41 = arith.constant 2 : index
    %c0_42 = arith.constant 0 : index
    %29 = vector.load %arg7[%c2_40, %c2_41, %c0_42] : memref<18x18x128xf32, #tpu.memory_space<vmem>>, vector<16x16x128xf32>
    %30 = vector.shape_cast %29 : vector<16x16x128xf32> to vector<256x128xf32>
    %c0_43 = arith.constant 0 : index
    %c1024 = arith.constant 1024 : index
    %31 = vector.load %arg9[%c0_43, %c1024] : memref<256x1152xf32, #tpu.memory_space<vmem>>, vector<256x128xf32>
    tpu.vector_store %arg9[%c0_43, %c1024], %30 {strides = array<i32>} : memref<256x1152xf32, #tpu.memory_space<vmem>>, vector<256x128xf32>,
    %c0_44 = arith.constant 0 : index
    %c0_45 = arith.constant 0 : index
    %32 = vector.load %arg9[%c0_44, %c0_45] : memref<256x1152xf32, #tpu.memory_space<vmem>>, vector<256x1152xf32>
    %c0_46 = arith.constant 0 : index
    %c0_47 = arith.constant 0 : index
    %33 = vector.load %arg2[%c0_46, %c0_47] : memref<1152x128xf32, #tpu.memory_space<vmem>>, vector<1152x128xf32>
    %cst_48 = arith.constant dense<0.000000e+00> : vector<256x128xf32>
    %34 = tpu.matmul %32, %33, %cst_48 {dimension_numbers = #tpu.dot_dimension_numbers<[1], [0], [0], [1], [0, 0, 1, 1], [], []>} : vector<256x1152xf32>, vector<1152x128xf32>, vector<256x128xf32> -> vector<256x128xf32>
    %c0_49 = arith.constant 0 : index
    %c0_50 = arith.constant 0 : index
    %35 = vector.load %arg3[%c0_49, %c0_50] : memref<1x128xf32, #tpu.memory_space<vmem>>, vector<1x128xf32>
    %36 = vector.broadcast %35 : vector<1x128xf32> to vector<256x128xf32>
    %37 = arith.addf %34, %36 : vector<256x128xf32>
    %cst_51 = arith.constant 0.000000e+00 : f32
    %38 = vector.broadcast %cst_51 : f32 to vector<256x128xf32>
    %39 = arith.maximumf %37, %38 : vector<256x128xf32>
    %cst_52 = arith.constant 0.000000e+00 : f32
    %40 = vector.broadcast %cst_52 : f32 to vector<18x18x128xf32>
    %c0_53 = arith.constant 0 : index
    %c0_54 = arith.constant 0 : index
    %c0_55 = arith.constant 0 : index
    %41 = vector.load %arg8[%c0_53, %c0_54, %c0_55] : memref<18x18x128xf32, #tpu.memory_space<vmem>>, vector<18x18x128xf32>
    tpu.vector_store %arg8[%c0_53, %c0_54, %c0_55], %40 {strides = array<i32>} : memref<18x18x128xf32, #tpu.memory_space<vmem>>, vector<18x18x128xf32>,
    %42 = vector.shape_cast %39 : vector<256x128xf32> to vector<16x16x128xf32>
    %c1_56 = arith.constant 1 : index
    %c1_57 = arith.constant 1 : index
    %c0_58 = arith.constant 0 : index
    %43 = vector.load %arg8[%c1_56, %c1_57, %c0_58] : memref<18x18x128xf32, #tpu.memory_space<vmem>>, vector<16x16x128xf32>
    tpu.vector_store %arg8[%c1_56, %c1_57, %c0_58], %42 {strides = array<i32>} : memref<18x18x128xf32, #tpu.memory_space<vmem>>, vector<16x16x128xf32>,
    %c0_59 = arith.constant 0 : index
    %c0_60 = arith.constant 0 : index
    %c0_61 = arith.constant 0 : index
    %44 = vector.load %arg8[%c0_59, %c0_60, %c0_61] : memref<18x18x128xf32, #tpu.memory_space<vmem>>, vector<16x16x128xf32>
    %45 = vector.shape_cast %44 : vector<16x16x128xf32> to vector<256x128xf32>
    %c0_62 = arith.constant 0 : index
    %c0_63 = arith.constant 0 : index
    %46 = vector.load %arg10[%c0_62, %c0_63] : memref<256x1152xf32, #tpu.memory_space<vmem>>, vector<256x128xf32>
    tpu.vector_store %arg10[%c0_62, %c0_63], %45 {strides = array<i32>} : memref<256x1152xf32, #tpu.memory_space<vmem>>, vector<256x128xf32>,
    %c0_64 = arith.constant 0 : index
    %c1_65 = arith.constant 1 : index
    %c0_66 = arith.constant 0 : index
    %47 = vector.load %arg8[%c0_64, %c1_65, %c0_66] : memref<18x18x128xf32, #tpu.memory_space<vmem>>, vector<16x16x128xf32>
    %48 = vector.shape_cast %47 : vector<16x16x128xf32> to vector<256x128xf32>
    %c0_67 = arith.constant 0 : index
    %c128_68 = arith.constant 128 : index
    %49 = vector.load %arg10[%c0_67, %c128_68] : memref<256x1152xf32, #tpu.memory_space<vmem>>, vector<256x128xf32>
    tpu.vector_store %arg10[%c0_67, %c128_68], %48 {strides = array<i32>} : memref<256x1152xf32, #tpu.memory_space<vmem>>, vector<256x128xf32>,
    %c0_69 = arith.constant 0 : index
    %c2_70 = arith.constant 2 : index
    %c0_71 = arith.constant 0 : index
    %50 = vector.load %arg8[%c0_69, %c2_70, %c0_71] : memref<18x18x128xf32, #tpu.memory_space<vmem>>, vector<16x16x128xf32>
    %51 = vector.shape_cast %50 : vector<16x16x128xf32> to vector<256x128xf32>
    %c0_72 = arith.constant 0 : index
    %c256_73 = arith.constant 256 : index
    %52 = vector.load %arg10[%c0_72, %c256_73] : memref<256x1152xf32, #tpu.memory_space<vmem>>, vector<256x128xf32>
    tpu.vector_store %arg10[%c0_72, %c256_73], %51 {strides = array<i32>} : memref<256x1152xf32, #tpu.memory_space<vmem>>, vector<256x128xf32>,
    %c1_74 = arith.constant 1 : index
    %c0_75 = arith.constant 0 : index
    %c0_76 = arith.constant 0 : index
    %53 = vector.load %arg8[%c1_74, %c0_75, %c0_76] : memref<18x18x128xf32, #tpu.memory_space<vmem>>, vector<16x16x128xf32>
    %54 = vector.shape_cast %53 : vector<16x16x128xf32> to vector<256x128xf32>
    %c0_77 = arith.constant 0 : index
    %c384_78 = arith.constant 384 : index
    %55 = vector.load %arg10[%c0_77, %c384_78] : memref<256x1152xf32, #tpu.memory_space<vmem>>, vector<256x128xf32>
    tpu.vector_store %arg10[%c0_77, %c384_78], %54 {strides = array<i32>} : memref<256x1152xf32, #tpu.memory_space<vmem>>, vector<256x128xf32>,
    %c1_79 = arith.constant 1 : index
    %c1_80 = arith.constant 1 : index
    %c0_81 = arith.constant 0 : index
    %56 = vector.load %arg8[%c1_79, %c1_80, %c0_81] : memref<18x18x128xf32, #tpu.memory_space<vmem>>, vector<16x16x128xf32>
    %57 = vector.shape_cast %56 : vector<16x16x128xf32> to vector<256x128xf32>
    %c0_82 = arith.constant 0 : index
    %c512_83 = arith.constant 512 : index
    %58 = vector.load %arg10[%c0_82, %c512_83] : memref<256x1152xf32, #tpu.memory_space<vmem>>, vector<256x128xf32>
    tpu.vector_store %arg10[%c0_82, %c512_83], %57 {strides = array<i32>} : memref<256x1152xf32, #tpu.memory_space<vmem>>, vector<256x128xf32>,
    %c1_84 = arith.constant 1 : index
    %c2_85 = arith.constant 2 : index
    %c0_86 = arith.constant 0 : index
    %59 = vector.load %arg8[%c1_84, %c2_85, %c0_86] : memref<18x18x128xf32, #tpu.memory_space<vmem>>, vector<16x16x128xf32>
    %60 = vector.shape_cast %59 : vector<16x16x128xf32> to vector<256x128xf32>
    %c0_87 = arith.constant 0 : index
    %c640_88 = arith.constant 640 : index
    %61 = vector.load %arg10[%c0_87, %c640_88] : memref<256x1152xf32, #tpu.memory_space<vmem>>, vector<256x128xf32>
    tpu.vector_store %arg10[%c0_87, %c640_88], %60 {strides = array<i32>} : memref<256x1152xf32, #tpu.memory_space<vmem>>, vector<256x128xf32>,
    %c2_89 = arith.constant 2 : index
    %c0_90 = arith.constant 0 : index
    %c0_91 = arith.constant 0 : index
    %62 = vector.load %arg8[%c2_89, %c0_90, %c0_91] : memref<18x18x128xf32, #tpu.memory_space<vmem>>, vector<16x16x128xf32>
    %63 = vector.shape_cast %62 : vector<16x16x128xf32> to vector<256x128xf32>
    %c0_92 = arith.constant 0 : index
    %c768_93 = arith.constant 768 : index
    %64 = vector.load %arg10[%c0_92, %c768_93] : memref<256x1152xf32, #tpu.memory_space<vmem>>, vector<256x128xf32>
    tpu.vector_store %arg10[%c0_92, %c768_93], %63 {strides = array<i32>} : memref<256x1152xf32, #tpu.memory_space<vmem>>, vector<256x128xf32>,
    %c2_94 = arith.constant 2 : index
    %c1_95 = arith.constant 1 : index
    %c0_96 = arith.constant 0 : index
    %65 = vector.load %arg8[%c2_94, %c1_95, %c0_96] : memref<18x18x128xf32, #tpu.memory_space<vmem>>, vector<16x16x128xf32>
    %66 = vector.shape_cast %65 : vector<16x16x128xf32> to vector<256x128xf32>
    %c0_97 = arith.constant 0 : index
    %c896_98 = arith.constant 896 : index
    %67 = vector.load %arg10[%c0_97, %c896_98] : memref<256x1152xf32, #tpu.memory_space<vmem>>, vector<256x128xf32>
    tpu.vector_store %arg10[%c0_97, %c896_98], %66 {strides = array<i32>} : memref<256x1152xf32, #tpu.memory_space<vmem>>, vector<256x128xf32>,
    %c2_99 = arith.constant 2 : index
    %c2_100 = arith.constant 2 : index
    %c0_101 = arith.constant 0 : index
    %68 = vector.load %arg8[%c2_99, %c2_100, %c0_101] : memref<18x18x128xf32, #tpu.memory_space<vmem>>, vector<16x16x128xf32>
    %69 = vector.shape_cast %68 : vector<16x16x128xf32> to vector<256x128xf32>
    %c0_102 = arith.constant 0 : index
    %c1024_103 = arith.constant 1024 : index
    %70 = vector.load %arg10[%c0_102, %c1024_103] : memref<256x1152xf32, #tpu.memory_space<vmem>>, vector<256x128xf32>
    tpu.vector_store %arg10[%c0_102, %c1024_103], %69 {strides = array<i32>} : memref<256x1152xf32, #tpu.memory_space<vmem>>, vector<256x128xf32>,
    %c0_104 = arith.constant 0 : index
    %c0_105 = arith.constant 0 : index
    %71 = vector.load %arg10[%c0_104, %c0_105] : memref<256x1152xf32, #tpu.memory_space<vmem>>, vector<256x1152xf32>
    %c0_106 = arith.constant 0 : index
    %c0_107 = arith.constant 0 : index
    %72 = vector.load %arg4[%c0_106, %c0_107] : memref<1152x128xf32, #tpu.memory_space<vmem>>, vector<1152x128xf32>
    %cst_108 = arith.constant dense<0.000000e+00> : vector<256x128xf32>
    %73 = tpu.matmul %71, %72, %cst_108 {dimension_numbers = #tpu.dot_dimension_numbers<[1], [0], [0], [1], [0, 0, 1, 1], [], []>} : vector<256x1152xf32>, vector<1152x128xf32>, vector<256x128xf32> -> vector<256x128xf32>
    %c0_109 = arith.constant 0 : index
    %c0_110 = arith.constant 0 : index
    %74 = vector.load %arg5[%c0_109, %c0_110] : memref<1x128xf32, #tpu.memory_space<vmem>>, vector<1x128xf32>
    %75 = vector.broadcast %74 : vector<1x128xf32> to vector<256x128xf32>
    %76 = arith.addf %73, %75 : vector<256x128xf32>
    %cst_111 = arith.constant 0.000000e+00 : f32
    %77 = vector.broadcast %cst_111 : f32 to vector<256x128xf32>
    %78 = arith.maximumf %76, %77 : vector<256x128xf32>
    %79 = vector.shape_cast %78 : vector<256x128xf32> to vector<16x16x128xf32>
    %c0_112 = arith.constant 0 : index
    %c0_113 = arith.constant 0 : index
    %c0_114 = arith.constant 0 : index
    %c0_115 = arith.constant 0 : index
    %80 = vector.load %arg6[%c0_112, %c0_113, %c0_114, %c0_115] : memref<1x16x16x128xf32, #tpu.memory_space<vmem>>, vector<1x16x16x128xf32>
    %81 = vector.shape_cast %80 : vector<1x16x16x128xf32> to vector<16x16x128xf32>
    %82 = vector.shape_cast %79 : vector<16x16x128xf32> to vector<1x16x16x128xf32>
    tpu.vector_store %arg6[%c0_112, %c0_113, %c0_114, %c0_115], %82 {strides = array<i32>} : memref<1x16x16x128xf32, #tpu.memory_space<vmem>>, vector<1x16x16x128xf32>,
    return
  }
  func.func @transform_0(%arg0: i32) -> (i32, i32, i32, i32) {
    %c0_i32 = arith.constant 0 : i32
    %c0_i32_0 = arith.constant 0 : i32
    %c0_i32_1 = arith.constant 0 : i32
    %c0_i32_2 = arith.constant 0 : i32
    return %arg0, %c0_i32, %c0_i32_0, %c0_i32_1 : i32, i32, i32, i32
  }
  func.func @transform_1(%arg0: i32) -> (i32, i32) {
    %c0_i32 = arith.constant 0 : i32
    %c0_i32_0 = arith.constant 0 : i32
    %c0_i32_1 = arith.constant 0 : i32
    return %c0_i32, %c0_i32_0 : i32, i32
  }
  func.func @transform_2(%arg0: i32) -> (i32, i32) {
    %c0_i32 = arith.constant 0 : i32
    %c0_i32_0 = arith.constant 0 : i32
    %c0_i32_1 = arith.constant 0 : i32
    return %c0_i32, %c0_i32_0 : i32, i32
  }
  func.func @transform_3(%arg0: i32) -> (i32, i32) {
    %c0_i32 = arith.constant 0 : i32
    %c0_i32_0 = arith.constant 0 : i32
    %c0_i32_1 = arith.constant 0 : i32
    return %c0_i32, %c0_i32_0 : i32, i32
  }
  func.func @transform_4(%arg0: i32) -> (i32, i32) {
    %c0_i32 = arith.constant 0 : i32
    %c0_i32_0 = arith.constant 0 : i32
    %c0_i32_1 = arith.constant 0 : i32
    return %c0_i32, %c0_i32_0 : i32, i32
  }
  func.func @transform_5(%arg0: i32) -> (i32, i32, i32, i32) {
    %c0_i32 = arith.constant 0 : i32
    %c0_i32_0 = arith.constant 0 : i32
    %c0_i32_1 = arith.constant 0 : i32
    %c0_i32_2 = arith.constant 0 : i32
    return %arg0, %c0_i32, %c0_i32_0, %c0_i32_1 : i32, i32, i32, i32
  }
}

</mosaic_0001>

<llo_original>
// kernel: double_conv.1
$region0: #{double_conv.1}
  #allocation0 [shape = 'u32[]', space=smem, size = 0x4, offset = 0x4, fixed_abs, tag = 'smem constant byte address 0x4 - core index']
  #allocation1 [shape = 'u32[144,128]{1,0:T(1,128)}', space=vmem, size = 0x12000, scoped, tag = 'internal scratch']
  #allocation2 [shape = 'f32[18,18,128]{2,1,0:T(8,128)}', space=vmem, size = 0x36000, scoped, tag = 'scratch operand']
  #allocation3 [shape = 'f32[18,18,128]{2,1,0:T(8,128)}', space=vmem, size = 0x36000, scoped, tag = 'scratch operand']
  #allocation4 [shape = 'f32[256,1152]{1,0:T(8,128)}', space=vmem, size = 0x120000, scoped, tag = 'scratch operand']
  #allocation5 [shape = 'f32[256,1152]{1,0:T(8,128)}', space=vmem, size = 0x120000, scoped, tag = 'scratch operand']
  %s0 = inlined_call_operand.vmem [shape: f32[2,16,16,4], index: 0, kind: input, shape index: {}]
  %s1 = inlined_call_operand.hbm [shape: f32[1152,128], index: 1, kind: input, shape index: {}]
  %s2 = inlined_call_operand.vmem [shape: f32[1,128], index: 2, kind: input, shape index: {}]
  %s3 = inlined_call_operand.hbm [shape: f32[1152,128], index: 3, kind: input, shape index: {}]
  %s4 = inlined_call_operand.vmem [shape: f32[1,128], index: 4, kind: input, shape index: {}]
  %s5 = inlined_call_operand.vmem [shape: f32[2,16,16,128], index: 5, kind: output, shape index: {}]
  %s6 = sld [smem:[#allocation0]]
  $region61: #{double_conv.1} parent=0
    _
  %s8 = ssub.s32 1, %s6
  %s9 = scalar_select 0, %s8, %s6
  $region1: #{double_conv.1} parent=0
    #allocation6 [shape = 'u8[589824]{0}', space=vmem, size = 0x90000, scoped, tag = 'input window, operand 1, single buffered']
    #allocation7 [shape = 's32[2]{0}', space=sflag, size = 0x8, scoped, tag = 'scoped memory for double_conv.1']
    #allocation8 [shape = 'u8[589824]{0}', space=vmem, size = 0x90000, scoped, tag = 'input window, operand 3, single buffered']
    #allocation9 [shape = 's32[1]{0}', space=sflag, size = 0x4, scoped, tag = 'scoped memory for double_conv.1']
    %10 = vsyncpa [#allocation7], 0
    %11 = vsyncpa [#allocation9], 0
    loop: start=0, step=1, limit=4
    $region2: #{double_conv.1} parent=1 // loop_pre_header
      _
    $region3: #{double_conv.1} parent=1 // loop_header
      %s13 = sphi 0, %s17
      %p14 = scmp.ge.s32.totalorder %s13, 4
      %s23 = sphi 0, %s25
      %s26 = sphi 0, %s23
      %s27 = sphi 0, %s26
      %s43 = sphi 0, %s27
      %s47 = sphi 0, %s47
      %s49 = sphi 0, %s47
      %s50 = sphi 0, %s49
      %s64 = sphi 0, %s50
      %s68 = sphi 0, %s68
      %s70 = sphi 0, %s68
      %s71 = sphi 0, %s70
      %s85 = sphi 0, %s71
      %s89 = sphi 0, %s89
      %s91 = sphi 0, %s89
      %s92 = sphi 0, %s91
      %s106 = sphi 0, %s92
      %s110 = sphi 0, %s110
      %s112 = sphi 0, %s110
      %s113 = sphi 0, %s112
      %s127 = sphi 0, %s113
      %s133 = sphi 0, %s135
      %s136 = sphi 0, %s133
      %s137 = sphi 0, %s136
      %s153 = sphi 0, %s137
    $region4: #{double_conv.1} parent=1 // loop_header_branch
      %16 = sbr.rel (%p14) target = $region8
    $region5: #{double_conv.1} parent=1 // loop_body
      %s18 = ssub.s32 %s13, 1
      %s19 = ssub.s32 %s13, 2
      %s20 = sadd.s32 %s13, 1
      %s21 = ssub.s32 %s13, %s20
      %p22 = scmp.eq.s32.totalorder %s21, 0
      %s24 = sadd.s32 %s23, 1
      %s25 = scalar_select %p22, %s23, %s24
      %p28 = pneg %p22
      %p29 = scmp.eq.s32.totalorder %s13, 1
      %p30 = por %p28, %p29
      %p31 = scmp.ne.s32.totalorder %s23, %s26
      %p32 = scmp.eq.s32.totalorder %s13, 0
      %p33 = por %p31, %p32
      %p34 = scmp.ne.s32.totalorder %s23, %s26
      %p35 = scmp.eq.s32.totalorder %s18, 1
      %p36 = por %p34, %p35
      %p37 = scmp.ne.s32.totalorder %s26, %s27
      %p38 = scmp.eq.s32.totalorder %s18, 0
      %p39 = por %p37, %p38
      %p40 = scmp.ne.s32.totalorder %s26, %s27
      %p41 = scmp.eq.s32.totalorder %s19, 1
      %p42 = por %p40, %p41
      %p44 = scmp.ne.s32.totalorder %s27, %s43
      %p45 = scmp.eq.s32.totalorder %s19, 0
      %p46 = por %p44, %p45
      %s48 = sadd.s32 %s47, 1
      %p51 = scmp.eq.s32.totalorder %s13, 1
      %p52 = scmp.ne.s32.totalorder %s47, %s49
      %p53 = scmp.eq.s32.totalorder %s13, 0
      %p54 = por %p52, %p53
      %p55 = scmp.ne.s32.totalorder %s47, %s49
      %p56 = scmp.eq.s32.totalorder %s18, 1
      %p57 = por %p55, %p56
      %p58 = scmp.ne.s32.totalorder %s49, %s50
      %p59 = scmp.eq.s32.totalorder %s18, 0
      %p60 = por %p58, %p59
      %p61 = scmp.ne.s32.totalorder %s49, %s50
      %p62 = scmp.eq.s32.totalorder %s19, 1
      %p63 = por %p61, %p62
      %p65 = scmp.ne.s32.totalorder %s50, %s64
      %p66 = scmp.eq.s32.totalorder %s19, 0
      %p67 = por %p65, %p66
      %s69 = sadd.s32 %s68, 1
      %p72 = scmp.eq.s32.totalorder %s13, 1
      %p73 = scmp.ne.s32.totalorder %s68, %s70
      %p74 = scmp.eq.s32.totalorder %s13, 0
      %p75 = por %p73, %p74
      %p76 = scmp.ne.s32.totalorder %s68, %s70
      %p77 = scmp.eq.s32.totalorder %s18, 1
      %p78 = por %p76, %p77
      %p79 = scmp.ne.s32.totalorder %s70, %s71
      %p80 = scmp.eq.s32.totalorder %s18, 0
      %p81 = por %p79, %p80
      %p82 = scmp.ne.s32.totalorder %s70, %s71
      %p83 = scmp.eq.s32.totalorder %s19, 1
      %p84 = por %p82, %p83
      %p86 = scmp.ne.s32.totalorder %s71, %s85
      %p87 = scmp.eq.s32.totalorder %s19, 0
      %p88 = por %p86, %p87
      %s90 = sadd.s32 %s89, 1
      %p93 = scmp.eq.s32.totalorder %s13, 1
      %p94 = scmp.ne.s32.totalorder %s89, %s91
      %p95 = scmp.eq.s32.totalorder %s13, 0
      %p96 = por %p94, %p95
      %p97 = scmp.ne.s32.totalorder %s89, %s91
      %p98 = scmp.eq.s32.totalorder %s18, 1
      %p99 = por %p97, %p98
      %p100 = scmp.ne.s32.totalorder %s91, %s92
      %p101 = scmp.eq.s32.totalorder %s18, 0
      %p102 = por %p100, %p101
      %p103 = scmp.ne.s32.totalorder %s91, %s92
      %p104 = scmp.eq.s32.totalorder %s19, 1
      %p105 = por %p103, %p104
      %p107 = scmp.ne.s32.totalorder %s92, %s106
      %p108 = scmp.eq.s32.totalorder %s19, 0
      %p109 = por %p107, %p108
      %s111 = sadd.s32 %s110, 1
      %p114 = scmp.eq.s32.totalorder %s13, 1
      %p115 = scmp.ne.s32.totalorder %s110, %s112
      %p116 = scmp.eq.s32.totalorder %s13, 0
      %p117 = por %p115, %p116
      %p118 = scmp.ne.s32.totalorder %s110, %s112
      %p119 = scmp.eq.s32.totalorder %s18, 1
      %p120 = por %p118, %p119
      %p121 = scmp.ne.s32.totalorder %s112, %s113
      %p122 = scmp.eq.s32.totalorder %s18, 0
      %p123 = por %p121, %p122
      %p124 = scmp.ne.s32.totalorder %s112, %s113
      %p125 = scmp.eq.s32.totalorder %s19, 1
      %p126 = por %p124, %p125
      %p128 = scmp.ne.s32.totalorder %s113, %s127
      %p129 = scmp.eq.s32.totalorder %s19, 0
      %p130 = por %p128, %p129
      %s131 = ssub.s32 %s13, %s20
      %p132 = scmp.eq.s32.totalorder %s131, 0
      %s134 = sadd.s32 %s133, 1
      %s135 = scalar_select %p132, %s133, %s134
      %p138 = pneg %p132
      %p139 = scmp.eq.s32.totalorder %s13, 1
      %p140 = por %p138, %p139
      %p141 = scmp.ne.s32.totalorder %s133, %s136
      %p142 = scmp.eq.s32.totalorder %s13, 0
      %p143 = por %p141, %p142
      %p144 = scmp.ne.s32.totalorder %s133, %s136
      %p145 = scmp.eq.s32.totalorder %s18, 1
      %p146 = por %p144, %p145
      %p147 = scmp.ne.s32.totalorder %s136, %s137
      %p148 = scmp.eq.s32.totalorder %s18, 0
      %p149 = por %p147, %p148
      %p150 = scmp.ne.s32.totalorder %s136, %s137
      %p151 = scmp.eq.s32.totalorder %s19, 1
      %p152 = por %p150, %p151
      %p154 = scmp.ne.s32.totalorder %s137, %s153
      %p155 = scmp.eq.s32.totalorder %s19, 0
      %p156 = por %p154, %p155
      %p157 = scmp.le.s32.totalorder 1, %s13
      %p158 = scmp.lt.s32.totalorder %s13, 3
      %p159 = pnand %p157, %p158
      %p160 = pneg %p159
      // Predicated region
      $region9: #{double_conv.1} parent=5 // pred_check
        _
      $region10: #{double_conv.1} parent=5 // pred_check_branch
        %162 = sbr.rel (%p159) target = $region12
      $region11: #{double_conv.1} parent=5 // pred_region
        %s163 = ssub.s32 %s13, 1
        // Predicated region
        $region13: #{double_conv.1} parent=11 // pred_check
          %p164 = pneg %p60
        $region14: #{double_conv.1} parent=11 // pred_check_branch
          %166 = sbr.rel (%p164) target = $region16
        $region15: #{double_conv.1} parent=11 // pred_region
          %s168 = ssub.s32 18432, 18432
          %169 = vsyncadd [#allocation7], %s168
          %s170 = sshll.u32 [#allocation6], 4
          %s171 = int_to_ptr.vmem [resolvable:$true] %s170
          %176 = dma.hbm_to_vmem [thread:$0]  %s1, 18432, %s171, [#allocation7], 128, 128, 8
        $region16: #{double_conv.1} parent=11 // pred_fallthru
          _
        // Predicated region
        $region17: #{double_conv.1} parent=11 // pred_check
          %p177 = pneg %p81
        $region18: #{double_conv.1} parent=11 // pred_check_branch
          %179 = sbr.rel (%p177) target = $region20
        $region19: #{double_conv.1} parent=11 // pred_region
          _
        $region20: #{double_conv.1} parent=11 // pred_fallthru
          _
        // Predicated region
        $region21: #{double_conv.1} parent=11 // pred_check
          %p180 = pneg %p102
        $region22: #{double_conv.1} parent=11 // pred_check_branch
          %182 = sbr.rel (%p180) target = $region24
        $region23: #{double_conv.1} parent=11 // pred_region
          %s184 = ssub.s32 18432, 18432
          %185 = vsyncadd [#allocation9], %s184
          %s186 = sshll.u32 [#allocation8], 4
          %s187 = int_to_ptr.vmem [resolvable:$true] %s186
          %192 = dma.hbm_to_vmem [thread:$0]  %s3, 18432, %s187, [#allocation9], 128, 128, 8
        $region24: #{double_conv.1} parent=11 // pred_fallthru
          _
        // Predicated region
        $region25: #{double_conv.1} parent=11 // pred_check
          %p193 = pneg %p123
        $region26: #{double_conv.1} parent=11 // pred_check_branch
          %195 = sbr.rel (%p193) target = $region28
        $region27: #{double_conv.1} parent=11 // pred_region
          _
        $region28: #{double_conv.1} parent=11 // pred_fallthru
          _
      $region12: #{double_conv.1} parent=5 // pred_fallthru
        _
      %p196 = scmp.lt.s32.totalorder %s13, 2
      // Predicated region
      $region29: #{double_conv.1} parent=5 // pred_check
        %p197 = pneg %p196
      $region30: #{double_conv.1} parent=5 // pred_check_branch
        %199 = sbr.rel (%p197) target = $region32
      $region31: #{double_conv.1} parent=5 // pred_region
        // Predicated region
        $region33: #{double_conv.1} parent=31 // pred_check
          %p200 = pneg %p33
        $region34: #{double_conv.1} parent=31 // pred_check_branch
          %202 = sbr.rel (%p200) target = $region36
        $region35: #{double_conv.1} parent=31 // pred_region
          %p203 = scmp.lt.s32.totalorder %s13, 1
          %s204 = scalar_select %p203, %s13, 1
          %s205 = smul.addr %s204, 32
          %s206 = smul.addr %s205, 8
          %s207 = scalar_lea.vmem %s0, %s206
        $region36: #{double_conv.1} parent=31 // pred_fallthru
          _
      $region32: #{double_conv.1} parent=5 // pred_fallthru
        _
      %p208 = scmp.le.s32.totalorder 1, %s13
      %p209 = scmp.lt.s32.totalorder %s13, 3
      %p210 = pnand %p208, %p209
      %p211 = pneg %p210
      // Predicated region
      $region37: #{double_conv.1} parent=5 // pred_check
        _
      $region38: #{double_conv.1} parent=5 // pred_check_branch
        %213 = sbr.rel (%p210) target = $region40
      $region39: #{double_conv.1} parent=5 // pred_region
        %s214 = ssub.s32 %s13, 1
        // Predicated region
        $region41: #{double_conv.1} parent=39 // pred_check
          %p215 = pneg %p60
        $region42: #{double_conv.1} parent=39 // pred_check_branch
          %217 = sbr.rel (%p215) target = $region44
        $region43: #{double_conv.1} parent=39 // pred_region
          %218 = dma.done [#allocation7], 18432
        $region44: #{double_conv.1} parent=39 // pred_fallthru
          _
        // Predicated region
        $region45: #{double_conv.1} parent=39 // pred_check
          %p219 = pneg %p102
        $region46: #{double_conv.1} parent=39 // pred_check_branch
          %221 = sbr.rel (%p219) target = $region48
        $region47: #{double_conv.1} parent=39 // pred_region
          %222 = dma.done [#allocation9], 18432
        $region48: #{double_conv.1} parent=39 // pred_fallthru
          _
        %p223 = scmp.lt.s32.totalorder %s18, 1
        %s224 = scalar_select %p223, %s18, 1
        %s225 = smul.addr %s224, 32
        %s226 = smul.addr %s225, 8
        %s227 = scalar_lea.vmem %s0, %s226
        %p228 = pneg %p39
        %p229 = pneg %p36
        %p230 = pneg %p60
        %p231 = pneg %p57
        %p232 = pneg %p81
        %p233 = pneg %p78
        %p234 = pneg %p102
        %p235 = pneg %p99
        %p236 = pneg %p123
        %p237 = pneg %p120
        %p238 = pneg %p149
        %p239 = pneg %p146
        %p240 = scmp.lt.s32.totalorder %s18, 1
        %s241 = scalar_select %p240, %s18, 1
        %s242 = smul.addr %s241, 32
        %s243 = smul.addr %s242, 8
        %s244 = scalar_lea.vmem %s5, %s243
        %p245 = scmp.lt.s32.totalorder %s18, 1
        %s246 = scalar_select %p245, %s18, 1
        %s247 = smul.addr %s246, 32
        %s248 = smul.addr %s247, 8
        %s249 = scalar_lea.vmem %s0, %s248
        %p250 = scmp.lt.s32.totalorder %s18, 1
        %s251 = scalar_select %p250, %s18, 1
        %s252 = smul.addr %s251, 32
        %s253 = smul.addr %s252, 8
        %s254 = scalar_lea.vmem %s5, %s253
        %255 = vst [vmem:[#allocation2] sm:$0xff] 0.0
        %256 = vst [vmem:[#allocation2 + $0x8] sm:$0xff] 0.0
        %257 = vst [vmem:[#allocation2 + $0x10] sm:$0x3] 0.0
        %258 = vst [vmem:[#allocation2 + $0x18] sm:$0xff] 0.0
        %259 = vst [vmem:[#allocation2 + $0x20] sm:$0xff] 0.0
        %260 = vst [vmem:[#allocation2 + $0x28] sm:$0x3] 0.0
        %261 = vst [vmem:[#allocation2 + $0x30] sm:$0xff] 0.0
        %262 = vst [vmem:[#allocation2 + $0x38] sm:$0xff] 0.0
        %263 = vst [vmem:[#allocation2 + $0x40] sm:$0x3] 0.0
        %264 = vst [vmem:[#allocation2 + $0x48] sm:$0xff] 0.0
        %265 = vst [vmem:[#allocation2 + $0x50] sm:$0xff] 0.0
        %266 = vst [vmem:[#allocation2 + $0x58] sm:$0x3] 0.0
        %267 = vst [vmem:[#allocation2 + $0x60] sm:$0xff] 0.0
        %268 = vst [vmem:[#allocation2 + $0x68] sm:$0xff] 0.0
        %269 = vst [vmem:[#allocation2 + $0x70] sm:$0x3] 0.0
        %270 = vst [vmem:[#allocation2 + $0x78] sm:$0xff] 0.0
        %271 = vst [vmem:[#allocation2 + $0x80] sm:$0xff] 0.0
        %272 = vst [vmem:[#allocation2 + $0x88] sm:$0x3] 0.0
        %273 = vst [vmem:[#allocation2 + $0x90] sm:$0xff] 0.0
        %274 = vst [vmem:[#allocation2 + $0x98] sm:$0xff] 0.0
        %275 = vst [vmem:[#allocation2 + $0xa0] sm:$0x3] 0.0
        %276 = vst [vmem:[#allocation2 + $0xa8] sm:$0xff] 0.0
        %277 = vst [vmem:[#allocation2 + $0xb0] sm:$0xff] 0.0
        %278 = vst [vmem:[#allocation2 + $0xb8] sm:$0x3] 0.0
        %279 = vst [vmem:[#allocation2 + $0xc0] sm:$0xff] 0.0
        %280 = vst [vmem:[#allocation2 + $0xc8] sm:$0xff] 0.0
        %281 = vst [vmem:[#allocation2 + $0xd0] sm:$0x3] 0.0
        %282 = vst [vmem:[#allocation2 + $0xd8] sm:$0xff] 0.0
        %283 = vst [vmem:[#allocation2 + $0xe0] sm:$0xff] 0.0
        %284 = vst [vmem:[#allocation2 + $0xe8] sm:$0x3] 0.0
        %285 = vst [vmem:[#allocation2 + $0xf0] sm:$0xff] 0.0
        %286 = vst [vmem:[#allocation2 + $0xf8] sm:$0xff] 0.0
        %287 = vst [vmem:[#allocation2 + $0x100] sm:$0x3] 0.0
        %288 = vst [vmem:[#allocation2 + $0x108] sm:$0xff] 0.0
        %289 = vst [vmem:[#allocation2 + $0x110] sm:$0xff] 0.0
        %290 = vst [vmem:[#allocation2 + $0x118] sm:$0x3] 0.0
        %291 = vst [vmem:[#allocation2 + $0x120] sm:$0xff] 0.0
        %292 = vst [vmem:[#allocation2 + $0x128] sm:$0xff] 0.0
        %293 = vst [vmem:[#allocation2 + $0x130] sm:$0x3] 0.0
        %294 = vst [vmem:[#allocation2 + $0x138] sm:$0xff] 0.0
        %295 = vst [vmem:[#allocation2 + $0x140] sm:$0xff] 0.0
        %296 = vst [vmem:[#allocation2 + $0x148] sm:$0x3] 0.0
        %297 = vst [vmem:[#allocation2 + $0x150] sm:$0xff] 0.0
        %298 = vst [vmem:[#allocation2 + $0x158] sm:$0xff] 0.0
        %299 = vst [vmem:[#allocation2 + $0x160] sm:$0x3] 0.0
        %300 = vst [vmem:[#allocation2 + $0x168] sm:$0xff] 0.0
        %301 = vst [vmem:[#allocation2 + $0x170] sm:$0xff] 0.0
        %302 = vst [vmem:[#allocation2 + $0x178] sm:$0x3] 0.0
        %303 = vst [vmem:[#allocation2 + $0x180] sm:$0xff] 0.0
        %304 = vst [vmem:[#allocation2 + $0x188] sm:$0xff] 0.0
        %305 = vst [vmem:[#allocation2 + $0x190] sm:$0x3] 0.0
        %306 = vst [vmem:[#allocation2 + $0x198] sm:$0xff] 0.0
        %307 = vst [vmem:[#allocation2 + $0x1a0] sm:$0xff] 0.0
        %308 = vst [vmem:[#allocation2 + $0x1a8] sm:$0x3] 0.0
        %v309 = vld [vmem:[%s249] sm:$0xff]
        %v310 = vld [vmem:[%s249 + $0x8] sm:$0xff]
        %v311 = vld [vmem:[%s249 + $0x10] sm:$0xff]
        %v312 = vld [vmem:[%s249 + $0x18] sm:$0xff]
        %v313 = vld [vmem:[%s249 + $0x20] sm:$0xff]
        %v314 = vld [vmem:[%s249 + $0x28] sm:$0xff]
        %v315 = vld [vmem:[%s249 + $0x30] sm:$0xff]
        %v316 = vld [vmem:[%s249 + $0x38] sm:$0xff]
        %v317 = vld [vmem:[%s249 + $0x40] sm:$0xff]
        %v318 = vld [vmem:[%s249 + $0x48] sm:$0xff]
        %v319 = vld [vmem:[%s249 + $0x50] sm:$0xff]
        %v320 = vld [vmem:[%s249 + $0x58] sm:$0xff]
        %v321 = vld [vmem:[%s249 + $0x60] sm:$0xff]
        %v322 = vld [vmem:[%s249 + $0x68] sm:$0xff]
        %v323 = vld [vmem:[%s249 + $0x70] sm:$0xff]
        %v324 = vld [vmem:[%s249 + $0x78] sm:$0xff]
        %v325 = vld [vmem:[%s249 + $0x80] sm:$0xff]
        %v326 = vld [vmem:[%s249 + $0x88] sm:$0xff]
        %v327 = vld [vmem:[%s249 + $0x90] sm:$0xff]
        %v328 = vld [vmem:[%s249 + $0x98] sm:$0xff]
        %v329 = vld [vmem:[%s249 + $0xa0] sm:$0xff]
        %v330 = vld [vmem:[%s249 + $0xa8] sm:$0xff]
        %v331 = vld [vmem:[%s249 + $0xb0] sm:$0xff]
        %v332 = vld [vmem:[%s249 + $0xb8] sm:$0xff]
        %v333 = vld [vmem:[%s249 + $0xc0] sm:$0xff]
        %v334 = vld [vmem:[%s249 + $0xc8] sm:$0xff]
        %v335 = vld [vmem:[%s249 + $0xd0] sm:$0xff]
        %v336 = vld [vmem:[%s249 + $0xd8] sm:$0xff]
        %v337 = vld [vmem:[%s249 + $0xe0] sm:$0xff]
        %v338 = vld [vmem:[%s249 + $0xe8] sm:$0xff]
        %v339 = vld [vmem:[%s249 + $0xf0] sm:$0xff]
        %v340 = vld [vmem:[%s249 + $0xf8] sm:$0xff]
        %s341 = scalar_lea.vmem [#allocation2], 24
        %vm342 = vcmask 31744
        %343 = vst.msk [vmem:[%s341 + $0x1] sm:$0xff] %vm342, %v309
        %344 = vst.msk [vmem:[%s341 + $0x9] sm:$0xff] %vm342, %v310
        %345 = vst.msk [vmem:[%s341 + $0x19] sm:$0xff] %vm342, %v311
        %346 = vst.msk [vmem:[%s341 + $0x21] sm:$0xff] %vm342, %v312
        %347 = vst.msk [vmem:[%s341 + $0x31] sm:$0xff] %vm342, %v313
        %348 = vst.msk [vmem:[%s341 + $0x39] sm:$0xff] %vm342, %v314
        %349 = vst.msk [vmem:[%s341 + $0x49] sm:$0xff] %vm342, %v315
        %350 = vst.msk [vmem:[%s341 + $0x51] sm:$0xff] %vm342, %v316
        %351 = vst.msk [vmem:[%s341 + $0x61] sm:$0xff] %vm342, %v317
        %352 = vst.msk [vmem:[%s341 + $0x69] sm:$0xff] %vm342, %v318
        %353 = vst.msk [vmem:[%s341 + $0x79] sm:$0xff] %vm342, %v319
        %354 = vst.msk [vmem:[%s341 + $0x81] sm:$0xff] %vm342, %v320
        %355 = vst.msk [vmem:[%s341 + $0x91] sm:$0xff] %vm342, %v321
        %356 = vst.msk [vmem:[%s341 + $0x99] sm:$0xff] %vm342, %v322
        %357 = vst.msk [vmem:[%s341 + $0xa9] sm:$0xff] %vm342, %v323
        %358 = vst.msk [vmem:[%s341 + $0xb1] sm:$0xff] %vm342, %v324
        %359 = vst.msk [vmem:[%s341 + $0xc1] sm:$0xff] %vm342, %v325
        %360 = vst.msk [vmem:[%s341 + $0xc9] sm:$0xff] %vm342, %v326
        %361 = vst.msk [vmem:[%s341 + $0xd9] sm:$0xff] %vm342, %v327
        %362 = vst.msk [vmem:[%s341 + $0xe1] sm:$0xff] %vm342, %v328
        %363 = vst.msk [vmem:[%s341 + $0xf1] sm:$0xff] %vm342, %v329
        %364 = vst.msk [vmem:[%s341 + $0xf9] sm:$0xff] %vm342, %v330
        %365 = vst.msk [vmem:[%s341 + $0x109] sm:$0xff] %vm342, %v331
        %366 = vst.msk [vmem:[%s341 + $0x111] sm:$0xff] %vm342, %v332
        %367 = vst.msk [vmem:[%s341 + $0x121] sm:$0xff] %vm342, %v333
        %368 = vst.msk [vmem:[%s341 + $0x129] sm:$0xff] %vm342, %v334
        %369 = vst.msk [vmem:[%s341 + $0x139] sm:$0xff] %vm342, %v335
        %370 = vst.msk [vmem:[%s341 + $0x141] sm:$0xff] %vm342, %v336
        %371 = vst.msk [vmem:[%s341 + $0x151] sm:$0xff] %vm342, %v337
        %372 = vst.msk [vmem:[%s341 + $0x159] sm:$0xff] %vm342, %v338
        %373 = vst.msk [vmem:[%s341 + $0x169] sm:$0xff] %vm342, %v339
        %374 = vst.msk [vmem:[%s341 + $0x171] sm:$0xff] %vm342, %v340
        %v375 = vld [vmem:[#allocation2] sm:$0xff]
        %v376 = vld [vmem:[#allocation2 + $0x8] sm:$0xff]
        %v377 = vld [vmem:[#allocation2 + $0x18] sm:$0xff]
        %v378 = vld [vmem:[#allocation2 + $0x20] sm:$0xff]
        %v379 = vld [vmem:[#allocation2 + $0x30] sm:$0xff]
        %v380 = vld [vmem:[#allocation2 + $0x38] sm:$0xff]
        %v381 = vld [vmem:[#allocation2 + $0x48] sm:$0xff]
        %v382 = vld [vmem:[#allocation2 + $0x50] sm:$0xff]
        %v383 = vld [vmem:[#allocation2 + $0x60] sm:$0xff]
        %v384 = vld [vmem:[#allocation2 + $0x68] sm:$0xff]
        %v385 = vld [vmem:[#allocation2 + $0x78] sm:$0xff]
        %v386 = vld [vmem:[#allocation2 + $0x80] sm:$0xff]
        %v387 = vld [vmem:[#allocation2 + $0x90] sm:$0xff]
        %v388 = vld [vmem:[#allocation2 + $0x98] sm:$0xff]
        %v389 = vld [vmem:[#allocation2 + $0xa8] sm:$0xff]
        %v390 = vld [vmem:[#allocation2 + $0xb0] sm:$0xff]
        %v391 = vld [vmem:[#allocation2 + $0xc0] sm:$0xff]
        %v392 = vld [vmem:[#allocation2 + $0xc8] sm:$0xff]
        %v393 = vld [vmem:[#allocation2 + $0xd8] sm:$0xff]
        %v394 = vld [vmem:[#allocation2 + $0xe0] sm:$0xff]
        %v395 = vld [vmem:[#allocation2 + $0xf0] sm:$0xff]
        %v396 = vld [vmem:[#allocation2 + $0xf8] sm:$0xff]
        %v397 = vld [vmem:[#allocation2 + $0x108] sm:$0xff]
        %v398 = vld [vmem:[#allocation2 + $0x110] sm:$0xff]
        %v399 = vld [vmem:[#allocation2 + $0x120] sm:$0xff]
        %v400 = vld [vmem:[#allocation2 + $0x128] sm:$0xff]
        %v401 = vld [vmem:[#allocation2 + $0x138] sm:$0xff]
        %v402 = vld [vmem:[#allocation2 + $0x140] sm:$0xff]
        %v403 = vld [vmem:[#allocation2 + $0x150] sm:$0xff]
        %v404 = vld [vmem:[#allocation2 + $0x158] sm:$0xff]
        %v405 = vld [vmem:[#allocation2 + $0x168] sm:$0xff]
        %v406 = vld [vmem:[#allocation2 + $0x170] sm:$0xff]
        %407 = vst [vmem:[#allocation4] sm:$0xff] %v375
        %408 = vst [vmem:[#allocation4 + $0x48] sm:$0xff] %v376
        %409 = vst [vmem:[#allocation4 + $0x90] sm:$0xff] %v377
        %410 = vst [vmem:[#allocation4 + $0xd8] sm:$0xff] %v378
        %411 = vst [vmem:[#allocation4 + $0x120] sm:$0xff] %v379
        %412 = vst [vmem:[#allocation4 + $0x168] sm:$0xff] %v380
        %413 = vst [vmem:[#allocation4 + $0x1b0] sm:$0xff] %v381
        %414 = vst [vmem:[#allocation4 + $0x1f8] sm:$0xff] %v382
        %415 = vst [vmem:[#allocation4 + $0x240] sm:$0xff] %v383
        %416 = vst [vmem:[#allocation4 + $0x288] sm:$0xff] %v384
        %417 = vst [vmem:[#allocation4 + $0x2d0] sm:$0xff] %v385
        %418 = vst [vmem:[#allocation4 + $0x318] sm:$0xff] %v386
        %419 = vst [vmem:[#allocation4 + $0x360] sm:$0xff] %v387
        %420 = vst [vmem:[#allocation4 + $0x3a8] sm:$0xff] %v388
        %421 = vst [vmem:[#allocation4 + $0x3f0] sm:$0xff] %v389
        %422 = vst [vmem:[#allocation4 + $0x438] sm:$0xff] %v390
        %423 = vst [vmem:[#allocation4 + $0x480] sm:$0xff] %v391
        %424 = vst [vmem:[#allocation4 + $0x4c8] sm:$0xff] %v392
        %425 = vst [vmem:[#allocation4 + $0x510] sm:$0xff] %v393
        %426 = vst [vmem:[#allocation4 + $0x558] sm:$0xff] %v394
        %427 = vst [vmem:[#allocation4 + $0x5a0] sm:$0xff] %v395
        %428 = vst [vmem:[#allocation4 + $0x5e8] sm:$0xff] %v396
        %429 = vst [vmem:[#allocation4 + $0x630] sm:$0xff] %v397
        %430 = vst [vmem:[#allocation4 + $0x678] sm:$0xff] %v398
        %431 = vst [vmem:[#allocation4 + $0x6c0] sm:$0xff] %v399
        %432 = vst [vmem:[#allocation4 + $0x708] sm:$0xff] %v400
        %433 = vst [vmem:[#allocation4 + $0x750] sm:$0xff] %v401
        %434 = vst [vmem:[#allocation4 + $0x798] sm:$0xff] %v402
        %435 = vst [vmem:[#allocation4 + $0x7e0] sm:$0xff] %v403
        %436 = vst [vmem:[#allocation4 + $0x828] sm:$0xff] %v404
        %437 = vst [vmem:[#allocation4 + $0x870] sm:$0xff] %v405
        %438 = vst [vmem:[#allocation4 + $0x8b8] sm:$0xff] %v406
        %v439 = vld [vmem:[#allocation2 + $0x1] sm:$0xff]
        %v440 = vld [vmem:[#allocation2 + $0x9] sm:$0xff]
        %v441 = vld [vmem:[#allocation2 + $0x19] sm:$0xff]
        %v442 = vld [vmem:[#allocation2 + $0x21] sm:$0xff]
        %v443 = vld [vmem:[#allocation2 + $0x31] sm:$0xff]
        %v444 = vld [vmem:[#allocation2 + $0x39] sm:$0xff]
        %v445 = vld [vmem:[#allocation2 + $0x49] sm:$0xff]
        %v446 = vld [vmem:[#allocation2 + $0x51] sm:$0xff]
        %v447 = vld [vmem:[#allocation2 + $0x61] sm:$0xff]
        %v448 = vld [vmem:[#allocation2 + $0x69] sm:$0xff]
        %v449 = vld [vmem:[#allocation2 + $0x79] sm:$0xff]
        %v450 = vld [vmem:[#allocation2 + $0x81] sm:$0xff]
        %v451 = vld [vmem:[#allocation2 + $0x91] sm:$0xff]
        %v452 = vld [vmem:[#allocation2 + $0x99] sm:$0xff]
        %v453 = vld [vmem:[#allocation2 + $0xa9] sm:$0xff]
        %v454 = vld [vmem:[#allocation2 + $0xb1] sm:$0xff]
        %v455 = vld [vmem:[#allocation2 + $0xc1] sm:$0xff]
        %v456 = vld [vmem:[#allocation2 + $0xc9] sm:$0xff]
        %v457 = vld [vmem:[#allocation2 + $0xd9] sm:$0xff]
        %v458 = vld [vmem:[#allocation2 + $0xe1] sm:$0xff]
        %v459 = vld [vmem:[#allocation2 + $0xf1] sm:$0xff]
        %v460 = vld [vmem:[#allocation2 + $0xf9] sm:$0xff]
        %v461 = vld [vmem:[#allocation2 + $0x109] sm:$0xff]
        %v462 = vld [vmem:[#allocation2 + $0x111] sm:$0xff]
        %v463 = vld [vmem:[#allocation2 + $0x121] sm:$0xff]
        %v464 = vld [vmem:[#allocation2 + $0x129] sm:$0xff]
        %v465 = vld [vmem:[#allocation2 + $0x139] sm:$0xff]
        %v466 = vld [vmem:[#allocation2 + $0x141] sm:$0xff]
        %v467 = vld [vmem:[#allocation2 + $0x151] sm:$0xff]
        %v468 = vld [vmem:[#allocation2 + $0x159] sm:$0xff]
        %v469 = vld [vmem:[#allocation2 + $0x169] sm:$0xff]
        %v470 = vld [vmem:[#allocation2 + $0x171] sm:$0xff]
        %471 = vst [vmem:[#allocation4 + $0x8] sm:$0xff] %v439
        %472 = vst [vmem:[#allocation4 + $0x50] sm:$0xff] %v440
        %473 = vst [vmem:[#allocation4 + $0x98] sm:$0xff] %v441
        %474 = vst [vmem:[#allocation4 + $0xe0] sm:$0xff] %v442
        %475 = vst [vmem:[#allocation4 + $0x128] sm:$0xff] %v443
        %476 = vst [vmem:[#allocation4 + $0x170] sm:$0xff] %v444
        %477 = vst [vmem:[#allocation4 + $0x1b8] sm:$0xff] %v445
        %478 = vst [vmem:[#allocation4 + $0x200] sm:$0xff] %v446
        %479 = vst [vmem:[#allocation4 + $0x248] sm:$0xff] %v447
        %480 = vst [vmem:[#allocation4 + $0x290] sm:$0xff] %v448
        %481 = vst [vmem:[#allocation4 + $0x2d8] sm:$0xff] %v449
        %482 = vst [vmem:[#allocation4 + $0x320] sm:$0xff] %v450
        %483 = vst [vmem:[#allocation4 + $0x368] sm:$0xff] %v451
        %484 = vst [vmem:[#allocation4 + $0x3b0] sm:$0xff] %v452
        %485 = vst [vmem:[#allocation4 + $0x3f8] sm:$0xff] %v453
        %486 = vst [vmem:[#allocation4 + $0x440] sm:$0xff] %v454
        %487 = vst [vmem:[#allocation4 + $0x488] sm:$0xff] %v455
        %488 = vst [vmem:[#allocation4 + $0x4d0] sm:$0xff] %v456
        %489 = vst [vmem:[#allocation4 + $0x518] sm:$0xff] %v457
        %490 = vst [vmem:[#allocation4 + $0x560] sm:$0xff] %v458
        %491 = vst [vmem:[#allocation4 + $0x5a8] sm:$0xff] %v459
        %492 = vst [vmem:[#allocation4 + $0x5f0] sm:$0xff] %v460
        %493 = vst [vmem:[#allocation4 + $0x638] sm:$0xff] %v461
        %494 = vst [vmem:[#allocation4 + $0x680] sm:$0xff] %v462
        %495 = vst [vmem:[#allocation4 + $0x6c8] sm:$0xff] %v463
        %496 = vst [vmem:[#allocation4 + $0x710] sm:$0xff] %v464
        %497 = vst [vmem:[#allocation4 + $0x758] sm:$0xff] %v465
        %498 = vst [vmem:[#allocation4 + $0x7a0] sm:$0xff] %v466
        %499 = vst [vmem:[#allocation4 + $0x7e8] sm:$0xff] %v467
        %500 = vst [vmem:[#allocation4 + $0x830] sm:$0xff] %v468
        %501 = vst [vmem:[#allocation4 + $0x878] sm:$0xff] %v469
        %502 = vst [vmem:[#allocation4 + $0x8c0] sm:$0xff] %v470
        %v503 = vld [vmem:[#allocation2 + $0x2] sm:$0xff]
        %v504 = vld [vmem:[#allocation2 + $0xa] sm:$0xff]
        %v505 = vld [vmem:[#allocation2 + $0x1a] sm:$0xff]
        %v506 = vld [vmem:[#allocation2 + $0x22] sm:$0xff]
        %v507 = vld [vmem:[#allocation2 + $0x32] sm:$0xff]
        %v508 = vld [vmem:[#allocation2 + $0x3a] sm:$0xff]
        %v509 = vld [vmem:[#allocation2 + $0x4a] sm:$0xff]
        %v510 = vld [vmem:[#allocation2 + $0x52] sm:$0xff]
        %v511 = vld [vmem:[#allocation2 + $0x62] sm:$0xff]
        %v512 = vld [vmem:[#allocation2 + $0x6a] sm:$0xff]
        %v513 = vld [vmem:[#allocation2 + $0x7a] sm:$0xff]
        %v514 = vld [vmem:[#allocation2 + $0x82] sm:$0xff]
        %v515 = vld [vmem:[#allocation2 + $0x92] sm:$0xff]
        %v516 = vld [vmem:[#allocation2 + $0x9a] sm:$0xff]
        %v517 = vld [vmem:[#allocation2 + $0xaa] sm:$0xff]
        %v518 = vld [vmem:[#allocation2 + $0xb2] sm:$0xff]
        %v519 = vld [vmem:[#allocation2 + $0xc2] sm:$0xff]
        %v520 = vld [vmem:[#allocation2 + $0xca] sm:$0xff]
        %v521 = vld [vmem:[#allocation2 + $0xda] sm:$0xff]
        %v522 = vld [vmem:[#allocation2 + $0xe2] sm:$0xff]
        %v523 = vld [vmem:[#allocation2 + $0xf2] sm:$0xff]
        %v524 = vld [vmem:[#allocation2 + $0xfa] sm:$0xff]
        %v525 = vld [vmem:[#allocation2 + $0x10a] sm:$0xff]
        %v526 = vld [vmem:[#allocation2 + $0x112] sm:$0xff]
        %v527 = vld [vmem:[#allocation2 + $0x122] sm:$0xff]
        %v528 = vld [vmem:[#allocation2 + $0x12a] sm:$0xff]
        %v529 = vld [vmem:[#allocation2 + $0x13a] sm:$0xff]
        %v530 = vld [vmem:[#allocation2 + $0x142] sm:$0xff]
        %v531 = vld [vmem:[#allocation2 + $0x152] sm:$0xff]
        %v532 = vld [vmem:[#allocation2 + $0x15a] sm:$0xff]
        %v533 = vld [vmem:[#allocation2 + $0x16a] sm:$0xff]
        %v534 = vld [vmem:[#allocation2 + $0x172] sm:$0xff]
        %535 = vst [vmem:[#allocation4 + $0x10] sm:$0xff] %v503
        %536 = vst [vmem:[#allocation4 + $0x58] sm:$0xff] %v504
        %537 = vst [vmem:[#allocation4 + $0xa0] sm:$0xff] %v505
        %538 = vst [vmem:[#allocation4 + $0xe8] sm:$0xff] %v506
        %539 = vst [vmem:[#allocation4 + $0x130] sm:$0xff] %v507
        %540 = vst [vmem:[#allocation4 + $0x178] sm:$0xff] %v508
        %541 = vst [vmem:[#allocation4 + $0x1c0] sm:$0xff] %v509
        %542 = vst [vmem:[#allocation4 + $0x208] sm:$0xff] %v510
        %543 = vst [vmem:[#allocation4 + $0x250] sm:$0xff] %v511
        %544 = vst [vmem:[#allocation4 + $0x298] sm:$0xff] %v512
        %545 = vst [vmem:[#allocation4 + $0x2e0] sm:$0xff] %v513
        %546 = vst [vmem:[#allocation4 + $0x328] sm:$0xff] %v514
        %547 = vst [vmem:[#allocation4 + $0x370] sm:$0xff] %v515
        %548 = vst [vmem:[#allocation4 + $0x3b8] sm:$0xff] %v516
        %549 = vst [vmem:[#allocation4 + $0x400] sm:$0xff] %v517
        %550 = vst [vmem:[#allocation4 + $0x448] sm:$0xff] %v518
        %551 = vst [vmem:[#allocation4 + $0x490] sm:$0xff] %v519
        %552 = vst [vmem:[#allocation4 + $0x4d8] sm:$0xff] %v520
        %553 = vst [vmem:[#allocation4 + $0x520] sm:$0xff] %v521
        %554 = vst [vmem:[#allocation4 + $0x568] sm:$0xff] %v522
        %555 = vst [vmem:[#allocation4 + $0x5b0] sm:$0xff] %v523
        %556 = vst [vmem:[#allocation4 + $0x5f8] sm:$0xff] %v524
        %557 = vst [vmem:[#allocation4 + $0x640] sm:$0xff] %v525
        %558 = vst [vmem:[#allocation4 + $0x688] sm:$0xff] %v526
        %559 = vst [vmem:[#allocation4 + $0x6d0] sm:$0xff] %v527
        %560 = vst [vmem:[#allocation4 + $0x718] sm:$0xff] %v528
        %561 = vst [vmem:[#allocation4 + $0x760] sm:$0xff] %v529
        %562 = vst [vmem:[#allocation4 + $0x7a8] sm:$0xff] %v530
        %563 = vst [vmem:[#allocation4 + $0x7f0] sm:$0xff] %v531
        %564 = vst [vmem:[#allocation4 + $0x838] sm:$0xff] %v532
        %565 = vst [vmem:[#allocation4 + $0x880] sm:$0xff] %v533
        %566 = vst [vmem:[#allocation4 + $0x8c8] sm:$0xff] %v534
        %v567 = vld [vmem:[%s341] sm:$0xff]
        %v568 = vld [vmem:[%s341 + $0x8] sm:$0xff]
        %v569 = vld [vmem:[%s341 + $0x18] sm:$0xff]
        %v570 = vld [vmem:[%s341 + $0x20] sm:$0xff]
        %v571 = vld [vmem:[%s341 + $0x30] sm:$0xff]
        %v572 = vld [vmem:[%s341 + $0x38] sm:$0xff]
        %v573 = vld [vmem:[%s341 + $0x48] sm:$0xff]
        %v574 = vld [vmem:[%s341 + $0x50] sm:$0xff]
        %v575 = vld [vmem:[%s341 + $0x60] sm:$0xff]
        %v576 = vld [vmem:[%s341 + $0x68] sm:$0xff]
        %v577 = vld [vmem:[%s341 + $0x78] sm:$0xff]
        %v578 = vld [vmem:[%s341 + $0x80] sm:$0xff]
        %v579 = vld [vmem:[%s341 + $0x90] sm:$0xff]
        %v580 = vld [vmem:[%s341 + $0x98] sm:$0xff]
        %v581 = vld [vmem:[%s341 + $0xa8] sm:$0xff]
        %v582 = vld [vmem:[%s341 + $0xb0] sm:$0xff]
        %v583 = vld [vmem:[%s341 + $0xc0] sm:$0xff]
        %v584 = vld [vmem:[%s341 + $0xc8] sm:$0xff]
        %v585 = vld [vmem:[%s341 + $0xd8] sm:$0xff]
        %v586 = vld [vmem:[%s341 + $0xe0] sm:$0xff]
        %v587 = vld [vmem:[%s341 + $0xf0] sm:$0xff]
        %v588 = vld [vmem:[%s341 + $0xf8] sm:$0xff]
        %v589 = vld [vmem:[%s341 + $0x108] sm:$0xff]
        %v590 = vld [vmem:[%s341 + $0x110] sm:$0xff]
        %v591 = vld [vmem:[%s341 + $0x120] sm:$0xff]
        %v592 = vld [vmem:[%s341 + $0x128] sm:$0xff]
        %v593 = vld [vmem:[%s341 + $0x138] sm:$0xff]
        %v594 = vld [vmem:[%s341 + $0x140] sm:$0xff]
        %v595 = vld [vmem:[%s341 + $0x150] sm:$0xff]
        %v596 = vld [vmem:[%s341 + $0x158] sm:$0xff]
        %v597 = vld [vmem:[%s341 + $0x168] sm:$0xff]
        %v598 = vld [vmem:[%s341 + $0x170] sm:$0xff]
        %599 = vst [vmem:[#allocation4 + $0x18] sm:$0xff] %v567
        %600 = vst [vmem:[#allocation4 + $0x60] sm:$0xff] %v568
        %601 = vst [vmem:[#allocation4 + $0xa8] sm:$0xff] %v569
        %602 = vst [vmem:[#allocation4 + $0xf0] sm:$0xff] %v570
        %603 = vst [vmem:[#allocation4 + $0x138] sm:$0xff] %v571
        %604 = vst [vmem:[#allocation4 + $0x180] sm:$0xff] %v572
        %605 = vst [vmem:[#allocation4 + $0x1c8] sm:$0xff] %v573
        %606 = vst [vmem:[#allocation4 + $0x210] sm:$0xff] %v574
        %607 = vst [vmem:[#allocation4 + $0x258] sm:$0xff] %v575
        %608 = vst [vmem:[#allocation4 + $0x2a0] sm:$0xff] %v576
        %609 = vst [vmem:[#allocation4 + $0x2e8] sm:$0xff] %v577
        %610 = vst [vmem:[#allocation4 + $0x330] sm:$0xff] %v578
        %611 = vst [vmem:[#allocation4 + $0x378] sm:$0xff] %v579
        %612 = vst [vmem:[#allocation4 + $0x3c0] sm:$0xff] %v580
        %613 = vst [vmem:[#allocation4 + $0x408] sm:$0xff] %v581
        %614 = vst [vmem:[#allocation4 + $0x450] sm:$0xff] %v582
        %615 = vst [vmem:[#allocation4 + $0x498] sm:$0xff] %v583
        %616 = vst [vmem:[#allocation4 + $0x4e0] sm:$0xff] %v584
        %617 = vst [vmem:[#allocation4 + $0x528] sm:$0xff] %v585
        %618 = vst [vmem:[#allocation4 + $0x570] sm:$0xff] %v586
        %619 = vst [vmem:[#allocation4 + $0x5b8] sm:$0xff] %v587
        %620 = vst [vmem:[#allocation4 + $0x600] sm:$0xff] %v588
        %621 = vst [vmem:[#allocation4 + $0x648] sm:$0xff] %v589
        %622 = vst [vmem:[#allocation4 + $0x690] sm:$0xff] %v590
        %623 = vst [vmem:[#allocation4 + $0x6d8] sm:$0xff] %v591
        %624 = vst [vmem:[#allocation4 + $0x720] sm:$0xff] %v592
        %625 = vst [vmem:[#allocation4 + $0x768] sm:$0xff] %v593
        %626 = vst [vmem:[#allocation4 + $0x7b0] sm:$0xff] %v594
        %627 = vst [vmem:[#allocation4 + $0x7f8] sm:$0xff] %v595
        %628 = vst [vmem:[#allocation4 + $0x840] sm:$0xff] %v596
        %629 = vst [vmem:[#allocation4 + $0x888] sm:$0xff] %v597
        %630 = vst [vmem:[#allocation4 + $0x8d0] sm:$0xff] %v598
        %v631 = vld [vmem:[%s341 + $0x1] sm:$0xff]
        %v632 = vld [vmem:[%s341 + $0x9] sm:$0xff]
        %v633 = vld [vmem:[%s341 + $0x19] sm:$0xff]
        %v634 = vld [vmem:[%s341 + $0x21] sm:$0xff]
        %v635 = vld [vmem:[%s341 + $0x31] sm:$0xff]
        %v636 = vld [vmem:[%s341 + $0x39] sm:$0xff]
        %v637 = vld [vmem:[%s341 + $0x49] sm:$0xff]
        %v638 = vld [vmem:[%s341 + $0x51] sm:$0xff]
        %v639 = vld [vmem:[%s341 + $0x61] sm:$0xff]
        %v640 = vld [vmem:[%s341 + $0x69] sm:$0xff]
        %v641 = vld [vmem:[%s341 + $0x79] sm:$0xff]
        %v642 = vld [vmem:[%s341 + $0x81] sm:$0xff]
        %v643 = vld [vmem:[%s341 + $0x91] sm:$0xff]
        %v644 = vld [vmem:[%s341 + $0x99] sm:$0xff]
        %v645 = vld [vmem:[%s341 + $0xa9] sm:$0xff]
        %v646 = vld [vmem:[%s341 + $0xb1] sm:$0xff]
        %v647 = vld [vmem:[%s341 + $0xc1] sm:$0xff]
        %v648 = vld [vmem:[%s341 + $0xc9] sm:$0xff]
        %v649 = vld [vmem:[%s341 + $0xd9] sm:$0xff]
        %v650 = vld [vmem:[%s341 + $0xe1] sm:$0xff]
        %v651 = vld [vmem:[%s341 + $0xf1] sm:$0xff]
        %v652 = vld [vmem:[%s341 + $0xf9] sm:$0xff]
        %v653 = vld [vmem:[%s341 + $0x109] sm:$0xff]
        %v654 = vld [vmem:[%s341 + $0x111] sm:$0xff]
        %v655 = vld [vmem:[%s341 + $0x121] sm:$0xff]
        %v656 = vld [vmem:[%s341 + $0x129] sm:$0xff]
        %v657 = vld [vmem:[%s341 + $0x139] sm:$0xff]
        %v658 = vld [vmem:[%s341 + $0x141] sm:$0xff]
        %v659 = vld [vmem:[%s341 + $0x151] sm:$0xff]
        %v660 = vld [vmem:[%s341 + $0x159] sm:$0xff]
        %v661 = vld [vmem:[%s341 + $0x169] sm:$0xff]
        %v662 = vld [vmem:[%s341 + $0x171] sm:$0xff]
        %663 = vst [vmem:[#allocation4 + $0x20] sm:$0xff] %v631
        %664 = vst [vmem:[#allocation4 + $0x68] sm:$0xff] %v632
        %665 = vst [vmem:[#allocation4 + $0xb0] sm:$0xff] %v633
        %666 = vst [vmem:[#allocation4 + $0xf8] sm:$0xff] %v634
        %667 = vst [vmem:[#allocation4 + $0x140] sm:$0xff] %v635
        %668 = vst [vmem:[#allocation4 + $0x188] sm:$0xff] %v636
        %669 = vst [vmem:[#allocation4 + $0x1d0] sm:$0xff] %v637
        %670 = vst [vmem:[#allocation4 + $0x218] sm:$0xff] %v638
        %671 = vst [vmem:[#allocation4 + $0x260] sm:$0xff] %v639
        %672 = vst [vmem:[#allocation4 + $0x2a8] sm:$0xff] %v640
        %673 = vst [vmem:[#allocation4 + $0x2f0] sm:$0xff] %v641
        %674 = vst [vmem:[#allocation4 + $0x338] sm:$0xff] %v642
        %675 = vst [vmem:[#allocation4 + $0x380] sm:$0xff] %v643
        %676 = vst [vmem:[#allocation4 + $0x3c8] sm:$0xff] %v644
        %677 = vst [vmem:[#allocation4 + $0x410] sm:$0xff] %v645
        %678 = vst [vmem:[#allocation4 + $0x458] sm:$0xff] %v646
        %679 = vst [vmem:[#allocation4 + $0x4a0] sm:$0xff] %v647
        %680 = vst [vmem:[#allocation4 + $0x4e8] sm:$0xff] %v648
        %681 = vst [vmem:[#allocation4 + $0x530] sm:$0xff] %v649
        %682 = vst [vmem:[#allocation4 + $0x578] sm:$0xff] %v650
        %683 = vst [vmem:[#allocation4 + $0x5c0] sm:$0xff] %v651
        %684 = vst [vmem:[#allocation4 + $0x608] sm:$0xff] %v652
        %685 = vst [vmem:[#allocation4 + $0x650] sm:$0xff] %v653
        %686 = vst [vmem:[#allocation4 + $0x698] sm:$0xff] %v654
        %687 = vst [vmem:[#allocation4 + $0x6e0] sm:$0xff] %v655
        %688 = vst [vmem:[#allocation4 + $0x728] sm:$0xff] %v656
        %689 = vst [vmem:[#allocation4 + $0x770] sm:$0xff] %v657
        %690 = vst [vmem:[#allocation4 + $0x7b8] sm:$0xff] %v658
        %691 = vst [vmem:[#allocation4 + $0x800] sm:$0xff] %v659
        %692 = vst [vmem:[#allocation4 + $0x848] sm:$0xff] %v660
        %693 = vst [vmem:[#allocation4 + $0x890] sm:$0xff] %v661
        %694 = vst [vmem:[#allocation4 + $0x8d8] sm:$0xff] %v662
        %v695 = vld [vmem:[%s341 + $0x2] sm:$0xff]
        %v696 = vld [vmem:[%s341 + $0xa] sm:$0xff]
        %v697 = vld [vmem:[%s341 + $0x1a] sm:$0xff]
        %v698 = vld [vmem:[%s341 + $0x22] sm:$0xff]
        %v699 = vld [vmem:[%s341 + $0x32] sm:$0xff]
        %v700 = vld [vmem:[%s341 + $0x3a] sm:$0xff]
        %v701 = vld [vmem:[%s341 + $0x4a] sm:$0xff]
        %v702 = vld [vmem:[%s341 + $0x52] sm:$0xff]
        %v703 = vld [vmem:[%s341 + $0x62] sm:$0xff]
        %v704 = vld [vmem:[%s341 + $0x6a] sm:$0xff]
        %v705 = vld [vmem:[%s341 + $0x7a] sm:$0xff]
        %v706 = vld [vmem:[%s341 + $0x82] sm:$0xff]
        %v707 = vld [vmem:[%s341 + $0x92] sm:$0xff]
        %v708 = vld [vmem:[%s341 + $0x9a] sm:$0xff]
        %v709 = vld [vmem:[%s341 + $0xaa] sm:$0xff]
        %v710 = vld [vmem:[%s341 + $0xb2] sm:$0xff]
        %v711 = vld [vmem:[%s341 + $0xc2] sm:$0xff]
        %v712 = vld [vmem:[%s341 + $0xca] sm:$0xff]
        %v713 = vld [vmem:[%s341 + $0xda] sm:$0xff]
        %v714 = vld [vmem:[%s341 + $0xe2] sm:$0xff]
        %v715 = vld [vmem:[%s341 + $0xf2] sm:$0xff]
        %v716 = vld [vmem:[%s341 + $0xfa] sm:$0xff]
        %v717 = vld [vmem:[%s341 + $0x10a] sm:$0xff]
        %v718 = vld [vmem:[%s341 + $0x112] sm:$0xff]
        %v719 = vld [vmem:[%s341 + $0x122] sm:$0xff]
        %v720 = vld [vmem:[%s341 + $0x12a] sm:$0xff]
        %v721 = vld [vmem:[%s341 + $0x13a] sm:$0xff]
        %v722 = vld [vmem:[%s341 + $0x142] sm:$0xff]
        %v723 = vld [vmem:[%s341 + $0x152] sm:$0xff]
        %v724 = vld [vmem:[%s341 + $0x15a] sm:$0xff]
        %v725 = vld [vmem:[%s341 + $0x16a] sm:$0xff]
        %v726 = vld [vmem:[%s341 + $0x172] sm:$0xff]
        %727 = vst [vmem:[#allocation4 + $0x28] sm:$0xff] %v695
        %728 = vst [vmem:[#allocation4 + $0x70] sm:$0xff] %v696
        %729 = vst [vmem:[#allocation4 + $0xb8] sm:$0xff] %v697
        %730 = vst [vmem:[#allocation4 + $0x100] sm:$0xff] %v698
        %731 = vst [vmem:[#allocation4 + $0x148] sm:$0xff] %v699
        %732 = vst [vmem:[#allocation4 + $0x190] sm:$0xff] %v700
        %733 = vst [vmem:[#allocation4 + $0x1d8] sm:$0xff] %v701
        %734 = vst [vmem:[#allocation4 + $0x220] sm:$0xff] %v702
        %735 = vst [vmem:[#allocation4 + $0x268] sm:$0xff] %v703
        %736 = vst [vmem:[#allocation4 + $0x2b0] sm:$0xff] %v704
        %737 = vst [vmem:[#allocation4 + $0x2f8] sm:$0xff] %v705
        %738 = vst [vmem:[#allocation4 + $0x340] sm:$0xff] %v706
        %739 = vst [vmem:[#allocation4 + $0x388] sm:$0xff] %v707
        %740 = vst [vmem:[#allocation4 + $0x3d0] sm:$0xff] %v708
        %741 = vst [vmem:[#allocation4 + $0x418] sm:$0xff] %v709
        %742 = vst [vmem:[#allocation4 + $0x460] sm:$0xff] %v710
        %743 = vst [vmem:[#allocation4 + $0x4a8] sm:$0xff] %v711
        %744 = vst [vmem:[#allocation4 + $0x4f0] sm:$0xff] %v712
        %745 = vst [vmem:[#allocation4 + $0x538] sm:$0xff] %v713
        %746 = vst [vmem:[#allocation4 + $0x580] sm:$0xff] %v714
        %747 = vst [vmem:[#allocation4 + $0x5c8] sm:$0xff] %v715
        %748 = vst [vmem:[#allocation4 + $0x610] sm:$0xff] %v716
        %749 = vst [vmem:[#allocation4 + $0x658] sm:$0xff] %v717
        %750 = vst [vmem:[#allocation4 + $0x6a0] sm:$0xff] %v718
        %751 = vst [vmem:[#allocation4 + $0x6e8] sm:$0xff] %v719
        %752 = vst [vmem:[#allocation4 + $0x730] sm:$0xff] %v720
        %753 = vst [vmem:[#allocation4 + $0x778] sm:$0xff] %v721
        %754 = vst [vmem:[#allocation4 + $0x7c0] sm:$0xff] %v722
        %755 = vst [vmem:[#allocation4 + $0x808] sm:$0xff] %v723
        %756 = vst [vmem:[#allocation4 + $0x850] sm:$0xff] %v724
        %757 = vst [vmem:[#allocation4 + $0x898] sm:$0xff] %v725
        %758 = vst [vmem:[#allocation4 + $0x8e0] sm:$0xff] %v726
        %s759 = scalar_lea.vmem [#allocation2], 48
        %v760 = vld [vmem:[%s759] sm:$0xff]
        %v761 = vld [vmem:[%s759 + $0x8] sm:$0xff]
        %v762 = vld [vmem:[%s759 + $0x18] sm:$0xff]
        %v763 = vld [vmem:[%s759 + $0x20] sm:$0xff]
        %v764 = vld [vmem:[%s759 + $0x30] sm:$0xff]
        %v765 = vld [vmem:[%s759 + $0x38] sm:$0xff]
        %v766 = vld [vmem:[%s759 + $0x48] sm:$0xff]
        %v767 = vld [vmem:[%s759 + $0x50] sm:$0xff]
        %v768 = vld [vmem:[%s759 + $0x60] sm:$0xff]
        %v769 = vld [vmem:[%s759 + $0x68] sm:$0xff]
        %v770 = vld [vmem:[%s759 + $0x78] sm:$0xff]
        %v771 = vld [vmem:[%s759 + $0x80] sm:$0xff]
        %v772 = vld [vmem:[%s759 + $0x90] sm:$0xff]
        %v773 = vld [vmem:[%s759 + $0x98] sm:$0xff]
        %v774 = vld [vmem:[%s759 + $0xa8] sm:$0xff]
        %v775 = vld [vmem:[%s759 + $0xb0] sm:$0xff]
        %v776 = vld [vmem:[%s759 + $0xc0] sm:$0xff]
        %v777 = vld [vmem:[%s759 + $0xc8] sm:$0xff]
        %v778 = vld [vmem:[%s759 + $0xd8] sm:$0xff]
        %v779 = vld [vmem:[%s759 + $0xe0] sm:$0xff]
        %v780 = vld [vmem:[%s759 + $0xf0] sm:$0xff]
        %v781 = vld [vmem:[%s759 + $0xf8] sm:$0xff]
        %v782 = vld [vmem:[%s759 + $0x108] sm:$0xff]
        %v783 = vld [vmem:[%s759 + $0x110] sm:$0xff]
        %v784 = vld [vmem:[%s759 + $0x120] sm:$0xff]
        %v785 = vld [vmem:[%s759 + $0x128] sm:$0xff]
        %v786 = vld [vmem:[%s759 + $0x138] sm:$0xff]
        %v787 = vld [vmem:[%s759 + $0x140] sm:$0xff]
        %v788 = vld [vmem:[%s759 + $0x150] sm:$0xff]
        %v789 = vld [vmem:[%s759 + $0x158] sm:$0xff]
        %v790 = vld [vmem:[%s759 + $0x168] sm:$0xff]
        %v791 = vld [vmem:[%s759 + $0x170] sm:$0xff]
        %792 = vst [vmem:[#allocation4 + $0x30] sm:$0xff] %v760
        %793 = vst [vmem:[#allocation4 + $0x78] sm:$0xff] %v761
        %794 = vst [vmem:[#allocation4 + $0xc0] sm:$0xff] %v762
        %795 = vst [vmem:[#allocation4 + $0x108] sm:$0xff] %v763
        %796 = vst [vmem:[#allocation4 + $0x150] sm:$0xff] %v764
        %797 = vst [vmem:[#allocation4 + $0x198] sm:$0xff] %v765
        %798 = vst [vmem:[#allocation4 + $0x1e0] sm:$0xff] %v766
        %799 = vst [vmem:[#allocation4 + $0x228] sm:$0xff] %v767
        %800 = vst [vmem:[#allocation4 + $0x270] sm:$0xff] %v768
        %801 = vst [vmem:[#allocation4 + $0x2b8] sm:$0xff] %v769
        %802 = vst [vmem:[#allocation4 + $0x300] sm:$0xff] %v770
        %803 = vst [vmem:[#allocation4 + $0x348] sm:$0xff] %v771
        %804 = vst [vmem:[#allocation4 + $0x390] sm:$0xff] %v772
        %805 = vst [vmem:[#allocation4 + $0x3d8] sm:$0xff] %v773
        %806 = vst [vmem:[#allocation4 + $0x420] sm:$0xff] %v774
        %807 = vst [vmem:[#allocation4 + $0x468] sm:$0xff] %v775
        %808 = vst [vmem:[#allocation4 + $0x4b0] sm:$0xff] %v776
        %809 = vst [vmem:[#allocation4 + $0x4f8] sm:$0xff] %v777
        %810 = vst [vmem:[#allocation4 + $0x540] sm:$0xff] %v778
        %811 = vst [vmem:[#allocation4 + $0x588] sm:$0xff] %v779
        %812 = vst [vmem:[#allocation4 + $0x5d0] sm:$0xff] %v780
        %813 = vst [vmem:[#allocation4 + $0x618] sm:$0xff] %v781
        %814 = vst [vmem:[#allocation4 + $0x660] sm:$0xff] %v782
        %815 = vst [vmem:[#allocation4 + $0x6a8] sm:$0xff] %v783
        %816 = vst [vmem:[#allocation4 + $0x6f0] sm:$0xff] %v784
        %817 = vst [vmem:[#allocation4 + $0x738] sm:$0xff] %v785
        %818 = vst [vmem:[#allocation4 + $0x780] sm:$0xff] %v786
        %819 = vst [vmem:[#allocation4 + $0x7c8] sm:$0xff] %v787
        %820 = vst [vmem:[#allocation4 + $0x810] sm:$0xff] %v788
        %821 = vst [vmem:[#allocation4 + $0x858] sm:$0xff] %v789
        %822 = vst [vmem:[#allocation4 + $0x8a0] sm:$0xff] %v790
        %823 = vst [vmem:[#allocation4 + $0x8e8] sm:$0xff] %v791
        %v824 = vld [vmem:[%s759 + $0x1] sm:$0xff]
        %v825 = vld [vmem:[%s759 + $0x9] sm:$0xff]
        %v826 = vld [vmem:[%s759 + $0x19] sm:$0xff]
        %v827 = vld [vmem:[%s759 + $0x21] sm:$0xff]
        %v828 = vld [vmem:[%s759 + $0x31] sm:$0xff]
        %v829 = vld [vmem:[%s759 + $0x39] sm:$0xff]
        %v830 = vld [vmem:[%s759 + $0x49] sm:$0xff]
        %v831 = vld [vmem:[%s759 + $0x51] sm:$0xff]
        %v832 = vld [vmem:[%s759 + $0x61] sm:$0xff]
        %v833 = vld [vmem:[%s759 + $0x69] sm:$0xff]
        %v834 = vld [vmem:[%s759 + $0x79] sm:$0xff]
        %v835 = vld [vmem:[%s759 + $0x81] sm:$0xff]
        %v836 = vld [vmem:[%s759 + $0x91] sm:$0xff]
        %v837 = vld [vmem:[%s759 + $0x99] sm:$0xff]
        %v838 = vld [vmem:[%s759 + $0xa9] sm:$0xff]
        %v839 = vld [vmem:[%s759 + $0xb1] sm:$0xff]
        %v840 = vld [vmem:[%s759 + $0xc1] sm:$0xff]
        %v841 = vld [vmem:[%s759 + $0xc9] sm:$0xff]
        %v842 = vld [vmem:[%s759 + $0xd9] sm:$0xff]
        %v843 = vld [vmem:[%s759 + $0xe1] sm:$0xff]
        %v844 = vld [vmem:[%s759 + $0xf1] sm:$0xff]
        %v845 = vld [vmem:[%s759 + $0xf9] sm:$0xff]
        %v846 = vld [vmem:[%s759 + $0x109] sm:$0xff]
        %v847 = vld [vmem:[%s759 + $0x111] sm:$0xff]
        %v848 = vld [vmem:[%s759 + $0x121] sm:$0xff]
        %v849 = vld [vmem:[%s759 + $0x129] sm:$0xff]
        %v850 = vld [vmem:[%s759 + $0x139] sm:$0xff]
        %v851 = vld [vmem:[%s759 + $0x141] sm:$0xff]
        %v852 = vld [vmem:[%s759 + $0x151] sm:$0xff]
        %v853 = vld [vmem:[%s759 + $0x159] sm:$0xff]
        %v854 = vld [vmem:[%s759 + $0x169] sm:$0xff]
        %v855 = vld [vmem:[%s759 + $0x171] sm:$0xff]
        %856 = vst [vmem:[#allocation4 + $0x38] sm:$0xff] %v824
        %857 = vst [vmem:[#allocation4 + $0x80] sm:$0xff] %v825
        %858 = vst [vmem:[#allocation4 + $0xc8] sm:$0xff] %v826
        %859 = vst [vmem:[#allocation4 + $0x110] sm:$0xff] %v827
        %860 = vst [vmem:[#allocation4 + $0x158] sm:$0xff] %v828
        %861 = vst [vmem:[#allocation4 + $0x1a0] sm:$0xff] %v829
        %862 = vst [vmem:[#allocation4 + $0x1e8] sm:$0xff] %v830
        %863 = vst [vmem:[#allocation4 + $0x230] sm:$0xff] %v831
        %864 = vst [vmem:[#allocation4 + $0x278] sm:$0xff] %v832
        %865 = vst [vmem:[#allocation4 + $0x2c0] sm:$0xff] %v833
        %866 = vst [vmem:[#allocation4 + $0x308] sm:$0xff] %v834
        %867 = vst [vmem:[#allocation4 + $0x350] sm:$0xff] %v835
        %868 = vst [vmem:[#allocation4 + $0x398] sm:$0xff] %v836
        %869 = vst [vmem:[#allocation4 + $0x3e0] sm:$0xff] %v837
        %870 = vst [vmem:[#allocation4 + $0x428] sm:$0xff] %v838
        %871 = vst [vmem:[#allocation4 + $0x470] sm:$0xff] %v839
        %872 = vst [vmem:[#allocation4 + $0x4b8] sm:$0xff] %v840
        %873 = vst [vmem:[#allocation4 + $0x500] sm:$0xff] %v841
        %874 = vst [vmem:[#allocation4 + $0x548] sm:$0xff] %v842
        %875 = vst [vmem:[#allocation4 + $0x590] sm:$0xff] %v843
        %876 = vst [vmem:[#allocation4 + $0x5d8] sm:$0xff] %v844
        %877 = vst [vmem:[#allocation4 + $0x620] sm:$0xff] %v845
        %878 = vst [vmem:[#allocation4 + $0x668] sm:$0xff] %v846
        %879 = vst [vmem:[#allocation4 + $0x6b0] sm:$0xff] %v847
        %880 = vst [vmem:[#allocation4 + $0x6f8] sm:$0xff] %v848
        %881 = vst [vmem:[#allocation4 + $0x740] sm:$0xff] %v849
        %882 = vst [vmem:[#allocation4 + $0x788] sm:$0xff] %v850
        %883 = vst [vmem:[#allocation4 + $0x7d0] sm:$0xff] %v851
        %884 = vst [vmem:[#allocation4 + $0x818] sm:$0xff] %v852
        %885 = vst [vmem:[#allocation4 + $0x860] sm:$0xff] %v853
        %886 = vst [vmem:[#allocation4 + $0x8a8] sm:$0xff] %v854
        %887 = vst [vmem:[#allocation4 + $0x8f0] sm:$0xff] %v855
        %v888 = vld [vmem:[%s759 + $0x2] sm:$0xff]
        %v889 = vld [vmem:[%s759 + $0xa] sm:$0xff]
        %v890 = vld [vmem:[%s759 + $0x1a] sm:$0xff]
        %v891 = vld [vmem:[%s759 + $0x22] sm:$0xff]
        %v892 = vld [vmem:[%s759 + $0x32] sm:$0xff]
        %v893 = vld [vmem:[%s759 + $0x3a] sm:$0xff]
        %v894 = vld [vmem:[%s759 + $0x4a] sm:$0xff]
        %v895 = vld [vmem:[%s759 + $0x52] sm:$0xff]
        %v896 = vld [vmem:[%s759 + $0x62] sm:$0xff]
        %v897 = vld [vmem:[%s759 + $0x6a] sm:$0xff]
        %v898 = vld [vmem:[%s759 + $0x7a] sm:$0xff]
        %v899 = vld [vmem:[%s759 + $0x82] sm:$0xff]
        %v900 = vld [vmem:[%s759 + $0x92] sm:$0xff]
        %v901 = vld [vmem:[%s759 + $0x9a] sm:$0xff]
        %v902 = vld [vmem:[%s759 + $0xaa] sm:$0xff]
        %v903 = vld [vmem:[%s759 + $0xb2] sm:$0xff]
        %v904 = vld [vmem:[%s759 + $0xc2] sm:$0xff]
        %v905 = vld [vmem:[%s759 + $0xca] sm:$0xff]
        %v906 = vld [vmem:[%s759 + $0xda] sm:$0xff]
        %v907 = vld [vmem:[%s759 + $0xe2] sm:$0xff]
        %v908 = vld [vmem:[%s759 + $0xf2] sm:$0xff]
        %v909 = vld [vmem:[%s759 + $0xfa] sm:$0xff]
        %v910 = vld [vmem:[%s759 + $0x10a] sm:$0xff]
        %v911 = vld [vmem:[%s759 + $0x112] sm:$0xff]
        %v912 = vld [vmem:[%s759 + $0x122] sm:$0xff]
        %v913 = vld [vmem:[%s759 + $0x12a] sm:$0xff]
        %v914 = vld [vmem:[%s759 + $0x13a] sm:$0xff]
        %v915 = vld [vmem:[%s759 + $0x142] sm:$0xff]
        %v916 = vld [vmem:[%s759 + $0x152] sm:$0xff]
        %v917 = vld [vmem:[%s759 + $0x15a] sm:$0xff]
        %v918 = vld [vmem:[%s759 + $0x16a] sm:$0xff]
        %v919 = vld [vmem:[%s759 + $0x172] sm:$0xff]
        %920 = vst [vmem:[#allocation4 + $0x40] sm:$0xff] %v888
        %921 = vst [vmem:[#allocation4 + $0x88] sm:$0xff] %v889
        %922 = vst [vmem:[#allocation4 + $0xd0] sm:$0xff] %v890
        %923 = vst [vmem:[#allocation4 + $0x118] sm:$0xff] %v891
        %924 = vst [vmem:[#allocation4 + $0x160] sm:$0xff] %v892
        %925 = vst [vmem:[#allocation4 + $0x1a8] sm:$0xff] %v893
        %926 = vst [vmem:[#allocation4 + $0x1f0] sm:$0xff] %v894
        %927 = vst [vmem:[#allocation4 + $0x238] sm:$0xff] %v895
        %928 = vst [vmem:[#allocation4 + $0x280] sm:$0xff] %v896
        %929 = vst [vmem:[#allocation4 + $0x2c8] sm:$0xff] %v897
        %930 = vst [vmem:[#allocation4 + $0x310] sm:$0xff] %v898
        %931 = vst [vmem:[#allocation4 + $0x358] sm:$0xff] %v899
        %932 = vst [vmem:[#allocation4 + $0x3a0] sm:$0xff] %v900
        %933 = vst [vmem:[#allocation4 + $0x3e8] sm:$0xff] %v901
        %934 = vst [vmem:[#allocation4 + $0x430] sm:$0xff] %v902
        %935 = vst [vmem:[#allocation4 + $0x478] sm:$0xff] %v903
        %936 = vst [vmem:[#allocation4 + $0x4c0] sm:$0xff] %v904
        %937 = vst [vmem:[#allocation4 + $0x508] sm:$0xff] %v905
        %938 = vst [vmem:[#allocation4 + $0x550] sm:$0xff] %v906
        %939 = vst [vmem:[#allocation4 + $0x598] sm:$0xff] %v907
        %940 = vst [vmem:[#allocation4 + $0x5e0] sm:$0xff] %v908
        %941 = vst [vmem:[#allocation4 + $0x628] sm:$0xff] %v909
        %942 = vst [vmem:[#allocation4 + $0x670] sm:$0xff] %v910
        %943 = vst [vmem:[#allocation4 + $0x6b8] sm:$0xff] %v911
        %944 = vst [vmem:[#allocation4 + $0x700] sm:$0xff] %v912
        %945 = vst [vmem:[#allocation4 + $0x748] sm:$0xff] %v913
        %946 = vst [vmem:[#allocation4 + $0x790] sm:$0xff] %v914
        %947 = vst [vmem:[#allocation4 + $0x7d8] sm:$0xff] %v915
        %948 = vst [vmem:[#allocation4 + $0x820] sm:$0xff] %v916
        %949 = vst [vmem:[#allocation4 + $0x868] sm:$0xff] %v917
        %950 = vst [vmem:[#allocation4 + $0x8b0] sm:$0xff] %v918
        %951 = vst [vmem:[#allocation4 + $0x8f8] sm:$0xff] %v919
        %v952 = vld [vmem:[#allocation4] sm:$0xff]
        %v953 = vld [vmem:[#allocation4 + $0x8] sm:$0xff]
        %v954 = vld [vmem:[#allocation4 + $0x10] sm:$0xff]
        %v955 = vld [vmem:[#allocation4 + $0x18] sm:$0xff]
        %v956 = vld [vmem:[#allocation4 + $0x20] sm:$0xff]
        %v957 = vld [vmem:[#allocation4 + $0x28] sm:$0xff]
        %v958 = vld [vmem:[#allocation4 + $0x30] sm:$0xff]
        %v959 = vld [vmem:[#allocation4 + $0x38] sm:$0xff]
        %v960 = vld [vmem:[#allocation4 + $0x40] sm:$0xff]
        %v961 = vld [vmem:[#allocation4 + $0x48] sm:$0xff]
        %v962 = vld [vmem:[#allocation4 + $0x50] sm:$0xff]
        %v963 = vld [vmem:[#allocation4 + $0x58] sm:$0xff]
        %v964 = vld [vmem:[#allocation4 + $0x60] sm:$0xff]
        %v965 = vld [vmem:[#allocation4 + $0x68] sm:$0xff]
        %v966 = vld [vmem:[#allocation4 + $0x70] sm:$0xff]
        %v967 = vld [vmem:[#allocation4 + $0x78] sm:$0xff]
        %v968 = vld [vmem:[#allocation4 + $0x80] sm:$0xff]
        %v969 = vld [vmem:[#allocation4 + $0x88] sm:$0xff]
        %v970 = vld [vmem:[#allocation4 + $0x90] sm:$0xff]
        %v971 = vld [vmem:[#allocation4 + $0x98] sm:$0xff]
        %v972 = vld [vmem:[#allocation4 + $0xa0] sm:$0xff]
        %v973 = vld [vmem:[#allocation4 + $0xa8] sm:$0xff]
        %v974 = vld [vmem:[#allocation4 + $0xb0] sm:$0xff]
        %v975 = vld [vmem:[#allocation4 + $0xb8] sm:$0xff]
        %v976 = vld [vmem:[#allocation4 + $0xc0] sm:$0xff]
        %v977 = vld [vmem:[#allocation4 + $0xc8] sm:$0xff]
        %v978 = vld [vmem:[#allocation4 + $0xd0] sm:$0xff]
        %v979 = vld [vmem:[#allocation4 + $0xd8] sm:$0xff]
        %v980 = vld [vmem:[#allocation4 + $0xe0] sm:$0xff]
        %v981 = vld [vmem:[#allocation4 + $0xe8] sm:$0xff]
        %v982 = vld [vmem:[#allocation4 + $0xf0] sm:$0xff]
        %v983 = vld [vmem:[#allocation4 + $0xf8] sm:$0xff]
        %v984 = vld [vmem:[#allocation4 + $0x100] sm:$0xff]
        %v985 = vld [vmem:[#allocation4 + $0x108] sm:$0xff]
        %v986 = vld [vmem:[#allocation4 + $0x110] sm:$0xff]
        %v987 = vld [vmem:[#allocation4 + $0x118] sm:$0xff]
        %v988 = vld [vmem:[#allocation4 + $0x120] sm:$0xff]
        %v989 = vld [vmem:[#allocation4 + $0x128] sm:$0xff]
        %v990 = vld [vmem:[#allocation4 + $0x130] sm:$0xff]
        %v991 = vld [vmem:[#allocation4 + $0x138] sm:$0xff]
        %v992 = vld [vmem:[#allocation4 + $0x140] sm:$0xff]
        %v993 = vld [vmem:[#allocation4 + $0x148] sm:$0xff]
        %v994 = vld [vmem:[#allocation4 + $0x150] sm:$0xff]
        %v995 = vld [vmem:[#allocation4 + $0x158] sm:$0xff]
        %v996 = vld [vmem:[#allocation4 + $0x160] sm:$0xff]
        %v997 = vld [vmem:[#allocation4 + $0x168] sm:$0xff]
        %v998 = vld [vmem:[#allocation4 + $0x170] sm:$0xff]
        %v999 = vld [vmem:[#allocation4 + $0x178] sm:$0xff]
        %v1000 = vld [vmem:[#allocation4 + $0x180] sm:$0xff]
        %v1001 = vld [vmem:[#allocation4 + $0x188] sm:$0xff]
        %v1002 = vld [vmem:[#allocation4 + $0x190] sm:$0xff]
        %v1003 = vld [vmem:[#allocation4 + $0x198] sm:$0xff]
        %v1004 = vld [vmem:[#allocation4 + $0x1a0] sm:$0xff]
        %v1005 = vld [vmem:[#allocation4 + $0x1a8] sm:$0xff]
        %v1006 = vld [vmem:[#allocation4 + $0x1b0] sm:$0xff]
        %v1007 = vld [vmem:[#allocation4 + $0x1b8] sm:$0xff]
        %v1008 = vld [vmem:[#allocation4 + $0x1c0] sm:$0xff]
        %v1009 = vld [vmem:[#allocation4 + $0x1c8] sm:$0xff]
        %v1010 = vld [vmem:[#allocation4 + $0x1d0] sm:$0xff]
        %v1011 = vld [vmem:[#allocation4 + $0x1d8] sm:$0xff]
        %v1012 = vld [vmem:[#allocation4 + $0x1e0] sm:$0xff]
        %v1013 = vld [vmem:[#allocation4 + $0x1e8] sm:$0xff]
        %v1014 = vld [vmem:[#allocation4 + $0x1f0] sm:$0xff]
        %v1015 = vld [vmem:[#allocation4 + $0x1f8] sm:$0xff]
        %v1016 = vld [vmem:[#allocation4 + $0x200] sm:$0xff]
        %v1017 = vld [vmem:[#allocation4 + $0x208] sm:$0xff]
        %v1018 = vld [vmem:[#allocation4 + $0x210] sm:$0xff]
        %v1019 = vld [vmem:[#allocation4 + $0x218] sm:$0xff]
        %v1020 = vld [vmem:[#allocation4 + $0x220] sm:$0xff]
        %v1021 = vld [vmem:[#allocation4 + $0x228] sm:$0xff]
        %v1022 = vld [vmem:[#allocation4 + $0x230] sm:$0xff]
        %v1023 = vld [vmem:[#allocation4 + $0x238] sm:$0xff]
        %v1024 = vld [vmem:[#allocation4 + $0x240] sm:$0xff]
        %v1025 = vld [vmem:[#allocation4 + $0x248] sm:$0xff]
        %v1026 = vld [vmem:[#allocation4 + $0x250] sm:$0xff]
        %v1027 = vld [vmem:[#allocation4 + $0x258] sm:$0xff]
        %v1028 = vld [vmem:[#allocation4 + $0x260] sm:$0xff]
        %v1029 = vld [vmem:[#allocation4 + $0x268] sm:$0xff]
        %v1030 = vld [vmem:[#allocation4 + $0x270] sm:$0xff]
        %v1031 = vld [vmem:[#allocation4 + $0x278] sm:$0xff]
        %v1032 = vld [vmem:[#allocation4 + $0x280] sm:$0xff]
        %v1033 = vld [vmem:[#allocation4 + $0x288] sm:$0xff]
        %v1034 = vld [vmem:[#allocation4 + $0x290] sm:$0xff]
        %v1035 = vld [vmem:[#allocation4 + $0x298] sm:$0xff]
        %v1036 = vld [vmem:[#allocation4 + $0x2a0] sm:$0xff]
        %v1037 = vld [vmem:[#allocation4 + $0x2a8] sm:$0xff]
        %v1038 = vld [vmem:[#allocation4 + $0x2b0] sm:$0xff]
        %v1039 = vld [vmem:[#allocation4 + $0x2b8] sm:$0xff]
        %v1040 = vld [vmem:[#allocation4 + $0x2c0] sm:$0xff]
        %v1041 = vld [vmem:[#allocation4 + $0x2c8] sm:$0xff]
        %v1042 = vld [vmem:[#allocation4 + $0x2d0] sm:$0xff]
        %v1043 = vld [vmem:[#allocation4 + $0x2d8] sm:$0xff]
        %v1044 = vld [vmem:[#allocation4 + $0x2e0] sm:$0xff]
        %v1045 = vld [vmem:[#allocation4 + $0x2e8] sm:$0xff]
        %v1046 = vld [vmem:[#allocation4 + $0x2f0] sm:$0xff]
        %v1047 = vld [vmem:[#allocation4 + $0x2f8] sm:$0xff]
        %v1048 = vld [vmem:[#allocation4 + $0x300] sm:$0xff]
        %v1049 = vld [vmem:[#allocation4 + $0x308] sm:$0xff]
        %v1050 = vld [vmem:[#allocation4 + $0x310] sm:$0xff]
        %v1051 = vld [vmem:[#allocation4 + $0x318] sm:$0xff]
        %v1052 = vld [vmem:[#allocation4 + $0x320] sm:$0xff]
        %v1053 = vld [vmem:[#allocation4 + $0x328] sm:$0xff]
        %v1054 = vld [vmem:[#allocation4 + $0x330] sm:$0xff]
        %v1055 = vld [vmem:[#allocation4 + $0x338] sm:$0xff]
        %v1056 = vld [vmem:[#allocation4 + $0x340] sm:$0xff]
        %v1057 = vld [vmem:[#allocation4 + $0x348] sm:$0xff]
        %v1058 = vld [vmem:[#allocation4 + $0x350] sm:$0xff]
        %v1059 = vld [vmem:[#allocation4 + $0x358] sm:$0xff]
        %v1060 = vld [vmem:[#allocation4 + $0x360] sm:$0xff]
        %v1061 = vld [vmem:[#allocation4 + $0x368] sm:$0xff]
        %v1062 = vld [vmem:[#allocation4 + $0x370] sm:$0xff]
        %v1063 = vld [vmem:[#allocation4 + $0x378] sm:$0xff]
        %v1064 = vld [vmem:[#allocation4 + $0x380] sm:$0xff]
        %v1065 = vld [vmem:[#allocation4 + $0x388] sm:$0xff]
        %v1066 = vld [vmem:[#allocation4 + $0x390] sm:$0xff]
        %v1067 = vld [vmem:[#allocation4 + $0x398] sm:$0xff]
        %v1068 = vld [vmem:[#allocation4 + $0x3a0] sm:$0xff]
        %v1069 = vld [vmem:[#allocation4 + $0x3a8] sm:$0xff]
        %v1070 = vld [vmem:[#allocation4 + $0x3b0] sm:$0xff]
        %v1071 = vld [vmem:[#allocation4 + $0x3b8] sm:$0xff]
        %v1072 = vld [vmem:[#allocation4 + $0x3c0] sm:$0xff]
        %v1073 = vld [vmem:[#allocation4 + $0x3c8] sm:$0xff]
        %v1074 = vld [vmem:[#allocation4 + $0x3d0] sm:$0xff]
        %v1075 = vld [vmem:[#allocation4 + $0x3d8] sm:$0xff]
        %v1076 = vld [vmem:[#allocation4 + $0x3e0] sm:$0xff]
        %v1077 = vld [vmem:[#allocation4 + $0x3e8] sm:$0xff]
        %v1078 = vld [vmem:[#allocation4 + $0x3f0] sm:$0xff]
        %v1079 = vld [vmem:[#allocation4 + $0x3f8] sm:$0xff]
        %v1080 = vld [vmem:[#allocation4 + $0x400] sm:$0xff]
        %v1081 = vld [vmem:[#allocation4 + $0x408] sm:$0xff]
        %v1082 = vld [vmem:[#allocation4 + $0x410] sm:$0xff]
        %v1083 = vld [vmem:[#allocation4 + $0x418] sm:$0xff]
        %v1084 = vld [vmem:[#allocation4 + $0x420] sm:$0xff]
        %v1085 = vld [vmem:[#allocation4 + $0x428] sm:$0xff]
        %v1086 = vld [vmem:[#allocation4 + $0x430] sm:$0xff]
        %v1087 = vld [vmem:[#allocation4 + $0x438] sm:$0xff]
        %v1088 = vld [vmem:[#allocation4 + $0x440] sm:$0xff]
        %v1089 = vld [vmem:[#allocation4 + $0x448] sm:$0xff]
        %v1090 = vld [vmem:[#allocation4 + $0x450] sm:$0xff]
        %v1091 = vld [vmem:[#allocation4 + $0x458] sm:$0xff]
        %v1092 = vld [vmem:[#allocation4 + $0x460] sm:$0xff]
        %v1093 = vld [vmem:[#allocation4 + $0x468] sm:$0xff]
        %v1094 = vld [vmem:[#allocation4 + $0x470] sm:$0xff]
        %v1095 = vld [vmem:[#allocation4 + $0x478] sm:$0xff]
        %v1096 = vld [vmem:[#allocation4 + $0x480] sm:$0xff]
        %v1097 = vld [vmem:[#allocation4 + $0x488] sm:$0xff]
        %v1098 = vld [vmem:[#allocation4 + $0x490] sm:$0xff]
        %v1099 = vld [vmem:[#allocation4 + $0x498] sm:$0xff]
        %v1100 = vld [vmem:[#allocation4 + $0x4a0] sm:$0xff]
        %v1101 = vld [vmem:[#allocation4 + $0x4a8] sm:$0xff]
        %v1102 = vld [vmem:[#allocation4 + $0x4b0] sm:$0xff]
        %v1103 = vld [vmem:[#allocation4 + $0x4b8] sm:$0xff]
        %v1104 = vld [vmem:[#allocation4 + $0x4c0] sm:$0xff]
        %v1105 = vld [vmem:[#allocation4 + $0x4c8] sm:$0xff]
        %v1106 = vld [vmem:[#allocation4 + $0x4d0] sm:$0xff]
        %v1107 = vld [vmem:[#allocation4 + $0x4d8] sm:$0xff]
        %v1108 = vld [vmem:[#allocation4 + $0x4e0] sm:$0xff]
        %v1109 = vld [vmem:[#allocation4 + $0x4e8] sm:$0xff]
        %v1110 = vld [vmem:[#allocation4 + $0x4f0] sm:$0xff]
        %v1111 = vld [vmem:[#allocation4 + $0x4f8] sm:$0xff]
        %v1112 = vld [vmem:[#allocation4 + $0x500] sm:$0xff]
        %v1113 = vld [vmem:[#allocation4 + $0x508] sm:$0xff]
        %v1114 = vld [vmem:[#allocation4 + $0x510] sm:$0xff]
        %v1115 = vld [vmem:[#allocation4 + $0x518] sm:$0xff]
        %v1116 = vld [vmem:[#allocation4 + $0x520] sm:$0xff]
        %v1117 = vld [vmem:[#allocation4 + $0x528] sm:$0xff]
        %v1118 = vld [vmem:[#allocation4 + $0x530] sm:$0xff]
        %v1119 = vld [vmem:[#allocation4 + $0x538] sm:$0xff]
        %v1120 = vld [vmem:[#allocation4 + $0x540] sm:$0xff]
        %v1121 = vld [vmem:[#allocation4 + $0x548] sm:$0xff]
        %v1122 = vld [vmem:[#allocation4 + $0x550] sm:$0xff]
        %v1123 = vld [vmem:[#allocation4 + $0x558] sm:$0xff]
        %v1124 = vld [vmem:[#allocation4 + $0x560] sm:$0xff]
        %v1125 = vld [vmem:[#allocation4 + $0x568] sm:$0xff]
        %v1126 = vld [vmem:[#allocation4 + $0x570] sm:$0xff]
        %v1127 = vld [vmem:[#allocation4 + $0x578] sm:$0xff]
        %v1128 = vld [vmem:[#allocation4 + $0x580] sm:$0xff]
        %v1129 = vld [vmem:[#allocation4 + $0x588] sm:$0xff]
        %v1130 = vld [vmem:[#allocation4 + $0x590] sm:$0xff]
        %v1131 = vld [vmem:[#allocation4 + $0x598] sm:$0xff]
        %v1132 = vld [vmem:[#allocation4 + $0x5a0] sm:$0xff]
        %v1133 = vld [vmem:[#allocation4 + $0x5a8] sm:$0xff]
        %v1134 = vld [vmem:[#allocation4 + $0x5b0] sm:$0xff]
        %v1135 = vld [vmem:[#allocation4 + $0x5b8] sm:$0xff]
        %v1136 = vld [vmem:[#allocation4 + $0x5c0] sm:$0xff]
        %v1137 = vld [vmem:[#allocation4 + $0x5c8] sm:$0xff]
        %v1138 = vld [vmem:[#allocation4 + $0x5d0] sm:$0xff]
        %v1139 = vld [vmem:[#allocation4 + $0x5d8] sm:$0xff]
        %v1140 = vld [vmem:[#allocation4 + $0x5e0] sm:$0xff]
        %v1141 = vld [vmem:[#allocation4 + $0x5e8] sm:$0xff]
        %v1142 = vld [vmem:[#allocation4 + $0x5f0] sm:$0xff]
        %v1143 = vld [vmem:[#allocation4 + $0x5f8] sm:$0xff]
        %v1144 = vld [vmem:[#allocation4 + $0x600] sm:$0xff]
        %v1145 = vld [vmem:[#allocation4 + $0x608] sm:$0xff]
        %v1146 = vld [vmem:[#allocation4 + $0x610] sm:$0xff]
        %v1147 = vld [vmem:[#allocation4 + $0x618] sm:$0xff]
        %v1148 = vld [vmem:[#allocation4 + $0x620] sm:$0xff]
        %v1149 = vld [vmem:[#allocation4 + $0x628] sm:$0xff]
        %v1150 = vld [vmem:[#allocation4 + $0x630] sm:$0xff]
        %v1151 = vld [vmem:[#allocation4 + $0x638] sm:$0xff]
        %v1152 = vld [vmem:[#allocation4 + $0x640] sm:$0xff]
        %v1153 = vld [vmem:[#allocation4 + $0x648] sm:$0xff]
        %v1154 = vld [vmem:[#allocation4 + $0x650] sm:$0xff]
        %v1155 = vld [vmem:[#allocation4 + $0x658] sm:$0xff]
        %v1156 = vld [vmem:[#allocation4 + $0x660] sm:$0xff]
        %v1157 = vld [vmem:[#allocation4 + $0x668] sm:$0xff]
        %v1158 = vld [vmem:[#allocation4 + $0x670] sm:$0xff]
        %v1159 = vld [vmem:[#allocation4 + $0x678] sm:$0xff]
        %v1160 = vld [vmem:[#allocation4 + $0x680] sm:$0xff]
        %v1161 = vld [vmem:[#allocation4 + $0x688] sm:$0xff]
        %v1162 = vld [vmem:[#allocation4 + $0x690] sm:$0xff]
        %v1163 = vld [vmem:[#allocation4 + $0x698] sm:$0xff]
        %v1164 = vld [vmem:[#allocation4 + $0x6a0] sm:$0xff]
        %v1165 = vld [vmem:[#allocation4 + $0x6a8] sm:$0xff]
        %v1166 = vld [vmem:[#allocation4 + $0x6b0] sm:$0xff]
        %v1167 = vld [vmem:[#allocation4 + $0x6b8] sm:$0xff]
        %v1168 = vld [vmem:[#allocation4 + $0x6c0] sm:$0xff]
        %v1169 = vld [vmem:[#allocation4 + $0x6c8] sm:$0xff]
        %v1170 = vld [vmem:[#allocation4 + $0x6d0] sm:$0xff]
        %v1171 = vld [vmem:[#allocation4 + $0x6d8] sm:$0xff]
        %v1172 = vld [vmem:[#allocation4 + $0x6e0] sm:$0xff]
        %v1173 = vld [vmem:[#allocation4 + $0x6e8] sm:$0xff]
        %v1174 = vld [vmem:[#allocation4 + $0x6f0] sm:$0xff]
        %v1175 = vld [vmem:[#allocation4 + $0x6f8] sm:$0xff]
        %v1176 = vld [vmem:[#allocation4 + $0x700] sm:$0xff]
        %v1177 = vld [vmem:[#allocation4 + $0x708] sm:$0xff]
        %v1178 = vld [vmem:[#allocation4 + $0x710] sm:$0xff]
        %v1179 = vld [vmem:[#allocation4 + $0x718] sm:$0xff]
        %v1180 = vld [vmem:[#allocation4 + $0x720] sm:$0xff]
        %v1181 = vld [vmem:[#allocation4 + $0x728] sm:$0xff]
        %v1182 = vld [vmem:[#allocation4 + $0x730] sm:$0xff]
        %v1183 = vld [vmem:[#allocation4 + $0x738] sm:$0xff]
        %v1184 = vld [vmem:[#allocation4 + $0x740] sm:$0xff]
        %v1185 = vld [vmem:[#allocation4 + $0x748] sm:$0xff]
        %v1186 = vld [vmem:[#allocation4 + $0x750] sm:$0xff]
        %v1187 = vld [vmem:[#allocation4 + $0x758] sm:$0xff]
        %v1188 = vld [vmem:[#allocation4 + $0x760] sm:$0xff]
        %v1189 = vld [vmem:[#allocation4 + $0x768] sm:$0xff]
        %v1190 = vld [vmem:[#allocation4 + $0x770] sm:$0xff]
        %v1191 = vld [vmem:[#allocation4 + $0x778] sm:$0xff]
        %v1192 = vld [vmem:[#allocation4 + $0x780] sm:$0xff]
        %v1193 = vld [vmem:[#allocation4 + $0x788] sm:$0xff]
        %v1194 = vld [vmem:[#allocation4 + $0x790] sm:$0xff]
        %v1195 = vld [vmem:[#allocation4 + $0x798] sm:$0xff]
        %v1196 = vld [vmem:[#allocation4 + $0x7a0] sm:$0xff]
        %v1197 = vld [vmem:[#allocation4 + $0x7a8] sm:$0xff]
        %v1198 = vld [vmem:[#allocation4 + $0x7b0] sm:$0xff]
        %v1199 = vld [vmem:[#allocation4 + $0x7b8] sm:$0xff]
        %v1200 = vld [vmem:[#allocation4 + $0x7c0] sm:$0xff]
        %v1201 = vld [vmem:[#allocation4 + $0x7c8] sm:$0xff]
        %v1202 = vld [vmem:[#allocation4 + $0x7d0] sm:$0xff]
        %v1203 = vld [vmem:[#allocation4 + $0x7d8] sm:$0xff]
        %v1204 = vld [vmem:[#allocation4 + $0x7e0] sm:$0xff]
        %v1205 = vld [vmem:[#allocation4 + $0x7e8] sm:$0xff]
        %v1206 = vld [vmem:[#allocation4 + $0x7f0] sm:$0xff]
        %v1207 = vld [vmem:[#allocation4 + $0x7f8] sm:$0xff]
        %v1208 = vld [vmem:[#allocation4 + $0x800] sm:$0xff]
        %v1209 = vld [vmem:[#allocation4 + $0x808] sm:$0xff]
        %v1210 = vld [vmem:[#allocation4 + $0x810] sm:$0xff]
        %v1211 = vld [vmem:[#allocation4 + $0x818] sm:$0xff]
        %v1212 = vld [vmem:[#allocation4 + $0x820] sm:$0xff]
        %v1213 = vld [vmem:[#allocation4 + $0x828] sm:$0xff]
        %v1214 = vld [vmem:[#allocation4 + $0x830] sm:$0xff]
        %v1215 = vld [vmem:[#allocation4 + $0x838] sm:$0xff]
        %v1216 = vld [vmem:[#allocation4 + $0x840] sm:$0xff]
        %v1217 = vld [vmem:[#allocation4 + $0x848] sm:$0xff]
        %v1218 = vld [vmem:[#allocation4 + $0x850] sm:$0xff]
        %v1219 = vld [vmem:[#allocation4 + $0x858] sm:$0xff]
        %v1220 = vld [vmem:[#allocation4 + $0x860] sm:$0xff]
        %v1221 = vld [vmem:[#allocation4 + $0x868] sm:$0xff]
        %v1222 = vld [vmem:[#allocation4 + $0x870] sm:$0xff]
        %v1223 = vld [vmem:[#allocation4 + $0x878] sm:$0xff]
        %v1224 = vld [vmem:[#allocation4 + $0x880] sm:$0xff]
        %v1225 = vld [vmem:[#allocation4 + $0x888] sm:$0xff]
        %v1226 = vld [vmem:[#allocation4 + $0x890] sm:$0xff]
        %v1227 = vld [vmem:[#allocation4 + $0x898] sm:$0xff]
        %v1228 = vld [vmem:[#allocation4 + $0x8a0] sm:$0xff]
        %v1229 = vld [vmem:[#allocation4 + $0x8a8] sm:$0xff]
        %v1230 = vld [vmem:[#allocation4 + $0x8b0] sm:$0xff]
        %v1231 = vld [vmem:[#allocation4 + $0x8b8] sm:$0xff]
        %v1232 = vld [vmem:[#allocation4 + $0x8c0] sm:$0xff]
        %v1233 = vld [vmem:[#allocation4 + $0x8c8] sm:$0xff]
        %v1234 = vld [vmem:[#allocation4 + $0x8d0] sm:$0xff]
        %v1235 = vld [vmem:[#allocation4 + $0x8d8] sm:$0xff]
        %v1236 = vld [vmem:[#allocation4 + $0x8e0] sm:$0xff]
        %v1237 = vld [vmem:[#allocation4 + $0x8e8] sm:$0xff]
        %v1238 = vld [vmem:[#allocation4 + $0x8f0] sm:$0xff]
        %v1239 = vld [vmem:[#allocation4 + $0x8f8] sm:$0xff]
        %v1240 = vld [vmem:[#allocation6] sm:$0xff]
        %v1241 = vld [vmem:[#allocation6 + $0x8] sm:$0xff]
        %v1242 = vld [vmem:[#allocation6 + $0x10] sm:$0xff]
        %v1243 = vld [vmem:[#allocation6 + $0x18] sm:$0xff]
        %v1244 = vld [vmem:[#allocation6 + $0x20] sm:$0xff]
        %v1245 = vld [vmem:[#allocation6 + $0x28] sm:$0xff]
        %v1246 = vld [vmem:[#allocation6 + $0x30] sm:$0xff]
        %v1247 = vld [vmem:[#allocation6 + $0x38] sm:$0xff]
        %v1248 = vld [vmem:[#allocation6 + $0x40] sm:$0xff]
        %v1249 = vld [vmem:[#allocation6 + $0x48] sm:$0xff]
        %v1250 = vld [vmem:[#allocation6 + $0x50] sm:$0xff]
        %v1251 = vld [vmem:[#allocation6 + $0x58] sm:$0xff]
        %v1252 = vld [vmem:[#allocation6 + $0x60] sm:$0xff]
        %v1253 = vld [vmem:[#allocation6 + $0x68] sm:$0xff]
        %v1254 = vld [vmem:[#allocation6 + $0x70] sm:$0xff]
        %v1255 = vld [vmem:[#allocation6 + $0x78] sm:$0xff]
        %v1256 = vld [vmem:[#allocation6 + $0x80] sm:$0xff]
        %v1257 = vld [vmem:[#allocation6 + $0x88] sm:$0xff]
        %v1258 = vld [vmem:[#allocation6 + $0x90] sm:$0xff]
        %v1259 = vld [vmem:[#allocation6 + $0x98] sm:$0xff]
        %v1260 = vld [vmem:[#allocation6 + $0xa0] sm:$0xff]
        %v1261 = vld [vmem:[#allocation6 + $0xa8] sm:$0xff]
        %v1262 = vld [vmem:[#allocation6 + $0xb0] sm:$0xff]
        %v1263 = vld [vmem:[#allocation6 + $0xb8] sm:$0xff]
        %v1264 = vld [vmem:[#allocation6 + $0xc0] sm:$0xff]
        %v1265 = vld [vmem:[#allocation6 + $0xc8] sm:$0xff]
        %v1266 = vld [vmem:[#allocation6 + $0xd0] sm:$0xff]
        %v1267 = vld [vmem:[#allocation6 + $0xd8] sm:$0xff]
        %v1268 = vld [vmem:[#allocation6 + $0xe0] sm:$0xff]
        %v1269 = vld [vmem:[#allocation6 + $0xe8] sm:$0xff]
        %v1270 = vld [vmem:[#allocation6 + $0xf0] sm:$0xff]
        %v1271 = vld [vmem:[#allocation6 + $0xf8] sm:$0xff]
        %v1272 = vld [vmem:[#allocation6 + $0x100] sm:$0xff]
        %v1273 = vld [vmem:[#allocation6 + $0x108] sm:$0xff]
        %v1274 = vld [vmem:[#allocation6 + $0x110] sm:$0xff]
        %v1275 = vld [vmem:[#allocation6 + $0x118] sm:$0xff]
        %v1276 = vld [vmem:[#allocation6 + $0x120] sm:$0xff]
        %v1277 = vld [vmem:[#allocation6 + $0x128] sm:$0xff]
        %v1278 = vld [vmem:[#allocation6 + $0x130] sm:$0xff]
        %v1279 = vld [vmem:[#allocation6 + $0x138] sm:$0xff]
        %v1280 = vld [vmem:[#allocation6 + $0x140] sm:$0xff]
        %v1281 = vld [vmem:[#allocation6 + $0x148] sm:$0xff]
        %v1282 = vld [vmem:[#allocation6 + $0x150] sm:$0xff]
        %v1283 = vld [vmem:[#allocation6 + $0x158] sm:$0xff]
        %v1284 = vld [vmem:[#allocation6 + $0x160] sm:$0xff]
        %v1285 = vld [vmem:[#allocation6 + $0x168] sm:$0xff]
        %v1286 = vld [vmem:[#allocation6 + $0x170] sm:$0xff]
        %v1287 = vld [vmem:[#allocation6 + $0x178] sm:$0xff]
        %v1288 = vld [vmem:[#allocation6 + $0x180] sm:$0xff]
        %v1289 = vld [vmem:[#allocation6 + $0x188] sm:$0xff]
        %v1290 = vld [vmem:[#allocation6 + $0x190] sm:$0xff]
        %v1291 = vld [vmem:[#allocation6 + $0x198] sm:$0xff]
        %v1292 = vld [vmem:[#allocation6 + $0x1a0] sm:$0xff]
        %v1293 = vld [vmem:[#allocation6 + $0x1a8] sm:$0xff]
        %v1294 = vld [vmem:[#allocation6 + $0x1b0] sm:$0xff]
        %v1295 = vld [vmem:[#allocation6 + $0x1b8] sm:$0xff]
        %v1296 = vld [vmem:[#allocation6 + $0x1c0] sm:$0xff]
        %v1297 = vld [vmem:[#allocation6 + $0x1c8] sm:$0xff]
        %v1298 = vld [vmem:[#allocation6 + $0x1d0] sm:$0xff]
        %v1299 = vld [vmem:[#allocation6 + $0x1d8] sm:$0xff]
        %v1300 = vld [vmem:[#allocation6 + $0x1e0] sm:$0xff]
        %v1301 = vld [vmem:[#allocation6 + $0x1e8] sm:$0xff]
        %v1302 = vld [vmem:[#allocation6 + $0x1f0] sm:$0xff]
        %v1303 = vld [vmem:[#allocation6 + $0x1f8] sm:$0xff]
        %v1304 = vld [vmem:[#allocation6 + $0x200] sm:$0xff]
        %v1305 = vld [vmem:[#allocation6 + $0x208] sm:$0xff]
        %v1306 = vld [vmem:[#allocation6 + $0x210] sm:$0xff]
        %v1307 = vld [vmem:[#allocation6 + $0x218] sm:$0xff]
        %v1308 = vld [vmem:[#allocation6 + $0x220] sm:$0xff]
        %v1309 = vld [vmem:[#allocation6 + $0x228] sm:$0xff]
        %v1310 = vld [vmem:[#allocation6 + $0x230] sm:$0xff]
        %v1311 = vld [vmem:[#allocation6 + $0x238] sm:$0xff]
        %v1312 = vld [vmem:[#allocation6 + $0x240] sm:$0xff]
        %v1313 = vld [vmem:[#allocation6 + $0x248] sm:$0xff]
        %v1314 = vld [vmem:[#allocation6 + $0x250] sm:$0xff]
        %v1315 = vld [vmem:[#allocation6 + $0x258] sm:$0xff]
        %v1316 = vld [vmem:[#allocation6 + $0x260] sm:$0xff]
        %v1317 = vld [vmem:[#allocation6 + $0x268] sm:$0xff]
        %v1318 = vld [vmem:[#allocation6 + $0x270] sm:$0xff]
        %v1319 = vld [vmem:[#allocation6 + $0x278] sm:$0xff]
        %v1320 = vld [vmem:[#allocation6 + $0x280] sm:$0xff]
        %v1321 = vld [vmem:[#allocation6 + $0x288] sm:$0xff]
        %v1322 = vld [vmem:[#allocation6 + $0x290] sm:$0xff]
        %v1323 = vld [vmem:[#allocation6 + $0x298] sm:$0xff]
        %v1324 = vld [vmem:[#allocation6 + $0x2a0] sm:$0xff]
        %v1325 = vld [vmem:[#allocation6 + $0x2a8] sm:$0xff]
        %v1326 = vld [vmem:[#allocation6 + $0x2b0] sm:$0xff]
        %v1327 = vld [vmem:[#allocation6 + $0x2b8] sm:$0xff]
        %v1328 = vld [vmem:[#allocation6 + $0x2c0] sm:$0xff]
        %v1329 = vld [vmem:[#allocation6 + $0x2c8] sm:$0xff]
        %v1330 = vld [vmem:[#allocation6 + $0x2d0] sm:$0xff]
        %v1331 = vld [vmem:[#allocation6 + $0x2d8] sm:$0xff]
        %v1332 = vld [vmem:[#allocation6 + $0x2e0] sm:$0xff]
        %v1333 = vld [vmem:[#allocation6 + $0x2e8] sm:$0xff]
        %v1334 = vld [vmem:[#allocation6 + $0x2f0] sm:$0xff]
        %v1335 = vld [vmem:[#allocation6 + $0x2f8] sm:$0xff]
        %v1336 = vld [vmem:[#allocation6 + $0x300] sm:$0xff]
        %v1337 = vld [vmem:[#allocation6 + $0x308] sm:$0xff]
        %v1338 = vld [vmem:[#allocation6 + $0x310] sm:$0xff]
        %v1339 = vld [vmem:[#allocation6 + $0x318] sm:$0xff]
        %v1340 = vld [vmem:[#allocation6 + $0x320] sm:$0xff]
        %v1341 = vld [vmem:[#allocation6 + $0x328] sm:$0xff]
        %v1342 = vld [vmem:[#allocation6 + $0x330] sm:$0xff]
        %v1343 = vld [vmem:[#allocation6 + $0x338] sm:$0xff]
        %v1344 = vld [vmem:[#allocation6 + $0x340] sm:$0xff]
        %v1345 = vld [vmem:[#allocation6 + $0x348] sm:$0xff]
        %v1346 = vld [vmem:[#allocation6 + $0x350] sm:$0xff]
        %v1347 = vld [vmem:[#allocation6 + $0x358] sm:$0xff]
        %v1348 = vld [vmem:[#allocation6 + $0x360] sm:$0xff]
        %v1349 = vld [vmem:[#allocation6 + $0x368] sm:$0xff]
        %v1350 = vld [vmem:[#allocation6 + $0x370] sm:$0xff]
        %v1351 = vld [vmem:[#allocation6 + $0x378] sm:$0xff]
        %v1352 = vld [vmem:[#allocation6 + $0x380] sm:$0xff]
        %v1353 = vld [vmem:[#allocation6 + $0x388] sm:$0xff]
        %v1354 = vld [vmem:[#allocation6 + $0x390] sm:$0xff]
        %v1355 = vld [vmem:[#allocation6 + $0x398] sm:$0xff]
        %v1356 = vld [vmem:[#allocation6 + $0x3a0] sm:$0xff]
        %v1357 = vld [vmem:[#allocation6 + $0x3a8] sm:$0xff]
        %v1358 = vld [vmem:[#allocation6 + $0x3b0] sm:$0xff]
        %v1359 = vld [vmem:[#allocation6 + $0x3b8] sm:$0xff]
        %v1360 = vld [vmem:[#allocation6 + $0x3c0] sm:$0xff]
        %v1361 = vld [vmem:[#allocation6 + $0x3c8] sm:$0xff]
        %v1362 = vld [vmem:[#allocation6 + $0x3d0] sm:$0xff]
        %v1363 = vld [vmem:[#allocation6 + $0x3d8] sm:$0xff]
        %v1364 = vld [vmem:[#allocation6 + $0x3e0] sm:$0xff]
        %v1365 = vld [vmem:[#allocation6 + $0x3e8] sm:$0xff]
        %v1366 = vld [vmem:[#allocation6 + $0x3f0] sm:$0xff]
        %v1367 = vld [vmem:[#allocation6 + $0x3f8] sm:$0xff]
        %v1368 = vld [vmem:[#allocation6 + $0x400] sm:$0xff]
        %v1369 = vld [vmem:[#allocation6 + $0x408] sm:$0xff]
        %v1370 = vld [vmem:[#allocation6 + $0x410] sm:$0xff]
        %v1371 = vld [vmem:[#allocation6 + $0x418] sm:$0xff]
        %v1372 = vld [vmem:[#allocation6 + $0x420] sm:$0xff]
        %v1373 = vld [vmem:[#allocation6 + $0x428] sm:$0xff]
        %v1374 = vld [vmem:[#allocation6 + $0x430] sm:$0xff]
        %v1375 = vld [vmem:[#allocation6 + $0x438] sm:$0xff]
        %v1376 = vld [vmem:[#allocation6 + $0x440] sm:$0xff]
        %v1377 = vld [vmem:[#allocation6 + $0x448] sm:$0xff]
        %v1378 = vld [vmem:[#allocation6 + $0x450] sm:$0xff]
        %v1379 = vld [vmem:[#allocation6 + $0x458] sm:$0xff]
        %v1380 = vld [vmem:[#allocation6 + $0x460] sm:$0xff]
        %v1381 = vld [vmem:[#allocation6 + $0x468] sm:$0xff]
        %v1382 = vld [vmem:[#allocation6 + $0x470] sm:$0xff]
        %v1383 = vld [vmem:[#allocation6 + $0x478] sm:$0xff]
        %v1384 = vld [vmem:[%s2] sm:$0x1]
        %v1386 = vlaneseq
        %v1387 = vshrl.u32 %v1386, 7
        %v1388 = vsub.s32 0, %v1387
        %v1389 = vrot.slane %v1384, %v1388
        %1391 = vmatprep.subr.mxu0 0.0
        %1392 = vmatpush1.msra.mxu0 %v1240
        %1393 = vmatprep.subr.mxu0 0.0
        %1394 = vmatpush1.msra.mxu0 %v1241
        %1395 = vmatprep.subr.mxu0 0.0
        %1396 = vmatpush1.msra.mxu0 %v1242
        %1397 = vmatprep.subr.mxu0 0.0
        %1398 = vmatpush1.msra.mxu0 %v1243
        %1399 = vmatprep.subr.mxu0 0.0
        %1400 = vmatpush1.msra.mxu0 %v1244
        %1401 = vmatprep.subr.mxu0 0.0
        %1402 = vmatpush1.msra.mxu0 %v1245
        %1403 = vmatprep.subr.mxu0 0.0
        %1404 = vmatpush1.msra.mxu0 %v1246
        %1405 = vmatprep.subr.mxu0 0.0
        %1406 = vmatpush1.msra.mxu0 %v1247
        %1407 = vmatprep.subr.mxu0 0.0
        %1408 = vmatpush1.msra.mxu0 %v1248
        %1409 = vmatprep.subr.mxu0 0.0
        %1410 = vmatpush1.msra.mxu0 %v1249
        %1411 = vmatprep.subr.mxu0 0.0
        %1412 = vmatpush1.msra.mxu0 %v1250
        %1413 = vmatprep.subr.mxu0 0.0
        %1414 = vmatpush1.msra.mxu0 %v1251
        %1415 = vmatprep.subr.mxu0 0.0
        %1416 = vmatpush1.msra.mxu0 %v1252
        %1417 = vmatprep.subr.mxu0 0.0
        %1418 = vmatpush1.msra.mxu0 %v1253
        %1419 = vmatprep.subr.mxu0 0.0
        %1420 = vmatpush1.msra.mxu0 %v1254
        %1421 = vmatprep.subr.mxu0 0.0
        %1422 = vmatpush1.msra.mxu0 %v1255
        %1423 = vmatprep.subr.mxu0 0.0
        %1424 = vmatpush1.msra.mxu0 %v1256
        %1425 = vmatprep.subr.mxu0 0.0
        %1426 = vmatpush1.msra.mxu0 %v1257
        %1427 = vmatprep.subr.mxu0 0.0
        %1428 = vmatpush1.msra.mxu0 %v1258
        %1429 = vmatprep.subr.mxu0 0.0
        %1430 = vmatpush1.msra.mxu0 %v1259
        %1431 = vmatprep.subr.mxu0 0.0
        %1432 = vmatpush1.msra.mxu0 %v1260
        %1433 = vmatprep.subr.mxu0 0.0
        %1434 = vmatpush1.msra.mxu0 %v1261
        %1435 = vmatprep.subr.mxu0 0.0
        %1436 = vmatpush1.msra.mxu0 %v1262
        %1437 = vmatprep.subr.mxu0 0.0
        %1438 = vmatpush1.msra.mxu0 %v1263
        %1439 = vmatprep.subr.mxu0 0.0
        %1440 = vmatpush1.msra.mxu0 %v1264
        %1441 = vmatprep.subr.mxu0 0.0
        %1442 = vmatpush1.msra.mxu0 %v1265
        %1443 = vmatprep.subr.mxu0 0.0
        %1444 = vmatpush1.msra.mxu0 %v1266
        %1445 = vmatprep.subr.mxu0 0.0
        %1446 = vmatpush1.msra.mxu0 %v1267
        %1447 = vmatprep.subr.mxu0 0.0
        %1448 = vmatpush1.msra.mxu0 %v1268
        %1449 = vmatprep.subr.mxu0 0.0
        %1450 = vmatpush1.msra.mxu0 %v1269
        %1451 = vmatprep.subr.mxu0 0.0
        %1452 = vmatpush1.msra.mxu0 %v1270
        %1453 = vmatprep.subr.mxu0 0.0
        %1454 = vmatpush1.msra.mxu0 %v1271
        %1455 = vmatprep.mubr.f32.mxu0 %v953
        %1456 = vmatmul.mubr.f32.gmra.mrb[0].mxu0 %v952
        %v1457 = vpop.f32.mrb[0].mxu0
        %v1458 = vadd.f32 %v1389, %v1457
        %v1459 = vpop.f32.mrb[0].mxu0
        %1460 = vmatprep.mubr.f32.mxu0 %v962
        %1461 = vmatmul.mubr.f32.gmra.mrb[0].mxu0 %v961
        %v1462 = vpop.f32.mrb[0].mxu0
        %v1463 = vadd.f32 %v1389, %v1462
        %v1464 = vpop.f32.mrb[0].mxu0
        %1465 = vmatprep.mubr.f32.mxu0 %v971
        %1466 = vmatmul.mubr.f32.gmra.mrb[0].mxu0 %v970
        %v1467 = vpop.f32.mrb[0].mxu0
        %v1468 = vadd.f32 %v1389, %v1467
        %v1469 = vpop.f32.mrb[0].mxu0
        %1470 = vmatprep.mubr.f32.mxu0 %v980
        %1471 = vmatmul.mubr.f32.gmra.mrb[0].mxu0 %v979
        %v1472 = vpop.f32.mrb[0].mxu0
        %v1473 = vadd.f32 %v1389, %v1472
        %v1474 = vpop.f32.mrb[0].mxu0
        %1475 = vmatprep.mubr.f32.mxu0 %v989
        %1476 = vmatmul.mubr.f32.gmra.mrb[0].mxu0 %v988
        %v1477 = vpop.f32.mrb[0].mxu0
        %v1478 = vadd.f32 %v1389, %v1477
        %v1479 = vpop.f32.mrb[0].mxu0
        %1480 = vmatprep.mubr.f32.mxu0 %v998
        %1481 = vmatmul.mubr.f32.gmra.mrb[0].mxu0 %v997
        %v1482 = vpop.f32.mrb[0].mxu0
        %v1483 = vadd.f32 %v1389, %v1482
        %v1484 = vpop.f32.mrb[0].mxu0
        %1485 = vmatprep.mubr.f32.mxu0 %v1007
        %1486 = vmatmul.mubr.f32.gmra.mrb[0].mxu0 %v1006
        %v1487 = vpop.f32.mrb[0].mxu0
        %v1488 = vadd.f32 %v1389, %v1487
        %v1489 = vpop.f32.mrb[0].mxu0
        %1490 = vmatprep.mubr.f32.mxu0 %v1016
        %1491 = vmatmul.mubr.f32.gmra.mrb[0].mxu0 %v1015
        %v1492 = vpop.f32.mrb[0].mxu0
        %v1493 = vadd.f32 %v1389, %v1492
        %v1494 = vpop.f32.mrb[0].mxu0
        %1495 = vmatprep.mubr.f32.mxu0 %v1025
        %1496 = vmatmul.mubr.f32.gmra.mrb[0].mxu0 %v1024
        %v1497 = vpop.f32.mrb[0].mxu0
        %v1498 = vadd.f32 %v1389, %v1497
        %v1499 = vpop.f32.mrb[0].mxu0
        %1500 = vmatprep.mubr.f32.mxu0 %v1034
        %1501 = vmatmul.mubr.f32.gmra.mrb[0].mxu0 %v1033
        %v1502 = vpop.f32.mrb[0].mxu0
        %v1503 = vadd.f32 %v1389, %v1502
        %v1504 = vpop.f32.mrb[0].mxu0
        %1505 = vmatprep.mubr.f32.mxu0 %v1043
        %1506 = vmatmul.mubr.f32.gmra.mrb[0].mxu0 %v1042
        %v1507 = vpop.f32.mrb[0].mxu0
        %v1508 = vadd.f32 %v1389, %v1507
        %v1509 = vpop.f32.mrb[0].mxu0
        %1510 = vmatprep.mubr.f32.mxu0 %v1052
        %1511 = vmatmul.mubr.f32.gmra.mrb[0].mxu0 %v1051
        %v1512 = vpop.f32.mrb[0].mxu0
        %v1513 = vadd.f32 %v1389, %v1512
        %v1514 = vpop.f32.mrb[0].mxu0
        %1515 = vmatprep.mubr.f32.mxu0 %v1061
        %1516 = vmatmul.mubr.f32.gmra.mrb[0].mxu0 %v1060
        %v1517 = vpop.f32.mrb[0].mxu0
        %v1518 = vadd.f32 %v1389, %v1517
        %v1519 = vpop.f32.mrb[0].mxu0
        %1520 = vmatprep.mubr.f32.mxu0 %v1070
        %1521 = vmatmul.mubr.f32.gmra.mrb[0].mxu0 %v1069
        %v1522 = vpop.f32.mrb[0].mxu0
        %v1523 = vadd.f32 %v1389, %v1522
        %v1524 = vpop.f32.mrb[0].mxu0
        %1525 = vmatprep.mubr.f32.mxu0 %v1079
        %1526 = vmatmul.mubr.f32.gmra.mrb[0].mxu0 %v1078
        %v1527 = vpop.f32.mrb[0].mxu0
        %v1528 = vadd.f32 %v1389, %v1527
        %v1529 = vpop.f32.mrb[0].mxu0
        %1530 = vmatprep.mubr.f32.mxu0 %v1088
        %1531 = vmatmul.mubr.f32.gmra.mrb[0].mxu0 %v1087
        %v1532 = vpop.f32.mrb[0].mxu0
        %v1533 = vadd.f32 %v1389, %v1532
        %v1534 = vpop.f32.mrb[0].mxu0
        %1535 = vmatprep.mubr.f32.mxu0 %v1097
        %1536 = vmatmul.mubr.f32.gmra.mrb[0].mxu0 %v1096
        %v1537 = vpop.f32.mrb[0].mxu0
        %v1538 = vadd.f32 %v1389, %v1537
        %v1539 = vpop.f32.mrb[0].mxu0
        %1540 = vmatprep.mubr.f32.mxu0 %v1106
        %1541 = vmatmul.mubr.f32.gmra.mrb[0].mxu0 %v1105
        %v1542 = vpop.f32.mrb[0].mxu0
        %v1543 = vadd.f32 %v1389, %v1542
        %v1544 = vpop.f32.mrb[0].mxu0
        %1545 = vmatprep.mubr.f32.mxu0 %v1115
        %1546 = vmatmul.mubr.f32.gmra.mrb[0].mxu0 %v1114
        %v1547 = vpop.f32.mrb[0].mxu0
        %v1548 = vadd.f32 %v1389, %v1547
        %v1549 = vpop.f32.mrb[0].mxu0
        %1550 = vmatprep.mubr.f32.mxu0 %v1124
        %1551 = vmatmul.mubr.f32.gmra.mrb[0].mxu0 %v1123
        %v1552 = vpop.f32.mrb[0].mxu0
        %v1553 = vadd.f32 %v1389, %v1552
        %v1554 = vpop.f32.mrb[0].mxu0
        %1555 = vmatprep.mubr.f32.mxu0 %v1133
        %1556 = vmatmul.mubr.f32.gmra.mrb[0].mxu0 %v1132
        %v1557 = vpop.f32.mrb[0].mxu0
        %v1558 = vadd.f32 %v1389, %v1557
        %v1559 = vpop.f32.mrb[0].mxu0
        %1560 = vmatprep.mubr.f32.mxu0 %v1142
        %1561 = vmatmul.mubr.f32.gmra.mrb[0].mxu0 %v1141
        %v1562 = vpop.f32.mrb[0].mxu0
        %v1563 = vadd.f32 %v1389, %v1562
        %v1564 = vpop.f32.mrb[0].mxu0
        %1565 = vmatprep.mubr.f32.mxu0 %v1151
        %1566 = vmatmul.mubr.f32.gmra.mrb[0].mxu0 %v1150
        %v1567 = vpop.f32.mrb[0].mxu0
        %v1568 = vadd.f32 %v1389, %v1567
        %v1569 = vpop.f32.mrb[0].mxu0
        %1570 = vmatprep.mubr.f32.mxu0 %v1160
        %1571 = vmatmul.mubr.f32.gmra.mrb[0].mxu0 %v1159
        %v1572 = vpop.f32.mrb[0].mxu0
        %v1573 = vadd.f32 %v1389, %v1572
        %v1574 = vpop.f32.mrb[0].mxu0
        %1575 = vmatprep.mubr.f32.mxu0 %v1169
        %1576 = vmatmul.mubr.f32.gmra.mrb[0].mxu0 %v1168
        %v1577 = vpop.f32.mrb[0].mxu0
        %v1578 = vadd.f32 %v1389, %v1577
        %v1579 = vpop.f32.mrb[0].mxu0
        %1580 = vmatprep.mubr.f32.mxu0 %v1178
        %1581 = vmatmul.mubr.f32.gmra.mrb[0].mxu0 %v1177
        %v1582 = vpop.f32.mrb[0].mxu0
        %v1583 = vadd.f32 %v1389, %v1582
        %v1584 = vpop.f32.mrb[0].mxu0
        %1585 = vmatprep.mubr.f32.mxu0 %v1187
        %1586 = vmatmul.mubr.f32.gmra.mrb[0].mxu0 %v1186
        %v1587 = vpop.f32.mrb[0].mxu0
        %v1588 = vadd.f32 %v1389, %v1587
        %v1589 = vpop.f32.mrb[0].mxu0
        %1590 = vmatprep.mubr.f32.mxu0 %v1196
        %1591 = vmatmul.mubr.f32.gmra.mrb[0].mxu0 %v1195
        %v1592 = vpop.f32.mrb[0].mxu0
        %v1593 = vadd.f32 %v1389, %v1592
        %v1594 = vpop.f32.mrb[0].mxu0
        %1595 = vmatprep.mubr.f32.mxu0 %v1205
        %1596 = vmatmul.mubr.f32.gmra.mrb[0].mxu0 %v1204
        %v1597 = vpop.f32.mrb[0].mxu0
        %v1598 = vadd.f32 %v1389, %v1597
        %v1599 = vpop.f32.mrb[0].mxu0
        %1600 = vmatprep.mubr.f32.mxu0 %v1214
        %1601 = vmatmul.mubr.f32.gmra.mrb[0].mxu0 %v1213
        %v1602 = vpop.f32.mrb[0].mxu0
        %v1603 = vadd.f32 %v1389, %v1602
        %v1604 = vpop.f32.mrb[0].mxu0
        %1605 = vmatprep.mubr.f32.mxu0 %v1223
        %1606 = vmatmul.mubr.f32.gmra.mrb[0].mxu0 %v1222
        %v1607 = vpop.f32.mrb[0].mxu0
        %v1608 = vadd.f32 %v1389, %v1607
        %v1609 = vpop.f32.mrb[0].mxu0
        %1610 = vmatprep.mubr.f32.mxu0 %v1232
        %1611 = vmatmul.mubr.f32.gmra.mrb[0].mxu0 %v1231
        %v1612 = vpop.f32.mrb[0].mxu0
        %v1613 = vadd.f32 %v1389, %v1612
        %v1614 = vpop.f32.mrb[0].mxu0
        %1615 = vdwg.mxu0
        %1616 = vmatprep.subr.mxu0 0.0
        %1617 = vmatpush1.msra.mxu0 %v1272
        %1618 = vmatprep.subr.mxu0 0.0
        %1619 = vmatpush1.msra.mxu0 %v1273
        %1620 = vmatprep.subr.mxu0 0.0
        %1621 = vmatpush1.msra.mxu0 %v1274
        %1622 = vmatprep.subr.mxu0 0.0
        %1623 = vmatpush1.msra.mxu0 %v1275
        %1624 = vmatprep.subr.mxu0 0.0
        %1625 = vmatpush1.msra.mxu0 %v1276
        %1626 = vmatprep.subr.mxu0 0.0
        %1627 = vmatpush1.msra.mxu0 %v1277
        %1628 = vmatprep.subr.mxu0 0.0
        %1629 = vmatpush1.msra.mxu0 %v1278
        %1630 = vmatprep.subr.mxu0 0.0
        %1631 = vmatpush1.msra.mxu0 %v1279
        %1632 = vmatprep.subr.mxu0 0.0
        %1633 = vmatpush1.msra.mxu0 %v1280
        %1634 = vmatprep.subr.mxu0 0.0
        %1635 = vmatpush1.msra.mxu0 %v1281
        %1636 = vmatprep.subr.mxu0 0.0
        %1637 = vmatpush1.msra.mxu0 %v1282
        %1638 = vmatprep.subr.mxu0 0.0
        %1639 = vmatpush1.msra.mxu0 %v1283
        %1640 = vmatprep.subr.mxu0 0.0
        %1641 = vmatpush1.msra.mxu0 %v1284
        %1642 = vmatprep.subr.mxu0 0.0
        %1643 = vmatpush1.msra.mxu0 %v1285
        %1644 = vmatprep.subr.mxu0 0.0
        %1645 = vmatpush1.msra.mxu0 %v1286
        %1646 = vmatprep.subr.mxu0 0.0
        %1647 = vmatpush1.msra.mxu0 %v1287
        %1648 = vmatprep.subr.mxu0 0.0
        %1649 = vmatpush1.msra.mxu0 %v1288
        %1650 = vmatprep.subr.mxu0 0.0
        %1651 = vmatpush1.msra.mxu0 %v1289
        %1652 = vmatprep.subr.mxu0 0.0
        %1653 = vmatpush1.msra.mxu0 %v1290
        %1654 = vmatprep.subr.mxu0 0.0
        %1655 = vmatpush1.msra.mxu0 %v1291
        %1656 = vmatprep.subr.mxu0 0.0
        %1657 = vmatpush1.msra.mxu0 %v1292
        %1658 = vmatprep.subr.mxu0 0.0
        %1659 = vmatpush1.msra.mxu0 %v1293
        %1660 = vmatprep.subr.mxu0 0.0
        %1661 = vmatpush1.msra.mxu0 %v1294
        %1662 = vmatprep.subr.mxu0 0.0
        %1663 = vmatpush1.msra.mxu0 %v1295
        %1664 = vmatprep.subr.mxu0 0.0
        %1665 = vmatpush1.msra.mxu0 %v1296
        %1666 = vmatprep.subr.mxu0 0.0
        %1667 = vmatpush1.msra.mxu0 %v1297
        %1668 = vmatprep.subr.mxu0 0.0
        %1669 = vmatpush1.msra.mxu0 %v1298
        %1670 = vmatprep.subr.mxu0 0.0
        %1671 = vmatpush1.msra.mxu0 %v1299
        %1672 = vmatprep.subr.mxu0 0.0
        %1673 = vmatpush1.msra.mxu0 %v1300
        %1674 = vmatprep.subr.mxu0 0.0
        %1675 = vmatpush1.msra.mxu0 %v1301
        %1676 = vmatprep.subr.mxu0 0.0
        %1677 = vmatpush1.msra.mxu0 %v1302
        %1678 = vmatprep.subr.mxu0 0.0
        %1679 = vmatpush1.msra.mxu0 %v1303
        %1680 = vmatprep.mubr.f32.mxu0 %v955
        %1681 = vmatmul.mubr.f32.gmra.mrb[0].mxu0 %v954
        %v1682 = vpop.f32.mrb[0].mxu0
        %v1683 = vadd.f32 %v1458, %v1682
        %v1684 = vpop.f32.mrb[0].mxu0
        %1685 = vmatprep.mubr.f32.mxu0 %v964
        %1686 = vmatmul.mubr.f32.gmra.mrb[0].mxu0 %v963
        %v1687 = vpop.f32.mrb[0].mxu0
        %v1688 = vadd.f32 %v1463, %v1687
        %v1689 = vpop.f32.mrb[0].mxu0
        %1690 = vmatprep.mubr.f32.mxu0 %v973
        %1691 = vmatmul.mubr.f32.gmra.mrb[0].mxu0 %v972
        %v1692 = vpop.f32.mrb[0].mxu0
        %v1693 = vadd.f32 %v1468, %v1692
        %v1694 = vpop.f32.mrb[0].mxu0
        %1695 = vmatprep.mubr.f32.mxu0 %v982
        %1696 = vmatmul.mubr.f32.gmra.mrb[0].mxu0 %v981
        %v1697 = vpop.f32.mrb[0].mxu0
        %v1698 = vadd.f32 %v1473, %v1697
        %v1699 = vpop.f32.mrb[0].mxu0
        %1700 = vmatprep.mubr.f32.mxu0 %v991
        %1701 = vmatmul.mubr.f32.gmra.mrb[0].mxu0 %v990
        %v1702 = vpop.f32.mrb[0].mxu0
        %v1703 = vadd.f32 %v1478, %v1702
        %v1704 = vpop.f32.mrb[0].mxu0
        %1705 = vmatprep.mubr.f32.mxu0 %v1000
        %1706 = vmatmul.mubr.f32.gmra.mrb[0].mxu0 %v999
        %v1707 = vpop.f32.mrb[0].mxu0
        %v1708 = vadd.f32 %v1483, %v1707
        %v1709 = vpop.f32.mrb[0].mxu0
        %1710 = vmatprep.mubr.f32.mxu0 %v1009
        %1711 = vmatmul.mubr.f32.gmra.mrb[0].mxu0 %v1008
        %v1712 = vpop.f32.mrb[0].mxu0
        %v1713 = vadd.f32 %v1488, %v1712
        %v1714 = vpop.f32.mrb[0].mxu0
        %1715 = vmatprep.mubr.f32.mxu0 %v1018
        %1716 = vmatmul.mubr.f32.gmra.mrb[0].mxu0 %v1017
        %v1717 = vpop.f32.mrb[0].mxu0
        %v1718 = vadd.f32 %v1493, %v1717
        %v1719 = vpop.f32.mrb[0].mxu0
        %1720 = vmatprep.mubr.f32.mxu0 %v1027
        %1721 = vmatmul.mubr.f32.gmra.mrb[0].mxu0 %v1026
        %v1722 = vpop.f32.mrb[0].mxu0
        %v1723 = vadd.f32 %v1498, %v1722
        %v1724 = vpop.f32.mrb[0].mxu0
        %1725 = vmatprep.mubr.f32.mxu0 %v1036
        %1726 = vmatmul.mubr.f32.gmra.mrb[0].mxu0 %v1035
        %v1727 = vpop.f32.mrb[0].mxu0
        %v1728 = vadd.f32 %v1503, %v1727
        %v1729 = vpop.f32.mrb[0].mxu0
        %1730 = vmatprep.mubr.f32.mxu0 %v1045
        %1731 = vmatmul.mubr.f32.gmra.mrb[0].mxu0 %v1044
        %v1732 = vpop.f32.mrb[0].mxu0
        %v1733 = vadd.f32 %v1508, %v1732
        %v1734 = vpop.f32.mrb[0].mxu0
        %1735 = vmatprep.mubr.f32.mxu0 %v1054
        %1736 = vmatmul.mubr.f32.gmra.mrb[0].mxu0 %v1053
        %v1737 = vpop.f32.mrb[0].mxu0
        %v1738 = vadd.f32 %v1513, %v1737
        %v1739 = vpop.f32.mrb[0].mxu0
        %1740 = vmatprep.mubr.f32.mxu0 %v1063
        %1741 = vmatmul.mubr.f32.gmra.mrb[0].mxu0 %v1062
        %v1742 = vpop.f32.mrb[0].mxu0
        %v1743 = vadd.f32 %v1518, %v1742
        %v1744 = vpop.f32.mrb[0].mxu0
        %1745 = vmatprep.mubr.f32.mxu0 %v1072
        %1746 = vmatmul.mubr.f32.gmra.mrb[0].mxu0 %v1071
        %v1747 = vpop.f32.mrb[0].mxu0
        %v1748 = vadd.f32 %v1523, %v1747
        %v1749 = vpop.f32.mrb[0].mxu0
        %1750 = vmatprep.mubr.f32.mxu0 %v1081
        %1751 = vmatmul.mubr.f32.gmra.mrb[0].mxu0 %v1080
        %v1752 = vpop.f32.mrb[0].mxu0
        %v1753 = vadd.f32 %v1528, %v1752
        %v1754 = vpop.f32.mrb[0].mxu0
        %1755 = vmatprep.mubr.f32.mxu0 %v1090
        %1756 = vmatmul.mubr.f32.gmra.mrb[0].mxu0 %v1089
        %v1757 = vpop.f32.mrb[0].mxu0
        %v1758 = vadd.f32 %v1533, %v1757
        %v1759 = vpop.f32.mrb[0].mxu0
        %1760 = vmatprep.mubr.f32.mxu0 %v1099
        %1761 = vmatmul.mubr.f32.gmra.mrb[0].mxu0 %v1098
        %v1762 = vpop.f32.mrb[0].mxu0
        %v1763 = vadd.f32 %v1538, %v1762
        %v1764 = vpop.f32.mrb[0].mxu0
        %1765 = vmatprep.mubr.f32.mxu0 %v1108
        %1766 = vmatmul.mubr.f32.gmra.mrb[0].mxu0 %v1107
        %v1767 = vpop.f32.mrb[0].mxu0
        %v1768 = vadd.f32 %v1543, %v1767
        %v1769 = vpop.f32.mrb[0].mxu0
        %1770 = vmatprep.mubr.f32.mxu0 %v1117
        %1771 = vmatmul.mubr.f32.gmra.mrb[0].mxu0 %v1116
        %v1772 = vpop.f32.mrb[0].mxu0
        %v1773 = vadd.f32 %v1548, %v1772
        %v1774 = vpop.f32.mrb[0].mxu0
        %1775 = vmatprep.mubr.f32.mxu0 %v1126
        %1776 = vmatmul.mubr.f32.gmra.mrb[0].mxu0 %v1125
        %v1777 = vpop.f32.mrb[0].mxu0
        %v1778 = vadd.f32 %v1553, %v1777
        %v1779 = vpop.f32.mrb[0].mxu0
        %1780 = vmatprep.mubr.f32.mxu0 %v1135
        %1781 = vmatmul.mubr.f32.gmra.mrb[0].mxu0 %v1134
        %v1782 = vpop.f32.mrb[0].mxu0
        %v1783 = vadd.f32 %v1558, %v1782
        %v1784 = vpop.f32.mrb[0].mxu0
        %1785 = vmatprep.mubr.f32.mxu0 %v1144
        %1786 = vmatmul.mubr.f32.gmra.mrb[0].mxu0 %v1143
        %v1787 = vpop.f32.mrb[0].mxu0
        %v1788 = vadd.f32 %v1563, %v1787
        %v1789 = vpop.f32.mrb[0].mxu0
        %1790 = vmatprep.mubr.f32.mxu0 %v1153
        %1791 = vmatmul.mubr.f32.gmra.mrb[0].mxu0 %v1152
        %v1792 = vpop.f32.mrb[0].mxu0
        %v1793 = vadd.f32 %v1568, %v1792
        %v1794 = vpop.f32.mrb[0].mxu0
        %1795 = vmatprep.mubr.f32.mxu0 %v1162
        %1796 = vmatmul.mubr.f32.gmra.mrb[0].mxu0 %v1161
        %v1797 = vpop.f32.mrb[0].mxu0
        %v1798 = vadd.f32 %v1573, %v1797
        %v1799 = vpop.f32.mrb[0].mxu0
        %1800 = vmatprep.mubr.f32.mxu0 %v1171
        %1801 = vmatmul.mubr.f32.gmra.mrb[0].mxu0 %v1170
        %v1802 = vpop.f32.mrb[0].mxu0
        %v1803 = vadd.f32 %v1578, %v1802
        %v1804 = vpop.f32.mrb[0].mxu0
        %1805 = vmatprep.mubr.f32.mxu0 %v1180
        %1806 = vmatmul.mubr.f32.gmra.mrb[0].mxu0 %v1179
        %v1807 = vpop.f32.mrb[0].mxu0
        %v1808 = vadd.f32 %v1583, %v1807
        %v1809 = vpop.f32.mrb[0].mxu0
        %1810 = vmatprep.mubr.f32.mxu0 %v1189
        %1811 = vmatmul.mubr.f32.gmra.mrb[0].mxu0 %v1188
        %v1812 = vpop.f32.mrb[0].mxu0
        %v1813 = vadd.f32 %v1588, %v1812
        %v1814 = vpop.f32.mrb[0].mxu0
        %1815 = vmatprep.mubr.f32.mxu0 %v1198
        %1816 = vmatmul.mubr.f32.gmra.mrb[0].mxu0 %v1197
        %v1817 = vpop.f32.mrb[0].mxu0
        %v1818 = vadd.f32 %v1593, %v1817
        %v1819 = vpop.f32.mrb[0].mxu0
        %1820 = vmatprep.mubr.f32.mxu0 %v1207
        %1821 = vmatmul.mubr.f32.gmra.mrb[0].mxu0 %v1206
        %v1822 = vpop.f32.mrb[0].mxu0
        %v1823 = vadd.f32 %v1598, %v1822
        %v1824 = vpop.f32.mrb[0].mxu0
        %1825 = vmatprep.mubr.f32.mxu0 %v1216
        %1826 = vmatmul.mubr.f32.gmra.mrb[0].mxu0 %v1215
        %v1827 = vpop.f32.mrb[0].mxu0
        %v1828 = vadd.f32 %v1603, %v1827
        %v1829 = vpop.f32.mrb[0].mxu0
        %1830 = vmatprep.mubr.f32.mxu0 %v1225
        %1831 = vmatmul.mubr.f32.gmra.mrb[0].mxu0 %v1224
        %v1832 = vpop.f32.mrb[0].mxu0
        %v1833 = vadd.f32 %v1608, %v1832
        %v1834 = vpop.f32.mrb[0].mxu0
        %1835 = vmatprep.mubr.f32.mxu0 %v1234
        %1836 = vmatmul.mubr.f32.gmra.mrb[0].mxu0 %v1233
        %v1837 = vpop.f32.mrb[0].mxu0
        %v1838 = vadd.f32 %v1613, %v1837
        %v1839 = vpop.f32.mrb[0].mxu0
        %1840 = vdwg.mxu0
        %1841 = vmatprep.subr.mxu0 0.0
        %1842 = vmatpush1.msra.mxu0 %v1304
        %1843 = vmatprep.subr.mxu0 0.0
        %1844 = vmatpush1.msra.mxu0 %v1305
        %1845 = vmatprep.subr.mxu0 0.0
        %1846 = vmatpush1.msra.mxu0 %v1306
        %1847 = vmatprep.subr.mxu0 0.0
        %1848 = vmatpush1.msra.mxu0 %v1307
        %1849 = vmatprep.subr.mxu0 0.0
        %1850 = vmatpush1.msra.mxu0 %v1308
        %1851 = vmatprep.subr.mxu0 0.0
        %1852 = vmatpush1.msra.mxu0 %v1309
        %1853 = vmatprep.subr.mxu0 0.0
        %1854 = vmatpush1.msra.mxu0 %v1310
        %1855 = vmatprep.subr.mxu0 0.0
        %1856 = vmatpush1.msra.mxu0 %v1311
        %1857 = vmatprep.subr.mxu0 0.0
        %1858 = vmatpush1.msra.mxu0 %v1312
        %1859 = vmatprep.subr.mxu0 0.0
        %1860 = vmatpush1.msra.mxu0 %v1313
        %1861 = vmatprep.subr.mxu0 0.0
        %1862 = vmatpush1.msra.mxu0 %v1314
        %1863 = vmatprep.subr.mxu0 0.0
        %1864 = vmatpush1.msra.mxu0 %v1315
        %1865 = vmatprep.subr.mxu0 0.0
        %1866 = vmatpush1.msra.mxu0 %v1316
        %1867 = vmatprep.subr.mxu0 0.0
        %1868 = vmatpush1.msra.mxu0 %v1317
        %1869 = vmatprep.subr.mxu0 0.0
        %1870 = vmatpush1.msra.mxu0 %v1318
        %1871 = vmatprep.subr.mxu0 0.0
        %1872 = vmatpush1.msra.mxu0 %v1319
        %1873 = vmatprep.subr.mxu0 0.0
        %1874 = vmatpush1.msra.mxu0 %v1320
        %1875 = vmatprep.subr.mxu0 0.0
        %1876 = vmatpush1.msra.mxu0 %v1321
        %1877 = vmatprep.subr.mxu0 0.0
        %1878 = vmatpush1.msra.mxu0 %v1322
        %1879 = vmatprep.subr.mxu0 0.0
        %1880 = vmatpush1.msra.mxu0 %v1323
        %1881 = vmatprep.subr.mxu0 0.0
        %1882 = vmatpush1.msra.mxu0 %v1324
        %1883 = vmatprep.subr.mxu0 0.0
        %1884 = vmatpush1.msra.mxu0 %v1325
        %1885 = vmatprep.subr.mxu0 0.0
        %1886 = vmatpush1.msra.mxu0 %v1326
        %1887 = vmatprep.subr.mxu0 0.0
        %1888 = vmatpush1.msra.mxu0 %v1327
        %1889 = vmatprep.subr.mxu0 0.0
        %1890 = vmatpush1.msra.mxu0 %v1328
        %1891 = vmatprep.subr.mxu0 0.0
        %1892 = vmatpush1.msra.mxu0 %v1329
        %1893 = vmatprep.subr.mxu0 0.0
        %1894 = vmatpush1.msra.mxu0 %v1330
        %1895 = vmatprep.subr.mxu0 0.0
        %1896 = vmatpush1.msra.mxu0 %v1331
        %1897 = vmatprep.subr.mxu0 0.0
        %1898 = vmatpush1.msra.mxu0 %v1332
        %1899 = vmatprep.subr.mxu0 0.0
        %1900 = vmatpush1.msra.mxu0 %v1333
        %1901 = vmatprep.subr.mxu0 0.0
        %1902 = vmatpush1.msra.mxu0 %v1334
        %1903 = vmatprep.subr.mxu0 0.0
        %1904 = vmatpush1.msra.mxu0 %v1335
        %1905 = vmatprep.mubr.f32.mxu0 %v957
        %1906 = vmatmul.mubr.f32.gmra.mrb[0].mxu0 %v956
        %v1907 = vpop.f32.mrb[0].mxu0
        %v1908 = vadd.f32 %v1683, %v1907
        %v1909 = vpop.f32.mrb[0].mxu0
        %1910 = vmatprep.mubr.f32.mxu0 %v966
        %1911 = vmatmul.mubr.f32.gmra.mrb[0].mxu0 %v965
        %v1912 = vpop.f32.mrb[0].mxu0
        %v1913 = vadd.f32 %v1688, %v1912
        %v1914 = vpop.f32.mrb[0].mxu0
        %1915 = vmatprep.mubr.f32.mxu0 %v975
        %1916 = vmatmul.mubr.f32.gmra.mrb[0].mxu0 %v974
        %v1917 = vpop.f32.mrb[0].mxu0
        %v1918 = vadd.f32 %v1693, %v1917
        %v1919 = vpop.f32.mrb[0].mxu0
        %1920 = vmatprep.mubr.f32.mxu0 %v984
        %1921 = vmatmul.mubr.f32.gmra.mrb[0].mxu0 %v983
        %v1922 = vpop.f32.mrb[0].mxu0
        %v1923 = vadd.f32 %v1698, %v1922
        %v1924 = vpop.f32.mrb[0].mxu0
        %1925 = vmatprep.mubr.f32.mxu0 %v993
        %1926 = vmatmul.mubr.f32.gmra.mrb[0].mxu0 %v992
        %v1927 = vpop.f32.mrb[0].mxu0
        %v1928 = vadd.f32 %v1703, %v1927
        %v1929 = vpop.f32.mrb[0].mxu0
        %1930 = vmatprep.mubr.f32.mxu0 %v1002
        %1931 = vmatmul.mubr.f32.gmra.mrb[0].mxu0 %v1001
        %v1932 = vpop.f32.mrb[0].mxu0
        %v1933 = vadd.f32 %v1708, %v1932
        %v1934 = vpop.f32.mrb[0].mxu0
        %1935 = vmatprep.mubr.f32.mxu0 %v1011
        %1936 = vmatmul.mubr.f32.gmra.mrb[0].mxu0 %v1010
        %v1937 = vpop.f32.mrb[0].mxu0
        %v1938 = vadd.f32 %v1713, %v1937
        %v1939 = vpop.f32.mrb[0].mxu0
        %1940 = vmatprep.mubr.f32.mxu0 %v1020
        %1941 = vmatmul.mubr.f32.gmra.mrb[0].mxu0 %v1019
        %v1942 = vpop.f32.mrb[0].mxu0
        %v1943 = vadd.f32 %v1718, %v1942
        %v1944 = vpop.f32.mrb[0].mxu0
        %1945 = vmatprep.mubr.f32.mxu0 %v1029
        %1946 = vmatmul.mubr.f32.gmra.mrb[0].mxu0 %v1028
        %v1947 = vpop.f32.mrb[0].mxu0
        %v1948 = vadd.f32 %v1723, %v1947
        %v1949 = vpop.f32.mrb[0].mxu0
        %1950 = vmatprep.mubr.f32.mxu0 %v1038
        %1951 = vmatmul.mubr.f32.gmra.mrb[0].mxu0 %v1037
        %v1952 = vpop.f32.mrb[0].mxu0
        %v1953 = vadd.f32 %v1728, %v1952
        %v1954 = vpop.f32.mrb[0].mxu0
        %1955 = vmatprep.mubr.f32.mxu0 %v1047
        %1956 = vmatmul.mubr.f32.gmra.mrb[0].mxu0 %v1046
        %v1957 = vpop.f32.mrb[0].mxu0
        %v1958 = vadd.f32 %v1733, %v1957
        %v1959 = vpop.f32.mrb[0].mxu0
        %1960 = vmatprep.mubr.f32.mxu0 %v1056
        %1961 = vmatmul.mubr.f32.gmra.mrb[0].mxu0 %v1055
        %v1962 = vpop.f32.mrb[0].mxu0
        %v1963 = vadd.f32 %v1738, %v1962
        %v1964 = vpop.f32.mrb[0].mxu0
        %1965 = vmatprep.mubr.f32.mxu0 %v1065
        %1966 = vmatmul.mubr.f32.gmra.mrb[0].mxu0 %v1064
        %v1967 = vpop.f32.mrb[0].mxu0
        %v1968 = vadd.f32 %v1743, %v1967
        %v1969 = vpop.f32.mrb[0].mxu0
        %1970 = vmatprep.mubr.f32.mxu0 %v1074
        %1971 = vmatmul.mubr.f32.gmra.mrb[0].mxu0 %v1073
        %v1972 = vpop.f32.mrb[0].mxu0
        %v1973 = vadd.f32 %v1748, %v1972
        %v1974 = vpop.f32.mrb[0].mxu0
        %1975 = vmatprep.mubr.f32.mxu0 %v1083
        %1976 = vmatmul.mubr.f32.gmra.mrb[0].mxu0 %v1082
        %v1977 = vpop.f32.mrb[0].mxu0
        %v1978 = vadd.f32 %v1753, %v1977
        %v1979 = vpop.f32.mrb[0].mxu0
        %1980 = vmatprep.mubr.f32.mxu0 %v1092
        %1981 = vmatmul.mubr.f32.gmra.mrb[0].mxu0 %v1091
        %v1982 = vpop.f32.mrb[0].mxu0
        %v1983 = vadd.f32 %v1758, %v1982
        %v1984 = vpop.f32.mrb[0].mxu0
        %1985 = vmatprep.mubr.f32.mxu0 %v1101
        %1986 = vmatmul.mubr.f32.gmra.mrb[0].mxu0 %v1100
        %v1987 = vpop.f32.mrb[0].mxu0
        %v1988 = vadd.f32 %v1763, %v1987
        %v1989 = vpop.f32.mrb[0].mxu0
        %1990 = vmatprep.mubr.f32.mxu0 %v1110
        %1991 = vmatmul.mubr.f32.gmra.mrb[0].mxu0 %v1109
        %v1992 = vpop.f32.mrb[0].mxu0
        %v1993 = vadd.f32 %v1768, %v1992
        %v1994 = vpop.f32.mrb[0].mxu0
        %1995 = vmatprep.mubr.f32.mxu0 %v1119
        %1996 = vmatmul.mubr.f32.gmra.mrb[0].mxu0 %v1118
        %v1997 = vpop.f32.mrb[0].mxu0
        %v1998 = vadd.f32 %v1773, %v1997
        %v1999 = vpop.f32.mrb[0].mxu0
        %2000 = vmatprep.mubr.f32.mxu0 %v1128
        %2001 = vmatmul.mubr.f32.gmra.mrb[0].mxu0 %v1127
        %v2002 = vpop.f32.mrb[0].mxu0
        %v2003 = vadd.f32 %v1778, %v2002
        %v2004 = vpop.f32.mrb[0].mxu0
        %2005 = vmatprep.mubr.f32.mxu0 %v1137
        %2006 = vmatmul.mubr.f32.gmra.mrb[0].mxu0 %v1136
        %v2007 = vpop.f32.mrb[0].mxu0
        %v2008 = vadd.f32 %v1783, %v2007
        %v2009 = vpop.f32.mrb[0].mxu0
        %2010 = vmatprep.mubr.f32.mxu0 %v1146
        %2011 = vmatmul.mubr.f32.gmra.mrb[0].mxu0 %v1145
        %v2012 = vpop.f32.mrb[0].mxu0
        %v2013 = vadd.f32 %v1788, %v2012
        %v2014 = vpop.f32.mrb[0].mxu0
        %2015 = vmatprep.mubr.f32.mxu0 %v1155
        %2016 = vmatmul.mubr.f32.gmra.mrb[0].mxu0 %v1154
        %v2017 = vpop.f32.mrb[0].mxu0
        %v2018 = vadd.f32 %v1793, %v2017
        %v2019 = vpop.f32.mrb[0].mxu0
        %2020 = vmatprep.mubr.f32.mxu0 %v1164
        %2021 = vmatmul.mubr.f32.gmra.mrb[0].mxu0 %v1163
        %v2022 = vpop.f32.mrb[0].mxu0
        %v2023 = vadd.f32 %v1798, %v2022
        %v2024 = vpop.f32.mrb[0].mxu0
        %2025 = vmatprep.mubr.f32.mxu0 %v1173
        %2026 = vmatmul.mubr.f32.gmra.mrb[0].mxu0 %v1172
        %v2027 = vpop.f32.mrb[0].mxu0
        %v2028 = vadd.f32 %v1803, %v2027
        %v2029 = vpop.f32.mrb[0].mxu0
        %2030 = vmatprep.mubr.f32.mxu0 %v1182
        %2031 = vmatmul.mubr.f32.gmra.mrb[0].mxu0 %v1181
        %v2032 = vpop.f32.mrb[0].mxu0
        %v2033 = vadd.f32 %v1808, %v2032
        %v2034 = vpop.f32.mrb[0].mxu0
        %2035 = vmatprep.mubr.f32.mxu0 %v1191
        %2036 = vmatmul.mubr.f32.gmra.mrb[0].mxu0 %v1190
        %v2037 = vpop.f32.mrb[0].mxu0
        %v2038 = vadd.f32 %v1813, %v2037
        %v2039 = vpop.f32.mrb[0].mxu0
        %2040 = vmatprep.mubr.f32.mxu0 %v1200
        %2041 = vmatmul.mubr.f32.gmra.mrb[0].mxu0 %v1199
        %v2042 = vpop.f32.mrb[0].mxu0
        %v2043 = vadd.f32 %v1818, %v2042
        %v2044 = vpop.f32.mrb[0].mxu0
        %2045 = vmatprep.mubr.f32.mxu0 %v1209
        %2046 = vmatmul.mubr.f32.gmra.mrb[0].mxu0 %v1208
        %v2047 = vpop.f32.mrb[0].mxu0
        %v2048 = vadd.f32 %v1823, %v2047
        %v2049 = vpop.f32.mrb[0].mxu0
        %2050 = vmatprep.mubr.f32.mxu0 %v1218
        %2051 = vmatmul.mubr.f32.gmra.mrb[0].mxu0 %v1217
        %v2052 = vpop.f32.mrb[0].mxu0
        %v2053 = vadd.f32 %v1828, %v2052
        %v2054 = vpop.f32.mrb[0].mxu0
        %2055 = vmatprep.mubr.f32.mxu0 %v1227
        %2056 = vmatmul.mubr.f32.gmra.mrb[0].mxu0 %v1226
        %v2057 = vpop.f32.mrb[0].mxu0
        %v2058 = vadd.f32 %v1833, %v2057
        %v2059 = vpop.f32.mrb[0].mxu0
        %2060 = vmatprep.mubr.f32.mxu0 %v1236
        %2061 = vmatmul.mubr.f32.gmra.mrb[0].mxu0 %v1235
        %v2062 = vpop.f32.mrb[0].mxu0
        %v2063 = vadd.f32 %v1838, %v2062
        %v2064 = vpop.f32.mrb[0].mxu0
        %2065 = vdwg.mxu0
        %2066 = vmatprep.subr.mxu0 0.0
        %2067 = vmatpush1.msra.mxu0 %v1336
        %2068 = vmatprep.subr.mxu0 0.0
        %2069 = vmatpush1.msra.mxu0 %v1337
        %2070 = vmatprep.subr.mxu0 0.0
        %2071 = vmatpush1.msra.mxu0 %v1338
        %2072 = vmatprep.subr.mxu0 0.0
        %2073 = vmatpush1.msra.mxu0 %v1339
        %2074 = vmatprep.subr.mxu0 0.0
        %2075 = vmatpush1.msra.mxu0 %v1340
        %2076 = vmatprep.subr.mxu0 0.0
        %2077 = vmatpush1.msra.mxu0 %v1341
        %2078 = vmatprep.subr.mxu0 0.0
        %2079 = vmatpush1.msra.mxu0 %v1342
        %2080 = vmatprep.subr.mxu0 0.0
        %2081 = vmatpush1.msra.mxu0 %v1343
        %2082 = vmatprep.subr.mxu0 0.0
        %2083 = vmatpush1.msra.mxu0 %v1344
        %2084 = vmatprep.subr.mxu0 0.0
        %2085 = vmatpush1.msra.mxu0 %v1345
        %2086 = vmatprep.subr.mxu0 0.0
        %2087 = vmatpush1.msra.mxu0 %v1346
        %2088 = vmatprep.subr.mxu0 0.0
        %2089 = vmatpush1.msra.mxu0 %v1347
        %2090 = vmatprep.subr.mxu0 0.0
        %2091 = vmatpush1.msra.mxu0 %v1348
        %2092 = vmatprep.subr.mxu0 0.0
        %2093 = vmatpush1.msra.mxu0 %v1349
        %2094 = vmatprep.subr.mxu0 0.0
        %2095 = vmatpush1.msra.mxu0 %v1350
        %2096 = vmatprep.subr.mxu0 0.0
        %2097 = vmatpush1.msra.mxu0 %v1351
        %2098 = vmatprep.subr.mxu0 0.0
        %2099 = vmatpush1.msra.mxu0 %v1352
        %2100 = vmatprep.subr.mxu0 0.0
        %2101 = vmatpush1.msra.mxu0 %v1353
        %2102 = vmatprep.subr.mxu0 0.0
        %2103 = vmatpush1.msra.mxu0 %v1354
        %2104 = vmatprep.subr.mxu0 0.0
        %2105 = vmatpush1.msra.mxu0 %v1355
        %2106 = vmatprep.subr.mxu0 0.0
        %2107 = vmatpush1.msra.mxu0 %v1356
        %2108 = vmatprep.subr.mxu0 0.0
        %2109 = vmatpush1.msra.mxu0 %v1357
        %2110 = vmatprep.subr.mxu0 0.0
        %2111 = vmatpush1.msra.mxu0 %v1358
        %2112 = vmatprep.subr.mxu0 0.0
        %2113 = vmatpush1.msra.mxu0 %v1359
        %2114 = vmatprep.subr.mxu0 0.0
        %2115 = vmatpush1.msra.mxu0 %v1360
        %2116 = vmatprep.subr.mxu0 0.0
        %2117 = vmatpush1.msra.mxu0 %v1361
        %2118 = vmatprep.subr.mxu0 0.0
        %2119 = vmatpush1.msra.mxu0 %v1362
        %2120 = vmatprep.subr.mxu0 0.0
        %2121 = vmatpush1.msra.mxu0 %v1363
        %2122 = vmatprep.subr.mxu0 0.0
        %2123 = vmatpush1.msra.mxu0 %v1364
        %2124 = vmatprep.subr.mxu0 0.0
        %2125 = vmatpush1.msra.mxu0 %v1365
        %2126 = vmatprep.subr.mxu0 0.0
        %2127 = vmatpush1.msra.mxu0 %v1366
        %2128 = vmatprep.subr.mxu0 0.0
        %2129 = vmatpush1.msra.mxu0 %v1367
        %2130 = vmatprep.mubr.f32.mxu0 %v959
        %2131 = vmatmul.mubr.f32.gmra.mrb[0].mxu0 %v958
        %v2132 = vpop.f32.mrb[0].mxu0
        %v2133 = vadd.f32 %v1908, %v2132
        %v2134 = vpop.f32.mrb[0].mxu0
        %2135 = vmatprep.mubr.f32.mxu0 %v968
        %2136 = vmatmul.mubr.f32.gmra.mrb[0].mxu0 %v967
        %v2137 = vpop.f32.mrb[0].mxu0
        %v2138 = vadd.f32 %v1913, %v2137
        %v2139 = vpop.f32.mrb[0].mxu0
        %2140 = vmatprep.mubr.f32.mxu0 %v977
        %2141 = vmatmul.mubr.f32.gmra.mrb[0].mxu0 %v976
        %v2142 = vpop.f32.mrb[0].mxu0
        %v2143 = vadd.f32 %v1918, %v2142
        %v2144 = vpop.f32.mrb[0].mxu0
        %2145 = vmatprep.mubr.f32.mxu0 %v986
        %2146 = vmatmul.mubr.f32.gmra.mrb[0].mxu0 %v985
        %v2147 = vpop.f32.mrb[0].mxu0
        %v2148 = vadd.f32 %v1923, %v2147
        %v2149 = vpop.f32.mrb[0].mxu0
        %2150 = vmatprep.mubr.f32.mxu0 %v995
        %2151 = vmatmul.mubr.f32.gmra.mrb[0].mxu0 %v994
        %v2152 = vpop.f32.mrb[0].mxu0
        %v2153 = vadd.f32 %v1928, %v2152
        %v2154 = vpop.f32.mrb[0].mxu0
        %2155 = vmatprep.mubr.f32.mxu0 %v1004
        %2156 = vmatmul.mubr.f32.gmra.mrb[0].mxu0 %v1003
        %v2157 = vpop.f32.mrb[0].mxu0
        %v2158 = vadd.f32 %v1933, %v2157
        %v2159 = vpop.f32.mrb[0].mxu0
        %2160 = vmatprep.mubr.f32.mxu0 %v1013
        %2161 = vmatmul.mubr.f32.gmra.mrb[0].mxu0 %v1012
        %v2162 = vpop.f32.mrb[0].mxu0
        %v2163 = vadd.f32 %v1938, %v2162
        %v2164 = vpop.f32.mrb[0].mxu0
        %2165 = vmatprep.mubr.f32.mxu0 %v1022
        %2166 = vmatmul.mubr.f32.gmra.mrb[0].mxu0 %v1021
        %v2167 = vpop.f32.mrb[0].mxu0
        %v2168 = vadd.f32 %v1943, %v2167
        %v2169 = vpop.f32.mrb[0].mxu0
        %2170 = vmatprep.mubr.f32.mxu0 %v1031
        %2171 = vmatmul.mubr.f32.gmra.mrb[0].mxu0 %v1030
        %v2172 = vpop.f32.mrb[0].mxu0
        %v2173 = vadd.f32 %v1948, %v2172
        %v2174 = vpop.f32.mrb[0].mxu0
        %2175 = vmatprep.mubr.f32.mxu0 %v1040
        %2176 = vmatmul.mubr.f32.gmra.mrb[0].mxu0 %v1039
        %v2177 = vpop.f32.mrb[0].mxu0
        %v2178 = vadd.f32 %v1953, %v2177
        %v2179 = vpop.f32.mrb[0].mxu0
        %2180 = vmatprep.mubr.f32.mxu0 %v1049
        %2181 = vmatmul.mubr.f32.gmra.mrb[0].mxu0 %v1048
        %v2182 = vpop.f32.mrb[0].mxu0
        %v2183 = vadd.f32 %v1958, %v2182
        %v2184 = vpop.f32.mrb[0].mxu0
        %2185 = vmatprep.mubr.f32.mxu0 %v1058
        %2186 = vmatmul.mubr.f32.gmra.mrb[0].mxu0 %v1057
        %v2187 = vpop.f32.mrb[0].mxu0
        %v2188 = vadd.f32 %v1963, %v2187
        %v2189 = vpop.f32.mrb[0].mxu0
        %2190 = vmatprep.mubr.f32.mxu0 %v1067
        %2191 = vmatmul.mubr.f32.gmra.mrb[0].mxu0 %v1066
        %v2192 = vpop.f32.mrb[0].mxu0
        %v2193 = vadd.f32 %v1968, %v2192
        %v2194 = vpop.f32.mrb[0].mxu0
        %2195 = vmatprep.mubr.f32.mxu0 %v1076
        %2196 = vmatmul.mubr.f32.gmra.mrb[0].mxu0 %v1075
        %v2197 = vpop.f32.mrb[0].mxu0
        %v2198 = vadd.f32 %v1973, %v2197
        %v2199 = vpop.f32.mrb[0].mxu0
        %2200 = vmatprep.mubr.f32.mxu0 %v1085
        %2201 = vmatmul.mubr.f32.gmra.mrb[0].mxu0 %v1084
        %v2202 = vpop.f32.mrb[0].mxu0
        %v2203 = vadd.f32 %v1978, %v2202
        %v2204 = vpop.f32.mrb[0].mxu0
        %2205 = vmatprep.mubr.f32.mxu0 %v1094
        %2206 = vmatmul.mubr.f32.gmra.mrb[0].mxu0 %v1093
        %v2207 = vpop.f32.mrb[0].mxu0
        %v2208 = vadd.f32 %v1983, %v2207
        %v2209 = vpop.f32.mrb[0].mxu0
        %2210 = vmatprep.mubr.f32.mxu0 %v1103
        %2211 = vmatmul.mubr.f32.gmra.mrb[0].mxu0 %v1102
        %v2212 = vpop.f32.mrb[0].mxu0
        %v2213 = vadd.f32 %v1988, %v2212
        %v2214 = vpop.f32.mrb[0].mxu0
        %2215 = vmatprep.mubr.f32.mxu0 %v1112
        %2216 = vmatmul.mubr.f32.gmra.mrb[0].mxu0 %v1111
        %v2217 = vpop.f32.mrb[0].mxu0
        %v2218 = vadd.f32 %v1993, %v2217
        %v2219 = vpop.f32.mrb[0].mxu0
        %2220 = vmatprep.mubr.f32.mxu0 %v1121
        %2221 = vmatmul.mubr.f32.gmra.mrb[0].mxu0 %v1120
        %v2222 = vpop.f32.mrb[0].mxu0
        %v2223 = vadd.f32 %v1998, %v2222
        %v2224 = vpop.f32.mrb[0].mxu0
        %2225 = vmatprep.mubr.f32.mxu0 %v1130
        %2226 = vmatmul.mubr.f32.gmra.mrb[0].mxu0 %v1129
        %v2227 = vpop.f32.mrb[0].mxu0
        %v2228 = vadd.f32 %v2003, %v2227
        %v2229 = vpop.f32.mrb[0].mxu0
        %2230 = vmatprep.mubr.f32.mxu0 %v1139
        %2231 = vmatmul.mubr.f32.gmra.mrb[0].mxu0 %v1138
        %v2232 = vpop.f32.mrb[0].mxu0
        %v2233 = vadd.f32 %v2008, %v2232
        %v2234 = vpop.f32.mrb[0].mxu0
        %2235 = vmatprep.mubr.f32.mxu0 %v1148
        %2236 = vmatmul.mubr.f32.gmra.mrb[0].mxu0 %v1147
        %v2237 = vpop.f32.mrb[0].mxu0
        %v2238 = vadd.f32 %v2013, %v2237
        %v2239 = vpop.f32.mrb[0].mxu0
        %2240 = vmatprep.mubr.f32.mxu0 %v1157
        %2241 = vmatmul.mubr.f32.gmra.mrb[0].mxu0 %v1156
        %v2242 = vpop.f32.mrb[0].mxu0
        %v2243 = vadd.f32 %v2018, %v2242
        %v2244 = vpop.f32.mrb[0].mxu0
        %2245 = vmatprep.mubr.f32.mxu0 %v1166
        %2246 = vmatmul.mubr.f32.gmra.mrb[0].mxu0 %v1165
        %v2247 = vpop.f32.mrb[0].mxu0
        %v2248 = vadd.f32 %v2023, %v2247
        %v2249 = vpop.f32.mrb[0].mxu0
        %2250 = vmatprep.mubr.f32.mxu0 %v1175
        %2251 = vmatmul.mubr.f32.gmra.mrb[0].mxu0 %v1174
        %v2252 = vpop.f32.mrb[0].mxu0
        %v2253 = vadd.f32 %v2028, %v2252
        %v2254 = vpop.f32.mrb[0].mxu0
        %2255 = vmatprep.mubr.f32.mxu0 %v1184
        %2256 = vmatmul.mubr.f32.gmra.mrb[0].mxu0 %v1183
        %v2257 = vpop.f32.mrb[0].mxu0
        %v2258 = vadd.f32 %v2033, %v2257
        %v2259 = vpop.f32.mrb[0].mxu0
        %2260 = vmatprep.mubr.f32.mxu0 %v1193
        %2261 = vmatmul.mubr.f32.gmra.mrb[0].mxu0 %v1192
        %v2262 = vpop.f32.mrb[0].mxu0
        %v2263 = vadd.f32 %v2038, %v2262
        %v2264 = vpop.f32.mrb[0].mxu0
        %2265 = vmatprep.mubr.f32.mxu0 %v1202
        %2266 = vmatmul.mubr.f32.gmra.mrb[0].mxu0 %v1201
        %v2267 = vpop.f32.mrb[0].mxu0
        %v2268 = vadd.f32 %v2043, %v2267
        %v2269 = vpop.f32.mrb[0].mxu0
        %2270 = vmatprep.mubr.f32.mxu0 %v1211
        %2271 = vmatmul.mubr.f32.gmra.mrb[0].mxu0 %v1210
        %v2272 = vpop.f32.mrb[0].mxu0
        %v2273 = vadd.f32 %v2048, %v2272
        %v2274 = vpop.f32.mrb[0].mxu0
        %2275 = vmatprep.mubr.f32.mxu0 %v1220
        %2276 = vmatmul.mubr.f32.gmra.mrb[0].mxu0 %v1219
        %v2277 = vpop.f32.mrb[0].mxu0
        %v2278 = vadd.f32 %v2053, %v2277
        %v2279 = vpop.f32.mrb[0].mxu0
        %2280 = vmatprep.mubr.f32.mxu0 %v1229
        %2281 = vmatmul.mubr.f32.gmra.mrb[0].mxu0 %v1228
        %v2282 = vpop.f32.mrb[0].mxu0
        %v2283 = vadd.f32 %v2058, %v2282
        %v2284 = vpop.f32.mrb[0].mxu0
        %2285 = vmatprep.mubr.f32.mxu0 %v1238
        %2286 = vmatmul.mubr.f32.gmra.mrb[0].mxu0 %v1237
        %v2287 = vpop.f32.mrb[0].mxu0
        %v2288 = vadd.f32 %v2063, %v2287
        %v2289 = vpop.f32.mrb[0].mxu0
        %2290 = vdwg.mxu0
        %2291 = vmatprep.subr.mxu0 0.0
        %2292 = vmatpush1.msra.mxu0 %v1368
        %2293 = vmatprep.subr.mxu0 0.0
        %2294 = vmatpush1.msra.mxu0 %v1369
        %2295 = vmatprep.subr.mxu0 0.0
        %2296 = vmatpush1.msra.mxu0 %v1370
        %2297 = vmatprep.subr.mxu0 0.0
        %2298 = vmatpush1.msra.mxu0 %v1371
        %2299 = vmatprep.subr.mxu0 0.0
        %2300 = vmatpush1.msra.mxu0 %v1372
        %2301 = vmatprep.subr.mxu0 0.0
        %2302 = vmatpush1.msra.mxu0 %v1373
        %2303 = vmatprep.subr.mxu0 0.0
        %2304 = vmatpush1.msra.mxu0 %v1374
        %2305 = vmatprep.subr.mxu0 0.0
        %2306 = vmatpush1.msra.mxu0 %v1375
        %2307 = vmatprep.subr.mxu0 0.0
        %2308 = vmatpush1.msra.mxu0 %v1376
        %2309 = vmatprep.subr.mxu0 0.0
        %2310 = vmatpush1.msra.mxu0 %v1377
        %2311 = vmatprep.subr.mxu0 0.0
        %2312 = vmatpush1.msra.mxu0 %v1378
        %2313 = vmatprep.subr.mxu0 0.0
        %2314 = vmatpush1.msra.mxu0 %v1379
        %2315 = vmatprep.subr.mxu0 0.0
        %2316 = vmatpush1.msra.mxu0 %v1380
        %2317 = vmatprep.subr.mxu0 0.0
        %2318 = vmatpush1.msra.mxu0 %v1381
        %2319 = vmatprep.subr.mxu0 0.0
        %2320 = vmatpush1.msra.mxu0 %v1382
        %2321 = vmatprep.subr.mxu0 0.0
        %2322 = vmatpush1.msra.mxu0 %v1383
        %2323 = vmatprep.subr.mxu0 0.0
        %2324 = vmatpush1.msra.mxu0 0.0
        %2325 = vmatprep.subr.mxu0 0.0
        %2326 = vmatpush1.msra.mxu0 0.0
        %2327 = vmatprep.subr.mxu0 0.0
        %2328 = vmatpush1.msra.mxu0 0.0
        %2329 = vmatprep.subr.mxu0 0.0
        %2330 = vmatpush1.msra.mxu0 0.0
        %2331 = vmatprep.subr.mxu0 0.0
        %2332 = vmatpush1.msra.mxu0 0.0
        %2333 = vmatprep.subr.mxu0 0.0
        %2334 = vmatpush1.msra.mxu0 0.0
        %2335 = vmatprep.subr.mxu0 0.0
        %2336 = vmatpush1.msra.mxu0 0.0
        %2337 = vmatprep.subr.mxu0 0.0
        %2338 = vmatpush1.msra.mxu0 0.0
        %2339 = vmatprep.subr.mxu0 0.0
        %2340 = vmatpush1.msra.mxu0 0.0
        %2341 = vmatprep.subr.mxu0 0.0
        %2342 = vmatpush1.msra.mxu0 0.0
        %2343 = vmatprep.subr.mxu0 0.0
        %2344 = vmatpush1.msra.mxu0 0.0
        %2345 = vmatprep.subr.mxu0 0.0
        %2346 = vmatpush1.msra.mxu0 0.0
        %2347 = vmatprep.subr.mxu0 0.0
        %2348 = vmatpush1.msra.mxu0 0.0
        %2349 = vmatprep.subr.mxu0 0.0
        %2350 = vmatpush1.msra.mxu0 0.0
        %2351 = vmatprep.subr.mxu0 0.0
        %2352 = vmatpush1.msra.mxu0 0.0
        %2353 = vmatprep.subr.mxu0 0.0
        %2354 = vmatpush1.msra.mxu0 0.0
        %2355 = vmatprep.mubr.f32.mxu0 0.0
        %2356 = vmatmul.mubr.f32.gmra.mrb[0].mxu0 %v960
        %v2357 = vpop.f32.mrb[0].mxu0
        %v2358 = vadd.f32 %v2133, %v2357
        %v2359 = vpop.f32.mrb[0].mxu0
        %2360 = vmatprep.mubr.f32.mxu0 0.0
        %2361 = vmatmul.mubr.f32.gmra.mrb[0].mxu0 %v969
        %v2362 = vpop.f32.mrb[0].mxu0
        %v2363 = vadd.f32 %v2138, %v2362
        %v2364 = vpop.f32.mrb[0].mxu0
        %2365 = vmatprep.mubr.f32.mxu0 0.0
        %2366 = vmatmul.mubr.f32.gmra.mrb[0].mxu0 %v978
        %v2367 = vpop.f32.mrb[0].mxu0
        %v2368 = vadd.f32 %v2143, %v2367
        %v2369 = vpop.f32.mrb[0].mxu0
        %2370 = vmatprep.mubr.f32.mxu0 0.0
        %2371 = vmatmul.mubr.f32.gmra.mrb[0].mxu0 %v987
        %v2372 = vpop.f32.mrb[0].mxu0
        %v2373 = vadd.f32 %v2148, %v2372
        %v2374 = vpop.f32.mrb[0].mxu0
        %2375 = vmatprep.mubr.f32.mxu0 0.0
        %2376 = vmatmul.mubr.f32.gmra.mrb[0].mxu0 %v996
        %v2377 = vpop.f32.mrb[0].mxu0
        %v2378 = vadd.f32 %v2153, %v2377
        %v2379 = vpop.f32.mrb[0].mxu0
        %2380 = vmatprep.mubr.f32.mxu0 0.0
        %2381 = vmatmul.mubr.f32.gmra.mrb[0].mxu0 %v1005
        %v2382 = vpop.f32.mrb[0].mxu0
        %v2383 = vadd.f32 %v2158, %v2382
        %v2384 = vpop.f32.mrb[0].mxu0
        %2385 = vmatprep.mubr.f32.mxu0 0.0
        %2386 = vmatmul.mubr.f32.gmra.mrb[0].mxu0 %v1014
        %v2387 = vpop.f32.mrb[0].mxu0
        %v2388 = vadd.f32 %v2163, %v2387
        %v2389 = vpop.f32.mrb[0].mxu0
        %2390 = vmatprep.mubr.f32.mxu0 0.0
        %2391 = vmatmul.mubr.f32.gmra.mrb[0].mxu0 %v1023
        %v2392 = vpop.f32.mrb[0].mxu0
        %v2393 = vadd.f32 %v2168, %v2392
        %v2394 = vpop.f32.mrb[0].mxu0
        %2395 = vmatprep.mubr.f32.mxu0 0.0
        %2396 = vmatmul.mubr.f32.gmra.mrb[0].mxu0 %v1032
        %v2397 = vpop.f32.mrb[0].mxu0
        %v2398 = vadd.f32 %v2173, %v2397
        %v2399 = vpop.f32.mrb[0].mxu0
        %2400 = vmatprep.mubr.f32.mxu0 0.0
        %2401 = vmatmul.mubr.f32.gmra.mrb[0].mxu0 %v1041
        %v2402 = vpop.f32.mrb[0].mxu0
        %v2403 = vadd.f32 %v2178, %v2402
        %v2404 = vpop.f32.mrb[0].mxu0
        %2405 = vmatprep.mubr.f32.mxu0 0.0
        %2406 = vmatmul.mubr.f32.gmra.mrb[0].mxu0 %v1050
        %v2407 = vpop.f32.mrb[0].mxu0
        %v2408 = vadd.f32 %v2183, %v2407
        %v2409 = vpop.f32.mrb[0].mxu0
        %2410 = vmatprep.mubr.f32.mxu0 0.0
        %2411 = vmatmul.mubr.f32.gmra.mrb[0].mxu0 %v1059
        %v2412 = vpop.f32.mrb[0].mxu0
        %v2413 = vadd.f32 %v2188, %v2412
        %v2414 = vpop.f32.mrb[0].mxu0
        %2415 = vmatprep.mubr.f32.mxu0 0.0
        %2416 = vmatmul.mubr.f32.gmra.mrb[0].mxu0 %v1068
        %v2417 = vpop.f32.mrb[0].mxu0
        %v2418 = vadd.f32 %v2193, %v2417
        %v2419 = vpop.f32.mrb[0].mxu0
        %2420 = vmatprep.mubr.f32.mxu0 0.0
        %2421 = vmatmul.mubr.f32.gmra.mrb[0].mxu0 %v1077
        %v2422 = vpop.f32.mrb[0].mxu0
        %v2423 = vadd.f32 %v2198, %v2422
        %v2424 = vpop.f32.mrb[0].mxu0
        %2425 = vmatprep.mubr.f32.mxu0 0.0
        %2426 = vmatmul.mubr.f32.gmra.mrb[0].mxu0 %v1086
        %v2427 = vpop.f32.mrb[0].mxu0
        %v2428 = vadd.f32 %v2203, %v2427
        %v2429 = vpop.f32.mrb[0].mxu0
        %2430 = vmatprep.mubr.f32.mxu0 0.0
        %2431 = vmatmul.mubr.f32.gmra.mrb[0].mxu0 %v1095
        %v2432 = vpop.f32.mrb[0].mxu0
        %v2433 = vadd.f32 %v2208, %v2432
        %v2434 = vpop.f32.mrb[0].mxu0
        %2435 = vmatprep.mubr.f32.mxu0 0.0
        %2436 = vmatmul.mubr.f32.gmra.mrb[0].mxu0 %v1104
        %v2437 = vpop.f32.mrb[0].mxu0
        %v2438 = vadd.f32 %v2213, %v2437
        %v2439 = vpop.f32.mrb[0].mxu0
        %2440 = vmatprep.mubr.f32.mxu0 0.0
        %2441 = vmatmul.mubr.f32.gmra.mrb[0].mxu0 %v1113
        %v2442 = vpop.f32.mrb[0].mxu0
        %v2443 = vadd.f32 %v2218, %v2442
        %v2444 = vpop.f32.mrb[0].mxu0
        %2445 = vmatprep.mubr.f32.mxu0 0.0
        %2446 = vmatmul.mubr.f32.gmra.mrb[0].mxu0 %v1122
        %v2447 = vpop.f32.mrb[0].mxu0
        %v2448 = vadd.f32 %v2223, %v2447
        %v2449 = vpop.f32.mrb[0].mxu0
        %2450 = vmatprep.mubr.f32.mxu0 0.0
        %2451 = vmatmul.mubr.f32.gmra.mrb[0].mxu0 %v1131
        %v2452 = vpop.f32.mrb[0].mxu0
        %v2453 = vadd.f32 %v2228, %v2452
        %v2454 = vpop.f32.mrb[0].mxu0
        %2455 = vmatprep.mubr.f32.mxu0 0.0
        %2456 = vmatmul.mubr.f32.gmra.mrb[0].mxu0 %v1140
        %v2457 = vpop.f32.mrb[0].mxu0
        %v2458 = vadd.f32 %v2233, %v2457
        %v2459 = vpop.f32.mrb[0].mxu0
        %2460 = vmatprep.mubr.f32.mxu0 0.0
        %2461 = vmatmul.mubr.f32.gmra.mrb[0].mxu0 %v1149
        %v2462 = vpop.f32.mrb[0].mxu0
        %v2463 = vadd.f32 %v2238, %v2462
        %v2464 = vpop.f32.mrb[0].mxu0
        %2465 = vmatprep.mubr.f32.mxu0 0.0
        %2466 = vmatmul.mubr.f32.gmra.mrb[0].mxu0 %v1158
        %v2467 = vpop.f32.mrb[0].mxu0
        %v2468 = vadd.f32 %v2243, %v2467
        %v2469 = vpop.f32.mrb[0].mxu0
        %2470 = vmatprep.mubr.f32.mxu0 0.0
        %2471 = vmatmul.mubr.f32.gmra.mrb[0].mxu0 %v1167
        %v2472 = vpop.f32.mrb[0].mxu0
        %v2473 = vadd.f32 %v2248, %v2472
        %v2474 = vpop.f32.mrb[0].mxu0
        %2475 = vmatprep.mubr.f32.mxu0 0.0
        %2476 = vmatmul.mubr.f32.gmra.mrb[0].mxu0 %v1176
        %v2477 = vpop.f32.mrb[0].mxu0
        %v2478 = vadd.f32 %v2253, %v2477
        %v2479 = vpop.f32.mrb[0].mxu0
        %2480 = vmatprep.mubr.f32.mxu0 0.0
        %2481 = vmatmul.mubr.f32.gmra.mrb[0].mxu0 %v1185
        %v2482 = vpop.f32.mrb[0].mxu0
        %v2483 = vadd.f32 %v2258, %v2482
        %v2484 = vpop.f32.mrb[0].mxu0
        %2485 = vmatprep.mubr.f32.mxu0 0.0
        %2486 = vmatmul.mubr.f32.gmra.mrb[0].mxu0 %v1194
        %v2487 = vpop.f32.mrb[0].mxu0
        %v2488 = vadd.f32 %v2263, %v2487
        %v2489 = vpop.f32.mrb[0].mxu0
        %2490 = vmatprep.mubr.f32.mxu0 0.0
        %2491 = vmatmul.mubr.f32.gmra.mrb[0].mxu0 %v1203
        %v2492 = vpop.f32.mrb[0].mxu0
        %v2493 = vadd.f32 %v2268, %v2492
        %v2494 = vpop.f32.mrb[0].mxu0
        %2495 = vmatprep.mubr.f32.mxu0 0.0
        %2496 = vmatmul.mubr.f32.gmra.mrb[0].mxu0 %v1212
        %v2497 = vpop.f32.mrb[0].mxu0
        %v2498 = vadd.f32 %v2273, %v2497
        %v2499 = vpop.f32.mrb[0].mxu0
        %2500 = vmatprep.mubr.f32.mxu0 0.0
        %2501 = vmatmul.mubr.f32.gmra.mrb[0].mxu0 %v1221
        %v2502 = vpop.f32.mrb[0].mxu0
        %v2503 = vadd.f32 %v2278, %v2502
        %v2504 = vpop.f32.mrb[0].mxu0
        %2505 = vmatprep.mubr.f32.mxu0 0.0
        %2506 = vmatmul.mubr.f32.gmra.mrb[0].mxu0 %v1230
        %v2507 = vpop.f32.mrb[0].mxu0
        %v2508 = vadd.f32 %v2283, %v2507
        %v2509 = vpop.f32.mrb[0].mxu0
        %2510 = vmatprep.mubr.f32.mxu0 0.0
        %2511 = vmatmul.mubr.f32.gmra.mrb[0].mxu0 %v1239
        %v2512 = vpop.f32.mrb[0].mxu0
        %v2513 = vadd.f32 %v2288, %v2512
        %v2514 = vpop.f32.mrb[0].mxu0
        %2515 = vdwg.mxu0
        %v2516 = vmax.f32 %v2358, 0.0
        %v2517 = vmax.f32 %v2363, 0.0
        %v2518 = vmax.f32 %v2368, 0.0
        %v2519 = vmax.f32 %v2373, 0.0
        %v2520 = vmax.f32 %v2378, 0.0
        %v2521 = vmax.f32 %v2383, 0.0
        %v2522 = vmax.f32 %v2388, 0.0
        %v2523 = vmax.f32 %v2393, 0.0
        %v2524 = vmax.f32 %v2398, 0.0
        %v2525 = vmax.f32 %v2403, 0.0
        %v2526 = vmax.f32 %v2408, 0.0
        %v2527 = vmax.f32 %v2413, 0.0
        %v2528 = vmax.f32 %v2418, 0.0
        %v2529 = vmax.f32 %v2423, 0.0
        %v2530 = vmax.f32 %v2428, 0.0
        %v2531 = vmax.f32 %v2433, 0.0
        %v2532 = vmax.f32 %v2438, 0.0
        %v2533 = vmax.f32 %v2443, 0.0
        %v2534 = vmax.f32 %v2448, 0.0
        %v2535 = vmax.f32 %v2453, 0.0
        %v2536 = vmax.f32 %v2458, 0.0
        %v2537 = vmax.f32 %v2463, 0.0
        %v2538 = vmax.f32 %v2468, 0.0
        %v2539 = vmax.f32 %v2473, 0.0
        %v2540 = vmax.f32 %v2478, 0.0
        %v2541 = vmax.f32 %v2483, 0.0
        %v2542 = vmax.f32 %v2488, 0.0
        %v2543 = vmax.f32 %v2493, 0.0
        %v2544 = vmax.f32 %v2498, 0.0
        %v2545 = vmax.f32 %v2503, 0.0
        %v2546 = vmax.f32 %v2508, 0.0
        %v2547 = vmax.f32 %v2513, 0.0
        %2548 = vst [vmem:[#allocation3] sm:$0xff] 0.0
        %2549 = vst [vmem:[#allocation3 + $0x8] sm:$0xff] 0.0
        %2550 = vst [vmem:[#allocation3 + $0x10] sm:$0x3] 0.0
        %2551 = vst [vmem:[#allocation3 + $0x18] sm:$0xff] 0.0
        %2552 = vst [vmem:[#allocation3 + $0x20] sm:$0xff] 0.0
        %2553 = vst [vmem:[#allocation3 + $0x28] sm:$0x3] 0.0
        %2554 = vst [vmem:[#allocation3 + $0x30] sm:$0xff] 0.0
        %2555 = vst [vmem:[#allocation3 + $0x38] sm:$0xff] 0.0
        %2556 = vst [vmem:[#allocation3 + $0x40] sm:$0x3] 0.0
        %2557 = vst [vmem:[#allocation3 + $0x48] sm:$0xff] 0.0
        %2558 = vst [vmem:[#allocation3 + $0x50] sm:$0xff] 0.0
        %2559 = vst [vmem:[#allocation3 + $0x58] sm:$0x3] 0.0
        %2560 = vst [vmem:[#allocation3 + $0x60] sm:$0xff] 0.0
        %2561 = vst [vmem:[#allocation3 + $0x68] sm:$0xff] 0.0
        %2562 = vst [vmem:[#allocation3 + $0x70] sm:$0x3] 0.0
        %2563 = vst [vmem:[#allocation3 + $0x78] sm:$0xff] 0.0
        %2564 = vst [vmem:[#allocation3 + $0x80] sm:$0xff] 0.0
        %2565 = vst [vmem:[#allocation3 + $0x88] sm:$0x3] 0.0
        %2566 = vst [vmem:[#allocation3 + $0x90] sm:$0xff] 0.0
        %2567 = vst [vmem:[#allocation3 + $0x98] sm:$0xff] 0.0
        %2568 = vst [vmem:[#allocation3 + $0xa0] sm:$0x3] 0.0
        %2569 = vst [vmem:[#allocation3 + $0xa8] sm:$0xff] 0.0
        %2570 = vst [vmem:[#allocation3 + $0xb0] sm:$0xff] 0.0
        %2571 = vst [vmem:[#allocation3 + $0xb8] sm:$0x3] 0.0
        %2572 = vst [vmem:[#allocation3 + $0xc0] sm:$0xff] 0.0
        %2573 = vst [vmem:[#allocation3 + $0xc8] sm:$0xff] 0.0
        %2574 = vst [vmem:[#allocation3 + $0xd0] sm:$0x3] 0.0
        %2575 = vst [vmem:[#allocation3 + $0xd8] sm:$0xff] 0.0
        %2576 = vst [vmem:[#allocation3 + $0xe0] sm:$0xff] 0.0
        %2577 = vst [vmem:[#allocation3 + $0xe8] sm:$0x3] 0.0
        %2578 = vst [vmem:[#allocation3 + $0xf0] sm:$0xff] 0.0
        %2579 = vst [vmem:[#allocation3 + $0xf8] sm:$0xff] 0.0
        %2580 = vst [vmem:[#allocation3 + $0x100] sm:$0x3] 0.0
        %2581 = vst [vmem:[#allocation3 + $0x108] sm:$0xff] 0.0
        %2582 = vst [vmem:[#allocation3 + $0x110] sm:$0xff] 0.0
        %2583 = vst [vmem:[#allocation3 + $0x118] sm:$0x3] 0.0
        %2584 = vst [vmem:[#allocation3 + $0x120] sm:$0xff] 0.0
        %2585 = vst [vmem:[#allocation3 + $0x128] sm:$0xff] 0.0
        %2586 = vst [vmem:[#allocation3 + $0x130] sm:$0x3] 0.0
        %2587 = vst [vmem:[#allocation3 + $0x138] sm:$0xff] 0.0
        %2588 = vst [vmem:[#allocation3 + $0x140] sm:$0xff] 0.0
        %2589 = vst [vmem:[#allocation3 + $0x148] sm:$0x3] 0.0
        %2590 = vst [vmem:[#allocation3 + $0x150] sm:$0xff] 0.0
        %2591 = vst [vmem:[#allocation3 + $0x158] sm:$0xff] 0.0
        %2592 = vst [vmem:[#allocation3 + $0x160] sm:$0x3] 0.0
        %2593 = vst [vmem:[#allocation3 + $0x168] sm:$0xff] 0.0
        %2594 = vst [vmem:[#allocation3 + $0x170] sm:$0xff] 0.0
        %2595 = vst [vmem:[#allocation3 + $0x178] sm:$0x3] 0.0
        %2596 = vst [vmem:[#allocation3 + $0x180] sm:$0xff] 0.0
        %2597 = vst [vmem:[#allocation3 + $0x188] sm:$0xff] 0.0
        %2598 = vst [vmem:[#allocation3 + $0x190] sm:$0x3] 0.0
        %2599 = vst [vmem:[#allocation3 + $0x198] sm:$0xff] 0.0
        %2600 = vst [vmem:[#allocation3 + $0x1a0] sm:$0xff] 0.0
        %2601 = vst [vmem:[#allocation3 + $0x1a8] sm:$0x3] 0.0
        %s2602 = scalar_lea.vmem [#allocation3], 24
        %2603 = vst [vmem:[%s2602 + $0x1] sm:$0xff] %v2516
        %2604 = vst [vmem:[%s2602 + $0x9] sm:$0xff] %v2517
        %2605 = vst [vmem:[%s2602 + $0x19] sm:$0xff] %v2518
        %2606 = vst [vmem:[%s2602 + $0x21] sm:$0xff] %v2519
        %2607 = vst [vmem:[%s2602 + $0x31] sm:$0xff] %v2520
        %2608 = vst [vmem:[%s2602 + $0x39] sm:$0xff] %v2521
        %2609 = vst [vmem:[%s2602 + $0x49] sm:$0xff] %v2522
        %2610 = vst [vmem:[%s2602 + $0x51] sm:$0xff] %v2523
        %2611 = vst [vmem:[%s2602 + $0x61] sm:$0xff] %v2524
        %2612 = vst [vmem:[%s2602 + $0x69] sm:$0xff] %v2525
        %2613 = vst [vmem:[%s2602 + $0x79] sm:$0xff] %v2526
        %2614 = vst [vmem:[%s2602 + $0x81] sm:$0xff] %v2527
        %2615 = vst [vmem:[%s2602 + $0x91] sm:$0xff] %v2528
        %2616 = vst [vmem:[%s2602 + $0x99] sm:$0xff] %v2529
        %2617 = vst [vmem:[%s2602 + $0xa9] sm:$0xff] %v2530
        %2618 = vst [vmem:[%s2602 + $0xb1] sm:$0xff] %v2531
        %2619 = vst [vmem:[%s2602 + $0xc1] sm:$0xff] %v2532
        %2620 = vst [vmem:[%s2602 + $0xc9] sm:$0xff] %v2533
        %2621 = vst [vmem:[%s2602 + $0xd9] sm:$0xff] %v2534
        %2622 = vst [vmem:[%s2602 + $0xe1] sm:$0xff] %v2535
        %2623 = vst [vmem:[%s2602 + $0xf1] sm:$0xff] %v2536
        %2624 = vst [vmem:[%s2602 + $0xf9] sm:$0xff] %v2537
        %2625 = vst [vmem:[%s2602 + $0x109] sm:$0xff] %v2538
        %2626 = vst [vmem:[%s2602 + $0x111] sm:$0xff] %v2539
        %2627 = vst [vmem:[%s2602 + $0x121] sm:$0xff] %v2540
        %2628 = vst [vmem:[%s2602 + $0x129] sm:$0xff] %v2541
        %2629 = vst [vmem:[%s2602 + $0x139] sm:$0xff] %v2542
        %2630 = vst [vmem:[%s2602 + $0x141] sm:$0xff] %v2543
        %2631 = vst [vmem:[%s2602 + $0x151] sm:$0xff] %v2544
        %2632 = vst [vmem:[%s2602 + $0x159] sm:$0xff] %v2545
        %2633 = vst [vmem:[%s2602 + $0x169] sm:$0xff] %v2546
        %2634 = vst [vmem:[%s2602 + $0x171] sm:$0xff] %v2547
        %v2635 = vld [vmem:[#allocation3] sm:$0xff]
        %v2636 = vld [vmem:[#allocation3 + $0x8] sm:$0xff]
        %v2637 = vld [vmem:[#allocation3 + $0x18] sm:$0xff]
        %v2638 = vld [vmem:[#allocation3 + $0x20] sm:$0xff]
        %v2639 = vld [vmem:[#allocation3 + $0x30] sm:$0xff]
        %v2640 = vld [vmem:[#allocation3 + $0x38] sm:$0xff]
        %v2641 = vld [vmem:[#allocation3 + $0x48] sm:$0xff]
        %v2642 = vld [vmem:[#allocation3 + $0x50] sm:$0xff]
        %v2643 = vld [vmem:[#allocation3 + $0x60] sm:$0xff]
        %v2644 = vld [vmem:[#allocation3 + $0x68] sm:$0xff]
        %v2645 = vld [vmem:[#allocation3 + $0x78] sm:$0xff]
        %v2646 = vld [vmem:[#allocation3 + $0x80] sm:$0xff]
        %v2647 = vld [vmem:[#allocation3 + $0x90] sm:$0xff]
        %v2648 = vld [vmem:[#allocation3 + $0x98] sm:$0xff]
        %v2649 = vld [vmem:[#allocation3 + $0xa8] sm:$0xff]
        %v2650 = vld [vmem:[#allocation3 + $0xb0] sm:$0xff]
        %v2651 = vld [vmem:[#allocation3 + $0xc0] sm:$0xff]
        %v2652 = vld [vmem:[#allocation3 + $0xc8] sm:$0xff]
        %v2653 = vld [vmem:[#allocation3 + $0xd8] sm:$0xff]
        %v2654 = vld [vmem:[#allocation3 + $0xe0] sm:$0xff]
        %v2655 = vld [vmem:[#allocation3 + $0xf0] sm:$0xff]
        %v2656 = vld [vmem:[#allocation3 + $0xf8] sm:$0xff]
        %v2657 = vld [vmem:[#allocation3 + $0x108] sm:$0xff]
        %v2658 = vld [vmem:[#allocation3 + $0x110] sm:$0xff]
        %v2659 = vld [vmem:[#allocation3 + $0x120] sm:$0xff]
        %v2660 = vld [vmem:[#allocation3 + $0x128] sm:$0xff]
        %v2661 = vld [vmem:[#allocation3 + $0x138] sm:$0xff]
        %v2662 = vld [vmem:[#allocation3 + $0x140] sm:$0xff]
        %v2663 = vld [vmem:[#allocation3 + $0x150] sm:$0xff]
        %v2664 = vld [vmem:[#allocation3 + $0x158] sm:$0xff]
        %v2665 = vld [vmem:[#allocation3 + $0x168] sm:$0xff]
        %v2666 = vld [vmem:[#allocation3 + $0x170] sm:$0xff]
        %2667 = vst [vmem:[#allocation5] sm:$0xff] %v2635
        %2668 = vst [vmem:[#allocation5 + $0x48] sm:$0xff] %v2636
        %2669 = vst [vmem:[#allocation5 + $0x90] sm:$0xff] %v2637
        %2670 = vst [vmem:[#allocation5 + $0xd8] sm:$0xff] %v2638
        %2671 = vst [vmem:[#allocation5 + $0x120] sm:$0xff] %v2639
        %2672 = vst [vmem:[#allocation5 + $0x168] sm:$0xff] %v2640
        %2673 = vst [vmem:[#allocation5 + $0x1b0] sm:$0xff] %v2641
        %2674 = vst [vmem:[#allocation5 + $0x1f8] sm:$0xff] %v2642
        %2675 = vst [vmem:[#allocation5 + $0x240] sm:$0xff] %v2643
        %2676 = vst [vmem:[#allocation5 + $0x288] sm:$0xff] %v2644
        %2677 = vst [vmem:[#allocation5 + $0x2d0] sm:$0xff] %v2645
        %2678 = vst [vmem:[#allocation5 + $0x318] sm:$0xff] %v2646
        %2679 = vst [vmem:[#allocation5 + $0x360] sm:$0xff] %v2647
        %2680 = vst [vmem:[#allocation5 + $0x3a8] sm:$0xff] %v2648
        %2681 = vst [vmem:[#allocation5 + $0x3f0] sm:$0xff] %v2649
        %2682 = vst [vmem:[#allocation5 + $0x438] sm:$0xff] %v2650
        %2683 = vst [vmem:[#allocation5 + $0x480] sm:$0xff] %v2651
        %2684 = vst [vmem:[#allocation5 + $0x4c8] sm:$0xff] %v2652
        %2685 = vst [vmem:[#allocation5 + $0x510] sm:$0xff] %v2653
        %2686 = vst [vmem:[#allocation5 + $0x558] sm:$0xff] %v2654
        %2687 = vst [vmem:[#allocation5 + $0x5a0] sm:$0xff] %v2655
        %2688 = vst [vmem:[#allocation5 + $0x5e8] sm:$0xff] %v2656
        %2689 = vst [vmem:[#allocation5 + $0x630] sm:$0xff] %v2657
        %2690 = vst [vmem:[#allocation5 + $0x678] sm:$0xff] %v2658
        %2691 = vst [vmem:[#allocation5 + $0x6c0] sm:$0xff] %v2659
        %2692 = vst [vmem:[#allocation5 + $0x708] sm:$0xff] %v2660
        %2693 = vst [vmem:[#allocation5 + $0x750] sm:$0xff] %v2661
        %2694 = vst [vmem:[#allocation5 + $0x798] sm:$0xff] %v2662
        %2695 = vst [vmem:[#allocation5 + $0x7e0] sm:$0xff] %v2663
        %2696 = vst [vmem:[#allocation5 + $0x828] sm:$0xff] %v2664
        %2697 = vst [vmem:[#allocation5 + $0x870] sm:$0xff] %v2665
        %2698 = vst [vmem:[#allocation5 + $0x8b8] sm:$0xff] %v2666
        %v2699 = vld [vmem:[#allocation3 + $0x1] sm:$0xff]
        %v2700 = vld [vmem:[#allocation3 + $0x9] sm:$0xff]
        %v2701 = vld [vmem:[#allocation3 + $0x19] sm:$0xff]
        %v2702 = vld [vmem:[#allocation3 + $0x21] sm:$0xff]
        %v2703 = vld [vmem:[#allocation3 + $0x31] sm:$0xff]
        %v2704 = vld [vmem:[#allocation3 + $0x39] sm:$0xff]
        %v2705 = vld [vmem:[#allocation3 + $0x49] sm:$0xff]
        %v2706 = vld [vmem:[#allocation3 + $0x51] sm:$0xff]
        %v2707 = vld [vmem:[#allocation3 + $0x61] sm:$0xff]
        %v2708 = vld [vmem:[#allocation3 + $0x69] sm:$0xff]
        %v2709 = vld [vmem:[#allocation3 + $0x79] sm:$0xff]
        %v2710 = vld [vmem:[#allocation3 + $0x81] sm:$0xff]
        %v2711 = vld [vmem:[#allocation3 + $0x91] sm:$0xff]
        %v2712 = vld [vmem:[#allocation3 + $0x99] sm:$0xff]
        %v2713 = vld [vmem:[#allocation3 + $0xa9] sm:$0xff]
        %v2714 = vld [vmem:[#allocation3 + $0xb1] sm:$0xff]
        %v2715 = vld [vmem:[#allocation3 + $0xc1] sm:$0xff]
        %v2716 = vld [vmem:[#allocation3 + $0xc9] sm:$0xff]
        %v2717 = vld [vmem:[#allocation3 + $0xd9] sm:$0xff]
        %v2718 = vld [vmem:[#allocation3 + $0xe1] sm:$0xff]
        %v2719 = vld [vmem:[#allocation3 + $0xf1] sm:$0xff]
        %v2720 = vld [vmem:[#allocation3 + $0xf9] sm:$0xff]
        %v2721 = vld [vmem:[#allocation3 + $0x109] sm:$0xff]
        %v2722 = vld [vmem:[#allocation3 + $0x111] sm:$0xff]
        %v2723 = vld [vmem:[#allocation3 + $0x121] sm:$0xff]
        %v2724 = vld [vmem:[#allocation3 + $0x129] sm:$0xff]
        %v2725 = vld [vmem:[#allocation3 + $0x139] sm:$0xff]
        %v2726 = vld [vmem:[#allocation3 + $0x141] sm:$0xff]
        %v2727 = vld [vmem:[#allocation3 + $0x151] sm:$0xff]
        %v2728 = vld [vmem:[#allocation3 + $0x159] sm:$0xff]
        %v2729 = vld [vmem:[#allocation3 + $0x169] sm:$0xff]
        %v2730 = vld [vmem:[#allocation3 + $0x171] sm:$0xff]
        %2731 = vst [vmem:[#allocation5 + $0x8] sm:$0xff] %v2699
        %2732 = vst [vmem:[#allocation5 + $0x50] sm:$0xff] %v2700
        %2733 = vst [vmem:[#allocation5 + $0x98] sm:$0xff] %v2701
        %2734 = vst [vmem:[#allocation5 + $0xe0] sm:$0xff] %v2702
        %2735 = vst [vmem:[#allocation5 + $0x128] sm:$0xff] %v2703
        %2736 = vst [vmem:[#allocation5 + $0x170] sm:$0xff] %v2704
        %2737 = vst [vmem:[#allocation5 + $0x1b8] sm:$0xff] %v2705
        %2738 = vst [vmem:[#allocation5 + $0x200] sm:$0xff] %v2706
        %2739 = vst [vmem:[#allocation5 + $0x248] sm:$0xff] %v2707
        %2740 = vst [vmem:[#allocation5 + $0x290] sm:$0xff] %v2708
        %2741 = vst [vmem:[#allocation5 + $0x2d8] sm:$0xff] %v2709
        %2742 = vst [vmem:[#allocation5 + $0x320] sm:$0xff] %v2710
        %2743 = vst [vmem:[#allocation5 + $0x368] sm:$0xff] %v2711
        %2744 = vst [vmem:[#allocation5 + $0x3b0] sm:$0xff] %v2712
        %2745 = vst [vmem:[#allocation5 + $0x3f8] sm:$0xff] %v2713
        %2746 = vst [vmem:[#allocation5 + $0x440] sm:$0xff] %v2714
        %2747 = vst [vmem:[#allocation5 + $0x488] sm:$0xff] %v2715
        %2748 = vst [vmem:[#allocation5 + $0x4d0] sm:$0xff] %v2716
        %2749 = vst [vmem:[#allocation5 + $0x518] sm:$0xff] %v2717
        %2750 = vst [vmem:[#allocation5 + $0x560] sm:$0xff] %v2718
        %2751 = vst [vmem:[#allocation5 + $0x5a8] sm:$0xff] %v2719
        %2752 = vst [vmem:[#allocation5 + $0x5f0] sm:$0xff] %v2720
        %2753 = vst [vmem:[#allocation5 + $0x638] sm:$0xff] %v2721
        %2754 = vst [vmem:[#allocation5 + $0x680] sm:$0xff] %v2722
        %2755 = vst [vmem:[#allocation5 + $0x6c8] sm:$0xff] %v2723
        %2756 = vst [vmem:[#allocation5 + $0x710] sm:$0xff] %v2724
        %2757 = vst [vmem:[#allocation5 + $0x758] sm:$0xff] %v2725
        %2758 = vst [vmem:[#allocation5 + $0x7a0] sm:$0xff] %v2726
        %2759 = vst [vmem:[#allocation5 + $0x7e8] sm:$0xff] %v2727
        %2760 = vst [vmem:[#allocation5 + $0x830] sm:$0xff] %v2728
        %2761 = vst [vmem:[#allocation5 + $0x878] sm:$0xff] %v2729
        %2762 = vst [vmem:[#allocation5 + $0x8c0] sm:$0xff] %v2730
        %v2763 = vld [vmem:[#allocation3 + $0x2] sm:$0xff]
        %v2764 = vld [vmem:[#allocation3 + $0xa] sm:$0xff]
        %v2765 = vld [vmem:[#allocation3 + $0x1a] sm:$0xff]
        %v2766 = vld [vmem:[#allocation3 + $0x22] sm:$0xff]
        %v2767 = vld [vmem:[#allocation3 + $0x32] sm:$0xff]
        %v2768 = vld [vmem:[#allocation3 + $0x3a] sm:$0xff]
        %v2769 = vld [vmem:[#allocation3 + $0x4a] sm:$0xff]
        %v2770 = vld [vmem:[#allocation3 + $0x52] sm:$0xff]
        %v2771 = vld [vmem:[#allocation3 + $0x62] sm:$0xff]
        %v2772 = vld [vmem:[#allocation3 + $0x6a] sm:$0xff]
        %v2773 = vld [vmem:[#allocation3 + $0x7a] sm:$0xff]
        %v2774 = vld [vmem:[#allocation3 + $0x82] sm:$0xff]
        %v2775 = vld [vmem:[#allocation3 + $0x92] sm:$0xff]
        %v2776 = vld [vmem:[#allocation3 + $0x9a] sm:$0xff]
        %v2777 = vld [vmem:[#allocation3 + $0xaa] sm:$0xff]
        %v2778 = vld [vmem:[#allocation3 + $0xb2] sm:$0xff]
        %v2779 = vld [vmem:[#allocation3 + $0xc2] sm:$0xff]
        %v2780 = vld [vmem:[#allocation3 + $0xca] sm:$0xff]
        %v2781 = vld [vmem:[#allocation3 + $0xda] sm:$0xff]
        %v2782 = vld [vmem:[#allocation3 + $0xe2] sm:$0xff]
        %v2783 = vld [vmem:[#allocation3 + $0xf2] sm:$0xff]
        %v2784 = vld [vmem:[#allocation3 + $0xfa] sm:$0xff]
        %v2785 = vld [vmem:[#allocation3 + $0x10a] sm:$0xff]
        %v2786 = vld [vmem:[#allocation3 + $0x112] sm:$0xff]
        %v2787 = vld [vmem:[#allocation3 + $0x122] sm:$0xff]
        %v2788 = vld [vmem:[#allocation3 + $0x12a] sm:$0xff]
        %v2789 = vld [vmem:[#allocation3 + $0x13a] sm:$0xff]
        %v2790 = vld [vmem:[#allocation3 + $0x142] sm:$0xff]
        %v2791 = vld [vmem:[#allocation3 + $0x152] sm:$0xff]
        %v2792 = vld [vmem:[#allocation3 + $0x15a] sm:$0xff]
        %v2793 = vld [vmem:[#allocation3 + $0x16a] sm:$0xff]
        %v2794 = vld [vmem:[#allocation3 + $0x172] sm:$0xff]
        %2795 = vst [vmem:[#allocation5 + $0x10] sm:$0xff] %v2763
        %2796 = vst [vmem:[#allocation5 + $0x58] sm:$0xff] %v2764
        %2797 = vst [vmem:[#allocation5 + $0xa0] sm:$0xff] %v2765
        %2798 = vst [vmem:[#allocation5 + $0xe8] sm:$0xff] %v2766
        %2799 = vst [vmem:[#allocation5 + $0x130] sm:$0xff] %v2767
        %2800 = vst [vmem:[#allocation5 + $0x178] sm:$0xff] %v2768
        %2801 = vst [vmem:[#allocation5 + $0x1c0] sm:$0xff] %v2769
        %2802 = vst [vmem:[#allocation5 + $0x208] sm:$0xff] %v2770
        %2803 = vst [vmem:[#allocation5 + $0x250] sm:$0xff] %v2771
        %2804 = vst [vmem:[#allocation5 + $0x298] sm:$0xff] %v2772
        %2805 = vst [vmem:[#allocation5 + $0x2e0] sm:$0xff] %v2773
        %2806 = vst [vmem:[#allocation5 + $0x328] sm:$0xff] %v2774
        %2807 = vst [vmem:[#allocation5 + $0x370] sm:$0xff] %v2775
        %2808 = vst [vmem:[#allocation5 + $0x3b8] sm:$0xff] %v2776
        %2809 = vst [vmem:[#allocation5 + $0x400] sm:$0xff] %v2777
        %2810 = vst [vmem:[#allocation5 + $0x448] sm:$0xff] %v2778
        %2811 = vst [vmem:[#allocation5 + $0x490] sm:$0xff] %v2779
        %2812 = vst [vmem:[#allocation5 + $0x4d8] sm:$0xff] %v2780
        %2813 = vst [vmem:[#allocation5 + $0x520] sm:$0xff] %v2781
        %2814 = vst [vmem:[#allocation5 + $0x568] sm:$0xff] %v2782
        %2815 = vst [vmem:[#allocation5 + $0x5b0] sm:$0xff] %v2783
        %2816 = vst [vmem:[#allocation5 + $0x5f8] sm:$0xff] %v2784
        %2817 = vst [vmem:[#allocation5 + $0x640] sm:$0xff] %v2785
        %2818 = vst [vmem:[#allocation5 + $0x688] sm:$0xff] %v2786
        %2819 = vst [vmem:[#allocation5 + $0x6d0] sm:$0xff] %v2787
        %2820 = vst [vmem:[#allocation5 + $0x718] sm:$0xff] %v2788
        %2821 = vst [vmem:[#allocation5 + $0x760] sm:$0xff] %v2789
        %2822 = vst [vmem:[#allocation5 + $0x7a8] sm:$0xff] %v2790
        %2823 = vst [vmem:[#allocation5 + $0x7f0] sm:$0xff] %v2791
        %2824 = vst [vmem:[#allocation5 + $0x838] sm:$0xff] %v2792
        %2825 = vst [vmem:[#allocation5 + $0x880] sm:$0xff] %v2793
        %2826 = vst [vmem:[#allocation5 + $0x8c8] sm:$0xff] %v2794
        %v2827 = vld [vmem:[%s2602] sm:$0xff]
        %v2828 = vld [vmem:[%s2602 + $0x8] sm:$0xff]
        %v2829 = vld [vmem:[%s2602 + $0x18] sm:$0xff]
        %v2830 = vld [vmem:[%s2602 + $0x20] sm:$0xff]
        %v2831 = vld [vmem:[%s2602 + $0x30] sm:$0xff]
        %v2832 = vld [vmem:[%s2602 + $0x38] sm:$0xff]
        %v2833 = vld [vmem:[%s2602 + $0x48] sm:$0xff]
        %v2834 = vld [vmem:[%s2602 + $0x50] sm:$0xff]
        %v2835 = vld [vmem:[%s2602 + $0x60] sm:$0xff]
        %v2836 = vld [vmem:[%s2602 + $0x68] sm:$0xff]
        %v2837 = vld [vmem:[%s2602 + $0x78] sm:$0xff]
        %v2838 = vld [vmem:[%s2602 + $0x80] sm:$0xff]
        %v2839 = vld [vmem:[%s2602 + $0x90] sm:$0xff]
        %v2840 = vld [vmem:[%s2602 + $0x98] sm:$0xff]
        %v2841 = vld [vmem:[%s2602 + $0xa8] sm:$0xff]
        %v2842 = vld [vmem:[%s2602 + $0xb0] sm:$0xff]
        %v2843 = vld [vmem:[%s2602 + $0xc0] sm:$0xff]
        %v2844 = vld [vmem:[%s2602 + $0xc8] sm:$0xff]
        %v2845 = vld [vmem:[%s2602 + $0xd8] sm:$0xff]
        %v2846 = vld [vmem:[%s2602 + $0xe0] sm:$0xff]
        %v2847 = vld [vmem:[%s2602 + $0xf0] sm:$0xff]
        %v2848 = vld [vmem:[%s2602 + $0xf8] sm:$0xff]
        %v2849 = vld [vmem:[%s2602 + $0x108] sm:$0xff]
        %v2850 = vld [vmem:[%s2602 + $0x110] sm:$0xff]
        %v2851 = vld [vmem:[%s2602 + $0x120] sm:$0xff]
        %v2852 = vld [vmem:[%s2602 + $0x128] sm:$0xff]
        %v2853 = vld [vmem:[%s2602 + $0x138] sm:$0xff]
        %v2854 = vld [vmem:[%s2602 + $0x140] sm:$0xff]
        %v2855 = vld [vmem:[%s2602 + $0x150] sm:$0xff]
        %v2856 = vld [vmem:[%s2602 + $0x158] sm:$0xff]
        %v2857 = vld [vmem:[%s2602 + $0x168] sm:$0xff]
        %v2858 = vld [vmem:[%s2602 + $0x170] sm:$0xff]
        %2859 = vst [vmem:[#allocation5 + $0x18] sm:$0xff] %v2827
        %2860 = vst [vmem:[#allocation5 + $0x60] sm:$0xff] %v2828
        %2861 = vst [vmem:[#allocation5 + $0xa8] sm:$0xff] %v2829
        %2862 = vst [vmem:[#allocation5 + $0xf0] sm:$0xff] %v2830
        %2863 = vst [vmem:[#allocation5 + $0x138] sm:$0xff] %v2831
        %2864 = vst [vmem:[#allocation5 + $0x180] sm:$0xff] %v2832
        %2865 = vst [vmem:[#allocation5 + $0x1c8] sm:$0xff] %v2833
        %2866 = vst [vmem:[#allocation5 + $0x210] sm:$0xff] %v2834
        %2867 = vst [vmem:[#allocation5 + $0x258] sm:$0xff] %v2835
        %2868 = vst [vmem:[#allocation5 + $0x2a0] sm:$0xff] %v2836
        %2869 = vst [vmem:[#allocation5 + $0x2e8] sm:$0xff] %v2837
        %2870 = vst [vmem:[#allocation5 + $0x330] sm:$0xff] %v2838
        %2871 = vst [vmem:[#allocation5 + $0x378] sm:$0xff] %v2839
        %2872 = vst [vmem:[#allocation5 + $0x3c0] sm:$0xff] %v2840
        %2873 = vst [vmem:[#allocation5 + $0x408] sm:$0xff] %v2841
        %2874 = vst [vmem:[#allocation5 + $0x450] sm:$0xff] %v2842
        %2875 = vst [vmem:[#allocation5 + $0x498] sm:$0xff] %v2843
        %2876 = vst [vmem:[#allocation5 + $0x4e0] sm:$0xff] %v2844
        %2877 = vst [vmem:[#allocation5 + $0x528] sm:$0xff] %v2845
        %2878 = vst [vmem:[#allocation5 + $0x570] sm:$0xff] %v2846
        %2879 = vst [vmem:[#allocation5 + $0x5b8] sm:$0xff] %v2847
        %2880 = vst [vmem:[#allocation5 + $0x600] sm:$0xff] %v2848
        %2881 = vst [vmem:[#allocation5 + $0x648] sm:$0xff] %v2849
        %2882 = vst [vmem:[#allocation5 + $0x690] sm:$0xff] %v2850
        %2883 = vst [vmem:[#allocation5 + $0x6d8] sm:$0xff] %v2851
        %2884 = vst [vmem:[#allocation5 + $0x720] sm:$0xff] %v2852
        %2885 = vst [vmem:[#allocation5 + $0x768] sm:$0xff] %v2853
        %2886 = vst [vmem:[#allocation5 + $0x7b0] sm:$0xff] %v2854
        %2887 = vst [vmem:[#allocation5 + $0x7f8] sm:$0xff] %v2855
        %2888 = vst [vmem:[#allocation5 + $0x840] sm:$0xff] %v2856
        %2889 = vst [vmem:[#allocation5 + $0x888] sm:$0xff] %v2857
        %2890 = vst [vmem:[#allocation5 + $0x8d0] sm:$0xff] %v2858
        %v2891 = vld [vmem:[%s2602 + $0x1] sm:$0xff]
        %v2892 = vld [vmem:[%s2602 + $0x9] sm:$0xff]
        %v2893 = vld [vmem:[%s2602 + $0x19] sm:$0xff]
        %v2894 = vld [vmem:[%s2602 + $0x21] sm:$0xff]
        %v2895 = vld [vmem:[%s2602 + $0x31] sm:$0xff]
        %v2896 = vld [vmem:[%s2602 + $0x39] sm:$0xff]
        %v2897 = vld [vmem:[%s2602 + $0x49] sm:$0xff]
        %v2898 = vld [vmem:[%s2602 + $0x51] sm:$0xff]
        %v2899 = vld [vmem:[%s2602 + $0x61] sm:$0xff]
        %v2900 = vld [vmem:[%s2602 + $0x69] sm:$0xff]
        %v2901 = vld [vmem:[%s2602 + $0x79] sm:$0xff]
        %v2902 = vld [vmem:[%s2602 + $0x81] sm:$0xff]
        %v2903 = vld [vmem:[%s2602 + $0x91] sm:$0xff]
        %v2904 = vld [vmem:[%s2602 + $0x99] sm:$0xff]
        %v2905 = vld [vmem:[%s2602 + $0xa9] sm:$0xff]
        %v2906 = vld [vmem:[%s2602 + $0xb1] sm:$0xff]
        %v2907 = vld [vmem:[%s2602 + $0xc1] sm:$0xff]
        %v2908 = vld [vmem:[%s2602 + $0xc9] sm:$0xff]
        %v2909 = vld [vmem:[%s2602 + $0xd9] sm:$0xff]
        %v2910 = vld [vmem:[%s2602 + $0xe1] sm:$0xff]
        %v2911 = vld [vmem:[%s2602 + $0xf1] sm:$0xff]
        %v2912 = vld [vmem:[%s2602 + $0xf9] sm:$0xff]
        %v2913 = vld [vmem:[%s2602 + $0x109] sm:$0xff]
        %v2914 = vld [vmem:[%s2602 + $0x111] sm:$0xff]
        %v2915 = vld [vmem:[%s2602 + $0x121] sm:$0xff]
        %v2916 = vld [vmem:[%s2602 + $0x129] sm:$0xff]
        %v2917 = vld [vmem:[%s2602 + $0x139] sm:$0xff]
        %v2918 = vld [vmem:[%s2602 + $0x141] sm:$0xff]
        %v2919 = vld [vmem:[%s2602 + $0x151] sm:$0xff]
        %v2920 = vld [vmem:[%s2602 + $0x159] sm:$0xff]
        %v2921 = vld [vmem:[%s2602 + $0x169] sm:$0xff]
        %v2922 = vld [vmem:[%s2602 + $0x171] sm:$0xff]
        %2923 = vst [vmem:[#allocation5 + $0x20] sm:$0xff] %v2891
        %2924 = vst [vmem:[#allocation5 + $0x68] sm:$0xff] %v2892
        %2925 = vst [vmem:[#allocation5 + $0xb0] sm:$0xff] %v2893
        %2926 = vst [vmem:[#allocation5 + $0xf8] sm:$0xff] %v2894
        %2927 = vst [vmem:[#allocation5 + $0x140] sm:$0xff] %v2895
        %2928 = vst [vmem:[#allocation5 + $0x188] sm:$0xff] %v2896
        %2929 = vst [vmem:[#allocation5 + $0x1d0] sm:$0xff] %v2897
        %2930 = vst [vmem:[#allocation5 + $0x218] sm:$0xff] %v2898
        %2931 = vst [vmem:[#allocation5 + $0x260] sm:$0xff] %v2899
        %2932 = vst [vmem:[#allocation5 + $0x2a8] sm:$0xff] %v2900
        %2933 = vst [vmem:[#allocation5 + $0x2f0] sm:$0xff] %v2901
        %2934 = vst [vmem:[#allocation5 + $0x338] sm:$0xff] %v2902
        %2935 = vst [vmem:[#allocation5 + $0x380] sm:$0xff] %v2903
        %2936 = vst [vmem:[#allocation5 + $0x3c8] sm:$0xff] %v2904
        %2937 = vst [vmem:[#allocation5 + $0x410] sm:$0xff] %v2905
        %2938 = vst [vmem:[#allocation5 + $0x458] sm:$0xff] %v2906
        %2939 = vst [vmem:[#allocation5 + $0x4a0] sm:$0xff] %v2907
        %2940 = vst [vmem:[#allocation5 + $0x4e8] sm:$0xff] %v2908
        %2941 = vst [vmem:[#allocation5 + $0x530] sm:$0xff] %v2909
        %2942 = vst [vmem:[#allocation5 + $0x578] sm:$0xff] %v2910
        %2943 = vst [vmem:[#allocation5 + $0x5c0] sm:$0xff] %v2911
        %2944 = vst [vmem:[#allocation5 + $0x608] sm:$0xff] %v2912
        %2945 = vst [vmem:[#allocation5 + $0x650] sm:$0xff] %v2913
        %2946 = vst [vmem:[#allocation5 + $0x698] sm:$0xff] %v2914
        %2947 = vst [vmem:[#allocation5 + $0x6e0] sm:$0xff] %v2915
        %2948 = vst [vmem:[#allocation5 + $0x728] sm:$0xff] %v2916
        %2949 = vst [vmem:[#allocation5 + $0x770] sm:$0xff] %v2917
        %2950 = vst [vmem:[#allocation5 + $0x7b8] sm:$0xff] %v2918
        %2951 = vst [vmem:[#allocation5 + $0x800] sm:$0xff] %v2919
        %2952 = vst [vmem:[#allocation5 + $0x848] sm:$0xff] %v2920
        %2953 = vst [vmem:[#allocation5 + $0x890] sm:$0xff] %v2921
        %2954 = vst [vmem:[#allocation5 + $0x8d8] sm:$0xff] %v2922
        %v2955 = vld [vmem:[%s2602 + $0x2] sm:$0xff]
        %v2956 = vld [vmem:[%s2602 + $0xa] sm:$0xff]
        %v2957 = vld [vmem:[%s2602 + $0x1a] sm:$0xff]
        %v2958 = vld [vmem:[%s2602 + $0x22] sm:$0xff]
        %v2959 = vld [vmem:[%s2602 + $0x32] sm:$0xff]
        %v2960 = vld [vmem:[%s2602 + $0x3a] sm:$0xff]
        %v2961 = vld [vmem:[%s2602 + $0x4a] sm:$0xff]
        %v2962 = vld [vmem:[%s2602 + $0x52] sm:$0xff]
        %v2963 = vld [vmem:[%s2602 + $0x62] sm:$0xff]
        %v2964 = vld [vmem:[%s2602 + $0x6a] sm:$0xff]
        %v2965 = vld [vmem:[%s2602 + $0x7a] sm:$0xff]
        %v2966 = vld [vmem:[%s2602 + $0x82] sm:$0xff]
        %v2967 = vld [vmem:[%s2602 + $0x92] sm:$0xff]
        %v2968 = vld [vmem:[%s2602 + $0x9a] sm:$0xff]
        %v2969 = vld [vmem:[%s2602 + $0xaa] sm:$0xff]
        %v2970 = vld [vmem:[%s2602 + $0xb2] sm:$0xff]
        %v2971 = vld [vmem:[%s2602 + $0xc2] sm:$0xff]
        %v2972 = vld [vmem:[%s2602 + $0xca] sm:$0xff]
        %v2973 = vld [vmem:[%s2602 + $0xda] sm:$0xff]
        %v2974 = vld [vmem:[%s2602 + $0xe2] sm:$0xff]
        %v2975 = vld [vmem:[%s2602 + $0xf2] sm:$0xff]
        %v2976 = vld [vmem:[%s2602 + $0xfa] sm:$0xff]
        %v2977 = vld [vmem:[%s2602 + $0x10a] sm:$0xff]
        %v2978 = vld [vmem:[%s2602 + $0x112] sm:$0xff]
        %v2979 = vld [vmem:[%s2602 + $0x122] sm:$0xff]
        %v2980 = vld [vmem:[%s2602 + $0x12a] sm:$0xff]
        %v2981 = vld [vmem:[%s2602 + $0x13a] sm:$0xff]
        %v2982 = vld [vmem:[%s2602 + $0x142] sm:$0xff]
        %v2983 = vld [vmem:[%s2602 + $0x152] sm:$0xff]
        %v2984 = vld [vmem:[%s2602 + $0x15a] sm:$0xff]
        %v2985 = vld [vmem:[%s2602 + $0x16a] sm:$0xff]
        %v2986 = vld [vmem:[%s2602 + $0x172] sm:$0xff]
        %2987 = vst [vmem:[#allocation5 + $0x28] sm:$0xff] %v2955
        %2988 = vst [vmem:[#allocation5 + $0x70] sm:$0xff] %v2956
        %2989 = vst [vmem:[#allocation5 + $0xb8] sm:$0xff] %v2957
        %2990 = vst [vmem:[#allocation5 + $0x100] sm:$0xff] %v2958
        %2991 = vst [vmem:[#allocation5 + $0x148] sm:$0xff] %v2959
        %2992 = vst [vmem:[#allocation5 + $0x190] sm:$0xff] %v2960
        %2993 = vst [vmem:[#allocation5 + $0x1d8] sm:$0xff] %v2961
        %2994 = vst [vmem:[#allocation5 + $0x220] sm:$0xff] %v2962
        %2995 = vst [vmem:[#allocation5 + $0x268] sm:$0xff] %v2963
        %2996 = vst [vmem:[#allocation5 + $0x2b0] sm:$0xff] %v2964
        %2997 = vst [vmem:[#allocation5 + $0x2f8] sm:$0xff] %v2965
        %2998 = vst [vmem:[#allocation5 + $0x340] sm:$0xff] %v2966
        %2999 = vst [vmem:[#allocation5 + $0x388] sm:$0xff] %v2967
        %3000 = vst [vmem:[#allocation5 + $0x3d0] sm:$0xff] %v2968
        %3001 = vst [vmem:[#allocation5 + $0x418] sm:$0xff] %v2969
        %3002 = vst [vmem:[#allocation5 + $0x460] sm:$0xff] %v2970
        %3003 = vst [vmem:[#allocation5 + $0x4a8] sm:$0xff] %v2971
        %3004 = vst [vmem:[#allocation5 + $0x4f0] sm:$0xff] %v2972
        %3005 = vst [vmem:[#allocation5 + $0x538] sm:$0xff] %v2973
        %3006 = vst [vmem:[#allocation5 + $0x580] sm:$0xff] %v2974
        %3007 = vst [vmem:[#allocation5 + $0x5c8] sm:$0xff] %v2975
        %3008 = vst [vmem:[#allocation5 + $0x610] sm:$0xff] %v2976
        %3009 = vst [vmem:[#allocation5 + $0x658] sm:$0xff] %v2977
        %3010 = vst [vmem:[#allocation5 + $0x6a0] sm:$0xff] %v2978
        %3011 = vst [vmem:[#allocation5 + $0x6e8] sm:$0xff] %v2979
        %3012 = vst [vmem:[#allocation5 + $0x730] sm:$0xff] %v2980
        %3013 = vst [vmem:[#allocation5 + $0x778] sm:$0xff] %v2981
        %3014 = vst [vmem:[#allocation5 + $0x7c0] sm:$0xff] %v2982
        %3015 = vst [vmem:[#allocation5 + $0x808] sm:$0xff] %v2983
        %3016 = vst [vmem:[#allocation5 + $0x850] sm:$0xff] %v2984
        %3017 = vst [vmem:[#allocation5 + $0x898] sm:$0xff] %v2985
        %3018 = vst [vmem:[#allocation5 + $0x8e0] sm:$0xff] %v2986
        %s3019 = scalar_lea.vmem [#allocation3], 48
        %v3020 = vld [vmem:[%s3019] sm:$0xff]
        %v3021 = vld [vmem:[%s3019 + $0x8] sm:$0xff]
        %v3022 = vld [vmem:[%s3019 + $0x18] sm:$0xff]
        %v3023 = vld [vmem:[%s3019 + $0x20] sm:$0xff]
        %v3024 = vld [vmem:[%s3019 + $0x30] sm:$0xff]
        %v3025 = vld [vmem:[%s3019 + $0x38] sm:$0xff]
        %v3026 = vld [vmem:[%s3019 + $0x48] sm:$0xff]
        %v3027 = vld [vmem:[%s3019 + $0x50] sm:$0xff]
        %v3028 = vld [vmem:[%s3019 + $0x60] sm:$0xff]
        %v3029 = vld [vmem:[%s3019 + $0x68] sm:$0xff]
        %v3030 = vld [vmem:[%s3019 + $0x78] sm:$0xff]
        %v3031 = vld [vmem:[%s3019 + $0x80] sm:$0xff]
        %v3032 = vld [vmem:[%s3019 + $0x90] sm:$0xff]
        %v3033 = vld [vmem:[%s3019 + $0x98] sm:$0xff]
        %v3034 = vld [vmem:[%s3019 + $0xa8] sm:$0xff]
        %v3035 = vld [vmem:[%s3019 + $0xb0] sm:$0xff]
        %v3036 = vld [vmem:[%s3019 + $0xc0] sm:$0xff]
        %v3037 = vld [vmem:[%s3019 + $0xc8] sm:$0xff]
        %v3038 = vld [vmem:[%s3019 + $0xd8] sm:$0xff]
        %v3039 = vld [vmem:[%s3019 + $0xe0] sm:$0xff]
        %v3040 = vld [vmem:[%s3019 + $0xf0] sm:$0xff]
        %v3041 = vld [vmem:[%s3019 + $0xf8] sm:$0xff]
        %v3042 = vld [vmem:[%s3019 + $0x108] sm:$0xff]
        %v3043 = vld [vmem:[%s3019 + $0x110] sm:$0xff]
        %v3044 = vld [vmem:[%s3019 + $0x120] sm:$0xff]
        %v3045 = vld [vmem:[%s3019 + $0x128] sm:$0xff]
        %v3046 = vld [vmem:[%s3019 + $0x138] sm:$0xff]
        %v3047 = vld [vmem:[%s3019 + $0x140] sm:$0xff]
        %v3048 = vld [vmem:[%s3019 + $0x150] sm:$0xff]
        %v3049 = vld [vmem:[%s3019 + $0x158] sm:$0xff]
        %v3050 = vld [vmem:[%s3019 + $0x168] sm:$0xff]
        %v3051 = vld [vmem:[%s3019 + $0x170] sm:$0xff]
        %3052 = vst [vmem:[#allocation5 + $0x30] sm:$0xff] %v3020
        %3053 = vst [vmem:[#allocation5 + $0x78] sm:$0xff] %v3021
        %3054 = vst [vmem:[#allocation5 + $0xc0] sm:$0xff] %v3022
        %3055 = vst [vmem:[#allocation5 + $0x108] sm:$0xff] %v3023
        %3056 = vst [vmem:[#allocation5 + $0x150] sm:$0xff] %v3024
        %3057 = vst [vmem:[#allocation5 + $0x198] sm:$0xff] %v3025
        %3058 = vst [vmem:[#allocation5 + $0x1e0] sm:$0xff] %v3026
        %3059 = vst [vmem:[#allocation5 + $0x228] sm:$0xff] %v3027
        %3060 = vst [vmem:[#allocation5 + $0x270] sm:$0xff] %v3028
        %3061 = vst [vmem:[#allocation5 + $0x2b8] sm:$0xff] %v3029
        %3062 = vst [vmem:[#allocation5 + $0x300] sm:$0xff] %v3030
        %3063 = vst [vmem:[#allocation5 + $0x348] sm:$0xff] %v3031
        %3064 = vst [vmem:[#allocation5 + $0x390] sm:$0xff] %v3032
        %3065 = vst [vmem:[#allocation5 + $0x3d8] sm:$0xff] %v3033
        %3066 = vst [vmem:[#allocation5 + $0x420] sm:$0xff] %v3034
        %3067 = vst [vmem:[#allocation5 + $0x468] sm:$0xff] %v3035
        %3068 = vst [vmem:[#allocation5 + $0x4b0] sm:$0xff] %v3036
        %3069 = vst [vmem:[#allocation5 + $0x4f8] sm:$0xff] %v3037
        %3070 = vst [vmem:[#allocation5 + $0x540] sm:$0xff] %v3038
        %3071 = vst [vmem:[#allocation5 + $0x588] sm:$0xff] %v3039
        %3072 = vst [vmem:[#allocation5 + $0x5d0] sm:$0xff] %v3040
        %3073 = vst [vmem:[#allocation5 + $0x618] sm:$0xff] %v3041
        %3074 = vst [vmem:[#allocation5 + $0x660] sm:$0xff] %v3042
        %3075 = vst [vmem:[#allocation5 + $0x6a8] sm:$0xff] %v3043
        %3076 = vst [vmem:[#allocation5 + $0x6f0] sm:$0xff] %v3044
        %3077 = vst [vmem:[#allocation5 + $0x738] sm:$0xff] %v3045
        %3078 = vst [vmem:[#allocation5 + $0x780] sm:$0xff] %v3046
        %3079 = vst [vmem:[#allocation5 + $0x7c8] sm:$0xff] %v3047
        %3080 = vst [vmem:[#allocation5 + $0x810] sm:$0xff] %v3048
        %3081 = vst [vmem:[#allocation5 + $0x858] sm:$0xff] %v3049
        %3082 = vst [vmem:[#allocation5 + $0x8a0] sm:$0xff] %v3050
        %3083 = vst [vmem:[#allocation5 + $0x8e8] sm:$0xff] %v3051
        %v3084 = vld [vmem:[%s3019 + $0x1] sm:$0xff]
        %v3085 = vld [vmem:[%s3019 + $0x9] sm:$0xff]
        %v3086 = vld [vmem:[%s3019 + $0x19] sm:$0xff]
        %v3087 = vld [vmem:[%s3019 + $0x21] sm:$0xff]
        %v3088 = vld [vmem:[%s3019 + $0x31] sm:$0xff]
        %v3089 = vld [vmem:[%s3019 + $0x39] sm:$0xff]
        %v3090 = vld [vmem:[%s3019 + $0x49] sm:$0xff]
        %v3091 = vld [vmem:[%s3019 + $0x51] sm:$0xff]
        %v3092 = vld [vmem:[%s3019 + $0x61] sm:$0xff]
        %v3093 = vld [vmem:[%s3019 + $0x69] sm:$0xff]
        %v3094 = vld [vmem:[%s3019 + $0x79] sm:$0xff]
        %v3095 = vld [vmem:[%s3019 + $0x81] sm:$0xff]
        %v3096 = vld [vmem:[%s3019 + $0x91] sm:$0xff]
        %v3097 = vld [vmem:[%s3019 + $0x99] sm:$0xff]
        %v3098 = vld [vmem:[%s3019 + $0xa9] sm:$0xff]
        %v3099 = vld [vmem:[%s3019 + $0xb1] sm:$0xff]
        %v3100 = vld [vmem:[%s3019 + $0xc1] sm:$0xff]
        %v3101 = vld [vmem:[%s3019 + $0xc9] sm:$0xff]
        %v3102 = vld [vmem:[%s3019 + $0xd9] sm:$0xff]
        %v3103 = vld [vmem:[%s3019 + $0xe1] sm:$0xff]
        %v3104 = vld [vmem:[%s3019 + $0xf1] sm:$0xff]
        %v3105 = vld [vmem:[%s3019 + $0xf9] sm:$0xff]
        %v3106 = vld [vmem:[%s3019 + $0x109] sm:$0xff]
        %v3107 = vld [vmem:[%s3019 + $0x111] sm:$0xff]
        %v3108 = vld [vmem:[%s3019 + $0x121] sm:$0xff]
        %v3109 = vld [vmem:[%s3019 + $0x129] sm:$0xff]
        %v3110 = vld [vmem:[%s3019 + $0x139] sm:$0xff]
        %v3111 = vld [vmem:[%s3019 + $0x141] sm:$0xff]
        %v3112 = vld [vmem:[%s3019 + $0x151] sm:$0xff]
        %v3113 = vld [vmem:[%s3019 + $0x159] sm:$0xff]
        %v3114 = vld [vmem:[%s3019 + $0x169] sm:$0xff]
        %v3115 = vld [vmem:[%s3019 + $0x171] sm:$0xff]
        %3116 = vst [vmem:[#allocation5 + $0x38] sm:$0xff] %v3084
        %3117 = vst [vmem:[#allocation5 + $0x80] sm:$0xff] %v3085
        %3118 = vst [vmem:[#allocation5 + $0xc8] sm:$0xff] %v3086
        %3119 = vst [vmem:[#allocation5 + $0x110] sm:$0xff] %v3087
        %3120 = vst [vmem:[#allocation5 + $0x158] sm:$0xff] %v3088
        %3121 = vst [vmem:[#allocation5 + $0x1a0] sm:$0xff] %v3089
        %3122 = vst [vmem:[#allocation5 + $0x1e8] sm:$0xff] %v3090
        %3123 = vst [vmem:[#allocation5 + $0x230] sm:$0xff] %v3091
        %3124 = vst [vmem:[#allocation5 + $0x278] sm:$0xff] %v3092
        %3125 = vst [vmem:[#allocation5 + $0x2c0] sm:$0xff] %v3093
        %3126 = vst [vmem:[#allocation5 + $0x308] sm:$0xff] %v3094
        %3127 = vst [vmem:[#allocation5 + $0x350] sm:$0xff] %v3095
        %3128 = vst [vmem:[#allocation5 + $0x398] sm:$0xff] %v3096
        %3129 = vst [vmem:[#allocation5 + $0x3e0] sm:$0xff] %v3097
        %3130 = vst [vmem:[#allocation5 + $0x428] sm:$0xff] %v3098
        %3131 = vst [vmem:[#allocation5 + $0x470] sm:$0xff] %v3099
        %3132 = vst [vmem:[#allocation5 + $0x4b8] sm:$0xff] %v3100
        %3133 = vst [vmem:[#allocation5 + $0x500] sm:$0xff] %v3101
        %3134 = vst [vmem:[#allocation5 + $0x548] sm:$0xff] %v3102
        %3135 = vst [vmem:[#allocation5 + $0x590] sm:$0xff] %v3103
        %3136 = vst [vmem:[#allocation5 + $0x5d8] sm:$0xff] %v3104
        %3137 = vst [vmem:[#allocation5 + $0x620] sm:$0xff] %v3105
        %3138 = vst [vmem:[#allocation5 + $0x668] sm:$0xff] %v3106
        %3139 = vst [vmem:[#allocation5 + $0x6b0] sm:$0xff] %v3107
        %3140 = vst [vmem:[#allocation5 + $0x6f8] sm:$0xff] %v3108
        %3141 = vst [vmem:[#allocation5 + $0x740] sm:$0xff] %v3109
        %3142 = vst [vmem:[#allocation5 + $0x788] sm:$0xff] %v3110
        %3143 = vst [vmem:[#allocation5 + $0x7d0] sm:$0xff] %v3111
        %3144 = vst [vmem:[#allocation5 + $0x818] sm:$0xff] %v3112
        %3145 = vst [vmem:[#allocation5 + $0x860] sm:$0xff] %v3113
        %3146 = vst [vmem:[#allocation5 + $0x8a8] sm:$0xff] %v3114
        %3147 = vst [vmem:[#allocation5 + $0x8f0] sm:$0xff] %v3115
        %v3148 = vld [vmem:[%s3019 + $0x2] sm:$0xff]
        %v3149 = vld [vmem:[%s3019 + $0xa] sm:$0xff]
        %v3150 = vld [vmem:[%s3019 + $0x1a] sm:$0xff]
        %v3151 = vld [vmem:[%s3019 + $0x22] sm:$0xff]
        %v3152 = vld [vmem:[%s3019 + $0x32] sm:$0xff]
        %v3153 = vld [vmem:[%s3019 + $0x3a] sm:$0xff]
        %v3154 = vld [vmem:[%s3019 + $0x4a] sm:$0xff]
        %v3155 = vld [vmem:[%s3019 + $0x52] sm:$0xff]
        %v3156 = vld [vmem:[%s3019 + $0x62] sm:$0xff]
        %v3157 = vld [vmem:[%s3019 + $0x6a] sm:$0xff]
        %v3158 = vld [vmem:[%s3019 + $0x7a] sm:$0xff]
        %v3159 = vld [vmem:[%s3019 + $0x82] sm:$0xff]
        %v3160 = vld [vmem:[%s3019 + $0x92] sm:$0xff]
        %v3161 = vld [vmem:[%s3019 + $0x9a] sm:$0xff]
        %v3162 = vld [vmem:[%s3019 + $0xaa] sm:$0xff]
        %v3163 = vld [vmem:[%s3019 + $0xb2] sm:$0xff]
        %v3164 = vld [vmem:[%s3019 + $0xc2] sm:$0xff]
        %v3165 = vld [vmem:[%s3019 + $0xca] sm:$0xff]
        %v3166 = vld [vmem:[%s3019 + $0xda] sm:$0xff]
        %v3167 = vld [vmem:[%s3019 + $0xe2] sm:$0xff]
        %v3168 = vld [vmem:[%s3019 + $0xf2] sm:$0xff]
        %v3169 = vld [vmem:[%s3019 + $0xfa] sm:$0xff]
        %v3170 = vld [vmem:[%s3019 + $0x10a] sm:$0xff]
        %v3171 = vld [vmem:[%s3019 + $0x112] sm:$0xff]
        %v3172 = vld [vmem:[%s3019 + $0x122] sm:$0xff]
        %v3173 = vld [vmem:[%s3019 + $0x12a] sm:$0xff]
        %v3174 = vld [vmem:[%s3019 + $0x13a] sm:$0xff]
        %v3175 = vld [vmem:[%s3019 + $0x142] sm:$0xff]
        %v3176 = vld [vmem:[%s3019 + $0x152] sm:$0xff]
        %v3177 = vld [vmem:[%s3019 + $0x15a] sm:$0xff]
        %v3178 = vld [vmem:[%s3019 + $0x16a] sm:$0xff]
        %v3179 = vld [vmem:[%s3019 + $0x172] sm:$0xff]
        %3180 = vst [vmem:[#allocation5 + $0x40] sm:$0xff] %v3148
        %3181 = vst [vmem:[#allocation5 + $0x88] sm:$0xff] %v3149
        %3182 = vst [vmem:[#allocation5 + $0xd0] sm:$0xff] %v3150
        %3183 = vst [vmem:[#allocation5 + $0x118] sm:$0xff] %v3151
        %3184 = vst [vmem:[#allocation5 + $0x160] sm:$0xff] %v3152
        %3185 = vst [vmem:[#allocation5 + $0x1a8] sm:$0xff] %v3153
        %3186 = vst [vmem:[#allocation5 + $0x1f0] sm:$0xff] %v3154
        %3187 = vst [vmem:[#allocation5 + $0x238] sm:$0xff] %v3155
        %3188 = vst [vmem:[#allocation5 + $0x280] sm:$0xff] %v3156
        %3189 = vst [vmem:[#allocation5 + $0x2c8] sm:$0xff] %v3157
        %3190 = vst [vmem:[#allocation5 + $0x310] sm:$0xff] %v3158
        %3191 = vst [vmem:[#allocation5 + $0x358] sm:$0xff] %v3159
        %3192 = vst [vmem:[#allocation5 + $0x3a0] sm:$0xff] %v3160
        %3193 = vst [vmem:[#allocation5 + $0x3e8] sm:$0xff] %v3161
        %3194 = vst [vmem:[#allocation5 + $0x430] sm:$0xff] %v3162
        %3195 = vst [vmem:[#allocation5 + $0x478] sm:$0xff] %v3163
        %3196 = vst [vmem:[#allocation5 + $0x4c0] sm:$0xff] %v3164
        %3197 = vst [vmem:[#allocation5 + $0x508] sm:$0xff] %v3165
        %3198 = vst [vmem:[#allocation5 + $0x550] sm:$0xff] %v3166
        %3199 = vst [vmem:[#allocation5 + $0x598] sm:$0xff] %v3167
        %3200 = vst [vmem:[#allocation5 + $0x5e0] sm:$0xff] %v3168
        %3201 = vst [vmem:[#allocation5 + $0x628] sm:$0xff] %v3169
        %3202 = vst [vmem:[#allocation5 + $0x670] sm:$0xff] %v3170
        %3203 = vst [vmem:[#allocation5 + $0x6b8] sm:$0xff] %v3171
        %3204 = vst [vmem:[#allocation5 + $0x700] sm:$0xff] %v3172
        %3205 = vst [vmem:[#allocation5 + $0x748] sm:$0xff] %v3173
        %3206 = vst [vmem:[#allocation5 + $0x790] sm:$0xff] %v3174
        %3207 = vst [vmem:[#allocation5 + $0x7d8] sm:$0xff] %v3175
        %3208 = vst [vmem:[#allocation5 + $0x820] sm:$0xff] %v3176
        %3209 = vst [vmem:[#allocation5 + $0x868] sm:$0xff] %v3177
        %3210 = vst [vmem:[#allocation5 + $0x8b0] sm:$0xff] %v3178
        %3211 = vst [vmem:[#allocation5 + $0x8f8] sm:$0xff] %v3179
        %v3212 = vld [vmem:[#allocation5] sm:$0xff]
        %v3213 = vld [vmem:[#allocation5 + $0x8] sm:$0xff]
        %v3214 = vld [vmem:[#allocation5 + $0x10] sm:$0xff]
        %v3215 = vld [vmem:[#allocation5 + $0x18] sm:$0xff]
        %v3216 = vld [vmem:[#allocation5 + $0x20] sm:$0xff]
        %v3217 = vld [vmem:[#allocation5 + $0x28] sm:$0xff]
        %v3218 = vld [vmem:[#allocation5 + $0x30] sm:$0xff]
        %v3219 = vld [vmem:[#allocation5 + $0x38] sm:$0xff]
        %v3220 = vld [vmem:[#allocation5 + $0x40] sm:$0xff]
        %v3221 = vld [vmem:[#allocation5 + $0x48] sm:$0xff]
        %v3222 = vld [vmem:[#allocation5 + $0x50] sm:$0xff]
        %v3223 = vld [vmem:[#allocation5 + $0x58] sm:$0xff]
        %v3224 = vld [vmem:[#allocation5 + $0x60] sm:$0xff]
        %v3225 = vld [vmem:[#allocation5 + $0x68] sm:$0xff]
        %v3226 = vld [vmem:[#allocation5 + $0x70] sm:$0xff]
        %v3227 = vld [vmem:[#allocation5 + $0x78] sm:$0xff]
        %v3228 = vld [vmem:[#allocation5 + $0x80] sm:$0xff]
        %v3229 = vld [vmem:[#allocation5 + $0x88] sm:$0xff]
        %v3230 = vld [vmem:[#allocation5 + $0x90] sm:$0xff]
        %v3231 = vld [vmem:[#allocation5 + $0x98] sm:$0xff]
        %v3232 = vld [vmem:[#allocation5 + $0xa0] sm:$0xff]
        %v3233 = vld [vmem:[#allocation5 + $0xa8] sm:$0xff]
        %v3234 = vld [vmem:[#allocation5 + $0xb0] sm:$0xff]
        %v3235 = vld [vmem:[#allocation5 + $0xb8] sm:$0xff]
        %v3236 = vld [vmem:[#allocation5 + $0xc0] sm:$0xff]
        %v3237 = vld [vmem:[#allocation5 + $0xc8] sm:$0xff]
        %v3238 = vld [vmem:[#allocation5 + $0xd0] sm:$0xff]
        %v3239 = vld [vmem:[#allocation5 + $0xd8] sm:$0xff]
        %v3240 = vld [vmem:[#allocation5 + $0xe0] sm:$0xff]
        %v3241 = vld [vmem:[#allocation5 + $0xe8] sm:$0xff]
        %v3242 = vld [vmem:[#allocation5 + $0xf0] sm:$0xff]
        %v3243 = vld [vmem:[#allocation5 + $0xf8] sm:$0xff]
        %v3244 = vld [vmem:[#allocation5 + $0x100] sm:$0xff]
        %v3245 = vld [vmem:[#allocation5 + $0x108] sm:$0xff]
        %v3246 = vld [vmem:[#allocation5 + $0x110] sm:$0xff]
        %v3247 = vld [vmem:[#allocation5 + $0x118] sm:$0xff]
        %v3248 = vld [vmem:[#allocation5 + $0x120] sm:$0xff]
        %v3249 = vld [vmem:[#allocation5 + $0x128] sm:$0xff]
        %v3250 = vld [vmem:[#allocation5 + $0x130] sm:$0xff]
        %v3251 = vld [vmem:[#allocation5 + $0x138] sm:$0xff]
        %v3252 = vld [vmem:[#allocation5 + $0x140] sm:$0xff]
        %v3253 = vld [vmem:[#allocation5 + $0x148] sm:$0xff]
        %v3254 = vld [vmem:[#allocation5 + $0x150] sm:$0xff]
        %v3255 = vld [vmem:[#allocation5 + $0x158] sm:$0xff]
        %v3256 = vld [vmem:[#allocation5 + $0x160] sm:$0xff]
        %v3257 = vld [vmem:[#allocation5 + $0x168] sm:$0xff]
        %v3258 = vld [vmem:[#allocation5 + $0x170] sm:$0xff]
        %v3259 = vld [vmem:[#allocation5 + $0x178] sm:$0xff]
        %v3260 = vld [vmem:[#allocation5 + $0x180] sm:$0xff]
        %v3261 = vld [vmem:[#allocation5 + $0x188] sm:$0xff]
        %v3262 = vld [vmem:[#allocation5 + $0x190] sm:$0xff]
        %v3263 = vld [vmem:[#allocation5 + $0x198] sm:$0xff]
        %v3264 = vld [vmem:[#allocation5 + $0x1a0] sm:$0xff]
        %v3265 = vld [vmem:[#allocation5 + $0x1a8] sm:$0xff]
        %v3266 = vld [vmem:[#allocation5 + $0x1b0] sm:$0xff]
        %v3267 = vld [vmem:[#allocation5 + $0x1b8] sm:$0xff]
        %v3268 = vld [vmem:[#allocation5 + $0x1c0] sm:$0xff]
        %v3269 = vld [vmem:[#allocation5 + $0x1c8] sm:$0xff]
        %v3270 = vld [vmem:[#allocation5 + $0x1d0] sm:$0xff]
        %v3271 = vld [vmem:[#allocation5 + $0x1d8] sm:$0xff]
        %v3272 = vld [vmem:[#allocation5 + $0x1e0] sm:$0xff]
        %v3273 = vld [vmem:[#allocation5 + $0x1e8] sm:$0xff]
        %v3274 = vld [vmem:[#allocation5 + $0x1f0] sm:$0xff]
        %v3275 = vld [vmem:[#allocation5 + $0x1f8] sm:$0xff]
        %v3276 = vld [vmem:[#allocation5 + $0x200] sm:$0xff]
        %v3277 = vld [vmem:[#allocation5 + $0x208] sm:$0xff]
        %v3278 = vld [vmem:[#allocation5 + $0x210] sm:$0xff]
        %v3279 = vld [vmem:[#allocation5 + $0x218] sm:$0xff]
        %v3280 = vld [vmem:[#allocation5 + $0x220] sm:$0xff]
        %v3281 = vld [vmem:[#allocation5 + $0x228] sm:$0xff]
        %v3282 = vld [vmem:[#allocation5 + $0x230] sm:$0xff]
        %v3283 = vld [vmem:[#allocation5 + $0x238] sm:$0xff]
        %v3284 = vld [vmem:[#allocation5 + $0x240] sm:$0xff]
        %v3285 = vld [vmem:[#allocation5 + $0x248] sm:$0xff]
        %v3286 = vld [vmem:[#allocation5 + $0x250] sm:$0xff]
        %v3287 = vld [vmem:[#allocation5 + $0x258] sm:$0xff]
        %v3288 = vld [vmem:[#allocation5 + $0x260] sm:$0xff]
        %v3289 = vld [vmem:[#allocation5 + $0x268] sm:$0xff]
        %v3290 = vld [vmem:[#allocation5 + $0x270] sm:$0xff]
        %v3291 = vld [vmem:[#allocation5 + $0x278] sm:$0xff]
        %v3292 = vld [vmem:[#allocation5 + $0x280] sm:$0xff]
        %v3293 = vld [vmem:[#allocation5 + $0x288] sm:$0xff]
        %v3294 = vld [vmem:[#allocation5 + $0x290] sm:$0xff]
        %v3295 = vld [vmem:[#allocation5 + $0x298] sm:$0xff]
        %v3296 = vld [vmem:[#allocation5 + $0x2a0] sm:$0xff]
        %v3297 = vld [vmem:[#allocation5 + $0x2a8] sm:$0xff]
        %v3298 = vld [vmem:[#allocation5 + $0x2b0] sm:$0xff]
        %v3299 = vld [vmem:[#allocation5 + $0x2b8] sm:$0xff]
        %v3300 = vld [vmem:[#allocation5 + $0x2c0] sm:$0xff]
        %v3301 = vld [vmem:[#allocation5 + $0x2c8] sm:$0xff]
        %v3302 = vld [vmem:[#allocation5 + $0x2d0] sm:$0xff]
        %v3303 = vld [vmem:[#allocation5 + $0x2d8] sm:$0xff]
        %v3304 = vld [vmem:[#allocation5 + $0x2e0] sm:$0xff]
        %v3305 = vld [vmem:[#allocation5 + $0x2e8] sm:$0xff]
        %v3306 = vld [vmem:[#allocation5 + $0x2f0] sm:$0xff]
        %v3307 = vld [vmem:[#allocation5 + $0x2f8] sm:$0xff]
        %v3308 = vld [vmem:[#allocation5 + $0x300] sm:$0xff]
        %v3309 = vld [vmem:[#allocation5 + $0x308] sm:$0xff]
        %v3310 = vld [vmem:[#allocation5 + $0x310] sm:$0xff]
        %v3311 = vld [vmem:[#allocation5 + $0x318] sm:$0xff]
        %v3312 = vld [vmem:[#allocation5 + $0x320] sm:$0xff]
        %v3313 = vld [vmem:[#allocation5 + $0x328] sm:$0xff]
        %v3314 = vld [vmem:[#allocation5 + $0x330] sm:$0xff]
        %v3315 = vld [vmem:[#allocation5 + $0x338] sm:$0xff]
        %v3316 = vld [vmem:[#allocation5 + $0x340] sm:$0xff]
        %v3317 = vld [vmem:[#allocation5 + $0x348] sm:$0xff]
        %v3318 = vld [vmem:[#allocation5 + $0x350] sm:$0xff]
        %v3319 = vld [vmem:[#allocation5 + $0x358] sm:$0xff]
        %v3320 = vld [vmem:[#allocation5 + $0x360] sm:$0xff]
        %v3321 = vld [vmem:[#allocation5 + $0x368] sm:$0xff]
        %v3322 = vld [vmem:[#allocation5 + $0x370] sm:$0xff]
        %v3323 = vld [vmem:[#allocation5 + $0x378] sm:$0xff]
        %v3324 = vld [vmem:[#allocation5 + $0x380] sm:$0xff]
        %v3325 = vld [vmem:[#allocation5 + $0x388] sm:$0xff]
        %v3326 = vld [vmem:[#allocation5 + $0x390] sm:$0xff]
        %v3327 = vld [vmem:[#allocation5 + $0x398] sm:$0xff]
        %v3328 = vld [vmem:[#allocation5 + $0x3a0] sm:$0xff]
        %v3329 = vld [vmem:[#allocation5 + $0x3a8] sm:$0xff]
        %v3330 = vld [vmem:[#allocation5 + $0x3b0] sm:$0xff]
        %v3331 = vld [vmem:[#allocation5 + $0x3b8] sm:$0xff]
        %v3332 = vld [vmem:[#allocation5 + $0x3c0] sm:$0xff]
        %v3333 = vld [vmem:[#allocation5 + $0x3c8] sm:$0xff]
        %v3334 = vld [vmem:[#allocation5 + $0x3d0] sm:$0xff]
        %v3335 = vld [vmem:[#allocation5 + $0x3d8] sm:$0xff]
        %v3336 = vld [vmem:[#allocation5 + $0x3e0] sm:$0xff]
        %v3337 = vld [vmem:[#allocation5 + $0x3e8] sm:$0xff]
        %v3338 = vld [vmem:[#allocation5 + $0x3f0] sm:$0xff]
        %v3339 = vld [vmem:[#allocation5 + $0x3f8] sm:$0xff]
        %v3340 = vld [vmem:[#allocation5 + $0x400] sm:$0xff]
        %v3341 = vld [vmem:[#allocation5 + $0x408] sm:$0xff]
        %v3342 = vld [vmem:[#allocation5 + $0x410] sm:$0xff]
        %v3343 = vld [vmem:[#allocation5 + $0x418] sm:$0xff]
        %v3344 = vld [vmem:[#allocation5 + $0x420] sm:$0xff]
        %v3345 = vld [vmem:[#allocation5 + $0x428] sm:$0xff]
        %v3346 = vld [vmem:[#allocation5 + $0x430] sm:$0xff]
        %v3347 = vld [vmem:[#allocation5 + $0x438] sm:$0xff]
        %v3348 = vld [vmem:[#allocation5 + $0x440] sm:$0xff]
        %v3349 = vld [vmem:[#allocation5 + $0x448] sm:$0xff]
        %v3350 = vld [vmem:[#allocation5 + $0x450] sm:$0xff]
        %v3351 = vld [vmem:[#allocation5 + $0x458] sm:$0xff]
        %v3352 = vld [vmem:[#allocation5 + $0x460] sm:$0xff]
        %v3353 = vld [vmem:[#allocation5 + $0x468] sm:$0xff]
        %v3354 = vld [vmem:[#allocation5 + $0x470] sm:$0xff]
        %v3355 = vld [vmem:[#allocation5 + $0x478] sm:$0xff]
        %v3356 = vld [vmem:[#allocation5 + $0x480] sm:$0xff]
        %v3357 = vld [vmem:[#allocation5 + $0x488] sm:$0xff]
        %v3358 = vld [vmem:[#allocation5 + $0x490] sm:$0xff]
        %v3359 = vld [vmem:[#allocation5 + $0x498] sm:$0xff]
        %v3360 = vld [vmem:[#allocation5 + $0x4a0] sm:$0xff]
        %v3361 = vld [vmem:[#allocation5 + $0x4a8] sm:$0xff]
        %v3362 = vld [vmem:[#allocation5 + $0x4b0] sm:$0xff]
        %v3363 = vld [vmem:[#allocation5 + $0x4b8] sm:$0xff]
        %v3364 = vld [vmem:[#allocation5 + $0x4c0] sm:$0xff]
        %v3365 = vld [vmem:[#allocation5 + $0x4c8] sm:$0xff]
        %v3366 = vld [vmem:[#allocation5 + $0x4d0] sm:$0xff]
        %v3367 = vld [vmem:[#allocation5 + $0x4d8] sm:$0xff]
        %v3368 = vld [vmem:[#allocation5 + $0x4e0] sm:$0xff]
        %v3369 = vld [vmem:[#allocation5 + $0x4e8] sm:$0xff]
        %v3370 = vld [vmem:[#allocation5 + $0x4f0] sm:$0xff]
        %v3371 = vld [vmem:[#allocation5 + $0x4f8] sm:$0xff]
        %v3372 = vld [vmem:[#allocation5 + $0x500] sm:$0xff]
        %v3373 = vld [vmem:[#allocation5 + $0x508] sm:$0xff]
        %v3374 = vld [vmem:[#allocation5 + $0x510] sm:$0xff]
        %v3375 = vld [vmem:[#allocation5 + $0x518] sm:$0xff]
        %v3376 = vld [vmem:[#allocation5 + $0x520] sm:$0xff]
        %v3377 = vld [vmem:[#allocation5 + $0x528] sm:$0xff]
        %v3378 = vld [vmem:[#allocation5 + $0x530] sm:$0xff]
        %v3379 = vld [vmem:[#allocation5 + $0x538] sm:$0xff]
        %v3380 = vld [vmem:[#allocation5 + $0x540] sm:$0xff]
        %v3381 = vld [vmem:[#allocation5 + $0x548] sm:$0xff]
        %v3382 = vld [vmem:[#allocation5 + $0x550] sm:$0xff]
        %v3383 = vld [vmem:[#allocation5 + $0x558] sm:$0xff]
        %v3384 = vld [vmem:[#allocation5 + $0x560] sm:$0xff]
        %v3385 = vld [vmem:[#allocation5 + $0x568] sm:$0xff]
        %v3386 = vld [vmem:[#allocation5 + $0x570] sm:$0xff]
        %v3387 = vld [vmem:[#allocation5 + $0x578] sm:$0xff]
        %v3388 = vld [vmem:[#allocation5 + $0x580] sm:$0xff]
        %v3389 = vld [vmem:[#allocation5 + $0x588] sm:$0xff]
        %v3390 = vld [vmem:[#allocation5 + $0x590] sm:$0xff]
        %v3391 = vld [vmem:[#allocation5 + $0x598] sm:$0xff]
        %v3392 = vld [vmem:[#allocation5 + $0x5a0] sm:$0xff]
        %v3393 = vld [vmem:[#allocation5 + $0x5a8] sm:$0xff]
        %v3394 = vld [vmem:[#allocation5 + $0x5b0] sm:$0xff]
        %v3395 = vld [vmem:[#allocation5 + $0x5b8] sm:$0xff]
        %v3396 = vld [vmem:[#allocation5 + $0x5c0] sm:$0xff]
        %v3397 = vld [vmem:[#allocation5 + $0x5c8] sm:$0xff]
        %v3398 = vld [vmem:[#allocation5 + $0x5d0] sm:$0xff]
        %v3399 = vld [vmem:[#allocation5 + $0x5d8] sm:$0xff]
        %v3400 = vld [vmem:[#allocation5 + $0x5e0] sm:$0xff]
        %v3401 = vld [vmem:[#allocation5 + $0x5e8] sm:$0xff]
        %v3402 = vld [vmem:[#allocation5 + $0x5f0] sm:$0xff]
        %v3403 = vld [vmem:[#allocation5 + $0x5f8] sm:$0xff]
        %v3404 = vld [vmem:[#allocation5 + $0x600] sm:$0xff]
        %v3405 = vld [vmem:[#allocation5 + $0x608] sm:$0xff]
        %v3406 = vld [vmem:[#allocation5 + $0x610] sm:$0xff]
        %v3407 = vld [vmem:[#allocation5 + $0x618] sm:$0xff]
        %v3408 = vld [vmem:[#allocation5 + $0x620] sm:$0xff]
        %v3409 = vld [vmem:[#allocation5 + $0x628] sm:$0xff]
        %v3410 = vld [vmem:[#allocation5 + $0x630] sm:$0xff]
        %v3411 = vld [vmem:[#allocation5 + $0x638] sm:$0xff]
        %v3412 = vld [vmem:[#allocation5 + $0x640] sm:$0xff]
        %v3413 = vld [vmem:[#allocation5 + $0x648] sm:$0xff]
        %v3414 = vld [vmem:[#allocation5 + $0x650] sm:$0xff]
        %v3415 = vld [vmem:[#allocation5 + $0x658] sm:$0xff]
        %v3416 = vld [vmem:[#allocation5 + $0x660] sm:$0xff]
        %v3417 = vld [vmem:[#allocation5 + $0x668] sm:$0xff]
        %v3418 = vld [vmem:[#allocation5 + $0x670] sm:$0xff]
        %v3419 = vld [vmem:[#allocation5 + $0x678] sm:$0xff]
        %v3420 = vld [vmem:[#allocation5 + $0x680] sm:$0xff]
        %v3421 = vld [vmem:[#allocation5 + $0x688] sm:$0xff]
        %v3422 = vld [vmem:[#allocation5 + $0x690] sm:$0xff]
        %v3423 = vld [vmem:[#allocation5 + $0x698] sm:$0xff]
        %v3424 = vld [vmem:[#allocation5 + $0x6a0] sm:$0xff]
        %v3425 = vld [vmem:[#allocation5 + $0x6a8] sm:$0xff]
        %v3426 = vld [vmem:[#allocation5 + $0x6b0] sm:$0xff]
        %v3427 = vld [vmem:[#allocation5 + $0x6b8] sm:$0xff]
        %v3428 = vld [vmem:[#allocation5 + $0x6c0] sm:$0xff]
        %v3429 = vld [vmem:[#allocation5 + $0x6c8] sm:$0xff]
        %v3430 = vld [vmem:[#allocation5 + $0x6d0] sm:$0xff]
        %v3431 = vld [vmem:[#allocation5 + $0x6d8] sm:$0xff]
        %v3432 = vld [vmem:[#allocation5 + $0x6e0] sm:$0xff]
        %v3433 = vld [vmem:[#allocation5 + $0x6e8] sm:$0xff]
        %v3434 = vld [vmem:[#allocation5 + $0x6f0] sm:$0xff]
        %v3435 = vld [vmem:[#allocation5 + $0x6f8] sm:$0xff]
        %v3436 = vld [vmem:[#allocation5 + $0x700] sm:$0xff]
        %v3437 = vld [vmem:[#allocation5 + $0x708] sm:$0xff]
        %v3438 = vld [vmem:[#allocation5 + $0x710] sm:$0xff]
        %v3439 = vld [vmem:[#allocation5 + $0x718] sm:$0xff]
        %v3440 = vld [vmem:[#allocation5 + $0x720] sm:$0xff]
        %v3441 = vld [vmem:[#allocation5 + $0x728] sm:$0xff]
        %v3442 = vld [vmem:[#allocation5 + $0x730] sm:$0xff]
        %v3443 = vld [vmem:[#allocation5 + $0x738] sm:$0xff]
        %v3444 = vld [vmem:[#allocation5 + $0x740] sm:$0xff]
        %v3445 = vld [vmem:[#allocation5 + $0x748] sm:$0xff]
        %v3446 = vld [vmem:[#allocation5 + $0x750] sm:$0xff]
        %v3447 = vld [vmem:[#allocation5 + $0x758] sm:$0xff]
        %v3448 = vld [vmem:[#allocation5 + $0x760] sm:$0xff]
        %v3449 = vld [vmem:[#allocation5 + $0x768] sm:$0xff]
        %v3450 = vld [vmem:[#allocation5 + $0x770] sm:$0xff]
        %v3451 = vld [vmem:[#allocation5 + $0x778] sm:$0xff]
        %v3452 = vld [vmem:[#allocation5 + $0x780] sm:$0xff]
        %v3453 = vld [vmem:[#allocation5 + $0x788] sm:$0xff]
        %v3454 = vld [vmem:[#allocation5 + $0x790] sm:$0xff]
        %v3455 = vld [vmem:[#allocation5 + $0x798] sm:$0xff]
        %v3456 = vld [vmem:[#allocation5 + $0x7a0] sm:$0xff]
        %v3457 = vld [vmem:[#allocation5 + $0x7a8] sm:$0xff]
        %v3458 = vld [vmem:[#allocation5 + $0x7b0] sm:$0xff]
        %v3459 = vld [vmem:[#allocation5 + $0x7b8] sm:$0xff]
        %v3460 = vld [vmem:[#allocation5 + $0x7c0] sm:$0xff]
        %v3461 = vld [vmem:[#allocation5 + $0x7c8] sm:$0xff]
        %v3462 = vld [vmem:[#allocation5 + $0x7d0] sm:$0xff]
        %v3463 = vld [vmem:[#allocation5 + $0x7d8] sm:$0xff]
        %v3464 = vld [vmem:[#allocation5 + $0x7e0] sm:$0xff]
        %v3465 = vld [vmem:[#allocation5 + $0x7e8] sm:$0xff]
        %v3466 = vld [vmem:[#allocation5 + $0x7f0] sm:$0xff]
        %v3467 = vld [vmem:[#allocation5 + $0x7f8] sm:$0xff]
        %v3468 = vld [vmem:[#allocation5 + $0x800] sm:$0xff]
        %v3469 = vld [vmem:[#allocation5 + $0x808] sm:$0xff]
        %v3470 = vld [vmem:[#allocation5 + $0x810] sm:$0xff]
        %v3471 = vld [vmem:[#allocation5 + $0x818] sm:$0xff]
        %v3472 = vld [vmem:[#allocation5 + $0x820] sm:$0xff]
        %v3473 = vld [vmem:[#allocation5 + $0x828] sm:$0xff]
        %v3474 = vld [vmem:[#allocation5 + $0x830] sm:$0xff]
        %v3475 = vld [vmem:[#allocation5 + $0x838] sm:$0xff]
        %v3476 = vld [vmem:[#allocation5 + $0x840] sm:$0xff]
        %v3477 = vld [vmem:[#allocation5 + $0x848] sm:$0xff]
        %v3478 = vld [vmem:[#allocation5 + $0x850] sm:$0xff]
        %v3479 = vld [vmem:[#allocation5 + $0x858] sm:$0xff]
        %v3480 = vld [vmem:[#allocation5 + $0x860] sm:$0xff]
        %v3481 = vld [vmem:[#allocation5 + $0x868] sm:$0xff]
        %v3482 = vld [vmem:[#allocation5 + $0x870] sm:$0xff]
        %v3483 = vld [vmem:[#allocation5 + $0x878] sm:$0xff]
        %v3484 = vld [vmem:[#allocation5 + $0x880] sm:$0xff]
        %v3485 = vld [vmem:[#allocation5 + $0x888] sm:$0xff]
        %v3486 = vld [vmem:[#allocation5 + $0x890] sm:$0xff]
        %v3487 = vld [vmem:[#allocation5 + $0x898] sm:$0xff]
        %v3488 = vld [vmem:[#allocation5 + $0x8a0] sm:$0xff]
        %v3489 = vld [vmem:[#allocation5 + $0x8a8] sm:$0xff]
        %v3490 = vld [vmem:[#allocation5 + $0x8b0] sm:$0xff]
        %v3491 = vld [vmem:[#allocation5 + $0x8b8] sm:$0xff]
        %v3492 = vld [vmem:[#allocation5 + $0x8c0] sm:$0xff]
        %v3493 = vld [vmem:[#allocation5 + $0x8c8] sm:$0xff]
        %v3494 = vld [vmem:[#allocation5 + $0x8d0] sm:$0xff]
        %v3495 = vld [vmem:[#allocation5 + $0x8d8] sm:$0xff]
        %v3496 = vld [vmem:[#allocation5 + $0x8e0] sm:$0xff]
        %v3497 = vld [vmem:[#allocation5 + $0x8e8] sm:$0xff]
        %v3498 = vld [vmem:[#allocation5 + $0x8f0] sm:$0xff]
        %v3499 = vld [vmem:[#allocation5 + $0x8f8] sm:$0xff]
        %v3500 = vld [vmem:[#allocation8] sm:$0xff]
        %v3501 = vld [vmem:[#allocation8 + $0x8] sm:$0xff]
        %v3502 = vld [vmem:[#allocation8 + $0x10] sm:$0xff]
        %v3503 = vld [vmem:[#allocation8 + $0x18] sm:$0xff]
        %v3504 = vld [vmem:[#allocation8 + $0x20] sm:$0xff]
        %v3505 = vld [vmem:[#allocation8 + $0x28] sm:$0xff]
        %v3506 = vld [vmem:[#allocation8 + $0x30] sm:$0xff]
        %v3507 = vld [vmem:[#allocation8 + $0x38] sm:$0xff]
        %v3508 = vld [vmem:[#allocation8 + $0x40] sm:$0xff]
        %v3509 = vld [vmem:[#allocation8 + $0x48] sm:$0xff]
        %v3510 = vld [vmem:[#allocation8 + $0x50] sm:$0xff]
        %v3511 = vld [vmem:[#allocation8 + $0x58] sm:$0xff]
        %v3512 = vld [vmem:[#allocation8 + $0x60] sm:$0xff]
        %v3513 = vld [vmem:[#allocation8 + $0x68] sm:$0xff]
        %v3514 = vld [vmem:[#allocation8 + $0x70] sm:$0xff]
        %v3515 = vld [vmem:[#allocation8 + $0x78] sm:$0xff]
        %v3516 = vld [vmem:[#allocation8 + $0x80] sm:$0xff]
        %v3517 = vld [vmem:[#allocation8 + $0x88] sm:$0xff]
        %v3518 = vld [vmem:[#allocation8 + $0x90] sm:$0xff]
        %v3519 = vld [vmem:[#allocation8 + $0x98] sm:$0xff]
        %v3520 = vld [vmem:[#allocation8 + $0xa0] sm:$0xff]
        %v3521 = vld [vmem:[#allocation8 + $0xa8] sm:$0xff]
        %v3522 = vld [vmem:[#allocation8 + $0xb0] sm:$0xff]
        %v3523 = vld [vmem:[#allocation8 + $0xb8] sm:$0xff]
        %v3524 = vld [vmem:[#allocation8 + $0xc0] sm:$0xff]
        %v3525 = vld [vmem:[#allocation8 + $0xc8] sm:$0xff]
        %v3526 = vld [vmem:[#allocation8 + $0xd0] sm:$0xff]
        %v3527 = vld [vmem:[#allocation8 + $0xd8] sm:$0xff]
        %v3528 = vld [vmem:[#allocation8 + $0xe0] sm:$0xff]
        %v3529 = vld [vmem:[#allocation8 + $0xe8] sm:$0xff]
        %v3530 = vld [vmem:[#allocation8 + $0xf0] sm:$0xff]
        %v3531 = vld [vmem:[#allocation8 + $0xf8] sm:$0xff]
        %v3532 = vld [vmem:[#allocation8 + $0x100] sm:$0xff]
        %v3533 = vld [vmem:[#allocation8 + $0x108] sm:$0xff]
        %v3534 = vld [vmem:[#allocation8 + $0x110] sm:$0xff]
        %v3535 = vld [vmem:[#allocation8 + $0x118] sm:$0xff]
        %v3536 = vld [vmem:[#allocation8 + $0x120] sm:$0xff]
        %v3537 = vld [vmem:[#allocation8 + $0x128] sm:$0xff]
        %v3538 = vld [vmem:[#allocation8 + $0x130] sm:$0xff]
        %v3539 = vld [vmem:[#allocation8 + $0x138] sm:$0xff]
        %v3540 = vld [vmem:[#allocation8 + $0x140] sm:$0xff]
        %v3541 = vld [vmem:[#allocation8 + $0x148] sm:$0xff]
        %v3542 = vld [vmem:[#allocation8 + $0x150] sm:$0xff]
        %v3543 = vld [vmem:[#allocation8 + $0x158] sm:$0xff]
        %v3544 = vld [vmem:[#allocation8 + $0x160] sm:$0xff]
        %v3545 = vld [vmem:[#allocation8 + $0x168] sm:$0xff]
        %v3546 = vld [vmem:[#allocation8 + $0x170] sm:$0xff]
        %v3547 = vld [vmem:[#allocation8 + $0x178] sm:$0xff]
        %v3548 = vld [vmem:[#allocation8 + $0x180] sm:$0xff]
        %v3549 = vld [vmem:[#allocation8 + $0x188] sm:$0xff]
        %v3550 = vld [vmem:[#allocation8 + $0x190] sm:$0xff]
        %v3551 = vld [vmem:[#allocation8 + $0x198] sm:$0xff]
        %v3552 = vld [vmem:[#allocation8 + $0x1a0] sm:$0xff]
        %v3553 = vld [vmem:[#allocation8 + $0x1a8] sm:$0xff]
        %v3554 = vld [vmem:[#allocation8 + $0x1b0] sm:$0xff]
        %v3555 = vld [vmem:[#allocation8 + $0x1b8] sm:$0xff]
        %v3556 = vld [vmem:[#allocation8 + $0x1c0] sm:$0xff]
        %v3557 = vld [vmem:[#allocation8 + $0x1c8] sm:$0xff]
        %v3558 = vld [vmem:[#allocation8 + $0x1d0] sm:$0xff]
        %v3559 = vld [vmem:[#allocation8 + $0x1d8] sm:$0xff]
        %v3560 = vld [vmem:[#allocation8 + $0x1e0] sm:$0xff]
        %v3561 = vld [vmem:[#allocation8 + $0x1e8] sm:$0xff]
        %v3562 = vld [vmem:[#allocation8 + $0x1f0] sm:$0xff]
        %v3563 = vld [vmem:[#allocation8 + $0x1f8] sm:$0xff]
        %v3564 = vld [vmem:[#allocation8 + $0x200] sm:$0xff]
        %v3565 = vld [vmem:[#allocation8 + $0x208] sm:$0xff]
        %v3566 = vld [vmem:[#allocation8 + $0x210] sm:$0xff]
        %v3567 = vld [vmem:[#allocation8 + $0x218] sm:$0xff]
        %v3568 = vld [vmem:[#allocation8 + $0x220] sm:$0xff]
        %v3569 = vld [vmem:[#allocation8 + $0x228] sm:$0xff]
        %v3570 = vld [vmem:[#allocation8 + $0x230] sm:$0xff]
        %v3571 = vld [vmem:[#allocation8 + $0x238] sm:$0xff]
        %v3572 = vld [vmem:[#allocation8 + $0x240] sm:$0xff]
        %v3573 = vld [vmem:[#allocation8 + $0x248] sm:$0xff]
        %v3574 = vld [vmem:[#allocation8 + $0x250] sm:$0xff]
        %v3575 = vld [vmem:[#allocation8 + $0x258] sm:$0xff]
        %v3576 = vld [vmem:[#allocation8 + $0x260] sm:$0xff]
        %v3577 = vld [vmem:[#allocation8 + $0x268] sm:$0xff]
        %v3578 = vld [vmem:[#allocation8 + $0x270] sm:$0xff]
        %v3579 = vld [vmem:[#allocation8 + $0x278] sm:$0xff]
        %v3580 = vld [vmem:[#allocation8 + $0x280] sm:$0xff]
        %v3581 = vld [vmem:[#allocation8 + $0x288] sm:$0xff]
        %v3582 = vld [vmem:[#allocation8 + $0x290] sm:$0xff]
        %v3583 = vld [vmem:[#allocation8 + $0x298] sm:$0xff]
        %v3584 = vld [vmem:[#allocation8 + $0x2a0] sm:$0xff]
        %v3585 = vld [vmem:[#allocation8 + $0x2a8] sm:$0xff]
        %v3586 = vld [vmem:[#allocation8 + $0x2b0] sm:$0xff]
        %v3587 = vld [vmem:[#allocation8 + $0x2b8] sm:$0xff]
        %v3588 = vld [vmem:[#allocation8 + $0x2c0] sm:$0xff]
        %v3589 = vld [vmem:[#allocation8 + $0x2c8] sm:$0xff]
        %v3590 = vld [vmem:[#allocation8 + $0x2d0] sm:$0xff]
        %v3591 = vld [vmem:[#allocation8 + $0x2d8] sm:$0xff]
        %v3592 = vld [vmem:[#allocation8 + $0x2e0] sm:$0xff]
        %v3593 = vld [vmem:[#allocation8 + $0x2e8] sm:$0xff]
        %v3594 = vld [vmem:[#allocation8 + $0x2f0] sm:$0xff]
        %v3595 = vld [vmem:[#allocation8 + $0x2f8] sm:$0xff]
        %v3596 = vld [vmem:[#allocation8 + $0x300] sm:$0xff]
        %v3597 = vld [vmem:[#allocation8 + $0x308] sm:$0xff]
        %v3598 = vld [vmem:[#allocation8 + $0x310] sm:$0xff]
        %v3599 = vld [vmem:[#allocation8 + $0x318] sm:$0xff]
        %v3600 = vld [vmem:[#allocation8 + $0x320] sm:$0xff]
        %v3601 = vld [vmem:[#allocation8 + $0x328] sm:$0xff]
        %v3602 = vld [vmem:[#allocation8 + $0x330] sm:$0xff]
        %v3603 = vld [vmem:[#allocation8 + $0x338] sm:$0xff]
        %v3604 = vld [vmem:[#allocation8 + $0x340] sm:$0xff]
        %v3605 = vld [vmem:[#allocation8 + $0x348] sm:$0xff]
        %v3606 = vld [vmem:[#allocation8 + $0x350] sm:$0xff]
        %v3607 = vld [vmem:[#allocation8 + $0x358] sm:$0xff]
        %v3608 = vld [vmem:[#allocation8 + $0x360] sm:$0xff]
        %v3609 = vld [vmem:[#allocation8 + $0x368] sm:$0xff]
        %v3610 = vld [vmem:[#allocation8 + $0x370] sm:$0xff]
        %v3611 = vld [vmem:[#allocation8 + $0x378] sm:$0xff]
        %v3612 = vld [vmem:[#allocation8 + $0x380] sm:$0xff]
        %v3613 = vld [vmem:[#allocation8 + $0x388] sm:$0xff]
        %v3614 = vld [vmem:[#allocation8 + $0x390] sm:$0xff]
        %v3615 = vld [vmem:[#allocation8 + $0x398] sm:$0xff]
        %v3616 = vld [vmem:[#allocation8 + $0x3a0] sm:$0xff]
        %v3617 = vld [vmem:[#allocation8 + $0x3a8] sm:$0xff]
        %v3618 = vld [vmem:[#allocation8 + $0x3b0] sm:$0xff]
        %v3619 = vld [vmem:[#allocation8 + $0x3b8] sm:$0xff]
        %v3620 = vld [vmem:[#allocation8 + $0x3c0] sm:$0xff]
        %v3621 = vld [vmem:[#allocation8 + $0x3c8] sm:$0xff]
        %v3622 = vld [vmem:[#allocation8 + $0x3d0] sm:$0xff]
        %v3623 = vld [vmem:[#allocation8 + $0x3d8] sm:$0xff]
        %v3624 = vld [vmem:[#allocation8 + $0x3e0] sm:$0xff]
        %v3625 = vld [vmem:[#allocation8 + $0x3e8] sm:$0xff]
        %v3626 = vld [vmem:[#allocation8 + $0x3f0] sm:$0xff]
        %v3627 = vld [vmem:[#allocation8 + $0x3f8] sm:$0xff]
        %v3628 = vld [vmem:[#allocation8 + $0x400] sm:$0xff]
        %v3629 = vld [vmem:[#allocation8 + $0x408] sm:$0xff]
        %v3630 = vld [vmem:[#allocation8 + $0x410] sm:$0xff]
        %v3631 = vld [vmem:[#allocation8 + $0x418] sm:$0xff]
        %v3632 = vld [vmem:[#allocation8 + $0x420] sm:$0xff]
        %v3633 = vld [vmem:[#allocation8 + $0x428] sm:$0xff]
        %v3634 = vld [vmem:[#allocation8 + $0x430] sm:$0xff]
        %v3635 = vld [vmem:[#allocation8 + $0x438] sm:$0xff]
        %v3636 = vld [vmem:[#allocation8 + $0x440] sm:$0xff]
        %v3637 = vld [vmem:[#allocation8 + $0x448] sm:$0xff]
        %v3638 = vld [vmem:[#allocation8 + $0x450] sm:$0xff]
        %v3639 = vld [vmem:[#allocation8 + $0x458] sm:$0xff]
        %v3640 = vld [vmem:[#allocation8 + $0x460] sm:$0xff]
        %v3641 = vld [vmem:[#allocation8 + $0x468] sm:$0xff]
        %v3642 = vld [vmem:[#allocation8 + $0x470] sm:$0xff]
        %v3643 = vld [vmem:[#allocation8 + $0x478] sm:$0xff]
        %v3644 = vld [vmem:[%s4] sm:$0x1]
        %v3646 = vlaneseq
        %v3647 = vshrl.u32 %v3646, 7
        %v3648 = vsub.s32 0, %v3647
        %v3649 = vrot.slane %v3644, %v3648
        %3651 = vmatprep.subr.mxu0 0.0
        %3652 = vmatpush1.msra.mxu0 %v3500
        %3653 = vmatprep.subr.mxu0 0.0
        %3654 = vmatpush1.msra.mxu0 %v3501
        %3655 = vmatprep.subr.mxu0 0.0
        %3656 = vmatpush1.msra.mxu0 %v3502
        %3657 = vmatprep.subr.mxu0 0.0
        %3658 = vmatpush1.msra.mxu0 %v3503
        %3659 = vmatprep.subr.mxu0 0.0
        %3660 = vmatpush1.msra.mxu0 %v3504
        %3661 = vmatprep.subr.mxu0 0.0
        %3662 = vmatpush1.msra.mxu0 %v3505
        %3663 = vmatprep.subr.mxu0 0.0
        %3664 = vmatpush1.msra.mxu0 %v3506
        %3665 = vmatprep.subr.mxu0 0.0
        %3666 = vmatpush1.msra.mxu0 %v3507
        %3667 = vmatprep.subr.mxu0 0.0
        %3668 = vmatpush1.msra.mxu0 %v3508
        %3669 = vmatprep.subr.mxu0 0.0
        %3670 = vmatpush1.msra.mxu0 %v3509
        %3671 = vmatprep.subr.mxu0 0.0
        %3672 = vmatpush1.msra.mxu0 %v3510
        %3673 = vmatprep.subr.mxu0 0.0
        %3674 = vmatpush1.msra.mxu0 %v3511
        %3675 = vmatprep.subr.mxu0 0.0
        %3676 = vmatpush1.msra.mxu0 %v3512
        %3677 = vmatprep.subr.mxu0 0.0
        %3678 = vmatpush1.msra.mxu0 %v3513
        %3679 = vmatprep.subr.mxu0 0.0
        %3680 = vmatpush1.msra.mxu0 %v3514
        %3681 = vmatprep.subr.mxu0 0.0
        %3682 = vmatpush1.msra.mxu0 %v3515
        %3683 = vmatprep.subr.mxu0 0.0
        %3684 = vmatpush1.msra.mxu0 %v3516
        %3685 = vmatprep.subr.mxu0 0.0
        %3686 = vmatpush1.msra.mxu0 %v3517
        %3687 = vmatprep.subr.mxu0 0.0
        %3688 = vmatpush1.msra.mxu0 %v3518
        %3689 = vmatprep.subr.mxu0 0.0
        %3690 = vmatpush1.msra.mxu0 %v3519
        %3691 = vmatprep.subr.mxu0 0.0
        %3692 = vmatpush1.msra.mxu0 %v3520
        %3693 = vmatprep.subr.mxu0 0.0
        %3694 = vmatpush1.msra.mxu0 %v3521
        %3695 = vmatprep.subr.mxu0 0.0
        %3696 = vmatpush1.msra.mxu0 %v3522
        %3697 = vmatprep.subr.mxu0 0.0
        %3698 = vmatpush1.msra.mxu0 %v3523
        %3699 = vmatprep.subr.mxu0 0.0
        %3700 = vmatpush1.msra.mxu0 %v3524
        %3701 = vmatprep.subr.mxu0 0.0
        %3702 = vmatpush1.msra.mxu0 %v3525
        %3703 = vmatprep.subr.mxu0 0.0
        %3704 = vmatpush1.msra.mxu0 %v3526
        %3705 = vmatprep.subr.mxu0 0.0
        %3706 = vmatpush1.msra.mxu0 %v3527
        %3707 = vmatprep.subr.mxu0 0.0
        %3708 = vmatpush1.msra.mxu0 %v3528
        %3709 = vmatprep.subr.mxu0 0.0
        %3710 = vmatpush1.msra.mxu0 %v3529
        %3711 = vmatprep.subr.mxu0 0.0
        %3712 = vmatpush1.msra.mxu0 %v3530
        %3713 = vmatprep.subr.mxu0 0.0
        %3714 = vmatpush1.msra.mxu0 %v3531
        %3715 = vmatprep.mubr.f32.mxu0 %v3213
        %3716 = vmatmul.mubr.f32.gmra.mrb[0].mxu0 %v3212
        %v3717 = vpop.f32.mrb[0].mxu0
        %v3718 = vadd.f32 %v3649, %v3717
        %v3719 = vpop.f32.mrb[0].mxu0
        %3720 = vmatprep.mubr.f32.mxu0 %v3222
        %3721 = vmatmul.mubr.f32.gmra.mrb[0].mxu0 %v3221
        %v3722 = vpop.f32.mrb[0].mxu0
        %v3723 = vadd.f32 %v3649, %v3722
        %v3724 = vpop.f32.mrb[0].mxu0
        %3725 = vmatprep.mubr.f32.mxu0 %v3231
        %3726 = vmatmul.mubr.f32.gmra.mrb[0].mxu0 %v3230
        %v3727 = vpop.f32.mrb[0].mxu0
        %v3728 = vadd.f32 %v3649, %v3727
        %v3729 = vpop.f32.mrb[0].mxu0
        %3730 = vmatprep.mubr.f32.mxu0 %v3240
        %3731 = vmatmul.mubr.f32.gmra.mrb[0].mxu0 %v3239
        %v3732 = vpop.f32.mrb[0].mxu0
        %v3733 = vadd.f32 %v3649, %v3732
        %v3734 = vpop.f32.mrb[0].mxu0
        %3735 = vmatprep.mubr.f32.mxu0 %v3249
        %3736 = vmatmul.mubr.f32.gmra.mrb[0].mxu0 %v3248
        %v3737 = vpop.f32.mrb[0].mxu0
        %v3738 = vadd.f32 %v3649, %v3737
        %v3739 = vpop.f32.mrb[0].mxu0
        %3740 = vmatprep.mubr.f32.mxu0 %v3258
        %3741 = vmatmul.mubr.f32.gmra.mrb[0].mxu0 %v3257
        %v3742 = vpop.f32.mrb[0].mxu0
        %v3743 = vadd.f32 %v3649, %v3742
        %v3744 = vpop.f32.mrb[0].mxu0
        %3745 = vmatprep.mubr.f32.mxu0 %v3267
        %3746 = vmatmul.mubr.f32.gmra.mrb[0].mxu0 %v3266
        %v3747 = vpop.f32.mrb[0].mxu0
        %v3748 = vadd.f32 %v3649, %v3747
        %v3749 = vpop.f32.mrb[0].mxu0
        %3750 = vmatprep.mubr.f32.mxu0 %v3276
        %3751 = vmatmul.mubr.f32.gmra.mrb[0].mxu0 %v3275
        %v3752 = vpop.f32.mrb[0].mxu0
        %v3753 = vadd.f32 %v3649, %v3752
        %v3754 = vpop.f32.mrb[0].mxu0
        %3755 = vmatprep.mubr.f32.mxu0 %v3285
        %3756 = vmatmul.mubr.f32.gmra.mrb[0].mxu0 %v3284
        %v3757 = vpop.f32.mrb[0].mxu0
        %v3758 = vadd.f32 %v3649, %v3757
        %v3759 = vpop.f32.mrb[0].mxu0
        %3760 = vmatprep.mubr.f32.mxu0 %v3294
        %3761 = vmatmul.mubr.f32.gmra.mrb[0].mxu0 %v3293
        %v3762 = vpop.f32.mrb[0].mxu0
        %v3763 = vadd.f32 %v3649, %v3762
        %v3764 = vpop.f32.mrb[0].mxu0
        %3765 = vmatprep.mubr.f32.mxu0 %v3303
        %3766 = vmatmul.mubr.f32.gmra.mrb[0].mxu0 %v3302
        %v3767 = vpop.f32.mrb[0].mxu0
        %v3768 = vadd.f32 %v3649, %v3767
        %v3769 = vpop.f32.mrb[0].mxu0
        %3770 = vmatprep.mubr.f32.mxu0 %v3312
        %3771 = vmatmul.mubr.f32.gmra.mrb[0].mxu0 %v3311
        %v3772 = vpop.f32.mrb[0].mxu0
        %v3773 = vadd.f32 %v3649, %v3772
        %v3774 = vpop.f32.mrb[0].mxu0
        %3775 = vmatprep.mubr.f32.mxu0 %v3321
        %3776 = vmatmul.mubr.f32.gmra.mrb[0].mxu0 %v3320
        %v3777 = vpop.f32.mrb[0].mxu0
        %v3778 = vadd.f32 %v3649, %v3777
        %v3779 = vpop.f32.mrb[0].mxu0
        %3780 = vmatprep.mubr.f32.mxu0 %v3330
        %3781 = vmatmul.mubr.f32.gmra.mrb[0].mxu0 %v3329
        %v3782 = vpop.f32.mrb[0].mxu0
        %v3783 = vadd.f32 %v3649, %v3782
        %v3784 = vpop.f32.mrb[0].mxu0
        %3785 = vmatprep.mubr.f32.mxu0 %v3339
        %3786 = vmatmul.mubr.f32.gmra.mrb[0].mxu0 %v3338
        %v3787 = vpop.f32.mrb[0].mxu0
        %v3788 = vadd.f32 %v3649, %v3787
        %v3789 = vpop.f32.mrb[0].mxu0
        %3790 = vmatprep.mubr.f32.mxu0 %v3348
        %3791 = vmatmul.mubr.f32.gmra.mrb[0].mxu0 %v3347
        %v3792 = vpop.f32.mrb[0].mxu0
        %v3793 = vadd.f32 %v3649, %v3792
        %v3794 = vpop.f32.mrb[0].mxu0
        %3795 = vmatprep.mubr.f32.mxu0 %v3357
        %3796 = vmatmul.mubr.f32.gmra.mrb[0].mxu0 %v3356
        %v3797 = vpop.f32.mrb[0].mxu0
        %v3798 = vadd.f32 %v3649, %v3797
        %v3799 = vpop.f32.mrb[0].mxu0
        %3800 = vmatprep.mubr.f32.mxu0 %v3366
        %3801 = vmatmul.mubr.f32.gmra.mrb[0].mxu0 %v3365
        %v3802 = vpop.f32.mrb[0].mxu0
        %v3803 = vadd.f32 %v3649, %v3802
        %v3804 = vpop.f32.mrb[0].mxu0
        %3805 = vmatprep.mubr.f32.mxu0 %v3375
        %3806 = vmatmul.mubr.f32.gmra.mrb[0].mxu0 %v3374
        %v3807 = vpop.f32.mrb[0].mxu0
        %v3808 = vadd.f32 %v3649, %v3807
        %v3809 = vpop.f32.mrb[0].mxu0
        %3810 = vmatprep.mubr.f32.mxu0 %v3384
        %3811 = vmatmul.mubr.f32.gmra.mrb[0].mxu0 %v3383
        %v3812 = vpop.f32.mrb[0].mxu0
        %v3813 = vadd.f32 %v3649, %v3812
        %v3814 = vpop.f32.mrb[0].mxu0
        %3815 = vmatprep.mubr.f32.mxu0 %v3393
        %3816 = vmatmul.mubr.f32.gmra.mrb[0].mxu0 %v3392
        %v3817 = vpop.f32.mrb[0].mxu0
        %v3818 = vadd.f32 %v3649, %v3817
        %v3819 = vpop.f32.mrb[0].mxu0
        %3820 = vmatprep.mubr.f32.mxu0 %v3402
        %3821 = vmatmul.mubr.f32.gmra.mrb[0].mxu0 %v3401
        %v3822 = vpop.f32.mrb[0].mxu0
        %v3823 = vadd.f32 %v3649, %v3822
        %v3824 = vpop.f32.mrb[0].mxu0
        %3825 = vmatprep.mubr.f32.mxu0 %v3411
        %3826 = vmatmul.mubr.f32.gmra.mrb[0].mxu0 %v3410
        %v3827 = vpop.f32.mrb[0].mxu0
        %v3828 = vadd.f32 %v3649, %v3827
        %v3829 = vpop.f32.mrb[0].mxu0
        %3830 = vmatprep.mubr.f32.mxu0 %v3420
        %3831 = vmatmul.mubr.f32.gmra.mrb[0].mxu0 %v3419
        %v3832 = vpop.f32.mrb[0].mxu0
        %v3833 = vadd.f32 %v3649, %v3832
        %v3834 = vpop.f32.mrb[0].mxu0
        %3835 = vmatprep.mubr.f32.mxu0 %v3429
        %3836 = vmatmul.mubr.f32.gmra.mrb[0].mxu0 %v3428
        %v3837 = vpop.f32.mrb[0].mxu0
        %v3838 = vadd.f32 %v3649, %v3837
        %v3839 = vpop.f32.mrb[0].mxu0
        %3840 = vmatprep.mubr.f32.mxu0 %v3438
        %3841 = vmatmul.mubr.f32.gmra.mrb[0].mxu0 %v3437
        %v3842 = vpop.f32.mrb[0].mxu0
        %v3843 = vadd.f32 %v3649, %v3842
        %v3844 = vpop.f32.mrb[0].mxu0
        %3845 = vmatprep.mubr.f32.mxu0 %v3447
        %3846 = vmatmul.mubr.f32.gmra.mrb[0].mxu0 %v3446
        %v3847 = vpop.f32.mrb[0].mxu0
        %v3848 = vadd.f32 %v3649, %v3847
        %v3849 = vpop.f32.mrb[0].mxu0
        %3850 = vmatprep.mubr.f32.mxu0 %v3456
        %3851 = vmatmul.mubr.f32.gmra.mrb[0].mxu0 %v3455
        %v3852 = vpop.f32.mrb[0].mxu0
        %v3853 = vadd.f32 %v3649, %v3852
        %v3854 = vpop.f32.mrb[0].mxu0
        %3855 = vmatprep.mubr.f32.mxu0 %v3465
        %3856 = vmatmul.mubr.f32.gmra.mrb[0].mxu0 %v3464
        %v3857 = vpop.f32.mrb[0].mxu0
        %v3858 = vadd.f32 %v3649, %v3857
        %v3859 = vpop.f32.mrb[0].mxu0
        %3860 = vmatprep.mubr.f32.mxu0 %v3474
        %3861 = vmatmul.mubr.f32.gmra.mrb[0].mxu0 %v3473
        %v3862 = vpop.f32.mrb[0].mxu0
        %v3863 = vadd.f32 %v3649, %v3862
        %v3864 = vpop.f32.mrb[0].mxu0
        %3865 = vmatprep.mubr.f32.mxu0 %v3483
        %3866 = vmatmul.mubr.f32.gmra.mrb[0].mxu0 %v3482
        %v3867 = vpop.f32.mrb[0].mxu0
        %v3868 = vadd.f32 %v3649, %v3867
        %v3869 = vpop.f32.mrb[0].mxu0
        %3870 = vmatprep.mubr.f32.mxu0 %v3492
        %3871 = vmatmul.mubr.f32.gmra.mrb[0].mxu0 %v3491
        %v3872 = vpop.f32.mrb[0].mxu0
        %v3873 = vadd.f32 %v3649, %v3872
        %v3874 = vpop.f32.mrb[0].mxu0
        %3875 = vdwg.mxu0
        %3876 = vmatprep.subr.mxu0 0.0
        %3877 = vmatpush1.msra.mxu0 %v3532
        %3878 = vmatprep.subr.mxu0 0.0
        %3879 = vmatpush1.msra.mxu0 %v3533
        %3880 = vmatprep.subr.mxu0 0.0
        %3881 = vmatpush1.msra.mxu0 %v3534
        %3882 = vmatprep.subr.mxu0 0.0
        %3883 = vmatpush1.msra.mxu0 %v3535
        %3884 = vmatprep.subr.mxu0 0.0
        %3885 = vmatpush1.msra.mxu0 %v3536
        %3886 = vmatprep.subr.mxu0 0.0
        %3887 = vmatpush1.msra.mxu0 %v3537
        %3888 = vmatprep.subr.mxu0 0.0
        %3889 = vmatpush1.msra.mxu0 %v3538
        %3890 = vmatprep.subr.mxu0 0.0
        %3891 = vmatpush1.msra.mxu0 %v3539
        %3892 = vmatprep.subr.mxu0 0.0
        %3893 = vmatpush1.msra.mxu0 %v3540
        %3894 = vmatprep.subr.mxu0 0.0
        %3895 = vmatpush1.msra.mxu0 %v3541
        %3896 = vmatprep.subr.mxu0 0.0
        %3897 = vmatpush1.msra.mxu0 %v3542
        %3898 = vmatprep.subr.mxu0 0.0
        %3899 = vmatpush1.msra.mxu0 %v3543
        %3900 = vmatprep.subr.mxu0 0.0
        %3901 = vmatpush1.msra.mxu0 %v3544
        %3902 = vmatprep.subr.mxu0 0.0
        %3903 = vmatpush1.msra.mxu0 %v3545
        %3904 = vmatprep.subr.mxu0 0.0
        %3905 = vmatpush1.msra.mxu0 %v3546
        %3906 = vmatprep.subr.mxu0 0.0
        %3907 = vmatpush1.msra.mxu0 %v3547
        %3908 = vmatprep.subr.mxu0 0.0
        %3909 = vmatpush1.msra.mxu0 %v3548
        %3910 = vmatprep.subr.mxu0 0.0
        %3911 = vmatpush1.msra.mxu0 %v3549
        %3912 = vmatprep.subr.mxu0 0.0
        %3913 = vmatpush1.msra.mxu0 %v3550
        %3914 = vmatprep.subr.mxu0 0.0
        %3915 = vmatpush1.msra.mxu0 %v3551
        %3916 = vmatprep.subr.mxu0 0.0
        %3917 = vmatpush1.msra.mxu0 %v3552
        %3918 = vmatprep.subr.mxu0 0.0
        %3919 = vmatpush1.msra.mxu0 %v3553
        %3920 = vmatprep.subr.mxu0 0.0
        %3921 = vmatpush1.msra.mxu0 %v3554
        %3922 = vmatprep.subr.mxu0 0.0
        %3923 = vmatpush1.msra.mxu0 %v3555
        %3924 = vmatprep.subr.mxu0 0.0
        %3925 = vmatpush1.msra.mxu0 %v3556
        %3926 = vmatprep.subr.mxu0 0.0
        %3927 = vmatpush1.msra.mxu0 %v3557
        %3928 = vmatprep.subr.mxu0 0.0
        %3929 = vmatpush1.msra.mxu0 %v3558
        %3930 = vmatprep.subr.mxu0 0.0
        %3931 = vmatpush1.msra.mxu0 %v3559
        %3932 = vmatprep.subr.mxu0 0.0
        %3933 = vmatpush1.msra.mxu0 %v3560
        %3934 = vmatprep.subr.mxu0 0.0
        %3935 = vmatpush1.msra.mxu0 %v3561
        %3936 = vmatprep.subr.mxu0 0.0
        %3937 = vmatpush1.msra.mxu0 %v3562
        %3938 = vmatprep.subr.mxu0 0.0
        %3939 = vmatpush1.msra.mxu0 %v3563
        %3940 = vmatprep.mubr.f32.mxu0 %v3215
        %3941 = vmatmul.mubr.f32.gmra.mrb[0].mxu0 %v3214
        %v3942 = vpop.f32.mrb[0].mxu0
        %v3943 = vadd.f32 %v3718, %v3942
        %v3944 = vpop.f32.mrb[0].mxu0
        %3945 = vmatprep.mubr.f32.mxu0 %v3224
        %3946 = vmatmul.mubr.f32.gmra.mrb[0].mxu0 %v3223
        %v3947 = vpop.f32.mrb[0].mxu0
        %v3948 = vadd.f32 %v3723, %v3947
        %v3949 = vpop.f32.mrb[0].mxu0
        %3950 = vmatprep.mubr.f32.mxu0 %v3233
        %3951 = vmatmul.mubr.f32.gmra.mrb[0].mxu0 %v3232
        %v3952 = vpop.f32.mrb[0].mxu0
        %v3953 = vadd.f32 %v3728, %v3952
        %v3954 = vpop.f32.mrb[0].mxu0
        %3955 = vmatprep.mubr.f32.mxu0 %v3242
        %3956 = vmatmul.mubr.f32.gmra.mrb[0].mxu0 %v3241
        %v3957 = vpop.f32.mrb[0].mxu0
        %v3958 = vadd.f32 %v3733, %v3957
        %v3959 = vpop.f32.mrb[0].mxu0
        %3960 = vmatprep.mubr.f32.mxu0 %v3251
        %3961 = vmatmul.mubr.f32.gmra.mrb[0].mxu0 %v3250
        %v3962 = vpop.f32.mrb[0].mxu0
        %v3963 = vadd.f32 %v3738, %v3962
        %v3964 = vpop.f32.mrb[0].mxu0
        %3965 = vmatprep.mubr.f32.mxu0 %v3260
        %3966 = vmatmul.mubr.f32.gmra.mrb[0].mxu0 %v3259
        %v3967 = vpop.f32.mrb[0].mxu0
        %v3968 = vadd.f32 %v3743, %v3967
        %v3969 = vpop.f32.mrb[0].mxu0
        %3970 = vmatprep.mubr.f32.mxu0 %v3269
        %3971 = vmatmul.mubr.f32.gmra.mrb[0].mxu0 %v3268
        %v3972 = vpop.f32.mrb[0].mxu0
        %v3973 = vadd.f32 %v3748, %v3972
        %v3974 = vpop.f32.mrb[0].mxu0
        %3975 = vmatprep.mubr.f32.mxu0 %v3278
        %3976 = vmatmul.mubr.f32.gmra.mrb[0].mxu0 %v3277
        %v3977 = vpop.f32.mrb[0].mxu0
        %v3978 = vadd.f32 %v3753, %v3977
        %v3979 = vpop.f32.mrb[0].mxu0
        %3980 = vmatprep.mubr.f32.mxu0 %v3287
        %3981 = vmatmul.mubr.f32.gmra.mrb[0].mxu0 %v3286
        %v3982 = vpop.f32.mrb[0].mxu0
        %v3983 = vadd.f32 %v3758, %v3982
        %v3984 = vpop.f32.mrb[0].mxu0
        %3985 = vmatprep.mubr.f32.mxu0 %v3296
        %3986 = vmatmul.mubr.f32.gmra.mrb[0].mxu0 %v3295
        %v3987 = vpop.f32.mrb[0].mxu0
        %v3988 = vadd.f32 %v3763, %v3987
        %v3989 = vpop.f32.mrb[0].mxu0
        %3990 = vmatprep.mubr.f32.mxu0 %v3305
        %3991 = vmatmul.mubr.f32.gmra.mrb[0].mxu0 %v3304
        %v3992 = vpop.f32.mrb[0].mxu0
        %v3993 = vadd.f32 %v3768, %v3992
        %v3994 = vpop.f32.mrb[0].mxu0
        %3995 = vmatprep.mubr.f32.mxu0 %v3314
        %3996 = vmatmul.mubr.f32.gmra.mrb[0].mxu0 %v3313
        %v3997 = vpop.f32.mrb[0].mxu0
        %v3998 = vadd.f32 %v3773, %v3997
        %v3999 = vpop.f32.mrb[0].mxu0
        %4000 = vmatprep.mubr.f32.mxu0 %v3323
        %4001 = vmatmul.mubr.f32.gmra.mrb[0].mxu0 %v3322
        %v4002 = vpop.f32.mrb[0].mxu0
        %v4003 = vadd.f32 %v3778, %v4002
        %v4004 = vpop.f32.mrb[0].mxu0
        %4005 = vmatprep.mubr.f32.mxu0 %v3332
        %4006 = vmatmul.mubr.f32.gmra.mrb[0].mxu0 %v3331
        %v4007 = vpop.f32.mrb[0].mxu0
        %v4008 = vadd.f32 %v3783, %v4007
        %v4009 = vpop.f32.mrb[0].mxu0
        %4010 = vmatprep.mubr.f32.mxu0 %v3341
        %4011 = vmatmul.mubr.f32.gmra.mrb[0].mxu0 %v3340
        %v4012 = vpop.f32.mrb[0].mxu0
        %v4013 = vadd.f32 %v3788, %v4012
        %v4014 = vpop.f32.mrb[0].mxu0
        %4015 = vmatprep.mubr.f32.mxu0 %v3350
        %4016 = vmatmul.mubr.f32.gmra.mrb[0].mxu0 %v3349
        %v4017 = vpop.f32.mrb[0].mxu0
        %v4018 = vadd.f32 %v3793, %v4017
        %v4019 = vpop.f32.mrb[0].mxu0
        %4020 = vmatprep.mubr.f32.mxu0 %v3359
        %4021 = vmatmul.mubr.f32.gmra.mrb[0].mxu0 %v3358
        %v4022 = vpop.f32.mrb[0].mxu0
        %v4023 = vadd.f32 %v3798, %v4022
        %v4024 = vpop.f32.mrb[0].mxu0
        %4025 = vmatprep.mubr.f32.mxu0 %v3368
        %4026 = vmatmul.mubr.f32.gmra.mrb[0].mxu0 %v3367
        %v4027 = vpop.f32.mrb[0].mxu0
        %v4028 = vadd.f32 %v3803, %v4027
        %v4029 = vpop.f32.mrb[0].mxu0
        %4030 = vmatprep.mubr.f32.mxu0 %v3377
        %4031 = vmatmul.mubr.f32.gmra.mrb[0].mxu0 %v3376
        %v4032 = vpop.f32.mrb[0].mxu0
        %v4033 = vadd.f32 %v3808, %v4032
        %v4034 = vpop.f32.mrb[0].mxu0
        %4035 = vmatprep.mubr.f32.mxu0 %v3386
        %4036 = vmatmul.mubr.f32.gmra.mrb[0].mxu0 %v3385
        %v4037 = vpop.f32.mrb[0].mxu0
        %v4038 = vadd.f32 %v3813, %v4037
        %v4039 = vpop.f32.mrb[0].mxu0
        %4040 = vmatprep.mubr.f32.mxu0 %v3395
        %4041 = vmatmul.mubr.f32.gmra.mrb[0].mxu0 %v3394
        %v4042 = vpop.f32.mrb[0].mxu0
        %v4043 = vadd.f32 %v3818, %v4042
        %v4044 = vpop.f32.mrb[0].mxu0
        %4045 = vmatprep.mubr.f32.mxu0 %v3404
        %4046 = vmatmul.mubr.f32.gmra.mrb[0].mxu0 %v3403
        %v4047 = vpop.f32.mrb[0].mxu0
        %v4048 = vadd.f32 %v3823, %v4047
        %v4049 = vpop.f32.mrb[0].mxu0
        %4050 = vmatprep.mubr.f32.mxu0 %v3413
        %4051 = vmatmul.mubr.f32.gmra.mrb[0].mxu0 %v3412
        %v4052 = vpop.f32.mrb[0].mxu0
        %v4053 = vadd.f32 %v3828, %v4052
        %v4054 = vpop.f32.mrb[0].mxu0
        %4055 = vmatprep.mubr.f32.mxu0 %v3422
        %4056 = vmatmul.mubr.f32.gmra.mrb[0].mxu0 %v3421
        %v4057 = vpop.f32.mrb[0].mxu0
        %v4058 = vadd.f32 %v3833, %v4057
        %v4059 = vpop.f32.mrb[0].mxu0
        %4060 = vmatprep.mubr.f32.mxu0 %v3431
        %4061 = vmatmul.mubr.f32.gmra.mrb[0].mxu0 %v3430
        %v4062 = vpop.f32.mrb[0].mxu0
        %v4063 = vadd.f32 %v3838, %v4062
        %v4064 = vpop.f32.mrb[0].mxu0
        %4065 = vmatprep.mubr.f32.mxu0 %v3440
        %4066 = vmatmul.mubr.f32.gmra.mrb[0].mxu0 %v3439
        %v4067 = vpop.f32.mrb[0].mxu0
        %v4068 = vadd.f32 %v3843, %v4067
        %v4069 = vpop.f32.mrb[0].mxu0
        %4070 = vmatprep.mubr.f32.mxu0 %v3449
        %4071 = vmatmul.mubr.f32.gmra.mrb[0].mxu0 %v3448
        %v4072 = vpop.f32.mrb[0].mxu0
        %v4073 = vadd.f32 %v3848, %v4072
        %v4074 = vpop.f32.mrb[0].mxu0
        %4075 = vmatprep.mubr.f32.mxu0 %v3458
        %4076 = vmatmul.mubr.f32.gmra.mrb[0].mxu0 %v3457
        %v4077 = vpop.f32.mrb[0].mxu0
        %v4078 = vadd.f32 %v3853, %v4077
        %v4079 = vpop.f32.mrb[0].mxu0
        %4080 = vmatprep.mubr.f32.mxu0 %v3467
        %4081 = vmatmul.mubr.f32.gmra.mrb[0].mxu0 %v3466
        %v4082 = vpop.f32.mrb[0].mxu0
        %v4083 = vadd.f32 %v3858, %v4082
        %v4084 = vpop.f32.mrb[0].mxu0
        %4085 = vmatprep.mubr.f32.mxu0 %v3476
        %4086 = vmatmul.mubr.f32.gmra.mrb[0].mxu0 %v3475
        %v4087 = vpop.f32.mrb[0].mxu0
        %v4088 = vadd.f32 %v3863, %v4087
        %v4089 = vpop.f32.mrb[0].mxu0
        %4090 = vmatprep.mubr.f32.mxu0 %v3485
        %4091 = vmatmul.mubr.f32.gmra.mrb[0].mxu0 %v3484
        %v4092 = vpop.f32.mrb[0].mxu0
        %v4093 = vadd.f32 %v3868, %v4092
        %v4094 = vpop.f32.mrb[0].mxu0
        %4095 = vmatprep.mubr.f32.mxu0 %v3494
        %4096 = vmatmul.mubr.f32.gmra.mrb[0].mxu0 %v3493
        %v4097 = vpop.f32.mrb[0].mxu0
        %v4098 = vadd.f32 %v3873, %v4097
        %v4099 = vpop.f32.mrb[0].mxu0
        %4100 = vdwg.mxu0
        %4101 = vmatprep.subr.mxu0 0.0
        %4102 = vmatpush1.msra.mxu0 %v3564
        %4103 = vmatprep.subr.mxu0 0.0
        %4104 = vmatpush1.msra.mxu0 %v3565
        %4105 = vmatprep.subr.mxu0 0.0
        %4106 = vmatpush1.msra.mxu0 %v3566
        %4107 = vmatprep.subr.mxu0 0.0
        %4108 = vmatpush1.msra.mxu0 %v3567
        %4109 = vmatprep.subr.mxu0 0.0
        %4110 = vmatpush1.msra.mxu0 %v3568
        %4111 = vmatprep.subr.mxu0 0.0
        %4112 = vmatpush1.msra.mxu0 %v3569
        %4113 = vmatprep.subr.mxu0 0.0
        %4114 = vmatpush1.msra.mxu0 %v3570
        %4115 = vmatprep.subr.mxu0 0.0
        %4116 = vmatpush1.msra.mxu0 %v3571
        %4117 = vmatprep.subr.mxu0 0.0
        %4118 = vmatpush1.msra.mxu0 %v3572
        %4119 = vmatprep.subr.mxu0 0.0
        %4120 = vmatpush1.msra.mxu0 %v3573
        %4121 = vmatprep.subr.mxu0 0.0
        %4122 = vmatpush1.msra.mxu0 %v3574
        %4123 = vmatprep.subr.mxu0 0.0
        %4124 = vmatpush1.msra.mxu0 %v3575
        %4125 = vmatprep.subr.mxu0 0.0
        %4126 = vmatpush1.msra.mxu0 %v3576
        %4127 = vmatprep.subr.mxu0 0.0
        %4128 = vmatpush1.msra.mxu0 %v3577
        %4129 = vmatprep.subr.mxu0 0.0
        %4130 = vmatpush1.msra.mxu0 %v3578
        %4131 = vmatprep.subr.mxu0 0.0
        %4132 = vmatpush1.msra.mxu0 %v3579
        %4133 = vmatprep.subr.mxu0 0.0
        %4134 = vmatpush1.msra.mxu0 %v3580
        %4135 = vmatprep.subr.mxu0 0.0
        %4136 = vmatpush1.msra.mxu0 %v3581
        %4137 = vmatprep.subr.mxu0 0.0
        %4138 = vmatpush1.msra.mxu0 %v3582
        %4139 = vmatprep.subr.mxu0 0.0
        %4140 = vmatpush1.msra.mxu0 %v3583
        %4141 = vmatprep.subr.mxu0 0.0
        %4142 = vmatpush1.msra.mxu0 %v3584
        %4143 = vmatprep.subr.mxu0 0.0
        %4144 = vmatpush1.msra.mxu0 %v3585
        %4145 = vmatprep.subr.mxu0 0.0
        %4146 = vmatpush1.msra.mxu0 %v3586
        %4147 = vmatprep.subr.mxu0 0.0
        %4148 = vmatpush1.msra.mxu0 %v3587
        %4149 = vmatprep.subr.mxu0 0.0
        %4150 = vmatpush1.msra.mxu0 %v3588
        %4151 = vmatprep.subr.mxu0 0.0
        %4152 = vmatpush1.msra.mxu0 %v3589
        %4153 = vmatprep.subr.mxu0 0.0
        %4154 = vmatpush1.msra.mxu0 %v3590
        %4155 = vmatprep.subr.mxu0 0.0
        %4156 = vmatpush1.msra.mxu0 %v3591
        %4157 = vmatprep.subr.mxu0 0.0
        %4158 = vmatpush1.msra.mxu0 %v3592
        %4159 = vmatprep.subr.mxu0 0.0
        %4160 = vmatpush1.msra.mxu0 %v3593
        %4161 = vmatprep.subr.mxu0 0.0
        %4162 = vmatpush1.msra.mxu0 %v3594
        %4163 = vmatprep.subr.mxu0 0.0
        %4164 = vmatpush1.msra.mxu0 %v3595
        %4165 = vmatprep.mubr.f32.mxu0 %v3217
        %4166 = vmatmul.mubr.f32.gmra.mrb[0].mxu0 %v3216
        %v4167 = vpop.f32.mrb[0].mxu0
        %v4168 = vadd.f32 %v3943, %v4167
        %v4169 = vpop.f32.mrb[0].mxu0
        %4170 = vmatprep.mubr.f32.mxu0 %v3226
        %4171 = vmatmul.mubr.f32.gmra.mrb[0].mxu0 %v3225
        %v4172 = vpop.f32.mrb[0].mxu0
        %v4173 = vadd.f32 %v3948, %v4172
        %v4174 = vpop.f32.mrb[0].mxu0
        %4175 = vmatprep.mubr.f32.mxu0 %v3235
        %4176 = vmatmul.mubr.f32.gmra.mrb[0].mxu0 %v3234
        %v4177 = vpop.f32.mrb[0].mxu0
        %v4178 = vadd.f32 %v3953, %v4177
        %v4179 = vpop.f32.mrb[0].mxu0
        %4180 = vmatprep.mubr.f32.mxu0 %v3244
        %4181 = vmatmul.mubr.f32.gmra.mrb[0].mxu0 %v3243
        %v4182 = vpop.f32.mrb[0].mxu0
        %v4183 = vadd.f32 %v3958, %v4182
        %v4184 = vpop.f32.mrb[0].mxu0
        %4185 = vmatprep.mubr.f32.mxu0 %v3253
        %4186 = vmatmul.mubr.f32.gmra.mrb[0].mxu0 %v3252
        %v4187 = vpop.f32.mrb[0].mxu0
        %v4188 = vadd.f32 %v3963, %v4187
        %v4189 = vpop.f32.mrb[0].mxu0
        %4190 = vmatprep.mubr.f32.mxu0 %v3262
        %4191 = vmatmul.mubr.f32.gmra.mrb[0].mxu0 %v3261
        %v4192 = vpop.f32.mrb[0].mxu0
        %v4193 = vadd.f32 %v3968, %v4192
        %v4194 = vpop.f32.mrb[0].mxu0
        %4195 = vmatprep.mubr.f32.mxu0 %v3271
        %4196 = vmatmul.mubr.f32.gmra.mrb[0].mxu0 %v3270
        %v4197 = vpop.f32.mrb[0].mxu0
        %v4198 = vadd.f32 %v3973, %v4197
        %v4199 = vpop.f32.mrb[0].mxu0
        %4200 = vmatprep.mubr.f32.mxu0 %v3280
        %4201 = vmatmul.mubr.f32.gmra.mrb[0].mxu0 %v3279
        %v4202 = vpop.f32.mrb[0].mxu0
        %v4203 = vadd.f32 %v3978, %v4202
        %v4204 = vpop.f32.mrb[0].mxu0
        %4205 = vmatprep.mubr.f32.mxu0 %v3289
        %4206 = vmatmul.mubr.f32.gmra.mrb[0].mxu0 %v3288
        %v4207 = vpop.f32.mrb[0].mxu0
        %v4208 = vadd.f32 %v3983, %v4207
        %v4209 = vpop.f32.mrb[0].mxu0
        %4210 = vmatprep.mubr.f32.mxu0 %v3298
        %4211 = vmatmul.mubr.f32.gmra.mrb[0].mxu0 %v3297
        %v4212 = vpop.f32.mrb[0].mxu0
        %v4213 = vadd.f32 %v3988, %v4212
        %v4214 = vpop.f32.mrb[0].mxu0
        %4215 = vmatprep.mubr.f32.mxu0 %v3307
        %4216 = vmatmul.mubr.f32.gmra.mrb[0].mxu0 %v3306
        %v4217 = vpop.f32.mrb[0].mxu0
        %v4218 = vadd.f32 %v3993, %v4217
        %v4219 = vpop.f32.mrb[0].mxu0
        %4220 = vmatprep.mubr.f32.mxu0 %v3316
        %4221 = vmatmul.mubr.f32.gmra.mrb[0].mxu0 %v3315
        %v4222 = vpop.f32.mrb[0].mxu0
        %v4223 = vadd.f32 %v3998, %v4222
        %v4224 = vpop.f32.mrb[0].mxu0
        %4225 = vmatprep.mubr.f32.mxu0 %v3325
        %4226 = vmatmul.mubr.f32.gmra.mrb[0].mxu0 %v3324
        %v4227 = vpop.f32.mrb[0].mxu0
        %v4228 = vadd.f32 %v4003, %v4227
        %v4229 = vpop.f32.mrb[0].mxu0
        %4230 = vmatprep.mubr.f32.mxu0 %v3334
        %4231 = vmatmul.mubr.f32.gmra.mrb[0].mxu0 %v3333
        %v4232 = vpop.f32.mrb[0].mxu0
        %v4233 = vadd.f32 %v4008, %v4232
        %v4234 = vpop.f32.mrb[0].mxu0
        %4235 = vmatprep.mubr.f32.mxu0 %v3343
        %4236 = vmatmul.mubr.f32.gmra.mrb[0].mxu0 %v3342
        %v4237 = vpop.f32.mrb[0].mxu0
        %v4238 = vadd.f32 %v4013, %v4237
        %v4239 = vpop.f32.mrb[0].mxu0
        %4240 = vmatprep.mubr.f32.mxu0 %v3352
        %4241 = vmatmul.mubr.f32.gmra.mrb[0].mxu0 %v3351
        %v4242 = vpop.f32.mrb[0].mxu0
        %v4243 = vadd.f32 %v4018, %v4242
        %v4244 = vpop.f32.mrb[0].mxu0
        %4245 = vmatprep.mubr.f32.mxu0 %v3361
        %4246 = vmatmul.mubr.f32.gmra.mrb[0].mxu0 %v3360
        %v4247 = vpop.f32.mrb[0].mxu0
        %v4248 = vadd.f32 %v4023, %v4247
        %v4249 = vpop.f32.mrb[0].mxu0
        %4250 = vmatprep.mubr.f32.mxu0 %v3370
        %4251 = vmatmul.mubr.f32.gmra.mrb[0].mxu0 %v3369
        %v4252 = vpop.f32.mrb[0].mxu0
        %v4253 = vadd.f32 %v4028, %v4252
        %v4254 = vpop.f32.mrb[0].mxu0
        %4255 = vmatprep.mubr.f32.mxu0 %v3379
        %4256 = vmatmul.mubr.f32.gmra.mrb[0].mxu0 %v3378
        %v4257 = vpop.f32.mrb[0].mxu0
        %v4258 = vadd.f32 %v4033, %v4257
        %v4259 = vpop.f32.mrb[0].mxu0
        %4260 = vmatprep.mubr.f32.mxu0 %v3388
        %4261 = vmatmul.mubr.f32.gmra.mrb[0].mxu0 %v3387
        %v4262 = vpop.f32.mrb[0].mxu0
        %v4263 = vadd.f32 %v4038, %v4262
        %v4264 = vpop.f32.mrb[0].mxu0
        %4265 = vmatprep.mubr.f32.mxu0 %v3397
        %4266 = vmatmul.mubr.f32.gmra.mrb[0].mxu0 %v3396
        %v4267 = vpop.f32.mrb[0].mxu0
        %v4268 = vadd.f32 %v4043, %v4267
        %v4269 = vpop.f32.mrb[0].mxu0
        %4270 = vmatprep.mubr.f32.mxu0 %v3406
        %4271 = vmatmul.mubr.f32.gmra.mrb[0].mxu0 %v3405
        %v4272 = vpop.f32.mrb[0].mxu0
        %v4273 = vadd.f32 %v4048, %v4272
        %v4274 = vpop.f32.mrb[0].mxu0
        %4275 = vmatprep.mubr.f32.mxu0 %v3415
        %4276 = vmatmul.mubr.f32.gmra.mrb[0].mxu0 %v3414
        %v4277 = vpop.f32.mrb[0].mxu0
        %v4278 = vadd.f32 %v4053, %v4277
        %v4279 = vpop.f32.mrb[0].mxu0
        %4280 = vmatprep.mubr.f32.mxu0 %v3424
        %4281 = vmatmul.mubr.f32.gmra.mrb[0].mxu0 %v3423
        %v4282 = vpop.f32.mrb[0].mxu0
        %v4283 = vadd.f32 %v4058, %v4282
        %v4284 = vpop.f32.mrb[0].mxu0
        %4285 = vmatprep.mubr.f32.mxu0 %v3433
        %4286 = vmatmul.mubr.f32.gmra.mrb[0].mxu0 %v3432
        %v4287 = vpop.f32.mrb[0].mxu0
        %v4288 = vadd.f32 %v4063, %v4287
        %v4289 = vpop.f32.mrb[0].mxu0
        %4290 = vmatprep.mubr.f32.mxu0 %v3442
        %4291 = vmatmul.mubr.f32.gmra.mrb[0].mxu0 %v3441
        %v4292 = vpop.f32.mrb[0].mxu0
        %v4293 = vadd.f32 %v4068, %v4292
        %v4294 = vpop.f32.mrb[0].mxu0
        %4295 = vmatprep.mubr.f32.mxu0 %v3451
        %4296 = vmatmul.mubr.f32.gmra.mrb[0].mxu0 %v3450
        %v4297 = vpop.f32.mrb[0].mxu0
        %v4298 = vadd.f32 %v4073, %v4297
        %v4299 = vpop.f32.mrb[0].mxu0
        %4300 = vmatprep.mubr.f32.mxu0 %v3460
        %4301 = vmatmul.mubr.f32.gmra.mrb[0].mxu0 %v3459
        %v4302 = vpop.f32.mrb[0].mxu0
        %v4303 = vadd.f32 %v4078, %v4302
        %v4304 = vpop.f32.mrb[0].mxu0
        %4305 = vmatprep.mubr.f32.mxu0 %v3469
        %4306 = vmatmul.mubr.f32.gmra.mrb[0].mxu0 %v3468
        %v4307 = vpop.f32.mrb[0].mxu0
        %v4308 = vadd.f32 %v4083, %v4307
        %v4309 = vpop.f32.mrb[0].mxu0
        %4310 = vmatprep.mubr.f32.mxu0 %v3478
        %4311 = vmatmul.mubr.f32.gmra.mrb[0].mxu0 %v3477
        %v4312 = vpop.f32.mrb[0].mxu0
        %v4313 = vadd.f32 %v4088, %v4312
        %v4314 = vpop.f32.mrb[0].mxu0
        %4315 = vmatprep.mubr.f32.mxu0 %v3487
        %4316 = vmatmul.mubr.f32.gmra.mrb[0].mxu0 %v3486
        %v4317 = vpop.f32.mrb[0].mxu0
        %v4318 = vadd.f32 %v4093, %v4317
        %v4319 = vpop.f32.mrb[0].mxu0
        %4320 = vmatprep.mubr.f32.mxu0 %v3496
        %4321 = vmatmul.mubr.f32.gmra.mrb[0].mxu0 %v3495
        %v4322 = vpop.f32.mrb[0].mxu0
        %v4323 = vadd.f32 %v4098, %v4322
        %v4324 = vpop.f32.mrb[0].mxu0
        %4325 = vdwg.mxu0
        %4326 = vmatprep.subr.mxu0 0.0
        %4327 = vmatpush1.msra.mxu0 %v3596
        %4328 = vmatprep.subr.mxu0 0.0
        %4329 = vmatpush1.msra.mxu0 %v3597
        %4330 = vmatprep.subr.mxu0 0.0
        %4331 = vmatpush1.msra.mxu0 %v3598
        %4332 = vmatprep.subr.mxu0 0.0
        %4333 = vmatpush1.msra.mxu0 %v3599
        %4334 = vmatprep.subr.mxu0 0.0
        %4335 = vmatpush1.msra.mxu0 %v3600
        %4336 = vmatprep.subr.mxu0 0.0
        %4337 = vmatpush1.msra.mxu0 %v3601
        %4338 = vmatprep.subr.mxu0 0.0
        %4339 = vmatpush1.msra.mxu0 %v3602
        %4340 = vmatprep.subr.mxu0 0.0
        %4341 = vmatpush1.msra.mxu0 %v3603
        %4342 = vmatprep.subr.mxu0 0.0
        %4343 = vmatpush1.msra.mxu0 %v3604
        %4344 = vmatprep.subr.mxu0 0.0
        %4345 = vmatpush1.msra.mxu0 %v3605
        %4346 = vmatprep.subr.mxu0 0.0
        %4347 = vmatpush1.msra.mxu0 %v3606
        %4348 = vmatprep.subr.mxu0 0.0
        %4349 = vmatpush1.msra.mxu0 %v3607
        %4350 = vmatprep.subr.mxu0 0.0
        %4351 = vmatpush1.msra.mxu0 %v3608
        %4352 = vmatprep.subr.mxu0 0.0
        %4353 = vmatpush1.msra.mxu0 %v3609
        %4354 = vmatprep.subr.mxu0 0.0
        %4355 = vmatpush1.msra.mxu0 %v3610
        %4356 = vmatprep.subr.mxu0 0.0
        %4357 = vmatpush1.msra.mxu0 %v3611
        %4358 = vmatprep.subr.mxu0 0.0
        %4359 = vmatpush1.msra.mxu0 %v3612
        %4360 = vmatprep.subr.mxu0 0.0
        %4361 = vmatpush1.msra.mxu0 %v3613
        %4362 = vmatprep.subr.mxu0 0.0
        %4363 = vmatpush1.msra.mxu0 %v3614
        %4364 = vmatprep.subr.mxu0 0.0
        %4365 = vmatpush1.msra.mxu0 %v3615
        %4366 = vmatprep.subr.mxu0 0.0
        %4367 = vmatpush1.msra.mxu0 %v3616
        %4368 = vmatprep.subr.mxu0 0.0
        %4369 = vmatpush1.msra.mxu0 %v3617
        %4370 = vmatprep.subr.mxu0 0.0
        %4371 = vmatpush1.msra.mxu0 %v3618
        %4372 = vmatprep.subr.mxu0 0.0
        %4373 = vmatpush1.msra.mxu0 %v3619
        %4374 = vmatprep.subr.mxu0 0.0
        %4375 = vmatpush1.msra.mxu0 %v3620
        %4376 = vmatprep.subr.mxu0 0.0
        %4377 = vmatpush1.msra.mxu0 %v3621
        %4378 = vmatprep.subr.mxu0 0.0
        %4379 = vmatpush1.msra.mxu0 %v3622
        %4380 = vmatprep.subr.mxu0 0.0
        %4381 = vmatpush1.msra.mxu0 %v3623
        %4382 = vmatprep.subr.mxu0 0.0
        %4383 = vmatpush1.msra.mxu0 %v3624
        %4384 = vmatprep.subr.mxu0 0.0
        %4385 = vmatpush1.msra.mxu0 %v3625
        %4386 = vmatprep.subr.mxu0 0.0
        %4387 = vmatpush1.msra.mxu0 %v3626
        %4388 = vmatprep.subr.mxu0 0.0
        %4389 = vmatpush1.msra.mxu0 %v3627
        %4390 = vmatprep.mubr.f32.mxu0 %v3219
        %4391 = vmatmul.mubr.f32.gmra.mrb[0].mxu0 %v3218
        %v4392 = vpop.f32.mrb[0].mxu0
        %v4393 = vadd.f32 %v4168, %v4392
        %v4394 = vpop.f32.mrb[0].mxu0
        %4395 = vmatprep.mubr.f32.mxu0 %v3228
        %4396 = vmatmul.mubr.f32.gmra.mrb[0].mxu0 %v3227
        %v4397 = vpop.f32.mrb[0].mxu0
        %v4398 = vadd.f32 %v4173, %v4397
        %v4399 = vpop.f32.mrb[0].mxu0
        %4400 = vmatprep.mubr.f32.mxu0 %v3237
        %4401 = vmatmul.mubr.f32.gmra.mrb[0].mxu0 %v3236
        %v4402 = vpop.f32.mrb[0].mxu0
        %v4403 = vadd.f32 %v4178, %v4402
        %v4404 = vpop.f32.mrb[0].mxu0
        %4405 = vmatprep.mubr.f32.mxu0 %v3246
        %4406 = vmatmul.mubr.f32.gmra.mrb[0].mxu0 %v3245
        %v4407 = vpop.f32.mrb[0].mxu0
        %v4408 = vadd.f32 %v4183, %v4407
        %v4409 = vpop.f32.mrb[0].mxu0
        %4410 = vmatprep.mubr.f32.mxu0 %v3255
        %4411 = vmatmul.mubr.f32.gmra.mrb[0].mxu0 %v3254
        %v4412 = vpop.f32.mrb[0].mxu0
        %v4413 = vadd.f32 %v4188, %v4412
        %v4414 = vpop.f32.mrb[0].mxu0
        %4415 = vmatprep.mubr.f32.mxu0 %v3264
        %4416 = vmatmul.mubr.f32.gmra.mrb[0].mxu0 %v3263
        %v4417 = vpop.f32.mrb[0].mxu0
        %v4418 = vadd.f32 %v4193, %v4417
        %v4419 = vpop.f32.mrb[0].mxu0
        %4420 = vmatprep.mubr.f32.mxu0 %v3273
        %4421 = vmatmul.mubr.f32.gmra.mrb[0].mxu0 %v3272
        %v4422 = vpop.f32.mrb[0].mxu0
        %v4423 = vadd.f32 %v4198, %v4422
        %v4424 = vpop.f32.mrb[0].mxu0
        %4425 = vmatprep.mubr.f32.mxu0 %v3282
        %4426 = vmatmul.mubr.f32.gmra.mrb[0].mxu0 %v3281
        %v4427 = vpop.f32.mrb[0].mxu0
        %v4428 = vadd.f32 %v4203, %v4427
        %v4429 = vpop.f32.mrb[0].mxu0
        %4430 = vmatprep.mubr.f32.mxu0 %v3291
        %4431 = vmatmul.mubr.f32.gmra.mrb[0].mxu0 %v3290
        %v4432 = vpop.f32.mrb[0].mxu0
        %v4433 = vadd.f32 %v4208, %v4432
        %v4434 = vpop.f32.mrb[0].mxu0
        %4435 = vmatprep.mubr.f32.mxu0 %v3300
        %4436 = vmatmul.mubr.f32.gmra.mrb[0].mxu0 %v3299
        %v4437 = vpop.f32.mrb[0].mxu0
        %v4438 = vadd.f32 %v4213, %v4437
        %v4439 = vpop.f32.mrb[0].mxu0
        %4440 = vmatprep.mubr.f32.mxu0 %v3309
        %4441 = vmatmul.mubr.f32.gmra.mrb[0].mxu0 %v3308
        %v4442 = vpop.f32.mrb[0].mxu0
        %v4443 = vadd.f32 %v4218, %v4442
        %v4444 = vpop.f32.mrb[0].mxu0
        %4445 = vmatprep.mubr.f32.mxu0 %v3318
        %4446 = vmatmul.mubr.f32.gmra.mrb[0].mxu0 %v3317
        %v4447 = vpop.f32.mrb[0].mxu0
        %v4448 = vadd.f32 %v4223, %v4447
        %v4449 = vpop.f32.mrb[0].mxu0
        %4450 = vmatprep.mubr.f32.mxu0 %v3327
        %4451 = vmatmul.mubr.f32.gmra.mrb[0].mxu0 %v3326
        %v4452 = vpop.f32.mrb[0].mxu0
        %v4453 = vadd.f32 %v4228, %v4452
        %v4454 = vpop.f32.mrb[0].mxu0
        %4455 = vmatprep.mubr.f32.mxu0 %v3336
        %4456 = vmatmul.mubr.f32.gmra.mrb[0].mxu0 %v3335
        %v4457 = vpop.f32.mrb[0].mxu0
        %v4458 = vadd.f32 %v4233, %v4457
        %v4459 = vpop.f32.mrb[0].mxu0
        %4460 = vmatprep.mubr.f32.mxu0 %v3345
        %4461 = vmatmul.mubr.f32.gmra.mrb[0].mxu0 %v3344
        %v4462 = vpop.f32.mrb[0].mxu0
        %v4463 = vadd.f32 %v4238, %v4462
        %v4464 = vpop.f32.mrb[0].mxu0
        %4465 = vmatprep.mubr.f32.mxu0 %v3354
        %4466 = vmatmul.mubr.f32.gmra.mrb[0].mxu0 %v3353
        %v4467 = vpop.f32.mrb[0].mxu0
        %v4468 = vadd.f32 %v4243, %v4467
        %v4469 = vpop.f32.mrb[0].mxu0
        %4470 = vmatprep.mubr.f32.mxu0 %v3363
        %4471 = vmatmul.mubr.f32.gmra.mrb[0].mxu0 %v3362
        %v4472 = vpop.f32.mrb[0].mxu0
        %v4473 = vadd.f32 %v4248, %v4472
        %v4474 = vpop.f32.mrb[0].mxu0
        %4475 = vmatprep.mubr.f32.mxu0 %v3372
        %4476 = vmatmul.mubr.f32.gmra.mrb[0].mxu0 %v3371
        %v4477 = vpop.f32.mrb[0].mxu0
        %v4478 = vadd.f32 %v4253, %v4477
        %v4479 = vpop.f32.mrb[0].mxu0
        %4480 = vmatprep.mubr.f32.mxu0 %v3381
        %4481 = vmatmul.mubr.f32.gmra.mrb[0].mxu0 %v3380
        %v4482 = vpop.f32.mrb[0].mxu0
        %v4483 = vadd.f32 %v4258, %v4482
        %v4484 = vpop.f32.mrb[0].mxu0
        %4485 = vmatprep.mubr.f32.mxu0 %v3390
        %4486 = vmatmul.mubr.f32.gmra.mrb[0].mxu0 %v3389
        %v4487 = vpop.f32.mrb[0].mxu0
        %v4488 = vadd.f32 %v4263, %v4487
        %v4489 = vpop.f32.mrb[0].mxu0
        %4490 = vmatprep.mubr.f32.mxu0 %v3399
        %4491 = vmatmul.mubr.f32.gmra.mrb[0].mxu0 %v3398
        %v4492 = vpop.f32.mrb[0].mxu0
        %v4493 = vadd.f32 %v4268, %v4492
        %v4494 = vpop.f32.mrb[0].mxu0
        %4495 = vmatprep.mubr.f32.mxu0 %v3408
        %4496 = vmatmul.mubr.f32.gmra.mrb[0].mxu0 %v3407
        %v4497 = vpop.f32.mrb[0].mxu0
        %v4498 = vadd.f32 %v4273, %v4497
        %v4499 = vpop.f32.mrb[0].mxu0
        %4500 = vmatprep.mubr.f32.mxu0 %v3417
        %4501 = vmatmul.mubr.f32.gmra.mrb[0].mxu0 %v3416
        %v4502 = vpop.f32.mrb[0].mxu0
        %v4503 = vadd.f32 %v4278, %v4502
        %v4504 = vpop.f32.mrb[0].mxu0
        %4505 = vmatprep.mubr.f32.mxu0 %v3426
        %4506 = vmatmul.mubr.f32.gmra.mrb[0].mxu0 %v3425
        %v4507 = vpop.f32.mrb[0].mxu0
        %v4508 = vadd.f32 %v4283, %v4507
        %v4509 = vpop.f32.mrb[0].mxu0
        %4510 = vmatprep.mubr.f32.mxu0 %v3435
        %4511 = vmatmul.mubr.f32.gmra.mrb[0].mxu0 %v3434
        %v4512 = vpop.f32.mrb[0].mxu0
        %v4513 = vadd.f32 %v4288, %v4512
        %v4514 = vpop.f32.mrb[0].mxu0
        %4515 = vmatprep.mubr.f32.mxu0 %v3444
        %4516 = vmatmul.mubr.f32.gmra.mrb[0].mxu0 %v3443
        %v4517 = vpop.f32.mrb[0].mxu0
        %v4518 = vadd.f32 %v4293, %v4517
        %v4519 = vpop.f32.mrb[0].mxu0
        %4520 = vmatprep.mubr.f32.mxu0 %v3453
        %4521 = vmatmul.mubr.f32.gmra.mrb[0].mxu0 %v3452
        %v4522 = vpop.f32.mrb[0].mxu0
        %v4523 = vadd.f32 %v4298, %v4522
        %v4524 = vpop.f32.mrb[0].mxu0
        %4525 = vmatprep.mubr.f32.mxu0 %v3462
        %4526 = vmatmul.mubr.f32.gmra.mrb[0].mxu0 %v3461
        %v4527 = vpop.f32.mrb[0].mxu0
        %v4528 = vadd.f32 %v4303, %v4527
        %v4529 = vpop.f32.mrb[0].mxu0
        %4530 = vmatprep.mubr.f32.mxu0 %v3471
        %4531 = vmatmul.mubr.f32.gmra.mrb[0].mxu0 %v3470
        %v4532 = vpop.f32.mrb[0].mxu0
        %v4533 = vadd.f32 %v4308, %v4532
        %v4534 = vpop.f32.mrb[0].mxu0
        %4535 = vmatprep.mubr.f32.mxu0 %v3480
        %4536 = vmatmul.mubr.f32.gmra.mrb[0].mxu0 %v3479
        %v4537 = vpop.f32.mrb[0].mxu0
        %v4538 = vadd.f32 %v4313, %v4537
        %v4539 = vpop.f32.mrb[0].mxu0
        %4540 = vmatprep.mubr.f32.mxu0 %v3489
        %4541 = vmatmul.mubr.f32.gmra.mrb[0].mxu0 %v3488
        %v4542 = vpop.f32.mrb[0].mxu0
        %v4543 = vadd.f32 %v4318, %v4542
        %v4544 = vpop.f32.mrb[0].mxu0
        %4545 = vmatprep.mubr.f32.mxu0 %v3498
        %4546 = vmatmul.mubr.f32.gmra.mrb[0].mxu0 %v3497
        %v4547 = vpop.f32.mrb[0].mxu0
        %v4548 = vadd.f32 %v4323, %v4547
        %v4549 = vpop.f32.mrb[0].mxu0
        %4550 = vdwg.mxu0
        %4551 = vmatprep.subr.mxu0 0.0
        %4552 = vmatpush1.msra.mxu0 %v3628
        %4553 = vmatprep.subr.mxu0 0.0
        %4554 = vmatpush1.msra.mxu0 %v3629
        %4555 = vmatprep.subr.mxu0 0.0
        %4556 = vmatpush1.msra.mxu0 %v3630
        %4557 = vmatprep.subr.mxu0 0.0
        %4558 = vmatpush1.msra.mxu0 %v3631
        %4559 = vmatprep.subr.mxu0 0.0
        %4560 = vmatpush1.msra.mxu0 %v3632
        %4561 = vmatprep.subr.mxu0 0.0
        %4562 = vmatpush1.msra.mxu0 %v3633
        %4563 = vmatprep.subr.mxu0 0.0
        %4564 = vmatpush1.msra.mxu0 %v3634
        %4565 = vmatprep.subr.mxu0 0.0
        %4566 = vmatpush1.msra.mxu0 %v3635
        %4567 = vmatprep.subr.mxu0 0.0
        %4568 = vmatpush1.msra.mxu0 %v3636
        %4569 = vmatprep.subr.mxu0 0.0
        %4570 = vmatpush1.msra.mxu0 %v3637
        %4571 = vmatprep.subr.mxu0 0.0
        %4572 = vmatpush1.msra.mxu0 %v3638
        %4573 = vmatprep.subr.mxu0 0.0
        %4574 = vmatpush1.msra.mxu0 %v3639
        %4575 = vmatprep.subr.mxu0 0.0
        %4576 = vmatpush1.msra.mxu0 %v3640
        %4577 = vmatprep.subr.mxu0 0.0
        %4578 = vmatpush1.msra.mxu0 %v3641
        %4579 = vmatprep.subr.mxu0 0.0
        %4580 = vmatpush1.msra.mxu0 %v3642
        %4581 = vmatprep.subr.mxu0 0.0
        %4582 = vmatpush1.msra.mxu0 %v3643
        %4583 = vmatprep.subr.mxu0 0.0
        %4584 = vmatpush1.msra.mxu0 0.0
        %4585 = vmatprep.subr.mxu0 0.0
        %4586 = vmatpush1.msra.mxu0 0.0
        %4587 = vmatprep.subr.mxu0 0.0
        %4588 = vmatpush1.msra.mxu0 0.0
        %4589 = vmatprep.subr.mxu0 0.0
        %4590 = vmatpush1.msra.mxu0 0.0
        %4591 = vmatprep.subr.mxu0 0.0
        %4592 = vmatpush1.msra.mxu0 0.0
        %4593 = vmatprep.subr.mxu0 0.0
        %4594 = vmatpush1.msra.mxu0 0.0
        %4595 = vmatprep.subr.mxu0 0.0
        %4596 = vmatpush1.msra.mxu0 0.0
        %4597 = vmatprep.subr.mxu0 0.0
        %4598 = vmatpush1.msra.mxu0 0.0
        %4599 = vmatprep.subr.mxu0 0.0
        %4600 = vmatpush1.msra.mxu0 0.0
        %4601 = vmatprep.subr.mxu0 0.0
        %4602 = vmatpush1.msra.mxu0 0.0
        %4603 = vmatprep.subr.mxu0 0.0
        %4604 = vmatpush1.msra.mxu0 0.0
        %4605 = vmatprep.subr.mxu0 0.0
        %4606 = vmatpush1.msra.mxu0 0.0
        %4607 = vmatprep.subr.mxu0 0.0
        %4608 = vmatpush1.msra.mxu0 0.0
        %4609 = vmatprep.subr.mxu0 0.0
        %4610 = vmatpush1.msra.mxu0 0.0
        %4611 = vmatprep.subr.mxu0 0.0
        %4612 = vmatpush1.msra.mxu0 0.0
        %4613 = vmatprep.subr.mxu0 0.0
        %4614 = vmatpush1.msra.mxu0 0.0
        %4615 = vmatprep.mubr.f32.mxu0 0.0
        %4616 = vmatmul.mubr.f32.gmra.mrb[0].mxu0 %v3220
        %v4617 = vpop.f32.mrb[0].mxu0
        %v4618 = vadd.f32 %v4393, %v4617
        %v4619 = vpop.f32.mrb[0].mxu0
        %4620 = vmatprep.mubr.f32.mxu0 0.0
        %4621 = vmatmul.mubr.f32.gmra.mrb[0].mxu0 %v3229
        %v4622 = vpop.f32.mrb[0].mxu0
        %v4623 = vadd.f32 %v4398, %v4622
        %v4624 = vpop.f32.mrb[0].mxu0
        %4625 = vmatprep.mubr.f32.mxu0 0.0
        %4626 = vmatmul.mubr.f32.gmra.mrb[0].mxu0 %v3238
        %v4627 = vpop.f32.mrb[0].mxu0
        %v4628 = vadd.f32 %v4403, %v4627
        %v4629 = vpop.f32.mrb[0].mxu0
        %4630 = vmatprep.mubr.f32.mxu0 0.0
        %4631 = vmatmul.mubr.f32.gmra.mrb[0].mxu0 %v3247
        %v4632 = vpop.f32.mrb[0].mxu0
        %v4633 = vadd.f32 %v4408, %v4632
        %v4634 = vpop.f32.mrb[0].mxu0
        %4635 = vmatprep.mubr.f32.mxu0 0.0
        %4636 = vmatmul.mubr.f32.gmra.mrb[0].mxu0 %v3256
        %v4637 = vpop.f32.mrb[0].mxu0
        %v4638 = vadd.f32 %v4413, %v4637
        %v4639 = vpop.f32.mrb[0].mxu0
        %4640 = vmatprep.mubr.f32.mxu0 0.0
        %4641 = vmatmul.mubr.f32.gmra.mrb[0].mxu0 %v3265
        %v4642 = vpop.f32.mrb[0].mxu0
        %v4643 = vadd.f32 %v4418, %v4642
        %v4644 = vpop.f32.mrb[0].mxu0
        %4645 = vmatprep.mubr.f32.mxu0 0.0
        %4646 = vmatmul.mubr.f32.gmra.mrb[0].mxu0 %v3274
        %v4647 = vpop.f32.mrb[0].mxu0
        %v4648 = vadd.f32 %v4423, %v4647
        %v4649 = vpop.f32.mrb[0].mxu0
        %4650 = vmatprep.mubr.f32.mxu0 0.0
        %4651 = vmatmul.mubr.f32.gmra.mrb[0].mxu0 %v3283
        %v4652 = vpop.f32.mrb[0].mxu0
        %v4653 = vadd.f32 %v4428, %v4652
        %v4654 = vpop.f32.mrb[0].mxu0
        %4655 = vmatprep.mubr.f32.mxu0 0.0
        %4656 = vmatmul.mubr.f32.gmra.mrb[0].mxu0 %v3292
        %v4657 = vpop.f32.mrb[0].mxu0
        %v4658 = vadd.f32 %v4433, %v4657
        %v4659 = vpop.f32.mrb[0].mxu0
        %4660 = vmatprep.mubr.f32.mxu0 0.0
        %4661 = vmatmul.mubr.f32.gmra.mrb[0].mxu0 %v3301
        %v4662 = vpop.f32.mrb[0].mxu0
        %v4663 = vadd.f32 %v4438, %v4662
        %v4664 = vpop.f32.mrb[0].mxu0
        %4665 = vmatprep.mubr.f32.mxu0 0.0
        %4666 = vmatmul.mubr.f32.gmra.mrb[0].mxu0 %v3310
        %v4667 = vpop.f32.mrb[0].mxu0
        %v4668 = vadd.f32 %v4443, %v4667
        %v4669 = vpop.f32.mrb[0].mxu0
        %4670 = vmatprep.mubr.f32.mxu0 0.0
        %4671 = vmatmul.mubr.f32.gmra.mrb[0].mxu0 %v3319
        %v4672 = vpop.f32.mrb[0].mxu0
        %v4673 = vadd.f32 %v4448, %v4672
        %v4674 = vpop.f32.mrb[0].mxu0
        %4675 = vmatprep.mubr.f32.mxu0 0.0
        %4676 = vmatmul.mubr.f32.gmra.mrb[0].mxu0 %v3328
        %v4677 = vpop.f32.mrb[0].mxu0
        %v4678 = vadd.f32 %v4453, %v4677
        %v4679 = vpop.f32.mrb[0].mxu0
        %4680 = vmatprep.mubr.f32.mxu0 0.0
        %4681 = vmatmul.mubr.f32.gmra.mrb[0].mxu0 %v3337
        %v4682 = vpop.f32.mrb[0].mxu0
        %v4683 = vadd.f32 %v4458, %v4682
        %v4684 = vpop.f32.mrb[0].mxu0
        %4685 = vmatprep.mubr.f32.mxu0 0.0
        %4686 = vmatmul.mubr.f32.gmra.mrb[0].mxu0 %v3346
        %v4687 = vpop.f32.mrb[0].mxu0
        %v4688 = vadd.f32 %v4463, %v4687
        %v4689 = vpop.f32.mrb[0].mxu0
        %4690 = vmatprep.mubr.f32.mxu0 0.0
        %4691 = vmatmul.mubr.f32.gmra.mrb[0].mxu0 %v3355
        %v4692 = vpop.f32.mrb[0].mxu0
        %v4693 = vadd.f32 %v4468, %v4692
        %v4694 = vpop.f32.mrb[0].mxu0
        %4695 = vmatprep.mubr.f32.mxu0 0.0
        %4696 = vmatmul.mubr.f32.gmra.mrb[0].mxu0 %v3364
        %v4697 = vpop.f32.mrb[0].mxu0
        %v4698 = vadd.f32 %v4473, %v4697
        %v4699 = vpop.f32.mrb[0].mxu0
        %4700 = vmatprep.mubr.f32.mxu0 0.0
        %4701 = vmatmul.mubr.f32.gmra.mrb[0].mxu0 %v3373
        %v4702 = vpop.f32.mrb[0].mxu0
        %v4703 = vadd.f32 %v4478, %v4702
        %v4704 = vpop.f32.mrb[0].mxu0
        %4705 = vmatprep.mubr.f32.mxu0 0.0
        %4706 = vmatmul.mubr.f32.gmra.mrb[0].mxu0 %v3382
        %v4707 = vpop.f32.mrb[0].mxu0
        %v4708 = vadd.f32 %v4483, %v4707
        %v4709 = vpop.f32.mrb[0].mxu0
        %4710 = vmatprep.mubr.f32.mxu0 0.0
        %4711 = vmatmul.mubr.f32.gmra.mrb[0].mxu0 %v3391
        %v4712 = vpop.f32.mrb[0].mxu0
        %v4713 = vadd.f32 %v4488, %v4712
        %v4714 = vpop.f32.mrb[0].mxu0
        %4715 = vmatprep.mubr.f32.mxu0 0.0
        %4716 = vmatmul.mubr.f32.gmra.mrb[0].mxu0 %v3400
        %v4717 = vpop.f32.mrb[0].mxu0
        %v4718 = vadd.f32 %v4493, %v4717
        %v4719 = vpop.f32.mrb[0].mxu0
        %4720 = vmatprep.mubr.f32.mxu0 0.0
        %4721 = vmatmul.mubr.f32.gmra.mrb[0].mxu0 %v3409
        %v4722 = vpop.f32.mrb[0].mxu0
        %v4723 = vadd.f32 %v4498, %v4722
        %v4724 = vpop.f32.mrb[0].mxu0
        %4725 = vmatprep.mubr.f32.mxu0 0.0
        %4726 = vmatmul.mubr.f32.gmra.mrb[0].mxu0 %v3418
        %v4727 = vpop.f32.mrb[0].mxu0
        %v4728 = vadd.f32 %v4503, %v4727
        %v4729 = vpop.f32.mrb[0].mxu0
        %4730 = vmatprep.mubr.f32.mxu0 0.0
        %4731 = vmatmul.mubr.f32.gmra.mrb[0].mxu0 %v3427
        %v4732 = vpop.f32.mrb[0].mxu0
        %v4733 = vadd.f32 %v4508, %v4732
        %v4734 = vpop.f32.mrb[0].mxu0
        %4735 = vmatprep.mubr.f32.mxu0 0.0
        %4736 = vmatmul.mubr.f32.gmra.mrb[0].mxu0 %v3436
        %v4737 = vpop.f32.mrb[0].mxu0
        %v4738 = vadd.f32 %v4513, %v4737
        %v4739 = vpop.f32.mrb[0].mxu0
        %4740 = vmatprep.mubr.f32.mxu0 0.0
        %4741 = vmatmul.mubr.f32.gmra.mrb[0].mxu0 %v3445
        %v4742 = vpop.f32.mrb[0].mxu0
        %v4743 = vadd.f32 %v4518, %v4742
        %v4744 = vpop.f32.mrb[0].mxu0
        %4745 = vmatprep.mubr.f32.mxu0 0.0
        %4746 = vmatmul.mubr.f32.gmra.mrb[0].mxu0 %v3454
        %v4747 = vpop.f32.mrb[0].mxu0
        %v4748 = vadd.f32 %v4523, %v4747
        %v4749 = vpop.f32.mrb[0].mxu0
        %4750 = vmatprep.mubr.f32.mxu0 0.0
        %4751 = vmatmul.mubr.f32.gmra.mrb[0].mxu0 %v3463
        %v4752 = vpop.f32.mrb[0].mxu0
        %v4753 = vadd.f32 %v4528, %v4752
        %v4754 = vpop.f32.mrb[0].mxu0
        %4755 = vmatprep.mubr.f32.mxu0 0.0
        %4756 = vmatmul.mubr.f32.gmra.mrb[0].mxu0 %v3472
        %v4757 = vpop.f32.mrb[0].mxu0
        %v4758 = vadd.f32 %v4533, %v4757
        %v4759 = vpop.f32.mrb[0].mxu0
        %4760 = vmatprep.mubr.f32.mxu0 0.0
        %4761 = vmatmul.mubr.f32.gmra.mrb[0].mxu0 %v3481
        %v4762 = vpop.f32.mrb[0].mxu0
        %v4763 = vadd.f32 %v4538, %v4762
        %v4764 = vpop.f32.mrb[0].mxu0
        %4765 = vmatprep.mubr.f32.mxu0 0.0
        %4766 = vmatmul.mubr.f32.gmra.mrb[0].mxu0 %v3490
        %v4767 = vpop.f32.mrb[0].mxu0
        %v4768 = vadd.f32 %v4543, %v4767
        %v4769 = vpop.f32.mrb[0].mxu0
        %4770 = vmatprep.mubr.f32.mxu0 0.0
        %4771 = vmatmul.mubr.f32.gmra.mrb[0].mxu0 %v3499
        %v4772 = vpop.f32.mrb[0].mxu0
        %v4773 = vadd.f32 %v4548, %v4772
        %v4774 = vpop.f32.mrb[0].mxu0
        %4775 = vdwg.mxu0
        %v4776 = vmax.f32 %v4618, 0.0
        %v4777 = vmax.f32 %v4623, 0.0
        %v4778 = vmax.f32 %v4628, 0.0
        %v4779 = vmax.f32 %v4633, 0.0
        %v4780 = vmax.f32 %v4638, 0.0
        %v4781 = vmax.f32 %v4643, 0.0
        %v4782 = vmax.f32 %v4648, 0.0
        %v4783 = vmax.f32 %v4653, 0.0
        %v4784 = vmax.f32 %v4658, 0.0
        %v4785 = vmax.f32 %v4663, 0.0
        %v4786 = vmax.f32 %v4668, 0.0
        %v4787 = vmax.f32 %v4673, 0.0
        %v4788 = vmax.f32 %v4678, 0.0
        %v4789 = vmax.f32 %v4683, 0.0
        %v4790 = vmax.f32 %v4688, 0.0
        %v4791 = vmax.f32 %v4693, 0.0
        %v4792 = vmax.f32 %v4698, 0.0
        %v4793 = vmax.f32 %v4703, 0.0
        %v4794 = vmax.f32 %v4708, 0.0
        %v4795 = vmax.f32 %v4713, 0.0
        %v4796 = vmax.f32 %v4718, 0.0
        %v4797 = vmax.f32 %v4723, 0.0
        %v4798 = vmax.f32 %v4728, 0.0
        %v4799 = vmax.f32 %v4733, 0.0
        %v4800 = vmax.f32 %v4738, 0.0
        %v4801 = vmax.f32 %v4743, 0.0
        %v4802 = vmax.f32 %v4748, 0.0
        %v4803 = vmax.f32 %v4753, 0.0
        %v4804 = vmax.f32 %v4758, 0.0
        %v4805 = vmax.f32 %v4763, 0.0
        %v4806 = vmax.f32 %v4768, 0.0
        %v4807 = vmax.f32 %v4773, 0.0
        %4808 = vst [vmem:[%s254] sm:$0xff] %v4776
        %4809 = vst [vmem:[%s254 + $0x8] sm:$0xff] %v4777
        %4810 = vst [vmem:[%s254 + $0x10] sm:$0xff] %v4778
        %4811 = vst [vmem:[%s254 + $0x18] sm:$0xff] %v4779
        %4812 = vst [vmem:[%s254 + $0x20] sm:$0xff] %v4780
        %4813 = vst [vmem:[%s254 + $0x28] sm:$0xff] %v4781
        %4814 = vst [vmem:[%s254 + $0x30] sm:$0xff] %v4782
        %4815 = vst [vmem:[%s254 + $0x38] sm:$0xff] %v4783
        %4816 = vst [vmem:[%s254 + $0x40] sm:$0xff] %v4784
        %4817 = vst [vmem:[%s254 + $0x48] sm:$0xff] %v4785
        %4818 = vst [vmem:[%s254 + $0x50] sm:$0xff] %v4786
        %4819 = vst [vmem:[%s254 + $0x58] sm:$0xff] %v4787
        %4820 = vst [vmem:[%s254 + $0x60] sm:$0xff] %v4788
        %4821 = vst [vmem:[%s254 + $0x68] sm:$0xff] %v4789
        %4822 = vst [vmem:[%s254 + $0x70] sm:$0xff] %v4790
        %4823 = vst [vmem:[%s254 + $0x78] sm:$0xff] %v4791
        %4824 = vst [vmem:[%s254 + $0x80] sm:$0xff] %v4792
        %4825 = vst [vmem:[%s254 + $0x88] sm:$0xff] %v4793
        %4826 = vst [vmem:[%s254 + $0x90] sm:$0xff] %v4794
        %4827 = vst [vmem:[%s254 + $0x98] sm:$0xff] %v4795
        %4828 = vst [vmem:[%s254 + $0xa0] sm:$0xff] %v4796
        %4829 = vst [vmem:[%s254 + $0xa8] sm:$0xff] %v4797
        %4830 = vst [vmem:[%s254 + $0xb0] sm:$0xff] %v4798
        %4831 = vst [vmem:[%s254 + $0xb8] sm:$0xff] %v4799
        %4832 = vst [vmem:[%s254 + $0xc0] sm:$0xff] %v4800
        %4833 = vst [vmem:[%s254 + $0xc8] sm:$0xff] %v4801
        %4834 = vst [vmem:[%s254 + $0xd0] sm:$0xff] %v4802
        %4835 = vst [vmem:[%s254 + $0xd8] sm:$0xff] %v4803
        %4836 = vst [vmem:[%s254 + $0xe0] sm:$0xff] %v4804
        %4837 = vst [vmem:[%s254 + $0xe8] sm:$0xff] %v4805
        %4838 = vst [vmem:[%s254 + $0xf0] sm:$0xff] %v4806
        %4839 = vst [vmem:[%s254 + $0xf8] sm:$0xff] %v4807
        %p4840 = scmp.lt.s32.totalorder %s18, 1
        %s4841 = scalar_select %p4840, %s18, 1
        %s4842 = smul.addr %s4841, 32
        %s4843 = smul.addr %s4842, 8
        %s4844 = scalar_lea.vmem %s5, %s4843
        // Predicated region
        $region49: #{double_conv.1} parent=39 // pred_check
          %p4845 = pneg %p146
        $region50: #{double_conv.1} parent=39 // pred_check_branch
          %4847 = sbr.rel (%p4845) target = $region52
        $region51: #{double_conv.1} parent=39 // pred_region
          _
        $region52: #{double_conv.1} parent=39 // pred_fallthru
          _
      $region40: #{double_conv.1} parent=5 // pred_fallthru
        _
      %p4848 = scmp.le.s32.totalorder 2, %s13
      // Predicated region
      $region53: #{double_conv.1} parent=5 // pred_check
        %p4849 = pneg %p4848
      $region54: #{double_conv.1} parent=5 // pred_check_branch
        %4851 = sbr.rel (%p4849) target = $region56
      $region55: #{double_conv.1} parent=5 // pred_region
        %s4852 = ssub.s32 %s13, 2
        // Predicated region
        $region57: #{double_conv.1} parent=55 // pred_check
          %p4853 = pneg %p152
        $region58: #{double_conv.1} parent=55 // pred_check_branch
          %4855 = sbr.rel (%p4853) target = $region60
        $region59: #{double_conv.1} parent=55 // pred_region
          %p4856 = scmp.lt.s32.totalorder %s19, 1
          %s4857 = scalar_select %p4856, %s19, 1
          %s4858 = smul.addr %s4857, 32
          %s4859 = smul.addr %s4858, 8
          %s4860 = scalar_lea.vmem %s5, %s4859
        $region60: #{double_conv.1} parent=55 // pred_fallthru
          _
      $region56: #{double_conv.1} parent=5 // pred_fallthru
        _
    $region6: #{double_conv.1} parent=1 // loop_footer
      %s17 = sadd.s32 1, %s13
    $region7: #{double_conv.1} parent=1 // loop_footer_branch
      %12 = sbr.rel target = $region3
    $region8: #{double_conv.1} parent=1 // loop_exit
      _
    %4861 = vsyncpa [#allocation7], 1
    %s4862 = scalar_lea.sflag [#allocation7], 1
    %4863 = vsyncpa %s4862, 1
    %4864 = vsyncpa [#allocation9], 1

</llo_original>
